<compile_context>
chip_gen: v6e
topology: v6e:2x2x1
jax: 0.10.0
libtpu: 0.0.40
codegen_flags: <defaults>
</compile_context>

<pallas_src>
import numpy as np
import jax
import jax.numpy as jnp
from jax.experimental import pallas as pl
from jax.experimental.pallas import tpu as pltpu

_BN_EPS = 1e-3


def _round_up(x, m):
    return (x + m - 1) // m * m


# ---------------------------------------------------------------------------
# Fused Pallas kernel factory: the whole XceptionModule in one pallas_call.
# ---------------------------------------------------------------------------
def _make_kernel(H, W, c0, c1, c2, c3):
    Mblk = H * W                                   # one image per grid step
    cins = (c0, c1, c2)
    couts = (c1, c2, c3)
    col_widths = (9 * c0, 9 * c1, 9 * c2 + c0)     # stage 3 carries shortcut cols
    PAD = _round_up(W + 1, 8)                      # zero-halo rows above/below
    TOTAL = Mblk + 2 * PAD

    def kernel(x_ref, w_ref, b_ref, o_ref,
               pad0_ref, pad1_ref, pad2_ref, col0_ref, col1_ref, col2_ref):
        pad_refs = (pad0_ref, pad1_ref, pad2_ref)
        col_refs = (col0_ref, col1_ref, col2_ref)

        x_bf = x_ref[...]                          # (Mblk, c0) bf16, one image
        x = x_bf.astype(jnp.float32)

        # Validity of the w-1 / w+1 source columns for each flattened (h,w) row.
        w_idx = jax.lax.broadcasted_iota(jnp.int32, (Mblk, 1), 0) % W
        ok_l = w_idx >= 1                          # source column w-1 exists
        ok_r = w_idx <= W - 2                      # source column w+1 exists

        def sep_stage(y_in, stage, extra=None):
            # ReLU -> row-padded scratch -> im2col packed along lanes ->
            # one bf16 MXU matmul against folded dw*BNdw*pw*BNpw weights + bias.
            cin, cout = cins[stage], couts[stage]
            pad_ref, col_ref = pad_refs[stage], col_refs[stage]

            # Zero ONLY the halo rows, then write ReLU'd activations into the
            # sublane-aligned interior (PAD is a multiple of 8).
            pad_ref[0:PAD, :] = jnp.zeros((PAD, cin), jnp.float32)
            pad_ref[PAD + Mblk:TOTAL, :] = jnp.zeros((PAD, cin), jnp.float32)
            pad_ref[PAD:PAD + Mblk, :] = jnp.maximum(y_in, 0.0)

            t = 0
            for dy in (-1, 0, 1):
                for dx in (-1, 0, 1):
                    s = dy * W + dx
                    z = pad_ref[PAD + s:PAD + s + Mblk, :]     # tap (dy, dx)
                    if dx == -1:
                        z = jnp.where(ok_l, z, 0.0)            # kill w-edge leak
                    elif dx == 1:
                        z = jnp.where(ok_r, z, 0.0)
                    col_ref[:, t * cin:(t + 1) * cin] = z.astype(jnp.bfloat16)
                    t += 1
            k = 9 * cin
            if extra is not None:                  # fused shortcut: raw bf16 x cols
                col_ref[:, k:k + extra.shape[1]] = extra
                k += extra.shape[1]

            wm = w_ref[stage, 0:k, 0:cout]         # (k, cout) bf16, resident
            bm = b_ref[stage:stage + 1, 0:cout]    # (1, cout) f32
            return jnp.dot(col_ref[...], wm,
                           preferred_element_type=jnp.float32) + bm

        y = sep_stage(x, 0)
        y = sep_stage(y, 1)
        y = sep_stage(y, 2, extra=x_bf)            # stage 3 + shortcut, one matmul
        # TODO(synk): at real Xception sizes present a lane-dense (B*H, W*C3)
        # output slab instead of a 32-wide last dim to avoid masked vst.
        o_ref[...] = y.astype(o_ref.dtype)

    return kernel, col_widths, (PAD, TOTAL)


# ---------------------------------------------------------------------------
# Wrapper (glue)
# ---------------------------------------------------------------------------
def xception_module_forward(x_nhwc, fused, depth_list):
    B, H, W, C0 = x_nhwc.shape
    C1, C2, C3 = depth_list
    Mblk = H * W

    kernel, col_widths, (PAD, TOTAL) = _make_kernel(H, W, C0, C1, C2, C3)

    x2d = x_nhwc.reshape(B * Mblk, C0).astype(jnp.bfloat16)   # lane dim = C0
    wpack, bpack = fused["wpack"], fused["bpack"]

    flops = 2 * B * Mblk * sum(kw * co for kw, co in zip(col_widths, (C1, C2, C3)))
    bytes_accessed = (x2d.size * 2 + wpack.size * 2 + bpack.size * 4
                      + B * Mblk * C3 * 4)

    out2d = pl.pallas_call(
        kernel,
        out_shape=jax.ShapeDtypeStruct((B * Mblk, C3), jnp.float32),
        grid=(B,),
        in_specs=[
            pl.BlockSpec((Mblk, C0), lambda b: (b, 0)),        # one image / step
            pl.BlockSpec(wpack.shape, lambda b: (0, 0, 0)),    # resident weights
            pl.BlockSpec(bpack.shape, lambda b: (0, 0)),       # resident biases
        ],
        out_specs=pl.BlockSpec((Mblk, C3), lambda b: (b, 0)),
        scratch_shapes=[
            pltpu.VMEM((TOTAL, C0), jnp.float32),              # row-padded acts
            pltpu.VMEM((TOTAL, C1), jnp.float32),
            pltpu.VMEM((TOTAL, C2), jnp.float32),
            pltpu.VMEM((Mblk, col_widths[0]), jnp.bfloat16),   # im2col buffers
            pltpu.VMEM((Mblk, col_widths[1]), jnp.bfloat16),
            pltpu.VMEM((Mblk, col_widths[2]), jnp.bfloat16),
        ],
        compiler_params=pltpu.CompilerParams(
            dimension_semantics=("parallel",)),                # v7x: 2 TCs
        cost_estimate=pl.CostEstimate(flops=flops, transcendentals=0,
                                      bytes_accessed=bytes_accessed),
    )(x2d, wpack, bpack)

    return out2d.reshape(B, H, W, C3)              # free wrapper-side reshape


# ---------------------------------------------------------------------------
# Deterministic parameter construction (synthetic; no checkpoint load)
# ---------------------------------------------------------------------------
def make_bn_fold(key, c):
    k1, k2, k3, k4 = jax.random.split(key, 4)
    gamma = 1.0 + 0.1 * jax.random.normal(k1, (c,))
    beta = 0.1 * jax.random.normal(k2, (c,))
    mean = 0.1 * jax.random.normal(k3, (c,))
    var = 1.0 + 0.1 * jnp.abs(jax.random.normal(k4, (c,)))
    scale = gamma / jnp.sqrt(var + _BN_EPS)
    bias = beta - mean * scale
    return (scale.reshape(1, c).astype(jnp.float32),
            bias.reshape(1, c).astype(jnp.float32))


def init_params(key, in_channels, depth_list):
    params = []
    cin = in_channels
    for i in range(3):
        key, k1, k2, kb1, kb2 = jax.random.split(key, 5)
        dw_w = (0.1 * jax.random.normal(k1, (3, 3, cin))).astype(jnp.float32)
        pw_w = (0.1 * jax.random.normal(k2, (cin, depth_list[i]))).astype(jnp.float32)
        dws, dwb = make_bn_fold(kb1, cin)
        pws, pwb = make_bn_fold(kb2, depth_list[i])
        params.append(dict(dw_w=dw_w, pw_w=pw_w, dws=dws, dwb=dwb,
                           pws=pws, pwb=pwb))
        cin = depth_list[i]
    key, kw, kb, kbn = jax.random.split(key, 4)
    cout = depth_list[-1]
    sk_w = (0.1 * jax.random.normal(kw, (in_channels, cout))).astype(jnp.float32)
    sk_cb = (0.1 * jax.random.normal(kb, (1, cout))).astype(jnp.float32)
    sks, skb = make_bn_fold(kbn, cout)
    sk = dict(w=sk_w, cb=sk_cb, s=sks, b=skb)
    return params, sk


def fold_params(params, sk):
    """Fold each {dw3x3, dw-BN, 1x1, pw-BN} stage (no nonlinearity between the
    two convs) into per-tap weights reshaped to (9*Cin, Cout) + bias (1, Cout),
    fold the shortcut conv-bias + BN into an affine map and APPEND it to stage
    3's weight block (extra K rows / summed bias).  Everything is packed into
    one bf16 weight slab (3, max_rows, C3) and one f32 bias slab (3, C3)."""
    stage_w, stage_b = [], []
    for p in params:
        cin, cout = p["pw_w"].shape
        w_eff = (p["dw_w"].reshape(9, cin, 1)
                 * p["dws"].reshape(1, cin, 1)
                 * p["pw_w"].reshape(1, cin, cout)
                 * p["pws"].reshape(1, 1, cout)).reshape(9 * cin, cout)
        b_eff = p["dwb"] @ (p["pw_w"] * p["pws"]) + p["pwb"]
        stage_w.append(w_eff)
        stage_b.append(b_eff)
    wsc = sk["w"] * sk["s"]                       # (C0, C3)
    bsc = sk["cb"] * sk["s"] + sk["b"]            # (1, C3)
    stage_w[2] = jnp.concatenate([stage_w[2], wsc], axis=0)   # fuse shortcut
    stage_b[2] = stage_b[2] + bsc

    c3 = wsc.shape[1]
    max_rows = max(w.shape[0] for w in stage_w)
    wpack = jnp.zeros((3, max_rows, c3), jnp.float32)
    bpack = jnp.zeros((3, c3), jnp.float32)
    for i, (w, b) in enumerate(zip(stage_w, stage_b)):
        wpack = wpack.at[i, :w.shape[0], :w.shape[1]].set(w)
        bpack = bpack.at[i, :b.shape[1]].set(b[0])
    return dict(wpack=wpack.astype(jnp.bfloat16), bpack=bpack)


# ---------------------------------------------------------------------------
# Pure-JAX reference (unfused, f32) for correctness check
# ---------------------------------------------------------------------------
def ref_forward(x_nhwc, params, sk):
    y = x_nhwc
    for p in params:
        cin = y.shape[-1]
        y = jnp.maximum(y, 0.0)
        rhs = p["dw_w"][:, :, None, :]  # HWIO, I=1, O=Cin (depthwise)
        y = jax.lax.conv_general_dilated(
            y, rhs, window_strides=(1, 1), padding=((1, 1), (1, 1)),
            dimension_numbers=("NHWC", "HWIO", "NHWC"),
            feature_group_count=cin)
        y = y * p["dws"] + p["dwb"]
        y = jnp.einsum("bhwc,cd->bhwd", y, p["pw_w"])
        y = y * p["pws"] + p["pwb"]
    sc = jnp.einsum("bhwc,cd->bhwd", x_nhwc, sk["w"]) + sk["cb"]
    sc = sc * sk["s"] + sk["b"]
    return y + sc


# ---------------------------------------------------------------------------
if __name__ == "__main__":
    key = jax.random.PRNGKey(0)
    B, C, H, W = 2, 8, 16, 16              # PyTorch NCHW input shape
    depth_list = [16, 16, 32]

    kx, kp = jax.random.split(key)
    x_nchw = jax.random.normal(kx, (B, C, H, W), jnp.float32)
    params, sk = init_params(kp, C, depth_list)
    fused = fold_params(params, sk)

    x_nhwc = jnp.transpose(x_nchw, (0, 2, 3, 1))   # NCHW -> NHWC for kernel

    out = xception_module_forward(x_nhwc, fused, depth_list)
    out = jax.block_until_ready(out)

    ref = ref_forward(x_nhwc, params, sk)
    # bf16 weights/activations (f32 accumulation) -> slightly relaxed tolerance.
    np.testing.assert_allclose(np.asarray(out), np.asarray(ref),
                               rtol=2e-2, atol=2e-2)

    # TODO(synk): stride>1 / explicit fixed_padding path and bounded-activation
    # (ReLU6/clamp) variants of the module are not exercised by this config.
    print("KERNEL_OK")
</pallas_src>

<mosaic_0001>
module attributes {stable_mosaic.version = 11 : i64} {
  func.func @kernel(%arg0: i32, %arg1: memref<256x8xbf16, #tpu.memory_space<vmem>>, %arg2: memref<3x152x32xbf16, #tpu.memory_space<vmem>>, %arg3: memref<3x32xf32, #tpu.memory_space<vmem>>, %arg4: memref<256x32xf32, #tpu.memory_space<vmem>>, %arg5: memref<304x8xf32, #tpu.memory_space<vmem>>, %arg6: memref<304x16xf32, #tpu.memory_space<vmem>>, %arg7: memref<304x16xf32, #tpu.memory_space<vmem>>, %arg8: memref<256x72xbf16, #tpu.memory_space<vmem>>, %arg9: memref<256x144xbf16, #tpu.memory_space<vmem>>, %arg10: memref<256x152xbf16, #tpu.memory_space<vmem>>) attributes {dimension_semantics = [#tpu.dimension_semantics<parallel>], iteration_bounds = array<i64: 2>, scalar_prefetch = 0 : i64, scratch_operands = 6 : i64, tpu.core_type = #tpu.core_type<tc>, window_params = [{transform_indices = @transform_0, window_bounds = array<i64: 256, 8>}, {pipeline_mode = #tpu.pipeline_mode<synchronous>, transform_indices = @transform_1, window_bounds = array<i64: 3, 152, 32>}, {pipeline_mode = #tpu.pipeline_mode<synchronous>, transform_indices = @transform_2, window_bounds = array<i64: 3, 32>}, {transform_indices = @transform_3, window_bounds = array<i64: 256, 32>}]} {
    %c0 = arith.constant 0 : index
    %c0_0 = arith.constant 0 : index
    %0 = vector.load %arg1[%c0, %c0_0] : memref<256x8xbf16, #tpu.memory_space<vmem>>, vector<256x8xbf16>
    %1 = arith.extf %0 : vector<256x8xbf16> to vector<256x8xf32>
    %2 = tpu.iota {dimensions = array<i32: 0>} : vector<256x1xi32>
    %c16_i32 = arith.constant 16 : i32
    %c0_i32 = arith.constant 0 : i32
    %3 = arith.cmpi eq, %c16_i32, %c0_i32 : i32
    %c1_i32 = arith.constant 1 : i32
    %4 = arith.select %3, %c1_i32, %c16_i32 : i32
    %5 = vector.broadcast %4 : i32 to vector<256x1xi32>
    %6 = arith.remsi %2, %5 : vector<256x1xi32>
    %c0_i32_1 = arith.constant 0 : i32
    %7 = vector.broadcast %c0_i32_1 : i32 to vector<256x1xi32>
    %8 = arith.cmpi ne, %6, %7 : vector<256x1xi32>
    %c0_i32_2 = arith.constant 0 : i32
    %9 = vector.broadcast %c0_i32_2 : i32 to vector<256x1xi32>
    %10 = arith.cmpi slt, %6, %9 : vector<256x1xi32>
    %c0_i32_3 = arith.constant 0 : i32
    %11 = arith.cmpi slt, %4, %c0_i32_3 : i32
    %12 = vector.broadcast %11 : i1 to vector<256x1xi1>
    %13 = vector.broadcast %12 : vector<256x1xi1> to vector<256x1xi1>
    %14 = arith.xori %10, %13 : vector<256x1xi1>
    %15 = arith.andi %14, %8 : vector<256x1xi1>
    %16 = vector.broadcast %4 : i32 to vector<256x1xi32>
    %17 = arith.addi %6, %16 : vector<256x1xi32>
    %18 = arith.select %15, %17, %6 : vector<256x1xi1>, vector<256x1xi32>
    %c1_i32_4 = arith.constant 1 : i32
    %19 = vector.broadcast %c1_i32_4 : i32 to vector<256x1xi32>
    %20 = arith.cmpi sge, %18, %19 : vector<256x1xi32>
    %c14_i32 = arith.constant 14 : i32
    %21 = vector.broadcast %c14_i32 : i32 to vector<256x1xi32>
    %22 = arith.cmpi sle, %18, %21 : vector<256x1xi32>
    %cst = arith.constant 0.000000e+00 : f32
    %23 = vector.broadcast %cst : f32 to vector<24x8xf32>
    %c0_5 = arith.constant 0 : index
    %c0_6 = arith.constant 0 : index
    %24 = vector.load %arg5[%c0_5, %c0_6] : memref<304x8xf32, #tpu.memory_space<vmem>>, vector<24x8xf32>
    tpu.vector_store %arg5[%c0_5, %c0_6], %23 {strides = array<i32>} : memref<304x8xf32, #tpu.memory_space<vmem>>, vector<24x8xf32>,
    %cst_7 = arith.constant 0.000000e+00 : f32
    %25 = vector.broadcast %cst_7 : f32 to vector<24x8xf32>
    %c280 = arith.constant 280 : index
    %c0_8 = arith.constant 0 : index
    %26 = vector.load %arg5[%c280, %c0_8] : memref<304x8xf32, #tpu.memory_space<vmem>>, vector<24x8xf32>
    tpu.vector_store %arg5[%c280, %c0_8], %25 {strides = array<i32>} : memref<304x8xf32, #tpu.memory_space<vmem>>, vector<24x8xf32>,
    %cst_9 = arith.constant 0.000000e+00 : f32
    %27 = vector.broadcast %cst_9 : f32 to vector<256x8xf32>
    %28 = arith.maximumf %1, %27 : vector<256x8xf32>
    %c24 = arith.constant 24 : index
    %c0_10 = arith.constant 0 : index
    %29 = vector.load %arg5[%c24, %c0_10] : memref<304x8xf32, #tpu.memory_space<vmem>>, vector<256x8xf32>
    tpu.vector_store %arg5[%c24, %c0_10], %28 {strides = array<i32>} : memref<304x8xf32, #tpu.memory_space<vmem>>, vector<256x8xf32>,
    %c7 = arith.constant 7 : index
    %c0_11 = arith.constant 0 : index
    %30 = vector.load %arg5[%c7, %c0_11] : memref<304x8xf32, #tpu.memory_space<vmem>>, vector<256x8xf32>
    %cst_12 = arith.constant 0.000000e+00 : f32
    %31 = vector.shape_cast %20 : vector<256x1xi1> to vector<256x1xi1>
    %32 = vector.broadcast %31 : vector<256x1xi1> to vector<256x8xi1>
    %33 = vector.broadcast %cst_12 : f32 to vector<256x8xf32>
    %34 = arith.select %32, %30, %33 : vector<256x8xi1>, vector<256x8xf32>
    %35 = arith.truncf %34 : vector<256x8xf32> to vector<256x8xbf16>
    %c0_13 = arith.constant 0 : index
    %c0_14 = arith.constant 0 : index
    %36 = vector.load %arg8[%c0_13, %c0_14] : memref<256x72xbf16, #tpu.memory_space<vmem>>, vector<256x8xbf16>
    tpu.vector_store %arg8[%c0_13, %c0_14], %35 {strides = array<i32>} : memref<256x72xbf16, #tpu.memory_space<vmem>>, vector<256x8xbf16>,
    %c8 = arith.constant 8 : index
    %c0_15 = arith.constant 0 : index
    %37 = vector.load %arg5[%c8, %c0_15] : memref<304x8xf32, #tpu.memory_space<vmem>>, vector<256x8xf32>
    %38 = arith.truncf %37 : vector<256x8xf32> to vector<256x8xbf16>
    %c0_16 = arith.constant 0 : index
    %c8_17 = arith.constant 8 : index
    %39 = vector.load %arg8[%c0_16, %c8_17] : memref<256x72xbf16, #tpu.memory_space<vmem>>, vector<256x8xbf16>
    tpu.vector_store %arg8[%c0_16, %c8_17], %38 {strides = array<i32>} : memref<256x72xbf16, #tpu.memory_space<vmem>>, vector<256x8xbf16>,
    %c9 = arith.constant 9 : index
    %c0_18 = arith.constant 0 : index
    %40 = vector.load %arg5[%c9, %c0_18] : memref<304x8xf32, #tpu.memory_space<vmem>>, vector<256x8xf32>
    %cst_19 = arith.constant 0.000000e+00 : f32
    %41 = vector.shape_cast %22 : vector<256x1xi1> to vector<256x1xi1>
    %42 = vector.broadcast %41 : vector<256x1xi1> to vector<256x8xi1>
    %43 = vector.broadcast %cst_19 : f32 to vector<256x8xf32>
    %44 = arith.select %42, %40, %43 : vector<256x8xi1>, vector<256x8xf32>
    %45 = arith.truncf %44 : vector<256x8xf32> to vector<256x8xbf16>
    %c0_20 = arith.constant 0 : index
    %c16 = arith.constant 16 : index
    %46 = vector.load %arg8[%c0_20, %c16] : memref<256x72xbf16, #tpu.memory_space<vmem>>, vector<256x8xbf16>
    tpu.vector_store %arg8[%c0_20, %c16], %45 {strides = array<i32>} : memref<256x72xbf16, #tpu.memory_space<vmem>>, vector<256x8xbf16>,
    %c23 = arith.constant 23 : index
    %c0_21 = arith.constant 0 : index
    %47 = vector.load %arg5[%c23, %c0_21] : memref<304x8xf32, #tpu.memory_space<vmem>>, vector<256x8xf32>
    %cst_22 = arith.constant 0.000000e+00 : f32
    %48 = vector.shape_cast %20 : vector<256x1xi1> to vector<256x1xi1>
    %49 = vector.broadcast %48 : vector<256x1xi1> to vector<256x8xi1>
    %50 = vector.broadcast %cst_22 : f32 to vector<256x8xf32>
    %51 = arith.select %49, %47, %50 : vector<256x8xi1>, vector<256x8xf32>
    %52 = arith.truncf %51 : vector<256x8xf32> to vector<256x8xbf16>
    %c0_23 = arith.constant 0 : index
    %c24_24 = arith.constant 24 : index
    %53 = vector.load %arg8[%c0_23, %c24_24] : memref<256x72xbf16, #tpu.memory_space<vmem>>, vector<256x8xbf16>
    tpu.vector_store %arg8[%c0_23, %c24_24], %52 {strides = array<i32>} : memref<256x72xbf16, #tpu.memory_space<vmem>>, vector<256x8xbf16>,
    %c24_25 = arith.constant 24 : index
    %c0_26 = arith.constant 0 : index
    %54 = vector.load %arg5[%c24_25, %c0_26] : memref<304x8xf32, #tpu.memory_space<vmem>>, vector<256x8xf32>
    %55 = arith.truncf %54 : vector<256x8xf32> to vector<256x8xbf16>
    %c0_27 = arith.constant 0 : index
    %c32 = arith.constant 32 : index
    %56 = vector.load %arg8[%c0_27, %c32] : memref<256x72xbf16, #tpu.memory_space<vmem>>, vector<256x8xbf16>
    tpu.vector_store %arg8[%c0_27, %c32], %55 {strides = array<i32>} : memref<256x72xbf16, #tpu.memory_space<vmem>>, vector<256x8xbf16>,
    %c25 = arith.constant 25 : index
    %c0_28 = arith.constant 0 : index
    %57 = vector.load %arg5[%c25, %c0_28] : memref<304x8xf32, #tpu.memory_space<vmem>>, vector<256x8xf32>
    %cst_29 = arith.constant 0.000000e+00 : f32
    %58 = vector.shape_cast %22 : vector<256x1xi1> to vector<256x1xi1>
    %59 = vector.broadcast %58 : vector<256x1xi1> to vector<256x8xi1>
    %60 = vector.broadcast %cst_29 : f32 to vector<256x8xf32>
    %61 = arith.select %59, %57, %60 : vector<256x8xi1>, vector<256x8xf32>
    %62 = arith.truncf %61 : vector<256x8xf32> to vector<256x8xbf16>
    %c0_30 = arith.constant 0 : index
    %c40 = arith.constant 40 : index
    %63 = vector.load %arg8[%c0_30, %c40] : memref<256x72xbf16, #tpu.memory_space<vmem>>, vector<256x8xbf16>
    tpu.vector_store %arg8[%c0_30, %c40], %62 {strides = array<i32>} : memref<256x72xbf16, #tpu.memory_space<vmem>>, vector<256x8xbf16>,
    %c39 = arith.constant 39 : index
    %c0_31 = arith.constant 0 : index
    %64 = vector.load %arg5[%c39, %c0_31] : memref<304x8xf32, #tpu.memory_space<vmem>>, vector<256x8xf32>
    %cst_32 = arith.constant 0.000000e+00 : f32
    %65 = vector.shape_cast %20 : vector<256x1xi1> to vector<256x1xi1>
    %66 = vector.broadcast %65 : vector<256x1xi1> to vector<256x8xi1>
    %67 = vector.broadcast %cst_32 : f32 to vector<256x8xf32>
    %68 = arith.select %66, %64, %67 : vector<256x8xi1>, vector<256x8xf32>
    %69 = arith.truncf %68 : vector<256x8xf32> to vector<256x8xbf16>
    %c0_33 = arith.constant 0 : index
    %c48 = arith.constant 48 : index
    %70 = vector.load %arg8[%c0_33, %c48] : memref<256x72xbf16, #tpu.memory_space<vmem>>, vector<256x8xbf16>
    tpu.vector_store %arg8[%c0_33, %c48], %69 {strides = array<i32>} : memref<256x72xbf16, #tpu.memory_space<vmem>>, vector<256x8xbf16>,
    %c40_34 = arith.constant 40 : index
    %c0_35 = arith.constant 0 : index
    %71 = vector.load %arg5[%c40_34, %c0_35] : memref<304x8xf32, #tpu.memory_space<vmem>>, vector<256x8xf32>
    %72 = arith.truncf %71 : vector<256x8xf32> to vector<256x8xbf16>
    %c0_36 = arith.constant 0 : index
    %c56 = arith.constant 56 : index
    %73 = vector.load %arg8[%c0_36, %c56] : memref<256x72xbf16, #tpu.memory_space<vmem>>, vector<256x8xbf16>
    tpu.vector_store %arg8[%c0_36, %c56], %72 {strides = array<i32>} : memref<256x72xbf16, #tpu.memory_space<vmem>>, vector<256x8xbf16>,
    %c41 = arith.constant 41 : index
    %c0_37 = arith.constant 0 : index
    %74 = vector.load %arg5[%c41, %c0_37] : memref<304x8xf32, #tpu.memory_space<vmem>>, vector<256x8xf32>
    %cst_38 = arith.constant 0.000000e+00 : f32
    %75 = vector.shape_cast %22 : vector<256x1xi1> to vector<256x1xi1>
    %76 = vector.broadcast %75 : vector<256x1xi1> to vector<256x8xi1>
    %77 = vector.broadcast %cst_38 : f32 to vector<256x8xf32>
    %78 = arith.select %76, %74, %77 : vector<256x8xi1>, vector<256x8xf32>
    %79 = arith.truncf %78 : vector<256x8xf32> to vector<256x8xbf16>
    %c0_39 = arith.constant 0 : index
    %c64 = arith.constant 64 : index
    %80 = vector.load %arg8[%c0_39, %c64] : memref<256x72xbf16, #tpu.memory_space<vmem>>, vector<256x8xbf16>
    tpu.vector_store %arg8[%c0_39, %c64], %79 {strides = array<i32>} : memref<256x72xbf16, #tpu.memory_space<vmem>>, vector<256x8xbf16>,
    %c0_40 = arith.constant 0 : index
    %c0_41 = arith.constant 0 : index
    %c0_42 = arith.constant 0 : index
    %81 = vector.load %arg2[%c0_40, %c0_41, %c0_42] : memref<3x152x32xbf16, #tpu.memory_space<vmem>>, vector<1x72x16xbf16>
    %82 = vector.shape_cast %81 : vector<1x72x16xbf16> to vector<72x16xbf16>
    %c0_43 = arith.constant 0 : index
    %c0_44 = arith.constant 0 : index
    %83 = vector.load %arg3[%c0_43, %c0_44] : memref<3x32xf32, #tpu.memory_space<vmem>>, vector<1x16xf32>
    %c0_45 = arith.constant 0 : index
    %c0_46 = arith.constant 0 : index
    %84 = vector.load %arg8[%c0_45, %c0_46] : memref<256x72xbf16, #tpu.memory_space<vmem>>, vector<256x72xbf16>
    %cst_47 = arith.constant dense<0.000000e+00> : vector<256x16xf32>
    %85 = tpu.matmul %84, %82, %cst_47 {dimension_numbers = #tpu.dot_dimension_numbers<[1], [0], [0], [1], [0, 0, 1, 1], [], []>} : vector<256x72xbf16>, vector<72x16xbf16>, vector<256x16xf32> -> vector<256x16xf32>
    %86 = vector.broadcast %83 : vector<1x16xf32> to vector<256x16xf32>
    %87 = arith.addf %85, %86 : vector<256x16xf32>
    %cst_48 = arith.constant 0.000000e+00 : f32
    %88 = vector.broadcast %cst_48 : f32 to vector<24x16xf32>
    %c0_49 = arith.constant 0 : index
    %c0_50 = arith.constant 0 : index
    %89 = vector.load %arg6[%c0_49, %c0_50] : memref<304x16xf32, #tpu.memory_space<vmem>>, vector<24x16xf32>
    tpu.vector_store %arg6[%c0_49, %c0_50], %88 {strides = array<i32>} : memref<304x16xf32, #tpu.memory_space<vmem>>, vector<24x16xf32>,
    %cst_51 = arith.constant 0.000000e+00 : f32
    %90 = vector.broadcast %cst_51 : f32 to vector<24x16xf32>
    %c280_52 = arith.constant 280 : index
    %c0_53 = arith.constant 0 : index
    %91 = vector.load %arg6[%c280_52, %c0_53] : memref<304x16xf32, #tpu.memory_space<vmem>>, vector<24x16xf32>
    tpu.vector_store %arg6[%c280_52, %c0_53], %90 {strides = array<i32>} : memref<304x16xf32, #tpu.memory_space<vmem>>, vector<24x16xf32>,
    %cst_54 = arith.constant 0.000000e+00 : f32
    %92 = vector.broadcast %cst_54 : f32 to vector<256x16xf32>
    %93 = arith.maximumf %87, %92 : vector<256x16xf32>
    %c24_55 = arith.constant 24 : index
    %c0_56 = arith.constant 0 : index
    %94 = vector.load %arg6[%c24_55, %c0_56] : memref<304x16xf32, #tpu.memory_space<vmem>>, vector<256x16xf32>
    tpu.vector_store %arg6[%c24_55, %c0_56], %93 {strides = array<i32>} : memref<304x16xf32, #tpu.memory_space<vmem>>, vector<256x16xf32>,
    %c7_57 = arith.constant 7 : index
    %c0_58 = arith.constant 0 : index
    %95 = vector.load %arg6[%c7_57, %c0_58] : memref<304x16xf32, #tpu.memory_space<vmem>>, vector<256x16xf32>
    %cst_59 = arith.constant 0.000000e+00 : f32
    %96 = vector.shape_cast %20 : vector<256x1xi1> to vector<256x1xi1>
    %97 = vector.broadcast %96 : vector<256x1xi1> to vector<256x16xi1>
    %98 = vector.broadcast %cst_59 : f32 to vector<256x16xf32>
    %99 = arith.select %97, %95, %98 : vector<256x16xi1>, vector<256x16xf32>
    %100 = arith.truncf %99 : vector<256x16xf32> to vector<256x16xbf16>
    %c0_60 = arith.constant 0 : index
    %c0_61 = arith.constant 0 : index
    %101 = vector.load %arg9[%c0_60, %c0_61] : memref<256x144xbf16, #tpu.memory_space<vmem>>, vector<256x16xbf16>
    tpu.vector_store %arg9[%c0_60, %c0_61], %100 {strides = array<i32>} : memref<256x144xbf16, #tpu.memory_space<vmem>>, vector<256x16xbf16>,
    %c8_62 = arith.constant 8 : index
    %c0_63 = arith.constant 0 : index
    %102 = vector.load %arg6[%c8_62, %c0_63] : memref<304x16xf32, #tpu.memory_space<vmem>>, vector<256x16xf32>
    %103 = arith.truncf %102 : vector<256x16xf32> to vector<256x16xbf16>
    %c0_64 = arith.constant 0 : index
    %c16_65 = arith.constant 16 : index
    %104 = vector.load %arg9[%c0_64, %c16_65] : memref<256x144xbf16, #tpu.memory_space<vmem>>, vector<256x16xbf16>
    tpu.vector_store %arg9[%c0_64, %c16_65], %103 {strides = array<i32>} : memref<256x144xbf16, #tpu.memory_space<vmem>>, vector<256x16xbf16>,
    %c9_66 = arith.constant 9 : index
    %c0_67 = arith.constant 0 : index
    %105 = vector.load %arg6[%c9_66, %c0_67] : memref<304x16xf32, #tpu.memory_space<vmem>>, vector<256x16xf32>
    %cst_68 = arith.constant 0.000000e+00 : f32
    %106 = vector.shape_cast %22 : vector<256x1xi1> to vector<256x1xi1>
    %107 = vector.broadcast %106 : vector<256x1xi1> to vector<256x16xi1>
    %108 = vector.broadcast %cst_68 : f32 to vector<256x16xf32>
    %109 = arith.select %107, %105, %108 : vector<256x16xi1>, vector<256x16xf32>
    %110 = arith.truncf %109 : vector<256x16xf32> to vector<256x16xbf16>
    %c0_69 = arith.constant 0 : index
    %c32_70 = arith.constant 32 : index
    %111 = vector.load %arg9[%c0_69, %c32_70] : memref<256x144xbf16, #tpu.memory_space<vmem>>, vector<256x16xbf16>
    tpu.vector_store %arg9[%c0_69, %c32_70], %110 {strides = array<i32>} : memref<256x144xbf16, #tpu.memory_space<vmem>>, vector<256x16xbf16>,
    %c23_71 = arith.constant 23 : index
    %c0_72 = arith.constant 0 : index
    %112 = vector.load %arg6[%c23_71, %c0_72] : memref<304x16xf32, #tpu.memory_space<vmem>>, vector<256x16xf32>
    %cst_73 = arith.constant 0.000000e+00 : f32
    %113 = vector.shape_cast %20 : vector<256x1xi1> to vector<256x1xi1>
    %114 = vector.broadcast %113 : vector<256x1xi1> to vector<256x16xi1>
    %115 = vector.broadcast %cst_73 : f32 to vector<256x16xf32>
    %116 = arith.select %114, %112, %115 : vector<256x16xi1>, vector<256x16xf32>
    %117 = arith.truncf %116 : vector<256x16xf32> to vector<256x16xbf16>
    %c0_74 = arith.constant 0 : index
    %c48_75 = arith.constant 48 : index
    %118 = vector.load %arg9[%c0_74, %c48_75] : memref<256x144xbf16, #tpu.memory_space<vmem>>, vector<256x16xbf16>
    tpu.vector_store %arg9[%c0_74, %c48_75], %117 {strides = array<i32>} : memref<256x144xbf16, #tpu.memory_space<vmem>>, vector<256x16xbf16>,
    %c24_76 = arith.constant 24 : index
    %c0_77 = arith.constant 0 : index
    %119 = vector.load %arg6[%c24_76, %c0_77] : memref<304x16xf32, #tpu.memory_space<vmem>>, vector<256x16xf32>
    %120 = arith.truncf %119 : vector<256x16xf32> to vector<256x16xbf16>
    %c0_78 = arith.constant 0 : index
    %c64_79 = arith.constant 64 : index
    %121 = vector.load %arg9[%c0_78, %c64_79] : memref<256x144xbf16, #tpu.memory_space<vmem>>, vector<256x16xbf16>
    tpu.vector_store %arg9[%c0_78, %c64_79], %120 {strides = array<i32>} : memref<256x144xbf16, #tpu.memory_space<vmem>>, vector<256x16xbf16>,
    %c25_80 = arith.constant 25 : index
    %c0_81 = arith.constant 0 : index
    %122 = vector.load %arg6[%c25_80, %c0_81] : memref<304x16xf32, #tpu.memory_space<vmem>>, vector<256x16xf32>
    %cst_82 = arith.constant 0.000000e+00 : f32
    %123 = vector.shape_cast %22 : vector<256x1xi1> to vector<256x1xi1>
    %124 = vector.broadcast %123 : vector<256x1xi1> to vector<256x16xi1>
    %125 = vector.broadcast %cst_82 : f32 to vector<256x16xf32>
    %126 = arith.select %124, %122, %125 : vector<256x16xi1>, vector<256x16xf32>
    %127 = arith.truncf %126 : vector<256x16xf32> to vector<256x16xbf16>
    %c0_83 = arith.constant 0 : index
    %c80 = arith.constant 80 : index
    %128 = vector.load %arg9[%c0_83, %c80] : memref<256x144xbf16, #tpu.memory_space<vmem>>, vector<256x16xbf16>
    tpu.vector_store %arg9[%c0_83, %c80], %127 {strides = array<i32>} : memref<256x144xbf16, #tpu.memory_space<vmem>>, vector<256x16xbf16>,
    %c39_84 = arith.constant 39 : index
    %c0_85 = arith.constant 0 : index
    %129 = vector.load %arg6[%c39_84, %c0_85] : memref<304x16xf32, #tpu.memory_space<vmem>>, vector<256x16xf32>
    %cst_86 = arith.constant 0.000000e+00 : f32
    %130 = vector.shape_cast %20 : vector<256x1xi1> to vector<256x1xi1>
    %131 = vector.broadcast %130 : vector<256x1xi1> to vector<256x16xi1>
    %132 = vector.broadcast %cst_86 : f32 to vector<256x16xf32>
    %133 = arith.select %131, %129, %132 : vector<256x16xi1>, vector<256x16xf32>
    %134 = arith.truncf %133 : vector<256x16xf32> to vector<256x16xbf16>
    %c0_87 = arith.constant 0 : index
    %c96 = arith.constant 96 : index
    %135 = vector.load %arg9[%c0_87, %c96] : memref<256x144xbf16, #tpu.memory_space<vmem>>, vector<256x16xbf16>
    tpu.vector_store %arg9[%c0_87, %c96], %134 {strides = array<i32>} : memref<256x144xbf16, #tpu.memory_space<vmem>>, vector<256x16xbf16>,
    %c40_88 = arith.constant 40 : index
    %c0_89 = arith.constant 0 : index
    %136 = vector.load %arg6[%c40_88, %c0_89] : memref<304x16xf32, #tpu.memory_space<vmem>>, vector<256x16xf32>
    %137 = arith.truncf %136 : vector<256x16xf32> to vector<256x16xbf16>
    %c0_90 = arith.constant 0 : index
    %c112 = arith.constant 112 : index
    %138 = vector.load %arg9[%c0_90, %c112] : memref<256x144xbf16, #tpu.memory_space<vmem>>, vector<256x16xbf16>
    tpu.vector_store %arg9[%c0_90, %c112], %137 {strides = array<i32>} : memref<256x144xbf16, #tpu.memory_space<vmem>>, vector<256x16xbf16>,
    %c41_91 = arith.constant 41 : index
    %c0_92 = arith.constant 0 : index
    %139 = vector.load %arg6[%c41_91, %c0_92] : memref<304x16xf32, #tpu.memory_space<vmem>>, vector<256x16xf32>
    %cst_93 = arith.constant 0.000000e+00 : f32
    %140 = vector.shape_cast %22 : vector<256x1xi1> to vector<256x1xi1>
    %141 = vector.broadcast %140 : vector<256x1xi1> to vector<256x16xi1>
    %142 = vector.broadcast %cst_93 : f32 to vector<256x16xf32>
    %143 = arith.select %141, %139, %142 : vector<256x16xi1>, vector<256x16xf32>
    %144 = arith.truncf %143 : vector<256x16xf32> to vector<256x16xbf16>
    %c0_94 = arith.constant 0 : index
    %c128 = arith.constant 128 : index
    %145 = vector.load %arg9[%c0_94, %c128] : memref<256x144xbf16, #tpu.memory_space<vmem>>, vector<256x16xbf16>
    tpu.vector_store %arg9[%c0_94, %c128], %144 {strides = array<i32>} : memref<256x144xbf16, #tpu.memory_space<vmem>>, vector<256x16xbf16>,
    %c1 = arith.constant 1 : index
    %c0_95 = arith.constant 0 : index
    %c0_96 = arith.constant 0 : index
    %146 = vector.load %arg2[%c1, %c0_95, %c0_96] : memref<3x152x32xbf16, #tpu.memory_space<vmem>>, vector<1x144x16xbf16>
    %147 = vector.shape_cast %146 : vector<1x144x16xbf16> to vector<144x16xbf16>
    %c1_97 = arith.constant 1 : index
    %c0_98 = arith.constant 0 : index
    %148 = vector.load %arg3[%c1_97, %c0_98] : memref<3x32xf32, #tpu.memory_space<vmem>>, vector<1x16xf32>
    %c0_99 = arith.constant 0 : index
    %c0_100 = arith.constant 0 : index
    %149 = vector.load %arg9[%c0_99, %c0_100] : memref<256x144xbf16, #tpu.memory_space<vmem>>, vector<256x144xbf16>
    %cst_101 = arith.constant dense<0.000000e+00> : vector<256x16xf32>
    %150 = tpu.matmul %149, %147, %cst_101 {dimension_numbers = #tpu.dot_dimension_numbers<[1], [0], [0], [1], [0, 0, 1, 1], [], []>} : vector<256x144xbf16>, vector<144x16xbf16>, vector<256x16xf32> -> vector<256x16xf32>
    %151 = vector.broadcast %148 : vector<1x16xf32> to vector<256x16xf32>
    %152 = arith.addf %150, %151 : vector<256x16xf32>
    %cst_102 = arith.constant 0.000000e+00 : f32
    %153 = vector.broadcast %cst_102 : f32 to vector<24x16xf32>
    %c0_103 = arith.constant 0 : index
    %c0_104 = arith.constant 0 : index
    %154 = vector.load %arg7[%c0_103, %c0_104] : memref<304x16xf32, #tpu.memory_space<vmem>>, vector<24x16xf32>
    tpu.vector_store %arg7[%c0_103, %c0_104], %153 {strides = array<i32>} : memref<304x16xf32, #tpu.memory_space<vmem>>, vector<24x16xf32>,
    %cst_105 = arith.constant 0.000000e+00 : f32
    %155 = vector.broadcast %cst_105 : f32 to vector<24x16xf32>
    %c280_106 = arith.constant 280 : index
    %c0_107 = arith.constant 0 : index
    %156 = vector.load %arg7[%c280_106, %c0_107] : memref<304x16xf32, #tpu.memory_space<vmem>>, vector<24x16xf32>
    tpu.vector_store %arg7[%c280_106, %c0_107], %155 {strides = array<i32>} : memref<304x16xf32, #tpu.memory_space<vmem>>, vector<24x16xf32>,
    %cst_108 = arith.constant 0.000000e+00 : f32
    %157 = vector.broadcast %cst_108 : f32 to vector<256x16xf32>
    %158 = arith.maximumf %152, %157 : vector<256x16xf32>
    %c24_109 = arith.constant 24 : index
    %c0_110 = arith.constant 0 : index
    %159 = vector.load %arg7[%c24_109, %c0_110] : memref<304x16xf32, #tpu.memory_space<vmem>>, vector<256x16xf32>
    tpu.vector_store %arg7[%c24_109, %c0_110], %158 {strides = array<i32>} : memref<304x16xf32, #tpu.memory_space<vmem>>, vector<256x16xf32>,
    %c7_111 = arith.constant 7 : index
    %c0_112 = arith.constant 0 : index
    %160 = vector.load %arg7[%c7_111, %c0_112] : memref<304x16xf32, #tpu.memory_space<vmem>>, vector<256x16xf32>
    %cst_113 = arith.constant 0.000000e+00 : f32
    %161 = vector.shape_cast %20 : vector<256x1xi1> to vector<256x1xi1>
    %162 = vector.broadcast %161 : vector<256x1xi1> to vector<256x16xi1>
    %163 = vector.broadcast %cst_113 : f32 to vector<256x16xf32>
    %164 = arith.select %162, %160, %163 : vector<256x16xi1>, vector<256x16xf32>
    %165 = arith.truncf %164 : vector<256x16xf32> to vector<256x16xbf16>
    %c0_114 = arith.constant 0 : index
    %c0_115 = arith.constant 0 : index
    %166 = vector.load %arg10[%c0_114, %c0_115] : memref<256x152xbf16, #tpu.memory_space<vmem>>, vector<256x16xbf16>
    tpu.vector_store %arg10[%c0_114, %c0_115], %165 {strides = array<i32>} : memref<256x152xbf16, #tpu.memory_space<vmem>>, vector<256x16xbf16>,
    %c8_116 = arith.constant 8 : index
    %c0_117 = arith.constant 0 : index
    %167 = vector.load %arg7[%c8_116, %c0_117] : memref<304x16xf32, #tpu.memory_space<vmem>>, vector<256x16xf32>
    %168 = arith.truncf %167 : vector<256x16xf32> to vector<256x16xbf16>
    %c0_118 = arith.constant 0 : index
    %c16_119 = arith.constant 16 : index
    %169 = vector.load %arg10[%c0_118, %c16_119] : memref<256x152xbf16, #tpu.memory_space<vmem>>, vector<256x16xbf16>
    tpu.vector_store %arg10[%c0_118, %c16_119], %168 {strides = array<i32>} : memref<256x152xbf16, #tpu.memory_space<vmem>>, vector<256x16xbf16>,
    %c9_120 = arith.constant 9 : index
    %c0_121 = arith.constant 0 : index
    %170 = vector.load %arg7[%c9_120, %c0_121] : memref<304x16xf32, #tpu.memory_space<vmem>>, vector<256x16xf32>
    %cst_122 = arith.constant 0.000000e+00 : f32
    %171 = vector.shape_cast %22 : vector<256x1xi1> to vector<256x1xi1>
    %172 = vector.broadcast %171 : vector<256x1xi1> to vector<256x16xi1>
    %173 = vector.broadcast %cst_122 : f32 to vector<256x16xf32>
    %174 = arith.select %172, %170, %173 : vector<256x16xi1>, vector<256x16xf32>
    %175 = arith.truncf %174 : vector<256x16xf32> to vector<256x16xbf16>
    %c0_123 = arith.constant 0 : index
    %c32_124 = arith.constant 32 : index
    %176 = vector.load %arg10[%c0_123, %c32_124] : memref<256x152xbf16, #tpu.memory_space<vmem>>, vector<256x16xbf16>
    tpu.vector_store %arg10[%c0_123, %c32_124], %175 {strides = array<i32>} : memref<256x152xbf16, #tpu.memory_space<vmem>>, vector<256x16xbf16>,
    %c23_125 = arith.constant 23 : index
    %c0_126 = arith.constant 0 : index
    %177 = vector.load %arg7[%c23_125, %c0_126] : memref<304x16xf32, #tpu.memory_space<vmem>>, vector<256x16xf32>
    %cst_127 = arith.constant 0.000000e+00 : f32
    %178 = vector.shape_cast %20 : vector<256x1xi1> to vector<256x1xi1>
    %179 = vector.broadcast %178 : vector<256x1xi1> to vector<256x16xi1>
    %180 = vector.broadcast %cst_127 : f32 to vector<256x16xf32>
    %181 = arith.select %179, %177, %180 : vector<256x16xi1>, vector<256x16xf32>
    %182 = arith.truncf %181 : vector<256x16xf32> to vector<256x16xbf16>
    %c0_128 = arith.constant 0 : index
    %c48_129 = arith.constant 48 : index
    %183 = vector.load %arg10[%c0_128, %c48_129] : memref<256x152xbf16, #tpu.memory_space<vmem>>, vector<256x16xbf16>
    tpu.vector_store %arg10[%c0_128, %c48_129], %182 {strides = array<i32>} : memref<256x152xbf16, #tpu.memory_space<vmem>>, vector<256x16xbf16>,
    %c24_130 = arith.constant 24 : index
    %c0_131 = arith.constant 0 : index
    %184 = vector.load %arg7[%c24_130, %c0_131] : memref<304x16xf32, #tpu.memory_space<vmem>>, vector<256x16xf32>
    %185 = arith.truncf %184 : vector<256x16xf32> to vector<256x16xbf16>
    %c0_132 = arith.constant 0 : index
    %c64_133 = arith.constant 64 : index
    %186 = vector.load %arg10[%c0_132, %c64_133] : memref<256x152xbf16, #tpu.memory_space<vmem>>, vector<256x16xbf16>
    tpu.vector_store %arg10[%c0_132, %c64_133], %185 {strides = array<i32>} : memref<256x152xbf16, #tpu.memory_space<vmem>>, vector<256x16xbf16>,
    %c25_134 = arith.constant 25 : index
    %c0_135 = arith.constant 0 : index
    %187 = vector.load %arg7[%c25_134, %c0_135] : memref<304x16xf32, #tpu.memory_space<vmem>>, vector<256x16xf32>
    %cst_136 = arith.constant 0.000000e+00 : f32
    %188 = vector.shape_cast %22 : vector<256x1xi1> to vector<256x1xi1>
    %189 = vector.broadcast %188 : vector<256x1xi1> to vector<256x16xi1>
    %190 = vector.broadcast %cst_136 : f32 to vector<256x16xf32>
    %191 = arith.select %189, %187, %190 : vector<256x16xi1>, vector<256x16xf32>
    %192 = arith.truncf %191 : vector<256x16xf32> to vector<256x16xbf16>
    %c0_137 = arith.constant 0 : index
    %c80_138 = arith.constant 80 : index
    %193 = vector.load %arg10[%c0_137, %c80_138] : memref<256x152xbf16, #tpu.memory_space<vmem>>, vector<256x16xbf16>
    tpu.vector_store %arg10[%c0_137, %c80_138], %192 {strides = array<i32>} : memref<256x152xbf16, #tpu.memory_space<vmem>>, vector<256x16xbf16>,
    %c39_139 = arith.constant 39 : index
    %c0_140 = arith.constant 0 : index
    %194 = vector.load %arg7[%c39_139, %c0_140] : memref<304x16xf32, #tpu.memory_space<vmem>>, vector<256x16xf32>
    %cst_141 = arith.constant 0.000000e+00 : f32
    %195 = vector.shape_cast %20 : vector<256x1xi1> to vector<256x1xi1>
    %196 = vector.broadcast %195 : vector<256x1xi1> to vector<256x16xi1>
    %197 = vector.broadcast %cst_141 : f32 to vector<256x16xf32>
    %198 = arith.select %196, %194, %197 : vector<256x16xi1>, vector<256x16xf32>
    %199 = arith.truncf %198 : vector<256x16xf32> to vector<256x16xbf16>
    %c0_142 = arith.constant 0 : index
    %c96_143 = arith.constant 96 : index
    %200 = vector.load %arg10[%c0_142, %c96_143] : memref<256x152xbf16, #tpu.memory_space<vmem>>, vector<256x16xbf16>
    tpu.vector_store %arg10[%c0_142, %c96_143], %199 {strides = array<i32>} : memref<256x152xbf16, #tpu.memory_space<vmem>>, vector<256x16xbf16>,
    %c40_144 = arith.constant 40 : index
    %c0_145 = arith.constant 0 : index
    %201 = vector.load %arg7[%c40_144, %c0_145] : memref<304x16xf32, #tpu.memory_space<vmem>>, vector<256x16xf32>
    %202 = arith.truncf %201 : vector<256x16xf32> to vector<256x16xbf16>
    %c0_146 = arith.constant 0 : index
    %c112_147 = arith.constant 112 : index
    %203 = vector.load %arg10[%c0_146, %c112_147] : memref<256x152xbf16, #tpu.memory_space<vmem>>, vector<256x16xbf16>
    tpu.vector_store %arg10[%c0_146, %c112_147], %202 {strides = array<i32>} : memref<256x152xbf16, #tpu.memory_space<vmem>>, vector<256x16xbf16>,
    %c41_148 = arith.constant 41 : index
    %c0_149 = arith.constant 0 : index
    %204 = vector.load %arg7[%c41_148, %c0_149] : memref<304x16xf32, #tpu.memory_space<vmem>>, vector<256x16xf32>
    %cst_150 = arith.constant 0.000000e+00 : f32
    %205 = vector.shape_cast %22 : vector<256x1xi1> to vector<256x1xi1>
    %206 = vector.broadcast %205 : vector<256x1xi1> to vector<256x16xi1>
    %207 = vector.broadcast %cst_150 : f32 to vector<256x16xf32>
    %208 = arith.select %206, %204, %207 : vector<256x16xi1>, vector<256x16xf32>
    %209 = arith.truncf %208 : vector<256x16xf32> to vector<256x16xbf16>
    %c0_151 = arith.constant 0 : index
    %c128_152 = arith.constant 128 : index
    %210 = vector.load %arg10[%c0_151, %c128_152] : memref<256x152xbf16, #tpu.memory_space<vmem>>, vector<256x16xbf16>
    tpu.vector_store %arg10[%c0_151, %c128_152], %209 {strides = array<i32>} : memref<256x152xbf16, #tpu.memory_space<vmem>>, vector<256x16xbf16>,
    %c0_153 = arith.constant 0 : index
    %c144 = arith.constant 144 : index
    %211 = vector.load %arg10[%c0_153, %c144] : memref<256x152xbf16, #tpu.memory_space<vmem>>, vector<256x8xbf16>
    tpu.vector_store %arg10[%c0_153, %c144], %0 {strides = array<i32>} : memref<256x152xbf16, #tpu.memory_space<vmem>>, vector<256x8xbf16>,
    %c2 = arith.constant 2 : index
    %c0_154 = arith.constant 0 : index
    %c0_155 = arith.constant 0 : index
    %212 = vector.load %arg2[%c2, %c0_154, %c0_155] : memref<3x152x32xbf16, #tpu.memory_space<vmem>>, vector<1x152x32xbf16>
    %213 = vector.shape_cast %212 : vector<1x152x32xbf16> to vector<152x32xbf16>
    %c2_156 = arith.constant 2 : index
    %c0_157 = arith.constant 0 : index
    %214 = vector.load %arg3[%c2_156, %c0_157] : memref<3x32xf32, #tpu.memory_space<vmem>>, vector<1x32xf32>
    %c0_158 = arith.constant 0 : index
    %c0_159 = arith.constant 0 : index
    %215 = vector.load %arg10[%c0_158, %c0_159] : memref<256x152xbf16, #tpu.memory_space<vmem>>, vector<256x152xbf16>
    %cst_160 = arith.constant dense<0.000000e+00> : vector<256x32xf32>
    %216 = tpu.matmul %215, %213, %cst_160 {dimension_numbers = #tpu.dot_dimension_numbers<[1], [0], [0], [1], [0, 0, 1, 1], [], []>} : vector<256x152xbf16>, vector<152x32xbf16>, vector<256x32xf32> -> vector<256x32xf32>
    %217 = vector.broadcast %214 : vector<1x32xf32> to vector<256x32xf32>
    %218 = arith.addf %216, %217 : vector<256x32xf32>
    %c0_161 = arith.constant 0 : index
    %c0_162 = arith.constant 0 : index
    %219 = vector.load %arg4[%c0_161, %c0_162] : memref<256x32xf32, #tpu.memory_space<vmem>>, vector<256x32xf32>
    tpu.vector_store %arg4[%c0_161, %c0_162], %218 {strides = array<i32>} : memref<256x32xf32, #tpu.memory_space<vmem>>, vector<256x32xf32>,
    return
  }
  func.func @transform_0(%arg0: i32) -> (i32, i32) {
    %c0_i32 = arith.constant 0 : i32
    %c0_i32_0 = arith.constant 0 : i32
    return %arg0, %c0_i32 : i32, i32
  }
  func.func @transform_1(%arg0: i32) -> (i32, i32, i32) {
    %c0_i32 = arith.constant 0 : i32
    %c0_i32_0 = arith.constant 0 : i32
    %c0_i32_1 = arith.constant 0 : i32
    %c0_i32_2 = arith.constant 0 : i32
    return %c0_i32, %c0_i32_0, %c0_i32_1 : i32, i32, i32
  }
  func.func @transform_2(%arg0: i32) -> (i32, i32) {
    %c0_i32 = arith.constant 0 : i32
    %c0_i32_0 = arith.constant 0 : i32
    %c0_i32_1 = arith.constant 0 : i32
    return %c0_i32, %c0_i32_0 : i32, i32
  }
  func.func @transform_3(%arg0: i32) -> (i32, i32) {
    %c0_i32 = arith.constant 0 : i32
    %c0_i32_0 = arith.constant 0 : i32
    return %arg0, %c0_i32 : i32, i32
  }
}

</mosaic_0001>

<llo_original>
// kernel: tpu_custom_call.1
$region0: #{tpu_custom_call.1}
  #allocation0 [shape = 'u32[]', space=smem, size = 0x4, offset = 0x4, fixed_abs, tag = 'smem constant byte address 0x4 - core index']
  #allocation1 [shape = 'u32[144,128]{1,0:T(1,128)}', space=vmem, size = 0x12000, scoped, tag = 'internal scratch']
  #allocation2 [shape = 'f32[304,8]{1,0:T(8,128)}', space=vmem, size = 0x26000, scoped, tag = 'scratch operand']
  #allocation3 [shape = 'f32[304,16]{1,0:T(8,128)}', space=vmem, size = 0x26000, scoped, tag = 'scratch operand']
  #allocation4 [shape = 'f32[304,16]{1,0:T(8,128)}', space=vmem, size = 0x26000, scoped, tag = 'scratch operand']
  #allocation5 [shape = 'bf16[256,72]{1,0:T(8,128)(2,1)}', space=vmem, size = 0x10000, scoped, tag = 'scratch operand']
  #allocation6 [shape = 'bf16[256,144]{1,0:T(8,128)(2,1)}', space=vmem, size = 0x20000, scoped, tag = 'scratch operand']
  #allocation7 [shape = 'bf16[256,152]{1,0:T(8,128)(2,1)}', space=vmem, size = 0x20000, scoped, tag = 'scratch operand']
  %s0 = inlined_call_operand.vmem [shape: bf16[512,8], index: 0, kind: input, shape index: {}]
  %s1 = inlined_call_operand.vmem [shape: bf16[3,152,32], index: 1, kind: input, shape index: {}]
  %s2 = inlined_call_operand.vmem [shape: f32[3,32], index: 2, kind: input, shape index: {}]
  %s3 = inlined_call_operand.vmem [shape: f32[512,32], index: 3, kind: output, shape index: {}]
  %s4 = sld [smem:[#allocation0]]
  $region45: #{tpu_custom_call.1} parent=0
    _
  %s6 = ssub.s32 1, %s4
  %s7 = scalar_select 0, %s6, %s4
  loop: start=0, step=1, limit=4
  $region2: #{tpu_custom_call.1} parent=0 // loop_pre_header
    _
  $region3: #{tpu_custom_call.1} parent=0 // loop_header
    %s9 = sphi 0, %s13
    %p10 = scmp.ge.s32.totalorder %s9, 4
    %s19 = sphi 0, %s21
    %s22 = sphi 0, %s19
    %s23 = sphi 0, %s22
    %s39 = sphi 0, %s23
    %s43 = sphi 0, %s43
    %s45 = sphi 0, %s43
    %s46 = sphi 0, %s45
    %s60 = sphi 0, %s46
    %s64 = sphi 0, %s64
    %s66 = sphi 0, %s64
    %s67 = sphi 0, %s66
    %s81 = sphi 0, %s67
    %s87 = sphi 0, %s89
    %s90 = sphi 0, %s87
    %s91 = sphi 0, %s90
    %s107 = sphi 0, %s91
  $region4: #{tpu_custom_call.1} parent=0 // loop_header_branch
    %12 = sbr.rel (%p10) target = $region8
  $region5: #{tpu_custom_call.1} parent=0 // loop_body
    %s14 = ssub.s32 %s9, 1
    %s15 = ssub.s32 %s9, 2
    %s16 = sadd.s32 %s9, 1
    %s17 = ssub.s32 %s9, %s16
    %p18 = scmp.eq.s32.totalorder %s17, 0
    %s20 = sadd.s32 %s19, 1
    %s21 = scalar_select %p18, %s19, %s20
    %p24 = pneg %p18
    %p25 = scmp.eq.s32.totalorder %s9, 1
    %p26 = por %p24, %p25
    %p27 = scmp.ne.s32.totalorder %s19, %s22
    %p28 = scmp.eq.s32.totalorder %s9, 0
    %p29 = por %p27, %p28
    %p30 = scmp.ne.s32.totalorder %s19, %s22
    %p31 = scmp.eq.s32.totalorder %s14, 1
    %p32 = por %p30, %p31
    %p33 = scmp.ne.s32.totalorder %s22, %s23
    %p34 = scmp.eq.s32.totalorder %s14, 0
    %p35 = por %p33, %p34
    %p36 = scmp.ne.s32.totalorder %s22, %s23
    %p37 = scmp.eq.s32.totalorder %s15, 1
    %p38 = por %p36, %p37
    %p40 = scmp.ne.s32.totalorder %s23, %s39
    %p41 = scmp.eq.s32.totalorder %s15, 0
    %p42 = por %p40, %p41
    %s44 = sadd.s32 %s43, 1
    %p47 = scmp.eq.s32.totalorder %s9, 1
    %p48 = scmp.ne.s32.totalorder %s43, %s45
    %p49 = scmp.eq.s32.totalorder %s9, 0
    %p50 = por %p48, %p49
    %p51 = scmp.ne.s32.totalorder %s43, %s45
    %p52 = scmp.eq.s32.totalorder %s14, 1
    %p53 = por %p51, %p52
    %p54 = scmp.ne.s32.totalorder %s45, %s46
    %p55 = scmp.eq.s32.totalorder %s14, 0
    %p56 = por %p54, %p55
    %p57 = scmp.ne.s32.totalorder %s45, %s46
    %p58 = scmp.eq.s32.totalorder %s15, 1
    %p59 = por %p57, %p58
    %p61 = scmp.ne.s32.totalorder %s46, %s60
    %p62 = scmp.eq.s32.totalorder %s15, 0
    %p63 = por %p61, %p62
    %s65 = sadd.s32 %s64, 1
    %p68 = scmp.eq.s32.totalorder %s9, 1
    %p69 = scmp.ne.s32.totalorder %s64, %s66
    %p70 = scmp.eq.s32.totalorder %s9, 0
    %p71 = por %p69, %p70
    %p72 = scmp.ne.s32.totalorder %s64, %s66
    %p73 = scmp.eq.s32.totalorder %s14, 1
    %p74 = por %p72, %p73
    %p75 = scmp.ne.s32.totalorder %s66, %s67
    %p76 = scmp.eq.s32.totalorder %s14, 0
    %p77 = por %p75, %p76
    %p78 = scmp.ne.s32.totalorder %s66, %s67
    %p79 = scmp.eq.s32.totalorder %s15, 1
    %p80 = por %p78, %p79
    %p82 = scmp.ne.s32.totalorder %s67, %s81
    %p83 = scmp.eq.s32.totalorder %s15, 0
    %p84 = por %p82, %p83
    %s85 = ssub.s32 %s9, %s16
    %p86 = scmp.eq.s32.totalorder %s85, 0
    %s88 = sadd.s32 %s87, 1
    %s89 = scalar_select %p86, %s87, %s88
    %p92 = pneg %p86
    %p93 = scmp.eq.s32.totalorder %s9, 1
    %p94 = por %p92, %p93
    %p95 = scmp.ne.s32.totalorder %s87, %s90
    %p96 = scmp.eq.s32.totalorder %s9, 0
    %p97 = por %p95, %p96
    %p98 = scmp.ne.s32.totalorder %s87, %s90
    %p99 = scmp.eq.s32.totalorder %s14, 1
    %p100 = por %p98, %p99
    %p101 = scmp.ne.s32.totalorder %s90, %s91
    %p102 = scmp.eq.s32.totalorder %s14, 0
    %p103 = por %p101, %p102
    %p104 = scmp.ne.s32.totalorder %s90, %s91
    %p105 = scmp.eq.s32.totalorder %s15, 1
    %p106 = por %p104, %p105
    %p108 = scmp.ne.s32.totalorder %s91, %s107
    %p109 = scmp.eq.s32.totalorder %s15, 0
    %p110 = por %p108, %p109
    %p111 = scmp.le.s32.totalorder 1, %s9
    %p112 = scmp.lt.s32.totalorder %s9, 3
    %p113 = pnand %p111, %p112
    %p114 = pneg %p113
    // Predicated region
    $region9: #{tpu_custom_call.1} parent=5 // pred_check
      _
    $region10: #{tpu_custom_call.1} parent=5 // pred_check_branch
      %116 = sbr.rel (%p113) target = $region12
    $region11: #{tpu_custom_call.1} parent=5 // pred_region
      %s117 = ssub.s32 %s9, 1
      // Predicated region
      $region13: #{tpu_custom_call.1} parent=11 // pred_check
        %p118 = pneg %p56
      $region14: #{tpu_custom_call.1} parent=11 // pred_check_branch
        %120 = sbr.rel (%p118) target = $region16
      $region15: #{tpu_custom_call.1} parent=11 // pred_region
        _
      $region16: #{tpu_custom_call.1} parent=11 // pred_fallthru
        _
      // Predicated region
      $region17: #{tpu_custom_call.1} parent=11 // pred_check
        %p121 = pneg %p77
      $region18: #{tpu_custom_call.1} parent=11 // pred_check_branch
        %123 = sbr.rel (%p121) target = $region20
      $region19: #{tpu_custom_call.1} parent=11 // pred_region
        _
      $region20: #{tpu_custom_call.1} parent=11 // pred_fallthru
        _
    $region12: #{tpu_custom_call.1} parent=5 // pred_fallthru
      _
    %p124 = scmp.lt.s32.totalorder %s9, 2
    // Predicated region
    $region21: #{tpu_custom_call.1} parent=5 // pred_check
      %p125 = pneg %p124
    $region22: #{tpu_custom_call.1} parent=5 // pred_check_branch
      %127 = sbr.rel (%p125) target = $region24
    $region23: #{tpu_custom_call.1} parent=5 // pred_region
      // Predicated region
      $region25: #{tpu_custom_call.1} parent=23 // pred_check
        %p128 = pneg %p29
      $region26: #{tpu_custom_call.1} parent=23 // pred_check_branch
        %130 = sbr.rel (%p128) target = $region28
      $region27: #{tpu_custom_call.1} parent=23 // pred_region
        %s131 = smul.u32 32, %s9
        %p132 = scmp.lt.s32.totalorder %s131, 63
        %s133 = scalar_select %p132, %s131, 63
        %s134 = smul.addr %s133, 4
        %s135 = scalar_lea.vmem %s0, %s134
        %s136 = smul.u32 32, %s9
      $region28: #{tpu_custom_call.1} parent=23 // pred_fallthru
        _
    $region24: #{tpu_custom_call.1} parent=5 // pred_fallthru
      _
    %p137 = scmp.le.s32.totalorder 1, %s9
    %p138 = scmp.lt.s32.totalorder %s9, 3
    %p139 = pnand %p137, %p138
    %p140 = pneg %p139
    // Predicated region
    $region29: #{tpu_custom_call.1} parent=5 // pred_check
      _
    $region30: #{tpu_custom_call.1} parent=5 // pred_check_branch
      %142 = sbr.rel (%p139) target = $region32
    $region31: #{tpu_custom_call.1} parent=5 // pred_region
      %s143 = ssub.s32 %s9, 1
      %s144 = smul.u32 32, %s14
      %p145 = scmp.lt.s32.totalorder %s144, 63
      %s146 = scalar_select %p145, %s144, 63
      %s147 = smul.addr %s146, 4
      %s148 = scalar_lea.vmem %s0, %s147
      %p149 = pneg %p35
      %p150 = pneg %p32
      %p151 = pneg %p56
      %p152 = pneg %p53
      %p153 = pneg %p77
      %p154 = pneg %p74
      %p155 = pneg %p103
      %p156 = pneg %p100
      %s157 = smul.u32 32, %s14
      %p158 = scmp.lt.s32.totalorder %s157, 63
      %s159 = scalar_select %p158, %s157, 63
      %s160 = smul.addr %s159, 8
      %s161 = scalar_lea.vmem %s3, %s160
      %s162 = smul.u32 32, %s14
      %p163 = scmp.lt.s32.totalorder %s162, 63
      %s164 = scalar_select %p163, %s162, 63
      %s165 = smul.addr %s164, 4
      %s166 = scalar_lea.vmem %s0, %s165
      %s167 = smul.u32 32, %s14
      %s168 = smul.u32 32, %s14
      %p169 = scmp.lt.s32.totalorder %s168, 63
      %s170 = scalar_select %p169, %s168, 63
      %s171 = smul.addr %s170, 8
      %s172 = scalar_lea.vmem %s3, %s171
      %s173 = smul.u32 32, %s14
      %v175 = vld [vmem:[%s166] sm:$0xf]
      %v176 = vld [vmem:[%s166 + $0x4] sm:$0xf]
      %v177 = vld [vmem:[%s166 + $0x8] sm:$0xf]
      %v178 = vld [vmem:[%s166 + $0xc] sm:$0xf]
      %v179 = vld [vmem:[%s166 + $0x10] sm:$0xf]
      %v180 = vld [vmem:[%s166 + $0x14] sm:$0xf]
      %v181 = vld [vmem:[%s166 + $0x18] sm:$0xf]
      %v182 = vld [vmem:[%s166 + $0x1c] sm:$0xf]
      %v183 = vld [vmem:[%s166 + $0x20] sm:$0xf]
      %v184 = vld [vmem:[%s166 + $0x24] sm:$0xf]
      %v185 = vld [vmem:[%s166 + $0x28] sm:$0xf]
      %v186 = vld [vmem:[%s166 + $0x2c] sm:$0xf]
      %v187 = vld [vmem:[%s166 + $0x30] sm:$0xf]
      %v188 = vld [vmem:[%s166 + $0x34] sm:$0xf]
      %v189 = vld [vmem:[%s166 + $0x38] sm:$0xf]
      %v190 = vld [vmem:[%s166 + $0x3c] sm:$0xf]
      %v191 = vld [vmem:[%s166 + $0x40] sm:$0xf]
      %v192 = vld [vmem:[%s166 + $0x44] sm:$0xf]
      %v193 = vld [vmem:[%s166 + $0x48] sm:$0xf]
      %v194 = vld [vmem:[%s166 + $0x4c] sm:$0xf]
      %v195 = vld [vmem:[%s166 + $0x50] sm:$0xf]
      %v196 = vld [vmem:[%s166 + $0x54] sm:$0xf]
      %v197 = vld [vmem:[%s166 + $0x58] sm:$0xf]
      %v198 = vld [vmem:[%s166 + $0x5c] sm:$0xf]
      %v199 = vld [vmem:[%s166 + $0x60] sm:$0xf]
      %v200 = vld [vmem:[%s166 + $0x64] sm:$0xf]
      %v201 = vld [vmem:[%s166 + $0x68] sm:$0xf]
      %v202 = vld [vmem:[%s166 + $0x6c] sm:$0xf]
      %v203 = vld [vmem:[%s166 + $0x70] sm:$0xf]
      %v204 = vld [vmem:[%s166 + $0x74] sm:$0xf]
      %v205 = vld [vmem:[%s166 + $0x78] sm:$0xf]
      %v206 = vld [vmem:[%s166 + $0x7c] sm:$0xf]
      %v207 = vunpack.c.l.bf16 %v175
      %v208 = vunpack.c.l.bf16 %v176
      %v209 = vunpack.c.l.bf16 %v177
      %v210 = vunpack.c.l.bf16 %v178
      %v211 = vunpack.c.l.bf16 %v179
      %v212 = vunpack.c.l.bf16 %v180
      %v213 = vunpack.c.l.bf16 %v181
      %v214 = vunpack.c.l.bf16 %v182
      %v215 = vunpack.c.l.bf16 %v183
      %v216 = vunpack.c.l.bf16 %v184
      %v217 = vunpack.c.l.bf16 %v185
      %v218 = vunpack.c.l.bf16 %v186
      %v219 = vunpack.c.l.bf16 %v187
      %v220 = vunpack.c.l.bf16 %v188
      %v221 = vunpack.c.l.bf16 %v189
      %v222 = vunpack.c.l.bf16 %v190
      %v223 = vunpack.c.l.bf16 %v191
      %v224 = vunpack.c.l.bf16 %v192
      %v225 = vunpack.c.l.bf16 %v193
      %v226 = vunpack.c.l.bf16 %v194
      %v227 = vunpack.c.l.bf16 %v195
      %v228 = vunpack.c.l.bf16 %v196
      %v229 = vunpack.c.l.bf16 %v197
      %v230 = vunpack.c.l.bf16 %v198
      %v231 = vunpack.c.l.bf16 %v199
      %v232 = vunpack.c.l.bf16 %v200
      %v233 = vunpack.c.l.bf16 %v201
      %v234 = vunpack.c.l.bf16 %v202
      %v235 = vunpack.c.l.bf16 %v203
      %v236 = vunpack.c.l.bf16 %v204
      %v237 = vunpack.c.l.bf16 %v205
      %v238 = vunpack.c.l.bf16 %v206
      %v239 = vlaneseq
      %v240 = vshrl.u32 %v239, 7
      %v241 = vadd.s32 %v240, 8
      %v242 = vadd.s32 %v240, 16
      %v243 = vadd.s32 %v240, 24
      %v244 = vadd.s32 %v240, 32
      %v245 = vadd.s32 %v240, 40
      %v246 = vadd.s32 %v240, 48
      %v247 = vadd.s32 %v240, 56
      %v248 = vadd.s32 %v240, 64
      %v249 = vadd.s32 %v240, 72
      %v250 = vadd.s32 %v240, 80
      %v251 = vadd.s32 %v240, 88
      %v252 = vadd.s32 %v240, 96
      %v253 = vadd.s32 %v240, 104
      %v254 = vadd.s32 %v240, 112
      %v255 = vadd.s32 %v240, 120
      %v256 = vadd.s32 %v240, 128
      %v257 = vadd.s32 %v240, 136
      %v258 = vadd.s32 %v240, 144
      %v259 = vadd.s32 %v240, 152
      %v260 = vadd.s32 %v240, 160
      %v261 = vadd.s32 %v240, 168
      %v262 = vadd.s32 %v240, 176
      %v263 = vadd.s32 %v240, 184
      %v264 = vadd.s32 %v240, 192
      %v265 = vadd.s32 %v240, 200
      %v266 = vadd.s32 %v240, 208
      %v267 = vadd.s32 %v240, 216
      %v268 = vadd.s32 %v240, 224
      %v269 = vadd.s32 %v240, 232
      %v270 = vadd.s32 %v240, 240
      %v271 = vadd.s32 %v240, 248
      %vm272 = vcmp.lt.s32.totalorder %v240, 0
      %v273 = vsub.s32 0, %v240
      %v274 = vsel %vm272, %v273, %v240
      %v275 = vshrl.u32 %v274, 4
      %v276 = vand.u32 %v274, 15
      %v277 = vsub.s32 0, %v276
      %v278 = vsel %vm272, %v277, %v276
      %vm279 = vcmp.lt.s32.totalorder %v241, 0
      %v280 = vsub.s32 0, %v241
      %v281 = vsel %vm279, %v280, %v241
      %v282 = vshrl.u32 %v281, 4
      %v283 = vand.u32 %v281, 15
      %v284 = vsub.s32 0, %v283
      %v285 = vsel %vm279, %v284, %v283
      %vm286 = vcmp.lt.s32.totalorder %v242, 0
      %v287 = vsub.s32 0, %v242
      %v288 = vsel %vm286, %v287, %v242
      %v289 = vshrl.u32 %v288, 4
      %v290 = vand.u32 %v288, 15
      %v291 = vsub.s32 0, %v290
      %v292 = vsel %vm286, %v291, %v290
      %vm293 = vcmp.lt.s32.totalorder %v243, 0
      %v294 = vsub.s32 0, %v243
      %v295 = vsel %vm293, %v294, %v243
      %v296 = vshrl.u32 %v295, 4
      %v297 = vand.u32 %v295, 15
      %v298 = vsub.s32 0, %v297
      %v299 = vsel %vm293, %v298, %v297
      %vm300 = vcmp.lt.s32.totalorder %v244, 0
      %v301 = vsub.s32 0, %v244
      %v302 = vsel %vm300, %v301, %v244
      %v303 = vshrl.u32 %v302, 4
      %v304 = vand.u32 %v302, 15
      %v305 = vsub.s32 0, %v304
      %v306 = vsel %vm300, %v305, %v304
      %vm307 = vcmp.lt.s32.totalorder %v245, 0
      %v308 = vsub.s32 0, %v245
      %v309 = vsel %vm307, %v308, %v245
      %v310 = vshrl.u32 %v309, 4
      %v311 = vand.u32 %v309, 15
      %v312 = vsub.s32 0, %v311
      %v313 = vsel %vm307, %v312, %v311
      %vm314 = vcmp.lt.s32.totalorder %v246, 0
      %v315 = vsub.s32 0, %v246
      %v316 = vsel %vm314, %v315, %v246
      %v317 = vshrl.u32 %v316, 4
      %v318 = vand.u32 %v316, 15
      %v319 = vsub.s32 0, %v318
      %v320 = vsel %vm314, %v319, %v318
      %vm321 = vcmp.lt.s32.totalorder %v247, 0
      %v322 = vsub.s32 0, %v247
      %v323 = vsel %vm321, %v322, %v247
      %v324 = vshrl.u32 %v323, 4
      %v325 = vand.u32 %v323, 15
      %v326 = vsub.s32 0, %v325
      %v327 = vsel %vm321, %v326, %v325
      %vm328 = vcmp.lt.s32.totalorder %v248, 0
      %v329 = vsub.s32 0, %v248
      %v330 = vsel %vm328, %v329, %v248
      %v331 = vshrl.u32 %v330, 4
      %v332 = vand.u32 %v330, 15
      %v333 = vsub.s32 0, %v332
      %v334 = vsel %vm328, %v333, %v332
      %vm335 = vcmp.lt.s32.totalorder %v249, 0
      %v336 = vsub.s32 0, %v249
      %v337 = vsel %vm335, %v336, %v249
      %v338 = vshrl.u32 %v337, 4
      %v339 = vand.u32 %v337, 15
      %v340 = vsub.s32 0, %v339
      %v341 = vsel %vm335, %v340, %v339
      %vm342 = vcmp.lt.s32.totalorder %v250, 0
      %v343 = vsub.s32 0, %v250
      %v344 = vsel %vm342, %v343, %v250
      %v345 = vshrl.u32 %v344, 4
      %v346 = vand.u32 %v344, 15
      %v347 = vsub.s32 0, %v346
      %v348 = vsel %vm342, %v347, %v346
      %vm349 = vcmp.lt.s32.totalorder %v251, 0
      %v350 = vsub.s32 0, %v251
      %v351 = vsel %vm349, %v350, %v251
      %v352 = vshrl.u32 %v351, 4
      %v353 = vand.u32 %v351, 15
      %v354 = vsub.s32 0, %v353
      %v355 = vsel %vm349, %v354, %v353
      %vm356 = vcmp.lt.s32.totalorder %v252, 0
      %v357 = vsub.s32 0, %v252
      %v358 = vsel %vm356, %v357, %v252
      %v359 = vshrl.u32 %v358, 4
      %v360 = vand.u32 %v358, 15
      %v361 = vsub.s32 0, %v360
      %v362 = vsel %vm356, %v361, %v360
      %vm363 = vcmp.lt.s32.totalorder %v253, 0
      %v364 = vsub.s32 0, %v253
      %v365 = vsel %vm363, %v364, %v253
      %v366 = vshrl.u32 %v365, 4
      %v367 = vand.u32 %v365, 15
      %v368 = vsub.s32 0, %v367
      %v369 = vsel %vm363, %v368, %v367
      %vm370 = vcmp.lt.s32.totalorder %v254, 0
      %v371 = vsub.s32 0, %v254
      %v372 = vsel %vm370, %v371, %v254
      %v373 = vshrl.u32 %v372, 4
      %v374 = vand.u32 %v372, 15
      %v375 = vsub.s32 0, %v374
      %v376 = vsel %vm370, %v375, %v374
      %vm377 = vcmp.lt.s32.totalorder %v255, 0
      %v378 = vsub.s32 0, %v255
      %v379 = vsel %vm377, %v378, %v255
      %v380 = vshrl.u32 %v379, 4
      %v381 = vand.u32 %v379, 15
      %v382 = vsub.s32 0, %v381
      %v383 = vsel %vm377, %v382, %v381
      %vm384 = vcmp.lt.s32.totalorder %v256, 0
      %v385 = vsub.s32 0, %v256
      %v386 = vsel %vm384, %v385, %v256
      %v387 = vshrl.u32 %v386, 4
      %v388 = vand.u32 %v386, 15
      %v389 = vsub.s32 0, %v388
      %v390 = vsel %vm384, %v389, %v388
      %vm391 = vcmp.lt.s32.totalorder %v257, 0
      %v392 = vsub.s32 0, %v257
      %v393 = vsel %vm391, %v392, %v257
      %v394 = vshrl.u32 %v393, 4
      %v395 = vand.u32 %v393, 15
      %v396 = vsub.s32 0, %v395
      %v397 = vsel %vm391, %v396, %v395
      %vm398 = vcmp.lt.s32.totalorder %v258, 0
      %v399 = vsub.s32 0, %v258
      %v400 = vsel %vm398, %v399, %v258
      %v401 = vshrl.u32 %v400, 4
      %v402 = vand.u32 %v400, 15
      %v403 = vsub.s32 0, %v402
      %v404 = vsel %vm398, %v403, %v402
      %vm405 = vcmp.lt.s32.totalorder %v259, 0
      %v406 = vsub.s32 0, %v259
      %v407 = vsel %vm405, %v406, %v259
      %v408 = vshrl.u32 %v407, 4
      %v409 = vand.u32 %v407, 15
      %v410 = vsub.s32 0, %v409
      %v411 = vsel %vm405, %v410, %v409
      %vm412 = vcmp.lt.s32.totalorder %v260, 0
      %v413 = vsub.s32 0, %v260
      %v414 = vsel %vm412, %v413, %v260
      %v415 = vshrl.u32 %v414, 4
      %v416 = vand.u32 %v414, 15
      %v417 = vsub.s32 0, %v416
      %v418 = vsel %vm412, %v417, %v416
      %vm419 = vcmp.lt.s32.totalorder %v261, 0
      %v420 = vsub.s32 0, %v261
      %v421 = vsel %vm419, %v420, %v261
      %v422 = vshrl.u32 %v421, 4
      %v423 = vand.u32 %v421, 15
      %v424 = vsub.s32 0, %v423
      %v425 = vsel %vm419, %v424, %v423
      %vm426 = vcmp.lt.s32.totalorder %v262, 0
      %v427 = vsub.s32 0, %v262
      %v428 = vsel %vm426, %v427, %v262
      %v429 = vshrl.u32 %v428, 4
      %v430 = vand.u32 %v428, 15
      %v431 = vsub.s32 0, %v430
      %v432 = vsel %vm426, %v431, %v430
      %vm433 = vcmp.lt.s32.totalorder %v263, 0
      %v434 = vsub.s32 0, %v263
      %v435 = vsel %vm433, %v434, %v263
      %v436 = vshrl.u32 %v435, 4
      %v437 = vand.u32 %v435, 15
      %v438 = vsub.s32 0, %v437
      %v439 = vsel %vm433, %v438, %v437
      %vm440 = vcmp.lt.s32.totalorder %v264, 0
      %v441 = vsub.s32 0, %v264
      %v442 = vsel %vm440, %v441, %v264
      %v443 = vshrl.u32 %v442, 4
      %v444 = vand.u32 %v442, 15
      %v445 = vsub.s32 0, %v444
      %v446 = vsel %vm440, %v445, %v444
      %vm447 = vcmp.lt.s32.totalorder %v265, 0
      %v448 = vsub.s32 0, %v265
      %v449 = vsel %vm447, %v448, %v265
      %v450 = vshrl.u32 %v449, 4
      %v451 = vand.u32 %v449, 15
      %v452 = vsub.s32 0, %v451
      %v453 = vsel %vm447, %v452, %v451
      %vm454 = vcmp.lt.s32.totalorder %v266, 0
      %v455 = vsub.s32 0, %v266
      %v456 = vsel %vm454, %v455, %v266
      %v457 = vshrl.u32 %v456, 4
      %v458 = vand.u32 %v456, 15
      %v459 = vsub.s32 0, %v458
      %v460 = vsel %vm454, %v459, %v458
      %vm461 = vcmp.lt.s32.totalorder %v267, 0
      %v462 = vsub.s32 0, %v267
      %v463 = vsel %vm461, %v462, %v267
      %v464 = vshrl.u32 %v463, 4
      %v465 = vand.u32 %v463, 15
      %v466 = vsub.s32 0, %v465
      %v467 = vsel %vm461, %v466, %v465
      %vm468 = vcmp.lt.s32.totalorder %v268, 0
      %v469 = vsub.s32 0, %v268
      %v470 = vsel %vm468, %v469, %v268
      %v471 = vshrl.u32 %v470, 4
      %v472 = vand.u32 %v470, 15
      %v473 = vsub.s32 0, %v472
      %v474 = vsel %vm468, %v473, %v472
      %vm475 = vcmp.lt.s32.totalorder %v269, 0
      %v476 = vsub.s32 0, %v269
      %v477 = vsel %vm475, %v476, %v269
      %v478 = vshrl.u32 %v477, 4
      %v479 = vand.u32 %v477, 15
      %v480 = vsub.s32 0, %v479
      %v481 = vsel %vm475, %v480, %v479
      %vm482 = vcmp.lt.s32.totalorder %v270, 0
      %v483 = vsub.s32 0, %v270
      %v484 = vsel %vm482, %v483, %v270
      %v485 = vshrl.u32 %v484, 4
      %v486 = vand.u32 %v484, 15
      %v487 = vsub.s32 0, %v486
      %v488 = vsel %vm482, %v487, %v486
      %vm489 = vcmp.lt.s32.totalorder %v271, 0
      %v490 = vsub.s32 0, %v271
      %v491 = vsel %vm489, %v490, %v271
      %v492 = vshrl.u32 %v491, 4
      %v493 = vand.u32 %v491, 15
      %v494 = vsub.s32 0, %v493
      %v495 = vsel %vm489, %v494, %v493
      %vm496 = vcmp.ne.s32.totalorder %v278, 0
      %vm497 = vcmp.ne.s32.totalorder %v285, 0
      %vm498 = vcmp.ne.s32.totalorder %v292, 0
      %vm499 = vcmp.ne.s32.totalorder %v299, 0
      %vm500 = vcmp.ne.s32.totalorder %v306, 0
      %vm501 = vcmp.ne.s32.totalorder %v313, 0
      %vm502 = vcmp.ne.s32.totalorder %v320, 0
      %vm503 = vcmp.ne.s32.totalorder %v327, 0
      %vm504 = vcmp.ne.s32.totalorder %v334, 0
      %vm505 = vcmp.ne.s32.totalorder %v341, 0
      %vm506 = vcmp.ne.s32.totalorder %v348, 0
      %vm507 = vcmp.ne.s32.totalorder %v355, 0
      %vm508 = vcmp.ne.s32.totalorder %v362, 0
      %vm509 = vcmp.ne.s32.totalorder %v369, 0
      %vm510 = vcmp.ne.s32.totalorder %v376, 0
      %vm511 = vcmp.ne.s32.totalorder %v383, 0
      %vm512 = vcmp.ne.s32.totalorder %v390, 0
      %vm513 = vcmp.ne.s32.totalorder %v397, 0
      %vm514 = vcmp.ne.s32.totalorder %v404, 0
      %vm515 = vcmp.ne.s32.totalorder %v411, 0
      %vm516 = vcmp.ne.s32.totalorder %v418, 0
      %vm517 = vcmp.ne.s32.totalorder %v425, 0
      %vm518 = vcmp.ne.s32.totalorder %v432, 0
      %vm519 = vcmp.ne.s32.totalorder %v439, 0
      %vm520 = vcmp.ne.s32.totalorder %v446, 0
      %vm521 = vcmp.ne.s32.totalorder %v453, 0
      %vm522 = vcmp.ne.s32.totalorder %v460, 0
      %vm523 = vcmp.ne.s32.totalorder %v467, 0
      %vm524 = vcmp.ne.s32.totalorder %v474, 0
      %vm525 = vcmp.ne.s32.totalorder %v481, 0
      %vm526 = vcmp.ne.s32.totalorder %v488, 0
      %vm527 = vcmp.ne.s32.totalorder %v495, 0
      %vm528 = vcmp.lt.s32.totalorder %v278, 0
      %vm529 = vcmp.lt.s32.totalorder %v285, 0
      %vm530 = vcmp.lt.s32.totalorder %v292, 0
      %vm531 = vcmp.lt.s32.totalorder %v299, 0
      %vm532 = vcmp.lt.s32.totalorder %v306, 0
      %vm533 = vcmp.lt.s32.totalorder %v313, 0
      %vm534 = vcmp.lt.s32.totalorder %v320, 0
      %vm535 = vcmp.lt.s32.totalorder %v327, 0
      %vm536 = vcmp.lt.s32.totalorder %v334, 0
      %vm537 = vcmp.lt.s32.totalorder %v341, 0
      %vm538 = vcmp.lt.s32.totalorder %v348, 0
      %vm539 = vcmp.lt.s32.totalorder %v355, 0
      %vm540 = vcmp.lt.s32.totalorder %v362, 0
      %vm541 = vcmp.lt.s32.totalorder %v369, 0
      %vm542 = vcmp.lt.s32.totalorder %v376, 0
      %vm543 = vcmp.lt.s32.totalorder %v383, 0
      %vm544 = vcmp.lt.s32.totalorder %v390, 0
      %vm545 = vcmp.lt.s32.totalorder %v397, 0
      %vm546 = vcmp.lt.s32.totalorder %v404, 0
      %vm547 = vcmp.lt.s32.totalorder %v411, 0
      %vm548 = vcmp.lt.s32.totalorder %v418, 0
      %vm549 = vcmp.lt.s32.totalorder %v425, 0
      %vm550 = vcmp.lt.s32.totalorder %v432, 0
      %vm551 = vcmp.lt.s32.totalorder %v439, 0
      %vm552 = vcmp.lt.s32.totalorder %v446, 0
      %vm553 = vcmp.lt.s32.totalorder %v453, 0
      %vm554 = vcmp.lt.s32.totalorder %v460, 0
      %vm555 = vcmp.lt.s32.totalorder %v467, 0
      %vm556 = vcmp.lt.s32.totalorder %v474, 0
      %vm557 = vcmp.lt.s32.totalorder %v481, 0
      %vm558 = vcmp.lt.s32.totalorder %v488, 0
      %vm559 = vcmp.lt.s32.totalorder %v495, 0
      %vm560 = vmand %vm528, %vm496
      %vm561 = vmand %vm529, %vm497
      %vm562 = vmand %vm530, %vm498
      %vm563 = vmand %vm531, %vm499
      %vm564 = vmand %vm532, %vm500
      %vm565 = vmand %vm533, %vm501
      %vm566 = vmand %vm534, %vm502
      %vm567 = vmand %vm535, %vm503
      %vm568 = vmand %vm536, %vm504
      %vm569 = vmand %vm537, %vm505
      %vm570 = vmand %vm538, %vm506
      %vm571 = vmand %vm539, %vm507
      %vm572 = vmand %vm540, %vm508
      %vm573 = vmand %vm541, %vm509
      %vm574 = vmand %vm542, %vm510
      %vm575 = vmand %vm543, %vm511
      %vm576 = vmand %vm544, %vm512
      %vm577 = vmand %vm545, %vm513
      %vm578 = vmand %vm546, %vm514
      %vm579 = vmand %vm547, %vm515
      %vm580 = vmand %vm548, %vm516
      %vm581 = vmand %vm549, %vm517
      %vm582 = vmand %vm550, %vm518
      %vm583 = vmand %vm551, %vm519
      %vm584 = vmand %vm552, %vm520
      %vm585 = vmand %vm553, %vm521
      %vm586 = vmand %vm554, %vm522
      %vm587 = vmand %vm555, %vm523
      %vm588 = vmand %vm556, %vm524
      %vm589 = vmand %vm557, %vm525
      %vm590 = vmand %vm558, %vm526
      %vm591 = vmand %vm559, %vm527
      %v592 = vadd.s32 %v278, 16
      %v593 = vadd.s32 %v285, 16
      %v594 = vadd.s32 %v292, 16
      %v595 = vadd.s32 %v299, 16
      %v596 = vadd.s32 %v306, 16
      %v597 = vadd.s32 %v313, 16
      %v598 = vadd.s32 %v320, 16
      %v599 = vadd.s32 %v327, 16
      %v600 = vadd.s32 %v334, 16
      %v601 = vadd.s32 %v341, 16
      %v602 = vadd.s32 %v348, 16
      %v603 = vadd.s32 %v355, 16
      %v604 = vadd.s32 %v362, 16
      %v605 = vadd.s32 %v369, 16
      %v606 = vadd.s32 %v376, 16
      %v607 = vadd.s32 %v383, 16
      %v608 = vadd.s32 %v390, 16
      %v609 = vadd.s32 %v397, 16
      %v610 = vadd.s32 %v404, 16
      %v611 = vadd.s32 %v411, 16
      %v612 = vadd.s32 %v418, 16
      %v613 = vadd.s32 %v425, 16
      %v614 = vadd.s32 %v432, 16
      %v615 = vadd.s32 %v439, 16
      %v616 = vadd.s32 %v446, 16
      %v617 = vadd.s32 %v453, 16
      %v618 = vadd.s32 %v460, 16
      %v619 = vadd.s32 %v467, 16
      %v620 = vadd.s32 %v474, 16
      %v621 = vadd.s32 %v481, 16
      %v622 = vadd.s32 %v488, 16
      %v623 = vadd.s32 %v495, 16
      %v624 = vsel %vm560, %v592, %v278
      %v625 = vsel %vm561, %v593, %v285
      %v626 = vsel %vm562, %v594, %v292
      %v627 = vsel %vm563, %v595, %v299
      %v628 = vsel %vm564, %v596, %v306
      %v629 = vsel %vm565, %v597, %v313
      %v630 = vsel %vm566, %v598, %v320
      %v631 = vsel %vm567, %v599, %v327
      %v632 = vsel %vm568, %v600, %v334
      %v633 = vsel %vm569, %v601, %v341
      %v634 = vsel %vm570, %v602, %v348
      %v635 = vsel %vm571, %v603, %v355
      %v636 = vsel %vm572, %v604, %v362
      %v637 = vsel %vm573, %v605, %v369
      %v638 = vsel %vm574, %v606, %v376
      %v639 = vsel %vm575, %v607, %v383
      %v640 = vsel %vm576, %v608, %v390
      %v641 = vsel %vm577, %v609, %v397
      %v642 = vsel %vm578, %v610, %v404
      %v643 = vsel %vm579, %v611, %v411
      %v644 = vsel %vm580, %v612, %v418
      %v645 = vsel %vm581, %v613, %v425
      %v646 = vsel %vm582, %v614, %v432
      %v647 = vsel %vm583, %v615, %v439
      %v648 = vsel %vm584, %v616, %v446
      %v649 = vsel %vm585, %v617, %v453
      %v650 = vsel %vm586, %v618, %v460
      %v651 = vsel %vm587, %v619, %v467
      %v652 = vsel %vm588, %v620, %v474
      %v653 = vsel %vm589, %v621, %v481
      %v654 = vsel %vm590, %v622, %v488
      %v655 = vsel %vm591, %v623, %v495
      %vm656 = vcmp.ge.s32.totalorder %v624, 1
      %vm657 = vcmp.ge.s32.totalorder %v625, 1
      %vm658 = vcmp.ge.s32.totalorder %v626, 1
      %vm659 = vcmp.ge.s32.totalorder %v627, 1
      %vm660 = vcmp.ge.s32.totalorder %v628, 1
      %vm661 = vcmp.ge.s32.totalorder %v629, 1
      %vm662 = vcmp.ge.s32.totalorder %v630, 1
      %vm663 = vcmp.ge.s32.totalorder %v631, 1
      %vm664 = vcmp.ge.s32.totalorder %v632, 1
      %vm665 = vcmp.ge.s32.totalorder %v633, 1
      %vm666 = vcmp.ge.s32.totalorder %v634, 1
      %vm667 = vcmp.ge.s32.totalorder %v635, 1
      %vm668 = vcmp.ge.s32.totalorder %v636, 1
      %vm669 = vcmp.ge.s32.totalorder %v637, 1
      %vm670 = vcmp.ge.s32.totalorder %v638, 1
      %vm671 = vcmp.ge.s32.totalorder %v639, 1
      %vm672 = vcmp.ge.s32.totalorder %v640, 1
      %vm673 = vcmp.ge.s32.totalorder %v641, 1
      %vm674 = vcmp.ge.s32.totalorder %v642, 1
      %vm675 = vcmp.ge.s32.totalorder %v643, 1
      %vm676 = vcmp.ge.s32.totalorder %v644, 1
      %vm677 = vcmp.ge.s32.totalorder %v645, 1
      %vm678 = vcmp.ge.s32.totalorder %v646, 1
      %vm679 = vcmp.ge.s32.totalorder %v647, 1
      %vm680 = vcmp.ge.s32.totalorder %v648, 1
      %vm681 = vcmp.ge.s32.totalorder %v649, 1
      %vm682 = vcmp.ge.s32.totalorder %v650, 1
      %vm683 = vcmp.ge.s32.totalorder %v651, 1
      %vm684 = vcmp.ge.s32.totalorder %v652, 1
      %vm685 = vcmp.ge.s32.totalorder %v653, 1
      %vm686 = vcmp.ge.s32.totalorder %v654, 1
      %vm687 = vcmp.ge.s32.totalorder %v655, 1
      %vm688 = vcmp.le.s32.totalorder %v624, 14
      %vm689 = vcmp.le.s32.totalorder %v625, 14
      %vm690 = vcmp.le.s32.totalorder %v626, 14
      %vm691 = vcmp.le.s32.totalorder %v627, 14
      %vm692 = vcmp.le.s32.totalorder %v628, 14
      %vm693 = vcmp.le.s32.totalorder %v629, 14
      %vm694 = vcmp.le.s32.totalorder %v630, 14
      %vm695 = vcmp.le.s32.totalorder %v631, 14
      %vm696 = vcmp.le.s32.totalorder %v632, 14
      %vm697 = vcmp.le.s32.totalorder %v633, 14
      %vm698 = vcmp.le.s32.totalorder %v634, 14
      %vm699 = vcmp.le.s32.totalorder %v635, 14
      %vm700 = vcmp.le.s32.totalorder %v636, 14
      %vm701 = vcmp.le.s32.totalorder %v637, 14
      %vm702 = vcmp.le.s32.totalorder %v638, 14
      %vm703 = vcmp.le.s32.totalorder %v639, 14
      %vm704 = vcmp.le.s32.totalorder %v640, 14
      %vm705 = vcmp.le.s32.totalorder %v641, 14
      %vm706 = vcmp.le.s32.totalorder %v642, 14
      %vm707 = vcmp.le.s32.totalorder %v643, 14
      %vm708 = vcmp.le.s32.totalorder %v644, 14
      %vm709 = vcmp.le.s32.totalorder %v645, 14
      %vm710 = vcmp.le.s32.totalorder %v646, 14
      %vm711 = vcmp.le.s32.totalorder %v647, 14
      %vm712 = vcmp.le.s32.totalorder %v648, 14
      %vm713 = vcmp.le.s32.totalorder %v649, 14
      %vm714 = vcmp.le.s32.totalorder %v650, 14
      %vm715 = vcmp.le.s32.totalorder %v651, 14
      %vm716 = vcmp.le.s32.totalorder %v652, 14
      %vm717 = vcmp.le.s32.totalorder %v653, 14
      %vm718 = vcmp.le.s32.totalorder %v654, 14
      %vm719 = vcmp.le.s32.totalorder %v655, 14
      %vm720 = vcmask 64512
      %721 = vst.msk [vmem:[#allocation2] sm:$0xff] %vm720, 0.0
      %722 = vst.msk [vmem:[#allocation2 + $0x8] sm:$0xff] %vm720, 0.0
      %723 = vst.msk [vmem:[#allocation2 + $0x10] sm:$0xff] %vm720, 0.0
      %724 = vst.msk [vmem:[#allocation2 + $0x118] sm:$0xff] %vm720, 0.0
      %725 = vst.msk [vmem:[#allocation2 + $0x120] sm:$0xff] %vm720, 0.0
      %726 = vst.msk [vmem:[#allocation2 + $0x128] sm:$0xff] %vm720, 0.0
      %v727 = vmax.f32 %v207, 0.0
      %v728 = vmax.f32 %v208, 0.0
      %v729 = vmax.f32 %v209, 0.0
      %v730 = vmax.f32 %v210, 0.0
      %v731 = vmax.f32 %v211, 0.0
      %v732 = vmax.f32 %v212, 0.0
      %v733 = vmax.f32 %v213, 0.0
      %v734 = vmax.f32 %v214, 0.0
      %v735 = vmax.f32 %v215, 0.0
      %v736 = vmax.f32 %v216, 0.0
      %v737 = vmax.f32 %v217, 0.0
      %v738 = vmax.f32 %v218, 0.0
      %v739 = vmax.f32 %v219, 0.0
      %v740 = vmax.f32 %v220, 0.0
      %v741 = vmax.f32 %v221, 0.0
      %v742 = vmax.f32 %v222, 0.0
      %v743 = vmax.f32 %v223, 0.0
      %v744 = vmax.f32 %v224, 0.0
      %v745 = vmax.f32 %v225, 0.0
      %v746 = vmax.f32 %v226, 0.0
      %v747 = vmax.f32 %v227, 0.0
      %v748 = vmax.f32 %v228, 0.0
      %v749 = vmax.f32 %v229, 0.0
      %v750 = vmax.f32 %v230, 0.0
      %v751 = vmax.f32 %v231, 0.0
      %v752 = vmax.f32 %v232, 0.0
      %v753 = vmax.f32 %v233, 0.0
      %v754 = vmax.f32 %v234, 0.0
      %v755 = vmax.f32 %v235, 0.0
      %v756 = vmax.f32 %v236, 0.0
      %v757 = vmax.f32 %v237, 0.0
      %v758 = vmax.f32 %v238, 0.0
      %759 = vst.msk [vmem:[#allocation2 + $0x18] sm:$0xff] %vm720, %v727
      %760 = vst.msk [vmem:[#allocation2 + $0x20] sm:$0xff] %vm720, %v728
      %761 = vst.msk [vmem:[#allocation2 + $0x28] sm:$0xff] %vm720, %v729
      %762 = vst.msk [vmem:[#allocation2 + $0x30] sm:$0xff] %vm720, %v730
      %763 = vst.msk [vmem:[#allocation2 + $0x38] sm:$0xff] %vm720, %v731
      %764 = vst.msk [vmem:[#allocation2 + $0x40] sm:$0xff] %vm720, %v732
      %765 = vst.msk [vmem:[#allocation2 + $0x48] sm:$0xff] %vm720, %v733
      %766 = vst.msk [vmem:[#allocation2 + $0x50] sm:$0xff] %vm720, %v734
      %767 = vst.msk [vmem:[#allocation2 + $0x58] sm:$0xff] %vm720, %v735
      %768 = vst.msk [vmem:[#allocation2 + $0x60] sm:$0xff] %vm720, %v736
      %769 = vst.msk [vmem:[#allocation2 + $0x68] sm:$0xff] %vm720, %v737
      %770 = vst.msk [vmem:[#allocation2 + $0x70] sm:$0xff] %vm720, %v738
      %771 = vst.msk [vmem:[#allocation2 + $0x78] sm:$0xff] %vm720, %v739
      %772 = vst.msk [vmem:[#allocation2 + $0x80] sm:$0xff] %vm720, %v740
      %773 = vst.msk [vmem:[#allocation2 + $0x88] sm:$0xff] %vm720, %v741
      %774 = vst.msk [vmem:[#allocation2 + $0x90] sm:$0xff] %vm720, %v742
      %775 = vst.msk [vmem:[#allocation2 + $0x98] sm:$0xff] %vm720, %v743
      %776 = vst.msk [vmem:[#allocation2 + $0xa0] sm:$0xff] %vm720, %v744
      %777 = vst.msk [vmem:[#allocation2 + $0xa8] sm:$0xff] %vm720, %v745
      %778 = vst.msk [vmem:[#allocation2 + $0xb0] sm:$0xff] %vm720, %v746
      %779 = vst.msk [vmem:[#allocation2 + $0xb8] sm:$0xff] %vm720, %v747
      %780 = vst.msk [vmem:[#allocation2 + $0xc0] sm:$0xff] %vm720, %v748
      %781 = vst.msk [vmem:[#allocation2 + $0xc8] sm:$0xff] %vm720, %v749
      %782 = vst.msk [vmem:[#allocation2 + $0xd0] sm:$0xff] %vm720, %v750
      %783 = vst.msk [vmem:[#allocation2 + $0xd8] sm:$0xff] %vm720, %v751
      %784 = vst.msk [vmem:[#allocation2 + $0xe0] sm:$0xff] %vm720, %v752
      %785 = vst.msk [vmem:[#allocation2 + $0xe8] sm:$0xff] %vm720, %v753
      %786 = vst.msk [vmem:[#allocation2 + $0xf0] sm:$0xff] %vm720, %v754
      %787 = vst.msk [vmem:[#allocation2 + $0xf8] sm:$0xff] %vm720, %v755
      %788 = vst.msk [vmem:[#allocation2 + $0x100] sm:$0xff] %vm720, %v756
      %789 = vst.msk [vmem:[#allocation2 + $0x108] sm:$0xff] %vm720, %v757
      %790 = vst.msk [vmem:[#allocation2 + $0x110] sm:$0xff] %vm720, %v758
      %v791 = vld [vmem:[#allocation2 + $0x7] sm:$0xff]
      %v792 = vld [vmem:[#allocation2 + $0xf] sm:$0xff]
      %v793 = vld [vmem:[#allocation2 + $0x17] sm:$0xff]
      %v794 = vld [vmem:[#allocation2 + $0x1f] sm:$0xff]
      %v795 = vld [vmem:[#allocation2 + $0x27] sm:$0xff]
      %v796 = vld [vmem:[#allocation2 + $0x2f] sm:$0xff]
      %v797 = vld [vmem:[#allocation2 + $0x37] sm:$0xff]
      %v798 = vld [vmem:[#allocation2 + $0x3f] sm:$0xff]
      %v799 = vld [vmem:[#allocation2 + $0x47] sm:$0xff]
      %v800 = vld [vmem:[#allocation2 + $0x4f] sm:$0xff]
      %v801 = vld [vmem:[#allocation2 + $0x57] sm:$0xff]
      %v802 = vld [vmem:[#allocation2 + $0x5f] sm:$0xff]
      %v803 = vld [vmem:[#allocation2 + $0x67] sm:$0xff]
      %v804 = vld [vmem:[#allocation2 + $0x6f] sm:$0xff]
      %v805 = vld [vmem:[#allocation2 + $0x77] sm:$0xff]
      %v806 = vld [vmem:[#allocation2 + $0x7f] sm:$0xff]
      %v807 = vld [vmem:[#allocation2 + $0x87] sm:$0xff]
      %v808 = vld [vmem:[#allocation2 + $0x8f] sm:$0xff]
      %v809 = vld [vmem:[#allocation2 + $0x97] sm:$0xff]
      %v810 = vld [vmem:[#allocation2 + $0x9f] sm:$0xff]
      %v811 = vld [vmem:[#allocation2 + $0xa7] sm:$0xff]
      %v812 = vld [vmem:[#allocation2 + $0xaf] sm:$0xff]
      %v813 = vld [vmem:[#allocation2 + $0xb7] sm:$0xff]
      %v814 = vld [vmem:[#allocation2 + $0xbf] sm:$0xff]
      %v815 = vld [vmem:[#allocation2 + $0xc7] sm:$0xff]
      %v816 = vld [vmem:[#allocation2 + $0xcf] sm:$0xff]
      %v817 = vld [vmem:[#allocation2 + $0xd7] sm:$0xff]
      %v818 = vld [vmem:[#allocation2 + $0xdf] sm:$0xff]
      %v819 = vld [vmem:[#allocation2 + $0xe7] sm:$0xff]
      %v820 = vld [vmem:[#allocation2 + $0xef] sm:$0xff]
      %v821 = vld [vmem:[#allocation2 + $0xf7] sm:$0xff]
      %v822 = vld [vmem:[#allocation2 + $0xff] sm:$0xff]
      %v823 = vsel %vm656, 1, 0
      %v824 = vsel %vm657, 1, 0
      %v825 = vsel %vm658, 1, 0
      %v826 = vsel %vm659, 1, 0
      %v827 = vsel %vm660, 1, 0
      %v828 = vsel %vm661, 1, 0
      %v829 = vsel %vm662, 1, 0
      %v830 = vsel %vm663, 1, 0
      %v831 = vsel %vm664, 1, 0
      %v832 = vsel %vm665, 1, 0
      %v833 = vsel %vm666, 1, 0
      %v834 = vsel %vm667, 1, 0
      %v835 = vsel %vm668, 1, 0
      %v836 = vsel %vm669, 1, 0
      %v837 = vsel %vm670, 1, 0
      %v838 = vsel %vm671, 1, 0
      %v839 = vsel %vm672, 1, 0
      %v840 = vsel %vm673, 1, 0
      %v841 = vsel %vm674, 1, 0
      %v842 = vsel %vm675, 1, 0
      %v843 = vsel %vm676, 1, 0
      %v844 = vsel %vm677, 1, 0
      %v845 = vsel %vm678, 1, 0
      %v846 = vsel %vm679, 1, 0
      %v847 = vsel %vm680, 1, 0
      %v848 = vsel %vm681, 1, 0
      %v849 = vsel %vm682, 1, 0
      %v850 = vsel %vm683, 1, 0
      %v851 = vsel %vm684, 1, 0
      %v852 = vsel %vm685, 1, 0
      %v853 = vsel %vm686, 1, 0
      %v854 = vsel %vm687, 1, 0
      %vm855 = vcmp.eq.s32.totalorder %v823, 1
      %vm856 = vcmp.eq.s32.totalorder %v824, 1
      %vm857 = vcmp.eq.s32.totalorder %v825, 1
      %vm858 = vcmp.eq.s32.totalorder %v826, 1
      %vm859 = vcmp.eq.s32.totalorder %v827, 1
      %vm860 = vcmp.eq.s32.totalorder %v828, 1
      %vm861 = vcmp.eq.s32.totalorder %v829, 1
      %vm862 = vcmp.eq.s32.totalorder %v830, 1
      %vm863 = vcmp.eq.s32.totalorder %v831, 1
      %vm864 = vcmp.eq.s32.totalorder %v832, 1
      %vm865 = vcmp.eq.s32.totalorder %v833, 1
      %vm866 = vcmp.eq.s32.totalorder %v834, 1
      %vm867 = vcmp.eq.s32.totalorder %v835, 1
      %vm868 = vcmp.eq.s32.totalorder %v836, 1
      %vm869 = vcmp.eq.s32.totalorder %v837, 1
      %vm870 = vcmp.eq.s32.totalorder %v838, 1
      %vm871 = vcmp.eq.s32.totalorder %v839, 1
      %vm872 = vcmp.eq.s32.totalorder %v840, 1
      %vm873 = vcmp.eq.s32.totalorder %v841, 1
      %vm874 = vcmp.eq.s32.totalorder %v842, 1
      %vm875 = vcmp.eq.s32.totalorder %v843, 1
      %vm876 = vcmp.eq.s32.totalorder %v844, 1
      %vm877 = vcmp.eq.s32.totalorder %v845, 1
      %vm878 = vcmp.eq.s32.totalorder %v846, 1
      %vm879 = vcmp.eq.s32.totalorder %v847, 1
      %vm880 = vcmp.eq.s32.totalorder %v848, 1
      %vm881 = vcmp.eq.s32.totalorder %v849, 1
      %vm882 = vcmp.eq.s32.totalorder %v850, 1
      %vm883 = vcmp.eq.s32.totalorder %v851, 1
      %vm884 = vcmp.eq.s32.totalorder %v852, 1
      %vm885 = vcmp.eq.s32.totalorder %v853, 1
      %vm886 = vcmp.eq.s32.totalorder %v854, 1
      %v887 = vsel %vm855, %v791, 0.0
      %v888 = vsel %vm856, %v792, 0.0
      %v889 = vsel %vm857, %v793, 0.0
      %v890 = vsel %vm858, %v794, 0.0
      %v891 = vsel %vm859, %v795, 0.0
      %v892 = vsel %vm860, %v796, 0.0
      %v893 = vsel %vm861, %v797, 0.0
      %v894 = vsel %vm862, %v798, 0.0
      %v895 = vsel %vm863, %v799, 0.0
      %v896 = vsel %vm864, %v800, 0.0
      %v897 = vsel %vm865, %v801, 0.0
      %v898 = vsel %vm866, %v802, 0.0
      %v899 = vsel %vm867, %v803, 0.0
      %v900 = vsel %vm868, %v804, 0.0
      %v901 = vsel %vm869, %v805, 0.0
      %v902 = vsel %vm870, %v806, 0.0
      %v903 = vsel %vm871, %v807, 0.0
      %v904 = vsel %vm872, %v808, 0.0
      %v905 = vsel %vm873, %v809, 0.0
      %v906 = vsel %vm874, %v810, 0.0
      %v907 = vsel %vm875, %v811, 0.0
      %v908 = vsel %vm876, %v812, 0.0
      %v909 = vsel %vm877, %v813, 0.0
      %v910 = vsel %vm878, %v814, 0.0
      %v911 = vsel %vm879, %v815, 0.0
      %v912 = vsel %vm880, %v816, 0.0
      %v913 = vsel %vm881, %v817, 0.0
      %v914 = vsel %vm882, %v818, 0.0
      %v915 = vsel %vm883, %v819, 0.0
      %v916 = vsel %vm884, %v820, 0.0
      %v917 = vsel %vm885, %v821, 0.0
      %v918 = vsel %vm886, %v822, 0.0
      %v919 = vpack.c.bf16 %v888, %v887
      %v920 = vpack.c.bf16 %v890, %v889
      %v921 = vpack.c.bf16 %v892, %v891
      %v922 = vpack.c.bf16 %v894, %v893
      %v923 = vpack.c.bf16 %v896, %v895
      %v924 = vpack.c.bf16 %v898, %v897
      %v925 = vpack.c.bf16 %v900, %v899
      %v926 = vpack.c.bf16 %v902, %v901
      %v927 = vpack.c.bf16 %v904, %v903
      %v928 = vpack.c.bf16 %v906, %v905
      %v929 = vpack.c.bf16 %v908, %v907
      %v930 = vpack.c.bf16 %v910, %v909
      %v931 = vpack.c.bf16 %v912, %v911
      %v932 = vpack.c.bf16 %v914, %v913
      %v933 = vpack.c.bf16 %v916, %v915
      %v934 = vpack.c.bf16 %v918, %v917
      %v951 = vunpack.c.l.b16 %v919
      %v952 = vunpack.c.h.b16 %v919
      %v953 = vunpack.c.l.b16 %v920
      %v954 = vunpack.c.h.b16 %v920
      %v955 = vunpack.c.l.b16 %v921
      %v956 = vunpack.c.h.b16 %v921
      %v957 = vunpack.c.l.b16 %v922
      %v958 = vunpack.c.h.b16 %v922
      %v959 = vunpack.c.l.b16 %v923
      %v960 = vunpack.c.h.b16 %v923
      %v961 = vunpack.c.l.b16 %v924
      %v962 = vunpack.c.h.b16 %v924
      %v963 = vunpack.c.l.b16 %v925
      %v964 = vunpack.c.h.b16 %v925
      %v965 = vunpack.c.l.b16 %v926
      %v966 = vunpack.c.h.b16 %v926
      %v967 = vunpack.c.l.b16 %v927
      %v968 = vunpack.c.h.b16 %v927
      %v969 = vunpack.c.l.b16 %v928
      %v970 = vunpack.c.h.b16 %v928
      %v971 = vunpack.c.l.b16 %v929
      %v972 = vunpack.c.h.b16 %v929
      %v973 = vunpack.c.l.b16 %v930
      %v974 = vunpack.c.h.b16 %v930
      %v975 = vunpack.c.l.b16 %v931
      %v976 = vunpack.c.h.b16 %v931
      %v977 = vunpack.c.l.b16 %v932
      %v978 = vunpack.c.h.b16 %v932
      %v979 = vunpack.c.l.b16 %v933
      %v980 = vunpack.c.h.b16 %v933
      %v981 = vunpack.c.l.b16 %v934
      %v982 = vunpack.c.h.b16 %v934
      %v983 = vpack.c.b16 %v951, %v951
      %v984 = vpack.c.b16 %v952, %v952
      %v985 = vpack.c.b16 %v953, %v953
      %v986 = vpack.c.b16 %v954, %v954
      %v987 = vpack.c.b16 %v955, %v955
      %v988 = vpack.c.b16 %v956, %v956
      %v989 = vpack.c.b16 %v957, %v957
      %v990 = vpack.c.b16 %v958, %v958
      %v991 = vpack.c.b16 %v959, %v959
      %v992 = vpack.c.b16 %v960, %v960
      %v993 = vpack.c.b16 %v961, %v961
      %v994 = vpack.c.b16 %v962, %v962
      %v995 = vpack.c.b16 %v963, %v963
      %v996 = vpack.c.b16 %v964, %v964
      %v997 = vpack.c.b16 %v965, %v965
      %v998 = vpack.c.b16 %v966, %v966
      %v999 = vpack.c.b16 %v967, %v967
      %v1000 = vpack.c.b16 %v968, %v968
      %v1001 = vpack.c.b16 %v969, %v969
      %v1002 = vpack.c.b16 %v970, %v970
      %v1003 = vpack.c.b16 %v971, %v971
      %v1004 = vpack.c.b16 %v972, %v972
      %v1005 = vpack.c.b16 %v973, %v973
      %v1006 = vpack.c.b16 %v974, %v974
      %v1007 = vpack.c.b16 %v975, %v975
      %v1008 = vpack.c.b16 %v976, %v976
      %v1009 = vpack.c.b16 %v977, %v977
      %v1010 = vpack.c.b16 %v978, %v978
      %v1011 = vpack.c.b16 %v979, %v979
      %v1012 = vpack.c.b16 %v980, %v980
      %v1013 = vpack.c.b16 %v981, %v981
      %v1014 = vpack.c.b16 %v982, %v982
      %vm1047 = vcmask 60416
      %1048 = vst.msk [vmem:[#allocation5] sm:$0xf] %vm1047, %v983
      %1049 = vst.msk [vmem:[#allocation5 + $0x4] sm:$0xf] %vm1047, %v984
      %1050 = vst.msk [vmem:[#allocation5 + $0x8] sm:$0xf] %vm1047, %v985
      %1051 = vst.msk [vmem:[#allocation5 + $0xc] sm:$0xf] %vm1047, %v986
      %1052 = vst.msk [vmem:[#allocation5 + $0x10] sm:$0xf] %vm1047, %v987
      %1053 = vst.msk [vmem:[#allocation5 + $0x14] sm:$0xf] %vm1047, %v988
      %1054 = vst.msk [vmem:[#allocation5 + $0x18] sm:$0xf] %vm1047, %v989
      %1055 = vst.msk [vmem:[#allocation5 + $0x1c] sm:$0xf] %vm1047, %v990
      %1056 = vst.msk [vmem:[#allocation5 + $0x20] sm:$0xf] %vm1047, %v991
      %1057 = vst.msk [vmem:[#allocation5 + $0x24] sm:$0xf] %vm1047, %v992
      %1058 = vst.msk [vmem:[#allocation5 + $0x28] sm:$0xf] %vm1047, %v993
      %1059 = vst.msk [vmem:[#allocation5 + $0x2c] sm:$0xf] %vm1047, %v994
      %1060 = vst.msk [vmem:[#allocation5 + $0x30] sm:$0xf] %vm1047, %v995
      %1061 = vst.msk [vmem:[#allocation5 + $0x34] sm:$0xf] %vm1047, %v996
      %1062 = vst.msk [vmem:[#allocation5 + $0x38] sm:$0xf] %vm1047, %v997
      %1063 = vst.msk [vmem:[#allocation5 + $0x3c] sm:$0xf] %vm1047, %v998
      %1064 = vst.msk [vmem:[#allocation5 + $0x40] sm:$0xf] %vm1047, %v999
      %1065 = vst.msk [vmem:[#allocation5 + $0x44] sm:$0xf] %vm1047, %v1000
      %1066 = vst.msk [vmem:[#allocation5 + $0x48] sm:$0xf] %vm1047, %v1001
      %1067 = vst.msk [vmem:[#allocation5 + $0x4c] sm:$0xf] %vm1047, %v1002
      %1068 = vst.msk [vmem:[#allocation5 + $0x50] sm:$0xf] %vm1047, %v1003
      %1069 = vst.msk [vmem:[#allocation5 + $0x54] sm:$0xf] %vm1047, %v1004
      %1070 = vst.msk [vmem:[#allocation5 + $0x58] sm:$0xf] %vm1047, %v1005
      %1071 = vst.msk [vmem:[#allocation5 + $0x5c] sm:$0xf] %vm1047, %v1006
      %1072 = vst.msk [vmem:[#allocation5 + $0x60] sm:$0xf] %vm1047, %v1007
      %1073 = vst.msk [vmem:[#allocation5 + $0x64] sm:$0xf] %vm1047, %v1008
      %1074 = vst.msk [vmem:[#allocation5 + $0x68] sm:$0xf] %vm1047, %v1009
      %1075 = vst.msk [vmem:[#allocation5 + $0x6c] sm:$0xf] %vm1047, %v1010
      %1076 = vst.msk [vmem:[#allocation5 + $0x70] sm:$0xf] %vm1047, %v1011
      %1077 = vst.msk [vmem:[#allocation5 + $0x74] sm:$0xf] %vm1047, %v1012
      %1078 = vst.msk [vmem:[#allocation5 + $0x78] sm:$0xf] %vm1047, %v1013
      %1079 = vst.msk [vmem:[#allocation5 + $0x7c] sm:$0xf] %vm1047, %v1014
      %v1080 = vld [vmem:[#allocation2 + $0x8] sm:$0xff]
      %v1081 = vld [vmem:[#allocation2 + $0x10] sm:$0xff]
      %v1082 = vld [vmem:[#allocation2 + $0x18] sm:$0xff]
      %v1083 = vld [vmem:[#allocation2 + $0x20] sm:$0xff]
      %v1084 = vld [vmem:[#allocation2 + $0x28] sm:$0xff]
      %v1085 = vld [vmem:[#allocation2 + $0x30] sm:$0xff]
      %v1086 = vld [vmem:[#allocation2 + $0x38] sm:$0xff]
      %v1087 = vld [vmem:[#allocation2 + $0x40] sm:$0xff]
      %v1088 = vld [vmem:[#allocation2 + $0x48] sm:$0xff]
      %v1089 = vld [vmem:[#allocation2 + $0x50] sm:$0xff]
      %v1090 = vld [vmem:[#allocation2 + $0x58] sm:$0xff]
      %v1091 = vld [vmem:[#allocation2 + $0x60] sm:$0xff]
      %v1092 = vld [vmem:[#allocation2 + $0x68] sm:$0xff]
      %v1093 = vld [vmem:[#allocation2 + $0x70] sm:$0xff]
      %v1094 = vld [vmem:[#allocation2 + $0x78] sm:$0xff]
      %v1095 = vld [vmem:[#allocation2 + $0x80] sm:$0xff]
      %v1096 = vld [vmem:[#allocation2 + $0x88] sm:$0xff]
      %v1097 = vld [vmem:[#allocation2 + $0x90] sm:$0xff]
      %v1098 = vld [vmem:[#allocation2 + $0x98] sm:$0xff]
      %v1099 = vld [vmem:[#allocation2 + $0xa0] sm:$0xff]
      %v1100 = vld [vmem:[#allocation2 + $0xa8] sm:$0xff]
      %v1101 = vld [vmem:[#allocation2 + $0xb0] sm:$0xff]
      %v1102 = vld [vmem:[#allocation2 + $0xb8] sm:$0xff]
      %v1103 = vld [vmem:[#allocation2 + $0xc0] sm:$0xff]
      %v1104 = vld [vmem:[#allocation2 + $0xc8] sm:$0xff]
      %v1105 = vld [vmem:[#allocation2 + $0xd0] sm:$0xff]
      %v1106 = vld [vmem:[#allocation2 + $0xd8] sm:$0xff]
      %v1107 = vld [vmem:[#allocation2 + $0xe0] sm:$0xff]
      %v1108 = vld [vmem:[#allocation2 + $0xe8] sm:$0xff]
      %v1109 = vld [vmem:[#allocation2 + $0xf0] sm:$0xff]
      %v1110 = vld [vmem:[#allocation2 + $0xf8] sm:$0xff]
      %v1111 = vld [vmem:[#allocation2 + $0x100] sm:$0xff]
      %v1112 = vpack.c.bf16 %v1081, %v1080
      %v1113 = vpack.c.bf16 %v1083, %v1082
      %v1114 = vpack.c.bf16 %v1085, %v1084
      %v1115 = vpack.c.bf16 %v1087, %v1086
      %v1116 = vpack.c.bf16 %v1089, %v1088
      %v1117 = vpack.c.bf16 %v1091, %v1090
      %v1118 = vpack.c.bf16 %v1093, %v1092
      %v1119 = vpack.c.bf16 %v1095, %v1094
      %v1120 = vpack.c.bf16 %v1097, %v1096
      %v1121 = vpack.c.bf16 %v1099, %v1098
      %v1122 = vpack.c.bf16 %v1101, %v1100
      %v1123 = vpack.c.bf16 %v1103, %v1102
      %v1124 = vpack.c.bf16 %v1105, %v1104
      %v1125 = vpack.c.bf16 %v1107, %v1106
      %v1126 = vpack.c.bf16 %v1109, %v1108
      %v1127 = vpack.c.bf16 %v1111, %v1110
      %v1144 = vunpack.c.l.b16 %v1112
      %v1145 = vunpack.c.h.b16 %v1112
      %v1146 = vunpack.c.l.b16 %v1113
      %v1147 = vunpack.c.h.b16 %v1113
      %v1148 = vunpack.c.l.b16 %v1114
      %v1149 = vunpack.c.h.b16 %v1114
      %v1150 = vunpack.c.l.b16 %v1115
      %v1151 = vunpack.c.h.b16 %v1115
      %v1152 = vunpack.c.l.b16 %v1116
      %v1153 = vunpack.c.h.b16 %v1116
      %v1154 = vunpack.c.l.b16 %v1117
      %v1155 = vunpack.c.h.b16 %v1117
      %v1156 = vunpack.c.l.b16 %v1118
      %v1157 = vunpack.c.h.b16 %v1118
      %v1158 = vunpack.c.l.b16 %v1119
      %v1159 = vunpack.c.h.b16 %v1119
      %v1160 = vunpack.c.l.b16 %v1120
      %v1161 = vunpack.c.h.b16 %v1120
      %v1162 = vunpack.c.l.b16 %v1121
      %v1163 = vunpack.c.h.b16 %v1121
      %v1164 = vunpack.c.l.b16 %v1122
      %v1165 = vunpack.c.h.b16 %v1122
      %v1166 = vunpack.c.l.b16 %v1123
      %v1167 = vunpack.c.h.b16 %v1123
      %v1168 = vunpack.c.l.b16 %v1124
      %v1169 = vunpack.c.h.b16 %v1124
      %v1170 = vunpack.c.l.b16 %v1125
      %v1171 = vunpack.c.h.b16 %v1125
      %v1172 = vunpack.c.l.b16 %v1126
      %v1173 = vunpack.c.h.b16 %v1126
      %v1174 = vunpack.c.l.b16 %v1127
      %v1175 = vunpack.c.h.b16 %v1127
      %v1176 = vpack.c.b16 %v1144, %v1144
      %v1177 = vpack.c.b16 %v1145, %v1145
      %v1178 = vpack.c.b16 %v1146, %v1146
      %v1179 = vpack.c.b16 %v1147, %v1147
      %v1180 = vpack.c.b16 %v1148, %v1148
      %v1181 = vpack.c.b16 %v1149, %v1149
      %v1182 = vpack.c.b16 %v1150, %v1150
      %v1183 = vpack.c.b16 %v1151, %v1151
      %v1184 = vpack.c.b16 %v1152, %v1152
      %v1185 = vpack.c.b16 %v1153, %v1153
      %v1186 = vpack.c.b16 %v1154, %v1154
      %v1187 = vpack.c.b16 %v1155, %v1155
      %v1188 = vpack.c.b16 %v1156, %v1156
      %v1189 = vpack.c.b16 %v1157, %v1157
      %v1190 = vpack.c.b16 %v1158, %v1158
      %v1191 = vpack.c.b16 %v1159, %v1159
      %v1192 = vpack.c.b16 %v1160, %v1160
      %v1193 = vpack.c.b16 %v1161, %v1161
      %v1194 = vpack.c.b16 %v1162, %v1162
      %v1195 = vpack.c.b16 %v1163, %v1163
      %v1196 = vpack.c.b16 %v1164, %v1164
      %v1197 = vpack.c.b16 %v1165, %v1165
      %v1198 = vpack.c.b16 %v1166, %v1166
      %v1199 = vpack.c.b16 %v1167, %v1167
      %v1200 = vpack.c.b16 %v1168, %v1168
      %v1201 = vpack.c.b16 %v1169, %v1169
      %v1202 = vpack.c.b16 %v1170, %v1170
      %v1203 = vpack.c.b16 %v1171, %v1171
      %v1204 = vpack.c.b16 %v1172, %v1172
      %v1205 = vpack.c.b16 %v1173, %v1173
      %v1206 = vpack.c.b16 %v1174, %v1174
      %v1207 = vpack.c.b16 %v1175, %v1175
      %1208 = vrot.lane.b32.xlu0 %v1176, 8
      %v1209 = vpop.permute.xlu0 %1208
      %1210 = vrot.lane.b32.xlu0 %v1177, 8
      %v1211 = vpop.permute.xlu0 %1210
      %1212 = vrot.lane.b32.xlu0 %v1178, 8
      %v1213 = vpop.permute.xlu0 %1212
      %1214 = vrot.lane.b32.xlu0 %v1179, 8
      %v1215 = vpop.permute.xlu0 %1214
      %1216 = vrot.lane.b32.xlu0 %v1180, 8
      %v1217 = vpop.permute.xlu0 %1216
      %1218 = vrot.lane.b32.xlu0 %v1181, 8
      %v1219 = vpop.permute.xlu0 %1218
      %1220 = vrot.lane.b32.xlu0 %v1182, 8
      %v1221 = vpop.permute.xlu0 %1220
      %1222 = vrot.lane.b32.xlu0 %v1183, 8
      %v1223 = vpop.permute.xlu0 %1222
      %1224 = vrot.lane.b32.xlu0 %v1184, 8
      %v1225 = vpop.permute.xlu0 %1224
      %1226 = vrot.lane.b32.xlu0 %v1185, 8
      %v1227 = vpop.permute.xlu0 %1226
      %1228 = vrot.lane.b32.xlu0 %v1186, 8
      %v1229 = vpop.permute.xlu0 %1228
      %1230 = vrot.lane.b32.xlu0 %v1187, 8
      %v1231 = vpop.permute.xlu0 %1230
      %1232 = vrot.lane.b32.xlu0 %v1188, 8
      %v1233 = vpop.permute.xlu0 %1232
      %1234 = vrot.lane.b32.xlu0 %v1189, 8
      %v1235 = vpop.permute.xlu0 %1234
      %1236 = vrot.lane.b32.xlu0 %v1190, 8
      %v1237 = vpop.permute.xlu0 %1236
      %1238 = vrot.lane.b32.xlu0 %v1191, 8
      %v1239 = vpop.permute.xlu0 %1238
      %1240 = vrot.lane.b32.xlu0 %v1192, 8
      %v1241 = vpop.permute.xlu0 %1240
      %1242 = vrot.lane.b32.xlu0 %v1193, 8
      %v1243 = vpop.permute.xlu0 %1242
      %1244 = vrot.lane.b32.xlu0 %v1194, 8
      %v1245 = vpop.permute.xlu0 %1244
      %1246 = vrot.lane.b32.xlu0 %v1195, 8
      %v1247 = vpop.permute.xlu0 %1246
      %1248 = vrot.lane.b32.xlu0 %v1196, 8
      %v1249 = vpop.permute.xlu0 %1248
      %1250 = vrot.lane.b32.xlu0 %v1197, 8
      %v1251 = vpop.permute.xlu0 %1250
      %1252 = vrot.lane.b32.xlu0 %v1198, 8
      %v1253 = vpop.permute.xlu0 %1252
      %1254 = vrot.lane.b32.xlu0 %v1199, 8
      %v1255 = vpop.permute.xlu0 %1254
      %1256 = vrot.lane.b32.xlu0 %v1200, 8
      %v1257 = vpop.permute.xlu0 %1256
      %1258 = vrot.lane.b32.xlu0 %v1201, 8
      %v1259 = vpop.permute.xlu0 %1258
      %1260 = vrot.lane.b32.xlu0 %v1202, 8
      %v1261 = vpop.permute.xlu0 %1260
      %1262 = vrot.lane.b32.xlu0 %v1203, 8
      %v1263 = vpop.permute.xlu0 %1262
      %1264 = vrot.lane.b32.xlu0 %v1204, 8
      %v1265 = vpop.permute.xlu0 %1264
      %1266 = vrot.lane.b32.xlu0 %v1205, 8
      %v1267 = vpop.permute.xlu0 %1266
      %1268 = vrot.lane.b32.xlu0 %v1206, 8
      %v1269 = vpop.permute.xlu0 %1268
      %1270 = vrot.lane.b32.xlu0 %v1207, 8
      %v1271 = vpop.permute.xlu0 %1270
      %vm1304 = vcmask 126016
      %1305 = vst.msk [vmem:[#allocation5] sm:$0xf] %vm1304, %v1209
      %1306 = vst.msk [vmem:[#allocation5 + $0x4] sm:$0xf] %vm1304, %v1211
      %1307 = vst.msk [vmem:[#allocation5 + $0x8] sm:$0xf] %vm1304, %v1213
      %1308 = vst.msk [vmem:[#allocation5 + $0xc] sm:$0xf] %vm1304, %v1215
      %1309 = vst.msk [vmem:[#allocation5 + $0x10] sm:$0xf] %vm1304, %v1217
      %1310 = vst.msk [vmem:[#allocation5 + $0x14] sm:$0xf] %vm1304, %v1219
      %1311 = vst.msk [vmem:[#allocation5 + $0x18] sm:$0xf] %vm1304, %v1221
      %1312 = vst.msk [vmem:[#allocation5 + $0x1c] sm:$0xf] %vm1304, %v1223
      %1313 = vst.msk [vmem:[#allocation5 + $0x20] sm:$0xf] %vm1304, %v1225
      %1314 = vst.msk [vmem:[#allocation5 + $0x24] sm:$0xf] %vm1304, %v1227
      %1315 = vst.msk [vmem:[#allocation5 + $0x28] sm:$0xf] %vm1304, %v1229
      %1316 = vst.msk [vmem:[#allocation5 + $0x2c] sm:$0xf] %vm1304, %v1231
      %1317 = vst.msk [vmem:[#allocation5 + $0x30] sm:$0xf] %vm1304, %v1233
      %1318 = vst.msk [vmem:[#allocation5 + $0x34] sm:$0xf] %vm1304, %v1235
      %1319 = vst.msk [vmem:[#allocation5 + $0x38] sm:$0xf] %vm1304, %v1237
      %1320 = vst.msk [vmem:[#allocation5 + $0x3c] sm:$0xf] %vm1304, %v1239
      %1321 = vst.msk [vmem:[#allocation5 + $0x40] sm:$0xf] %vm1304, %v1241
      %1322 = vst.msk [vmem:[#allocation5 + $0x44] sm:$0xf] %vm1304, %v1243
      %1323 = vst.msk [vmem:[#allocation5 + $0x48] sm:$0xf] %vm1304, %v1245
      %1324 = vst.msk [vmem:[#allocation5 + $0x4c] sm:$0xf] %vm1304, %v1247
      %1325 = vst.msk [vmem:[#allocation5 + $0x50] sm:$0xf] %vm1304, %v1249
      %1326 = vst.msk [vmem:[#allocation5 + $0x54] sm:$0xf] %vm1304, %v1251
      %1327 = vst.msk [vmem:[#allocation5 + $0x58] sm:$0xf] %vm1304, %v1253
      %1328 = vst.msk [vmem:[#allocation5 + $0x5c] sm:$0xf] %vm1304, %v1255
      %1329 = vst.msk [vmem:[#allocation5 + $0x60] sm:$0xf] %vm1304, %v1257
      %1330 = vst.msk [vmem:[#allocation5 + $0x64] sm:$0xf] %vm1304, %v1259
      %1331 = vst.msk [vmem:[#allocation5 + $0x68] sm:$0xf] %vm1304, %v1261
      %1332 = vst.msk [vmem:[#allocation5 + $0x6c] sm:$0xf] %vm1304, %v1263
      %1333 = vst.msk [vmem:[#allocation5 + $0x70] sm:$0xf] %vm1304, %v1265
      %1334 = vst.msk [vmem:[#allocation5 + $0x74] sm:$0xf] %vm1304, %v1267
      %1335 = vst.msk [vmem:[#allocation5 + $0x78] sm:$0xf] %vm1304, %v1269
      %1336 = vst.msk [vmem:[#allocation5 + $0x7c] sm:$0xf] %vm1304, %v1271
      %v1337 = vld [vmem:[#allocation2 + $0x9] sm:$0xff]
      %v1338 = vld [vmem:[#allocation2 + $0x11] sm:$0xff]
      %v1339 = vld [vmem:[#allocation2 + $0x19] sm:$0xff]
      %v1340 = vld [vmem:[#allocation2 + $0x21] sm:$0xff]
      %v1341 = vld [vmem:[#allocation2 + $0x29] sm:$0xff]
      %v1342 = vld [vmem:[#allocation2 + $0x31] sm:$0xff]
      %v1343 = vld [vmem:[#allocation2 + $0x39] sm:$0xff]
      %v1344 = vld [vmem:[#allocation2 + $0x41] sm:$0xff]
      %v1345 = vld [vmem:[#allocation2 + $0x49] sm:$0xff]
      %v1346 = vld [vmem:[#allocation2 + $0x51] sm:$0xff]
      %v1347 = vld [vmem:[#allocation2 + $0x59] sm:$0xff]
      %v1348 = vld [vmem:[#allocation2 + $0x61] sm:$0xff]
      %v1349 = vld [vmem:[#allocation2 + $0x69] sm:$0xff]
      %v1350 = vld [vmem:[#allocation2 + $0x71] sm:$0xff]
      %v1351 = vld [vmem:[#allocation2 + $0x79] sm:$0xff]
      %v1352 = vld [vmem:[#allocation2 + $0x81] sm:$0xff]
      %v1353 = vld [vmem:[#allocation2 + $0x89] sm:$0xff]
      %v1354 = vld [vmem:[#allocation2 + $0x91] sm:$0xff]
      %v1355 = vld [vmem:[#allocation2 + $0x99] sm:$0xff]
      %v1356 = vld [vmem:[#allocation2 + $0xa1] sm:$0xff]
      %v1357 = vld [vmem:[#allocation2 + $0xa9] sm:$0xff]
      %v1358 = vld [vmem:[#allocation2 + $0xb1] sm:$0xff]
      %v1359 = vld [vmem:[#allocation2 + $0xb9] sm:$0xff]
      %v1360 = vld [vmem:[#allocation2 + $0xc1] sm:$0xff]
      %v1361 = vld [vmem:[#allocation2 + $0xc9] sm:$0xff]
      %v1362 = vld [vmem:[#allocation2 + $0xd1] sm:$0xff]
      %v1363 = vld [vmem:[#allocation2 + $0xd9] sm:$0xff]
      %v1364 = vld [vmem:[#allocation2 + $0xe1] sm:$0xff]
      %v1365 = vld [vmem:[#allocation2 + $0xe9] sm:$0xff]
      %v1366 = vld [vmem:[#allocation2 + $0xf1] sm:$0xff]
      %v1367 = vld [vmem:[#allocation2 + $0xf9] sm:$0xff]
      %v1368 = vld [vmem:[#allocation2 + $0x101] sm:$0xff]
      %v1369 = vsel %vm688, 1, 0
      %v1370 = vsel %vm689, 1, 0
      %v1371 = vsel %vm690, 1, 0
      %v1372 = vsel %vm691, 1, 0
      %v1373 = vsel %vm692, 1, 0
      %v1374 = vsel %vm693, 1, 0
      %v1375 = vsel %vm694, 1, 0
      %v1376 = vsel %vm695, 1, 0
      %v1377 = vsel %vm696, 1, 0
      %v1378 = vsel %vm697, 1, 0
      %v1379 = vsel %vm698, 1, 0
      %v1380 = vsel %vm699, 1, 0
      %v1381 = vsel %vm700, 1, 0
      %v1382 = vsel %vm701, 1, 0
      %v1383 = vsel %vm702, 1, 0
      %v1384 = vsel %vm703, 1, 0
      %v1385 = vsel %vm704, 1, 0
      %v1386 = vsel %vm705, 1, 0
      %v1387 = vsel %vm706, 1, 0
      %v1388 = vsel %vm707, 1, 0
      %v1389 = vsel %vm708, 1, 0
      %v1390 = vsel %vm709, 1, 0
      %v1391 = vsel %vm710, 1, 0
      %v1392 = vsel %vm711, 1, 0
      %v1393 = vsel %vm712, 1, 0
      %v1394 = vsel %vm713, 1, 0
      %v1395 = vsel %vm714, 1, 0
      %v1396 = vsel %vm715, 1, 0
      %v1397 = vsel %vm716, 1, 0
      %v1398 = vsel %vm717, 1, 0
      %v1399 = vsel %vm718, 1, 0
      %v1400 = vsel %vm719, 1, 0
      %vm1401 = vcmp.eq.s32.totalorder %v1369, 1
      %vm1402 = vcmp.eq.s32.totalorder %v1370, 1
      %vm1403 = vcmp.eq.s32.totalorder %v1371, 1
      %vm1404 = vcmp.eq.s32.totalorder %v1372, 1
      %vm1405 = vcmp.eq.s32.totalorder %v1373, 1
      %vm1406 = vcmp.eq.s32.totalorder %v1374, 1
      %vm1407 = vcmp.eq.s32.totalorder %v1375, 1
      %vm1408 = vcmp.eq.s32.totalorder %v1376, 1
      %vm1409 = vcmp.eq.s32.totalorder %v1377, 1
      %vm1410 = vcmp.eq.s32.totalorder %v1378, 1
      %vm1411 = vcmp.eq.s32.totalorder %v1379, 1
      %vm1412 = vcmp.eq.s32.totalorder %v1380, 1
      %vm1413 = vcmp.eq.s32.totalorder %v1381, 1
      %vm1414 = vcmp.eq.s32.totalorder %v1382, 1
      %vm1415 = vcmp.eq.s32.totalorder %v1383, 1
      %vm1416 = vcmp.eq.s32.totalorder %v1384, 1
      %vm1417 = vcmp.eq.s32.totalorder %v1385, 1
      %vm1418 = vcmp.eq.s32.totalorder %v1386, 1
      %vm1419 = vcmp.eq.s32.totalorder %v1387, 1
      %vm1420 = vcmp.eq.s32.totalorder %v1388, 1
      %vm1421 = vcmp.eq.s32.totalorder %v1389, 1
      %vm1422 = vcmp.eq.s32.totalorder %v1390, 1
      %vm1423 = vcmp.eq.s32.totalorder %v1391, 1
      %vm1424 = vcmp.eq.s32.totalorder %v1392, 1
      %vm1425 = vcmp.eq.s32.totalorder %v1393, 1
      %vm1426 = vcmp.eq.s32.totalorder %v1394, 1
      %vm1427 = vcmp.eq.s32.totalorder %v1395, 1
      %vm1428 = vcmp.eq.s32.totalorder %v1396, 1
      %vm1429 = vcmp.eq.s32.totalorder %v1397, 1
      %vm1430 = vcmp.eq.s32.totalorder %v1398, 1
      %vm1431 = vcmp.eq.s32.totalorder %v1399, 1
      %vm1432 = vcmp.eq.s32.totalorder %v1400, 1
      %v1433 = vsel %vm1401, %v1337, 0.0
      %v1434 = vsel %vm1402, %v1338, 0.0
      %v1435 = vsel %vm1403, %v1339, 0.0
      %v1436 = vsel %vm1404, %v1340, 0.0
      %v1437 = vsel %vm1405, %v1341, 0.0
      %v1438 = vsel %vm1406, %v1342, 0.0
      %v1439 = vsel %vm1407, %v1343, 0.0
      %v1440 = vsel %vm1408, %v1344, 0.0
      %v1441 = vsel %vm1409, %v1345, 0.0
      %v1442 = vsel %vm1410, %v1346, 0.0
      %v1443 = vsel %vm1411, %v1347, 0.0
      %v1444 = vsel %vm1412, %v1348, 0.0
      %v1445 = vsel %vm1413, %v1349, 0.0
      %v1446 = vsel %vm1414, %v1350, 0.0
      %v1447 = vsel %vm1415, %v1351, 0.0
      %v1448 = vsel %vm1416, %v1352, 0.0
      %v1449 = vsel %vm1417, %v1353, 0.0
      %v1450 = vsel %vm1418, %v1354, 0.0
      %v1451 = vsel %vm1419, %v1355, 0.0
      %v1452 = vsel %vm1420, %v1356, 0.0
      %v1453 = vsel %vm1421, %v1357, 0.0
      %v1454 = vsel %vm1422, %v1358, 0.0
      %v1455 = vsel %vm1423, %v1359, 0.0
      %v1456 = vsel %vm1424, %v1360, 0.0
      %v1457 = vsel %vm1425, %v1361, 0.0
      %v1458 = vsel %vm1426, %v1362, 0.0
      %v1459 = vsel %vm1427, %v1363, 0.0
      %v1460 = vsel %vm1428, %v1364, 0.0
      %v1461 = vsel %vm1429, %v1365, 0.0
      %v1462 = vsel %vm1430, %v1366, 0.0
      %v1463 = vsel %vm1431, %v1367, 0.0
      %v1464 = vsel %vm1432, %v1368, 0.0
      %v1465 = vpack.c.bf16 %v1434, %v1433
      %v1466 = vpack.c.bf16 %v1436, %v1435
      %v1467 = vpack.c.bf16 %v1438, %v1437
      %v1468 = vpack.c.bf16 %v1440, %v1439
      %v1469 = vpack.c.bf16 %v1442, %v1441
      %v1470 = vpack.c.bf16 %v1444, %v1443
      %v1471 = vpack.c.bf16 %v1446, %v1445
      %v1472 = vpack.c.bf16 %v1448, %v1447
      %v1473 = vpack.c.bf16 %v1450, %v1449
      %v1474 = vpack.c.bf16 %v1452, %v1451
      %v1475 = vpack.c.bf16 %v1454, %v1453
      %v1476 = vpack.c.bf16 %v1456, %v1455
      %v1477 = vpack.c.bf16 %v1458, %v1457
      %v1478 = vpack.c.bf16 %v1460, %v1459
      %v1479 = vpack.c.bf16 %v1462, %v1461
      %v1480 = vpack.c.bf16 %v1464, %v1463
      %v1497 = vunpack.c.l.b16 %v1465
      %v1498 = vunpack.c.h.b16 %v1465
      %v1499 = vunpack.c.l.b16 %v1466
      %v1500 = vunpack.c.h.b16 %v1466
      %v1501 = vunpack.c.l.b16 %v1467
      %v1502 = vunpack.c.h.b16 %v1467
      %v1503 = vunpack.c.l.b16 %v1468
      %v1504 = vunpack.c.h.b16 %v1468
      %v1505 = vunpack.c.l.b16 %v1469
      %v1506 = vunpack.c.h.b16 %v1469
      %v1507 = vunpack.c.l.b16 %v1470
      %v1508 = vunpack.c.h.b16 %v1470
      %v1509 = vunpack.c.l.b16 %v1471
      %v1510 = vunpack.c.h.b16 %v1471
      %v1511 = vunpack.c.l.b16 %v1472
      %v1512 = vunpack.c.h.b16 %v1472
      %v1513 = vunpack.c.l.b16 %v1473
      %v1514 = vunpack.c.h.b16 %v1473
      %v1515 = vunpack.c.l.b16 %v1474
      %v1516 = vunpack.c.h.b16 %v1474
      %v1517 = vunpack.c.l.b16 %v1475
      %v1518 = vunpack.c.h.b16 %v1475
      %v1519 = vunpack.c.l.b16 %v1476
      %v1520 = vunpack.c.h.b16 %v1476
      %v1521 = vunpack.c.l.b16 %v1477
      %v1522 = vunpack.c.h.b16 %v1477
      %v1523 = vunpack.c.l.b16 %v1478
      %v1524 = vunpack.c.h.b16 %v1478
      %v1525 = vunpack.c.l.b16 %v1479
      %v1526 = vunpack.c.h.b16 %v1479
      %v1527 = vunpack.c.l.b16 %v1480
      %v1528 = vunpack.c.h.b16 %v1480
      %v1529 = vpack.c.b16 %v1497, %v1497
      %v1530 = vpack.c.b16 %v1498, %v1498
      %v1531 = vpack.c.b16 %v1499, %v1499
      %v1532 = vpack.c.b16 %v1500, %v1500
      %v1533 = vpack.c.b16 %v1501, %v1501
      %v1534 = vpack.c.b16 %v1502, %v1502
      %v1535 = vpack.c.b16 %v1503, %v1503
      %v1536 = vpack.c.b16 %v1504, %v1504
      %v1537 = vpack.c.b16 %v1505, %v1505
      %v1538 = vpack.c.b16 %v1506, %v1506
      %v1539 = vpack.c.b16 %v1507, %v1507
      %v1540 = vpack.c.b16 %v1508, %v1508
      %v1541 = vpack.c.b16 %v1509, %v1509
      %v1542 = vpack.c.b16 %v1510, %v1510
      %v1543 = vpack.c.b16 %v1511, %v1511
      %v1544 = vpack.c.b16 %v1512, %v1512
      %v1545 = vpack.c.b16 %v1513, %v1513
      %v1546 = vpack.c.b16 %v1514, %v1514
      %v1547 = vpack.c.b16 %v1515, %v1515
      %v1548 = vpack.c.b16 %v1516, %v1516
      %v1549 = vpack.c.b16 %v1517, %v1517
      %v1550 = vpack.c.b16 %v1518, %v1518
      %v1551 = vpack.c.b16 %v1519, %v1519
      %v1552 = vpack.c.b16 %v1520, %v1520
      %v1553 = vpack.c.b16 %v1521, %v1521
      %v1554 = vpack.c.b16 %v1522, %v1522
      %v1555 = vpack.c.b16 %v1523, %v1523
      %v1556 = vpack.c.b16 %v1524, %v1524
      %v1557 = vpack.c.b16 %v1525, %v1525
      %v1558 = vpack.c.b16 %v1526, %v1526
      %v1559 = vpack.c.b16 %v1527, %v1527
      %v1560 = vpack.c.b16 %v1528, %v1528
      %1561 = vrot.lane.b32.xlu0 %v1529, 16
      %v1562 = vpop.permute.xlu0 %1561
      %1563 = vrot.lane.b32.xlu0 %v1530, 16
      %v1564 = vpop.permute.xlu0 %1563
      %1565 = vrot.lane.b32.xlu0 %v1531, 16
      %v1566 = vpop.permute.xlu0 %1565
      %1567 = vrot.lane.b32.xlu0 %v1532, 16
      %v1568 = vpop.permute.xlu0 %1567
      %1569 = vrot.lane.b32.xlu0 %v1533, 16
      %v1570 = vpop.permute.xlu0 %1569
      %1571 = vrot.lane.b32.xlu0 %v1534, 16
      %v1572 = vpop.permute.xlu0 %1571
      %1573 = vrot.lane.b32.xlu0 %v1535, 16
      %v1574 = vpop.permute.xlu0 %1573
      %1575 = vrot.lane.b32.xlu0 %v1536, 16
      %v1576 = vpop.permute.xlu0 %1575
      %1577 = vrot.lane.b32.xlu0 %v1537, 16
      %v1578 = vpop.permute.xlu0 %1577
      %1579 = vrot.lane.b32.xlu0 %v1538, 16
      %v1580 = vpop.permute.xlu0 %1579
      %1581 = vrot.lane.b32.xlu0 %v1539, 16
      %v1582 = vpop.permute.xlu0 %1581
      %1583 = vrot.lane.b32.xlu0 %v1540, 16
      %v1584 = vpop.permute.xlu0 %1583
      %1585 = vrot.lane.b32.xlu0 %v1541, 16
      %v1586 = vpop.permute.xlu0 %1585
      %1587 = vrot.lane.b32.xlu0 %v1542, 16
      %v1588 = vpop.permute.xlu0 %1587
      %1589 = vrot.lane.b32.xlu0 %v1543, 16
      %v1590 = vpop.permute.xlu0 %1589
      %1591 = vrot.lane.b32.xlu0 %v1544, 16
      %v1592 = vpop.permute.xlu0 %1591
      %1593 = vrot.lane.b32.xlu0 %v1545, 16
      %v1594 = vpop.permute.xlu0 %1593
      %1595 = vrot.lane.b32.xlu0 %v1546, 16
      %v1596 = vpop.permute.xlu0 %1595
      %1597 = vrot.lane.b32.xlu0 %v1547, 16
      %v1598 = vpop.permute.xlu0 %1597
      %1599 = vrot.lane.b32.xlu0 %v1548, 16
      %v1600 = vpop.permute.xlu0 %1599
      %1601 = vrot.lane.b32.xlu0 %v1549, 16
      %v1602 = vpop.permute.xlu0 %1601
      %1603 = vrot.lane.b32.xlu0 %v1550, 16
      %v1604 = vpop.permute.xlu0 %1603
      %1605 = vrot.lane.b32.xlu0 %v1551, 16
      %v1606 = vpop.permute.xlu0 %1605
      %1607 = vrot.lane.b32.xlu0 %v1552, 16
      %v1608 = vpop.permute.xlu0 %1607
      %1609 = vrot.lane.b32.xlu0 %v1553, 16
      %v1610 = vpop.permute.xlu0 %1609
      %1611 = vrot.lane.b32.xlu0 %v1554, 16
      %v1612 = vpop.permute.xlu0 %1611
      %1613 = vrot.lane.b32.xlu0 %v1555, 16
      %v1614 = vpop.permute.xlu0 %1613
      %1615 = vrot.lane.b32.xlu0 %v1556, 16
      %v1616 = vpop.permute.xlu0 %1615
      %1617 = vrot.lane.b32.xlu0 %v1557, 16
      %v1618 = vpop.permute.xlu0 %1617
      %1619 = vrot.lane.b32.xlu0 %v1558, 16
      %v1620 = vpop.permute.xlu0 %1619
      %1621 = vrot.lane.b32.xlu0 %v1559, 16
      %v1622 = vpop.permute.xlu0 %1621
      %1623 = vrot.lane.b32.xlu0 %v1560, 16
      %v1624 = vpop.permute.xlu0 %1623
      %vm1657 = vcmask 191616
      %1658 = vst.msk [vmem:[#allocation5] sm:$0xf] %vm1657, %v1562
      %1659 = vst.msk [vmem:[#allocation5 + $0x4] sm:$0xf] %vm1657, %v1564
      %1660 = vst.msk [vmem:[#allocation5 + $0x8] sm:$0xf] %vm1657, %v1566
      %1661 = vst.msk [vmem:[#allocation5 + $0xc] sm:$0xf] %vm1657, %v1568
      %1662 = vst.msk [vmem:[#allocation5 + $0x10] sm:$0xf] %vm1657, %v1570
      %1663 = vst.msk [vmem:[#allocation5 + $0x14] sm:$0xf] %vm1657, %v1572
      %1664 = vst.msk [vmem:[#allocation5 + $0x18] sm:$0xf] %vm1657, %v1574
      %1665 = vst.msk [vmem:[#allocation5 + $0x1c] sm:$0xf] %vm1657, %v1576
      %1666 = vst.msk [vmem:[#allocation5 + $0x20] sm:$0xf] %vm1657, %v1578
      %1667 = vst.msk [vmem:[#allocation5 + $0x24] sm:$0xf] %vm1657, %v1580
      %1668 = vst.msk [vmem:[#allocation5 + $0x28] sm:$0xf] %vm1657, %v1582
      %1669 = vst.msk [vmem:[#allocation5 + $0x2c] sm:$0xf] %vm1657, %v1584
      %1670 = vst.msk [vmem:[#allocation5 + $0x30] sm:$0xf] %vm1657, %v1586
      %1671 = vst.msk [vmem:[#allocation5 + $0x34] sm:$0xf] %vm1657, %v1588
      %1672 = vst.msk [vmem:[#allocation5 + $0x38] sm:$0xf] %vm1657, %v1590
      %1673 = vst.msk [vmem:[#allocation5 + $0x3c] sm:$0xf] %vm1657, %v1592
      %1674 = vst.msk [vmem:[#allocation5 + $0x40] sm:$0xf] %vm1657, %v1594
      %1675 = vst.msk [vmem:[#allocation5 + $0x44] sm:$0xf] %vm1657, %v1596
      %1676 = vst.msk [vmem:[#allocation5 + $0x48] sm:$0xf] %vm1657, %v1598
      %1677 = vst.msk [vmem:[#allocation5 + $0x4c] sm:$0xf] %vm1657, %v1600
      %1678 = vst.msk [vmem:[#allocation5 + $0x50] sm:$0xf] %vm1657, %v1602
      %1679 = vst.msk [vmem:[#allocation5 + $0x54] sm:$0xf] %vm1657, %v1604
      %1680 = vst.msk [vmem:[#allocation5 + $0x58] sm:$0xf] %vm1657, %v1606
      %1681 = vst.msk [vmem:[#allocation5 + $0x5c] sm:$0xf] %vm1657, %v1608
      %1682 = vst.msk [vmem:[#allocation5 + $0x60] sm:$0xf] %vm1657, %v1610
      %1683 = vst.msk [vmem:[#allocation5 + $0x64] sm:$0xf] %vm1657, %v1612
      %1684 = vst.msk [vmem:[#allocation5 + $0x68] sm:$0xf] %vm1657, %v1614
      %1685 = vst.msk [vmem:[#allocation5 + $0x6c] sm:$0xf] %vm1657, %v1616
      %1686 = vst.msk [vmem:[#allocation5 + $0x70] sm:$0xf] %vm1657, %v1618
      %1687 = vst.msk [vmem:[#allocation5 + $0x74] sm:$0xf] %vm1657, %v1620
      %1688 = vst.msk [vmem:[#allocation5 + $0x78] sm:$0xf] %vm1657, %v1622
      %1689 = vst.msk [vmem:[#allocation5 + $0x7c] sm:$0xf] %vm1657, %v1624
      %v1690 = vld [vmem:[#allocation2 + $0x17] sm:$0xff]
      %v1691 = vld [vmem:[#allocation2 + $0x1f] sm:$0xff]
      %v1692 = vld [vmem:[#allocation2 + $0x27] sm:$0xff]
      %v1693 = vld [vmem:[#allocation2 + $0x2f] sm:$0xff]
      %v1694 = vld [vmem:[#allocation2 + $0x37] sm:$0xff]
      %v1695 = vld [vmem:[#allocation2 + $0x3f] sm:$0xff]
      %v1696 = vld [vmem:[#allocation2 + $0x47] sm:$0xff]
      %v1697 = vld [vmem:[#allocation2 + $0x4f] sm:$0xff]
      %v1698 = vld [vmem:[#allocation2 + $0x57] sm:$0xff]
      %v1699 = vld [vmem:[#allocation2 + $0x5f] sm:$0xff]
      %v1700 = vld [vmem:[#allocation2 + $0x67] sm:$0xff]
      %v1701 = vld [vmem:[#allocation2 + $0x6f] sm:$0xff]
      %v1702 = vld [vmem:[#allocation2 + $0x77] sm:$0xff]
      %v1703 = vld [vmem:[#allocation2 + $0x7f] sm:$0xff]
      %v1704 = vld [vmem:[#allocation2 + $0x87] sm:$0xff]
      %v1705 = vld [vmem:[#allocation2 + $0x8f] sm:$0xff]
      %v1706 = vld [vmem:[#allocation2 + $0x97] sm:$0xff]
      %v1707 = vld [vmem:[#allocation2 + $0x9f] sm:$0xff]
      %v1708 = vld [vmem:[#allocation2 + $0xa7] sm:$0xff]
      %v1709 = vld [vmem:[#allocation2 + $0xaf] sm:$0xff]
      %v1710 = vld [vmem:[#allocation2 + $0xb7] sm:$0xff]
      %v1711 = vld [vmem:[#allocation2 + $0xbf] sm:$0xff]
      %v1712 = vld [vmem:[#allocation2 + $0xc7] sm:$0xff]
      %v1713 = vld [vmem:[#allocation2 + $0xcf] sm:$0xff]
      %v1714 = vld [vmem:[#allocation2 + $0xd7] sm:$0xff]
      %v1715 = vld [vmem:[#allocation2 + $0xdf] sm:$0xff]
      %v1716 = vld [vmem:[#allocation2 + $0xe7] sm:$0xff]
      %v1717 = vld [vmem:[#allocation2 + $0xef] sm:$0xff]
      %v1718 = vld [vmem:[#allocation2 + $0xf7] sm:$0xff]
      %v1719 = vld [vmem:[#allocation2 + $0xff] sm:$0xff]
      %v1720 = vld [vmem:[#allocation2 + $0x107] sm:$0xff]
      %v1721 = vld [vmem:[#allocation2 + $0x10f] sm:$0xff]
      %v1722 = vsel %vm855, %v1690, 0.0
      %v1723 = vsel %vm856, %v1691, 0.0
      %v1724 = vsel %vm857, %v1692, 0.0
      %v1725 = vsel %vm858, %v1693, 0.0
      %v1726 = vsel %vm859, %v1694, 0.0
      %v1727 = vsel %vm860, %v1695, 0.0
      %v1728 = vsel %vm861, %v1696, 0.0
      %v1729 = vsel %vm862, %v1697, 0.0
      %v1730 = vsel %vm863, %v1698, 0.0
      %v1731 = vsel %vm864, %v1699, 0.0
      %v1732 = vsel %vm865, %v1700, 0.0
      %v1733 = vsel %vm866, %v1701, 0.0
      %v1734 = vsel %vm867, %v1702, 0.0
      %v1735 = vsel %vm868, %v1703, 0.0
      %v1736 = vsel %vm869, %v1704, 0.0
      %v1737 = vsel %vm870, %v1705, 0.0
      %v1738 = vsel %vm871, %v1706, 0.0
      %v1739 = vsel %vm872, %v1707, 0.0
      %v1740 = vsel %vm873, %v1708, 0.0
      %v1741 = vsel %vm874, %v1709, 0.0
      %v1742 = vsel %vm875, %v1710, 0.0
      %v1743 = vsel %vm876, %v1711, 0.0
      %v1744 = vsel %vm877, %v1712, 0.0
      %v1745 = vsel %vm878, %v1713, 0.0
      %v1746 = vsel %vm879, %v1714, 0.0
      %v1747 = vsel %vm880, %v1715, 0.0
      %v1748 = vsel %vm881, %v1716, 0.0
      %v1749 = vsel %vm882, %v1717, 0.0
      %v1750 = vsel %vm883, %v1718, 0.0
      %v1751 = vsel %vm884, %v1719, 0.0
      %v1752 = vsel %vm885, %v1720, 0.0
      %v1753 = vsel %vm886, %v1721, 0.0
      %v1754 = vpack.c.bf16 %v1723, %v1722
      %v1755 = vpack.c.bf16 %v1725, %v1724
      %v1756 = vpack.c.bf16 %v1727, %v1726
      %v1757 = vpack.c.bf16 %v1729, %v1728
      %v1758 = vpack.c.bf16 %v1731, %v1730
      %v1759 = vpack.c.bf16 %v1733, %v1732
      %v1760 = vpack.c.bf16 %v1735, %v1734
      %v1761 = vpack.c.bf16 %v1737, %v1736
      %v1762 = vpack.c.bf16 %v1739, %v1738
      %v1763 = vpack.c.bf16 %v1741, %v1740
      %v1764 = vpack.c.bf16 %v1743, %v1742
      %v1765 = vpack.c.bf16 %v1745, %v1744
      %v1766 = vpack.c.bf16 %v1747, %v1746
      %v1767 = vpack.c.bf16 %v1749, %v1748
      %v1768 = vpack.c.bf16 %v1751, %v1750
      %v1769 = vpack.c.bf16 %v1753, %v1752
      %v1786 = vunpack.c.l.b16 %v1754
      %v1787 = vunpack.c.h.b16 %v1754
      %v1788 = vunpack.c.l.b16 %v1755
      %v1789 = vunpack.c.h.b16 %v1755
      %v1790 = vunpack.c.l.b16 %v1756
      %v1791 = vunpack.c.h.b16 %v1756
      %v1792 = vunpack.c.l.b16 %v1757
      %v1793 = vunpack.c.h.b16 %v1757
      %v1794 = vunpack.c.l.b16 %v1758
      %v1795 = vunpack.c.h.b16 %v1758
      %v1796 = vunpack.c.l.b16 %v1759
      %v1797 = vunpack.c.h.b16 %v1759
      %v1798 = vunpack.c.l.b16 %v1760
      %v1799 = vunpack.c.h.b16 %v1760
      %v1800 = vunpack.c.l.b16 %v1761
      %v1801 = vunpack.c.h.b16 %v1761
      %v1802 = vunpack.c.l.b16 %v1762
      %v1803 = vunpack.c.h.b16 %v1762
      %v1804 = vunpack.c.l.b16 %v1763
      %v1805 = vunpack.c.h.b16 %v1763
      %v1806 = vunpack.c.l.b16 %v1764
      %v1807 = vunpack.c.h.b16 %v1764
      %v1808 = vunpack.c.l.b16 %v1765
      %v1809 = vunpack.c.h.b16 %v1765
      %v1810 = vunpack.c.l.b16 %v1766
      %v1811 = vunpack.c.h.b16 %v1766
      %v1812 = vunpack.c.l.b16 %v1767
      %v1813 = vunpack.c.h.b16 %v1767
      %v1814 = vunpack.c.l.b16 %v1768
      %v1815 = vunpack.c.h.b16 %v1768
      %v1816 = vunpack.c.l.b16 %v1769
      %v1817 = vunpack.c.h.b16 %v1769
      %v1818 = vpack.c.b16 %v1786, %v1786
      %v1819 = vpack.c.b16 %v1787, %v1787
      %v1820 = vpack.c.b16 %v1788, %v1788
      %v1821 = vpack.c.b16 %v1789, %v1789
      %v1822 = vpack.c.b16 %v1790, %v1790
      %v1823 = vpack.c.b16 %v1791, %v1791
      %v1824 = vpack.c.b16 %v1792, %v1792
      %v1825 = vpack.c.b16 %v1793, %v1793
      %v1826 = vpack.c.b16 %v1794, %v1794
      %v1827 = vpack.c.b16 %v1795, %v1795
      %v1828 = vpack.c.b16 %v1796, %v1796
      %v1829 = vpack.c.b16 %v1797, %v1797
      %v1830 = vpack.c.b16 %v1798, %v1798
      %v1831 = vpack.c.b16 %v1799, %v1799
      %v1832 = vpack.c.b16 %v1800, %v1800
      %v1833 = vpack.c.b16 %v1801, %v1801
      %v1834 = vpack.c.b16 %v1802, %v1802
      %v1835 = vpack.c.b16 %v1803, %v1803
      %v1836 = vpack.c.b16 %v1804, %v1804
      %v1837 = vpack.c.b16 %v1805, %v1805
      %v1838 = vpack.c.b16 %v1806, %v1806
      %v1839 = vpack.c.b16 %v1807, %v1807
      %v1840 = vpack.c.b16 %v1808, %v1808
      %v1841 = vpack.c.b16 %v1809, %v1809
      %v1842 = vpack.c.b16 %v1810, %v1810
      %v1843 = vpack.c.b16 %v1811, %v1811
      %v1844 = vpack.c.b16 %v1812, %v1812
      %v1845 = vpack.c.b16 %v1813, %v1813
      %v1846 = vpack.c.b16 %v1814, %v1814
      %v1847 = vpack.c.b16 %v1815, %v1815
      %v1848 = vpack.c.b16 %v1816, %v1816
      %v1849 = vpack.c.b16 %v1817, %v1817
      %1850 = vrot.lane.b32.xlu0 %v1818, 24
      %v1851 = vpop.permute.xlu0 %1850
      %1852 = vrot.lane.b32.xlu0 %v1819, 24
      %v1853 = vpop.permute.xlu0 %1852
      %1854 = vrot.lane.b32.xlu0 %v1820, 24
      %v1855 = vpop.permute.xlu0 %1854
      %1856 = vrot.lane.b32.xlu0 %v1821, 24
      %v1857 = vpop.permute.xlu0 %1856
      %1858 = vrot.lane.b32.xlu0 %v1822, 24
      %v1859 = vpop.permute.xlu0 %1858
      %1860 = vrot.lane.b32.xlu0 %v1823, 24
      %v1861 = vpop.permute.xlu0 %1860
      %1862 = vrot.lane.b32.xlu0 %v1824, 24
      %v1863 = vpop.permute.xlu0 %1862
      %1864 = vrot.lane.b32.xlu0 %v1825, 24
      %v1865 = vpop.permute.xlu0 %1864
      %1866 = vrot.lane.b32.xlu0 %v1826, 24
      %v1867 = vpop.permute.xlu0 %1866
      %1868 = vrot.lane.b32.xlu0 %v1827, 24
      %v1869 = vpop.permute.xlu0 %1868
      %1870 = vrot.lane.b32.xlu0 %v1828, 24
      %v1871 = vpop.permute.xlu0 %1870
      %1872 = vrot.lane.b32.xlu0 %v1829, 24
      %v1873 = vpop.permute.xlu0 %1872
      %1874 = vrot.lane.b32.xlu0 %v1830, 24
      %v1875 = vpop.permute.xlu0 %1874
      %1876 = vrot.lane.b32.xlu0 %v1831, 24
      %v1877 = vpop.permute.xlu0 %1876
      %1878 = vrot.lane.b32.xlu0 %v1832, 24
      %v1879 = vpop.permute.xlu0 %1878
      %1880 = vrot.lane.b32.xlu0 %v1833, 24
      %v1881 = vpop.permute.xlu0 %1880
      %1882 = vrot.lane.b32.xlu0 %v1834, 24
      %v1883 = vpop.permute.xlu0 %1882
      %1884 = vrot.lane.b32.xlu0 %v1835, 24
      %v1885 = vpop.permute.xlu0 %1884
      %1886 = vrot.lane.b32.xlu0 %v1836, 24
      %v1887 = vpop.permute.xlu0 %1886
      %1888 = vrot.lane.b32.xlu0 %v1837, 24
      %v1889 = vpop.permute.xlu0 %1888
      %1890 = vrot.lane.b32.xlu0 %v1838, 24
      %v1891 = vpop.permute.xlu0 %1890
      %1892 = vrot.lane.b32.xlu0 %v1839, 24
      %v1893 = vpop.permute.xlu0 %1892
      %1894 = vrot.lane.b32.xlu0 %v1840, 24
      %v1895 = vpop.permute.xlu0 %1894
      %1896 = vrot.lane.b32.xlu0 %v1841, 24
      %v1897 = vpop.permute.xlu0 %1896
      %1898 = vrot.lane.b32.xlu0 %v1842, 24
      %v1899 = vpop.permute.xlu0 %1898
      %1900 = vrot.lane.b32.xlu0 %v1843, 24
      %v1901 = vpop.permute.xlu0 %1900
      %1902 = vrot.lane.b32.xlu0 %v1844, 24
      %v1903 = vpop.permute.xlu0 %1902
      %1904 = vrot.lane.b32.xlu0 %v1845, 24
      %v1905 = vpop.permute.xlu0 %1904
      %1906 = vrot.lane.b32.xlu0 %v1846, 24
      %v1907 = vpop.permute.xlu0 %1906
      %1908 = vrot.lane.b32.xlu0 %v1847, 24
      %v1909 = vpop.permute.xlu0 %1908
      %1910 = vrot.lane.b32.xlu0 %v1848, 24
      %v1911 = vpop.permute.xlu0 %1910
      %1912 = vrot.lane.b32.xlu0 %v1849, 24
      %v1913 = vpop.permute.xlu0 %1912
      %vm1946 = vcmask 257216
      %1947 = vst.msk [vmem:[#allocation5] sm:$0xf] %vm1946, %v1851
      %1948 = vst.msk [vmem:[#allocation5 + $0x4] sm:$0xf] %vm1946, %v1853
      %1949 = vst.msk [vmem:[#allocation5 + $0x8] sm:$0xf] %vm1946, %v1855
      %1950 = vst.msk [vmem:[#allocation5 + $0xc] sm:$0xf] %vm1946, %v1857
      %1951 = vst.msk [vmem:[#allocation5 + $0x10] sm:$0xf] %vm1946, %v1859
      %1952 = vst.msk [vmem:[#allocation5 + $0x14] sm:$0xf] %vm1946, %v1861
      %1953 = vst.msk [vmem:[#allocation5 + $0x18] sm:$0xf] %vm1946, %v1863
      %1954 = vst.msk [vmem:[#allocation5 + $0x1c] sm:$0xf] %vm1946, %v1865
      %1955 = vst.msk [vmem:[#allocation5 + $0x20] sm:$0xf] %vm1946, %v1867
      %1956 = vst.msk [vmem:[#allocation5 + $0x24] sm:$0xf] %vm1946, %v1869
      %1957 = vst.msk [vmem:[#allocation5 + $0x28] sm:$0xf] %vm1946, %v1871
      %1958 = vst.msk [vmem:[#allocation5 + $0x2c] sm:$0xf] %vm1946, %v1873
      %1959 = vst.msk [vmem:[#allocation5 + $0x30] sm:$0xf] %vm1946, %v1875
      %1960 = vst.msk [vmem:[#allocation5 + $0x34] sm:$0xf] %vm1946, %v1877
      %1961 = vst.msk [vmem:[#allocation5 + $0x38] sm:$0xf] %vm1946, %v1879
      %1962 = vst.msk [vmem:[#allocation5 + $0x3c] sm:$0xf] %vm1946, %v1881
      %1963 = vst.msk [vmem:[#allocation5 + $0x40] sm:$0xf] %vm1946, %v1883
      %1964 = vst.msk [vmem:[#allocation5 + $0x44] sm:$0xf] %vm1946, %v1885
      %1965 = vst.msk [vmem:[#allocation5 + $0x48] sm:$0xf] %vm1946, %v1887
      %1966 = vst.msk [vmem:[#allocation5 + $0x4c] sm:$0xf] %vm1946, %v1889
      %1967 = vst.msk [vmem:[#allocation5 + $0x50] sm:$0xf] %vm1946, %v1891
      %1968 = vst.msk [vmem:[#allocation5 + $0x54] sm:$0xf] %vm1946, %v1893
      %1969 = vst.msk [vmem:[#allocation5 + $0x58] sm:$0xf] %vm1946, %v1895
      %1970 = vst.msk [vmem:[#allocation5 + $0x5c] sm:$0xf] %vm1946, %v1897
      %1971 = vst.msk [vmem:[#allocation5 + $0x60] sm:$0xf] %vm1946, %v1899
      %1972 = vst.msk [vmem:[#allocation5 + $0x64] sm:$0xf] %vm1946, %v1901
      %1973 = vst.msk [vmem:[#allocation5 + $0x68] sm:$0xf] %vm1946, %v1903
      %1974 = vst.msk [vmem:[#allocation5 + $0x6c] sm:$0xf] %vm1946, %v1905
      %1975 = vst.msk [vmem:[#allocation5 + $0x70] sm:$0xf] %vm1946, %v1907
      %1976 = vst.msk [vmem:[#allocation5 + $0x74] sm:$0xf] %vm1946, %v1909
      %1977 = vst.msk [vmem:[#allocation5 + $0x78] sm:$0xf] %vm1946, %v1911
      %1978 = vst.msk [vmem:[#allocation5 + $0x7c] sm:$0xf] %vm1946, %v1913
      %v1979 = vld [vmem:[#allocation2 + $0x18] sm:$0xff]
      %v1980 = vld [vmem:[#allocation2 + $0x20] sm:$0xff]
      %v1981 = vld [vmem:[#allocation2 + $0x28] sm:$0xff]
      %v1982 = vld [vmem:[#allocation2 + $0x30] sm:$0xff]
      %v1983 = vld [vmem:[#allocation2 + $0x38] sm:$0xff]
      %v1984 = vld [vmem:[#allocation2 + $0x40] sm:$0xff]
      %v1985 = vld [vmem:[#allocation2 + $0x48] sm:$0xff]
      %v1986 = vld [vmem:[#allocation2 + $0x50] sm:$0xff]
      %v1987 = vld [vmem:[#allocation2 + $0x58] sm:$0xff]
      %v1988 = vld [vmem:[#allocation2 + $0x60] sm:$0xff]
      %v1989 = vld [vmem:[#allocation2 + $0x68] sm:$0xff]
      %v1990 = vld [vmem:[#allocation2 + $0x70] sm:$0xff]
      %v1991 = vld [vmem:[#allocation2 + $0x78] sm:$0xff]
      %v1992 = vld [vmem:[#allocation2 + $0x80] sm:$0xff]
      %v1993 = vld [vmem:[#allocation2 + $0x88] sm:$0xff]
      %v1994 = vld [vmem:[#allocation2 + $0x90] sm:$0xff]
      %v1995 = vld [vmem:[#allocation2 + $0x98] sm:$0xff]
      %v1996 = vld [vmem:[#allocation2 + $0xa0] sm:$0xff]
      %v1997 = vld [vmem:[#allocation2 + $0xa8] sm:$0xff]
      %v1998 = vld [vmem:[#allocation2 + $0xb0] sm:$0xff]
      %v1999 = vld [vmem:[#allocation2 + $0xb8] sm:$0xff]
      %v2000 = vld [vmem:[#allocation2 + $0xc0] sm:$0xff]
      %v2001 = vld [vmem:[#allocation2 + $0xc8] sm:$0xff]
      %v2002 = vld [vmem:[#allocation2 + $0xd0] sm:$0xff]
      %v2003 = vld [vmem:[#allocation2 + $0xd8] sm:$0xff]
      %v2004 = vld [vmem:[#allocation2 + $0xe0] sm:$0xff]
      %v2005 = vld [vmem:[#allocation2 + $0xe8] sm:$0xff]
      %v2006 = vld [vmem:[#allocation2 + $0xf0] sm:$0xff]
      %v2007 = vld [vmem:[#allocation2 + $0xf8] sm:$0xff]
      %v2008 = vld [vmem:[#allocation2 + $0x100] sm:$0xff]
      %v2009 = vld [vmem:[#allocation2 + $0x108] sm:$0xff]
      %v2010 = vld [vmem:[#allocation2 + $0x110] sm:$0xff]
      %v2011 = vpack.c.bf16 %v1980, %v1979
      %v2012 = vpack.c.bf16 %v1982, %v1981
      %v2013 = vpack.c.bf16 %v1984, %v1983
      %v2014 = vpack.c.bf16 %v1986, %v1985
      %v2015 = vpack.c.bf16 %v1988, %v1987
      %v2016 = vpack.c.bf16 %v1990, %v1989
      %v2017 = vpack.c.bf16 %v1992, %v1991
      %v2018 = vpack.c.bf16 %v1994, %v1993
      %v2019 = vpack.c.bf16 %v1996, %v1995
      %v2020 = vpack.c.bf16 %v1998, %v1997
      %v2021 = vpack.c.bf16 %v2000, %v1999
      %v2022 = vpack.c.bf16 %v2002, %v2001
      %v2023 = vpack.c.bf16 %v2004, %v2003
      %v2024 = vpack.c.bf16 %v2006, %v2005
      %v2025 = vpack.c.bf16 %v2008, %v2007
      %v2026 = vpack.c.bf16 %v2010, %v2009
      %v2043 = vunpack.c.l.b16 %v2011
      %v2044 = vunpack.c.h.b16 %v2011
      %v2045 = vunpack.c.l.b16 %v2012
      %v2046 = vunpack.c.h.b16 %v2012
      %v2047 = vunpack.c.l.b16 %v2013
      %v2048 = vunpack.c.h.b16 %v2013
      %v2049 = vunpack.c.l.b16 %v2014
      %v2050 = vunpack.c.h.b16 %v2014
      %v2051 = vunpack.c.l.b16 %v2015
      %v2052 = vunpack.c.h.b16 %v2015
      %v2053 = vunpack.c.l.b16 %v2016
      %v2054 = vunpack.c.h.b16 %v2016
      %v2055 = vunpack.c.l.b16 %v2017
      %v2056 = vunpack.c.h.b16 %v2017
      %v2057 = vunpack.c.l.b16 %v2018
      %v2058 = vunpack.c.h.b16 %v2018
      %v2059 = vunpack.c.l.b16 %v2019
      %v2060 = vunpack.c.h.b16 %v2019
      %v2061 = vunpack.c.l.b16 %v2020
      %v2062 = vunpack.c.h.b16 %v2020
      %v2063 = vunpack.c.l.b16 %v2021
      %v2064 = vunpack.c.h.b16 %v2021
      %v2065 = vunpack.c.l.b16 %v2022
      %v2066 = vunpack.c.h.b16 %v2022
      %v2067 = vunpack.c.l.b16 %v2023
      %v2068 = vunpack.c.h.b16 %v2023
      %v2069 = vunpack.c.l.b16 %v2024
      %v2070 = vunpack.c.h.b16 %v2024
      %v2071 = vunpack.c.l.b16 %v2025
      %v2072 = vunpack.c.h.b16 %v2025
      %v2073 = vunpack.c.l.b16 %v2026
      %v2074 = vunpack.c.h.b16 %v2026
      %v2075 = vpack.c.b16 %v2043, %v2043
      %v2076 = vpack.c.b16 %v2044, %v2044
      %v2077 = vpack.c.b16 %v2045, %v2045
      %v2078 = vpack.c.b16 %v2046, %v2046
      %v2079 = vpack.c.b16 %v2047, %v2047
      %v2080 = vpack.c.b16 %v2048, %v2048
      %v2081 = vpack.c.b16 %v2049, %v2049
      %v2082 = vpack.c.b16 %v2050, %v2050
      %v2083 = vpack.c.b16 %v2051, %v2051
      %v2084 = vpack.c.b16 %v2052, %v2052
      %v2085 = vpack.c.b16 %v2053, %v2053
      %v2086 = vpack.c.b16 %v2054, %v2054
      %v2087 = vpack.c.b16 %v2055, %v2055
      %v2088 = vpack.c.b16 %v2056, %v2056
      %v2089 = vpack.c.b16 %v2057, %v2057
      %v2090 = vpack.c.b16 %v2058, %v2058
      %v2091 = vpack.c.b16 %v2059, %v2059
      %v2092 = vpack.c.b16 %v2060, %v2060
      %v2093 = vpack.c.b16 %v2061, %v2061
      %v2094 = vpack.c.b16 %v2062, %v2062
      %v2095 = vpack.c.b16 %v2063, %v2063
      %v2096 = vpack.c.b16 %v2064, %v2064
      %v2097 = vpack.c.b16 %v2065, %v2065
      %v2098 = vpack.c.b16 %v2066, %v2066
      %v2099 = vpack.c.b16 %v2067, %v2067
      %v2100 = vpack.c.b16 %v2068, %v2068
      %v2101 = vpack.c.b16 %v2069, %v2069
      %v2102 = vpack.c.b16 %v2070, %v2070
      %v2103 = vpack.c.b16 %v2071, %v2071
      %v2104 = vpack.c.b16 %v2072, %v2072
      %v2105 = vpack.c.b16 %v2073, %v2073
      %v2106 = vpack.c.b16 %v2074, %v2074
      %2107 = vrot.lane.b32.xlu0 %v2075, 32
      %v2108 = vpop.permute.xlu0 %2107
      %2109 = vrot.lane.b32.xlu0 %v2076, 32
      %v2110 = vpop.permute.xlu0 %2109
      %2111 = vrot.lane.b32.xlu0 %v2077, 32
      %v2112 = vpop.permute.xlu0 %2111
      %2113 = vrot.lane.b32.xlu0 %v2078, 32
      %v2114 = vpop.permute.xlu0 %2113
      %2115 = vrot.lane.b32.xlu0 %v2079, 32
      %v2116 = vpop.permute.xlu0 %2115
      %2117 = vrot.lane.b32.xlu0 %v2080, 32
      %v2118 = vpop.permute.xlu0 %2117
      %2119 = vrot.lane.b32.xlu0 %v2081, 32
      %v2120 = vpop.permute.xlu0 %2119
      %2121 = vrot.lane.b32.xlu0 %v2082, 32
      %v2122 = vpop.permute.xlu0 %2121
      %2123 = vrot.lane.b32.xlu0 %v2083, 32
      %v2124 = vpop.permute.xlu0 %2123
      %2125 = vrot.lane.b32.xlu0 %v2084, 32
      %v2126 = vpop.permute.xlu0 %2125
      %2127 = vrot.lane.b32.xlu0 %v2085, 32
      %v2128 = vpop.permute.xlu0 %2127
      %2129 = vrot.lane.b32.xlu0 %v2086, 32
      %v2130 = vpop.permute.xlu0 %2129
      %2131 = vrot.lane.b32.xlu0 %v2087, 32
      %v2132 = vpop.permute.xlu0 %2131
      %2133 = vrot.lane.b32.xlu0 %v2088, 32
      %v2134 = vpop.permute.xlu0 %2133
      %2135 = vrot.lane.b32.xlu0 %v2089, 32
      %v2136 = vpop.permute.xlu0 %2135
      %2137 = vrot.lane.b32.xlu0 %v2090, 32
      %v2138 = vpop.permute.xlu0 %2137
      %2139 = vrot.lane.b32.xlu0 %v2091, 32
      %v2140 = vpop.permute.xlu0 %2139
      %2141 = vrot.lane.b32.xlu0 %v2092, 32
      %v2142 = vpop.permute.xlu0 %2141
      %2143 = vrot.lane.b32.xlu0 %v2093, 32
      %v2144 = vpop.permute.xlu0 %2143
      %2145 = vrot.lane.b32.xlu0 %v2094, 32
      %v2146 = vpop.permute.xlu0 %2145
      %2147 = vrot.lane.b32.xlu0 %v2095, 32
      %v2148 = vpop.permute.xlu0 %2147
      %2149 = vrot.lane.b32.xlu0 %v2096, 32
      %v2150 = vpop.permute.xlu0 %2149
      %2151 = vrot.lane.b32.xlu0 %v2097, 32
      %v2152 = vpop.permute.xlu0 %2151
      %2153 = vrot.lane.b32.xlu0 %v2098, 32
      %v2154 = vpop.permute.xlu0 %2153
      %2155 = vrot.lane.b32.xlu0 %v2099, 32
      %v2156 = vpop.permute.xlu0 %2155
      %2157 = vrot.lane.b32.xlu0 %v2100, 32
      %v2158 = vpop.permute.xlu0 %2157
      %2159 = vrot.lane.b32.xlu0 %v2101, 32
      %v2160 = vpop.permute.xlu0 %2159
      %2161 = vrot.lane.b32.xlu0 %v2102, 32
      %v2162 = vpop.permute.xlu0 %2161
      %2163 = vrot.lane.b32.xlu0 %v2103, 32
      %v2164 = vpop.permute.xlu0 %2163
      %2165 = vrot.lane.b32.xlu0 %v2104, 32
      %v2166 = vpop.permute.xlu0 %2165
      %2167 = vrot.lane.b32.xlu0 %v2105, 32
      %v2168 = vpop.permute.xlu0 %2167
      %2169 = vrot.lane.b32.xlu0 %v2106, 32
      %v2170 = vpop.permute.xlu0 %2169
      %vm2203 = vcmask 322816
      %2204 = vst.msk [vmem:[#allocation5] sm:$0xf] %vm2203, %v2108
      %2205 = vst.msk [vmem:[#allocation5 + $0x4] sm:$0xf] %vm2203, %v2110
      %2206 = vst.msk [vmem:[#allocation5 + $0x8] sm:$0xf] %vm2203, %v2112
      %2207 = vst.msk [vmem:[#allocation5 + $0xc] sm:$0xf] %vm2203, %v2114
      %2208 = vst.msk [vmem:[#allocation5 + $0x10] sm:$0xf] %vm2203, %v2116
      %2209 = vst.msk [vmem:[#allocation5 + $0x14] sm:$0xf] %vm2203, %v2118
      %2210 = vst.msk [vmem:[#allocation5 + $0x18] sm:$0xf] %vm2203, %v2120
      %2211 = vst.msk [vmem:[#allocation5 + $0x1c] sm:$0xf] %vm2203, %v2122
      %2212 = vst.msk [vmem:[#allocation5 + $0x20] sm:$0xf] %vm2203, %v2124
      %2213 = vst.msk [vmem:[#allocation5 + $0x24] sm:$0xf] %vm2203, %v2126
      %2214 = vst.msk [vmem:[#allocation5 + $0x28] sm:$0xf] %vm2203, %v2128
      %2215 = vst.msk [vmem:[#allocation5 + $0x2c] sm:$0xf] %vm2203, %v2130
      %2216 = vst.msk [vmem:[#allocation5 + $0x30] sm:$0xf] %vm2203, %v2132
      %2217 = vst.msk [vmem:[#allocation5 + $0x34] sm:$0xf] %vm2203, %v2134
      %2218 = vst.msk [vmem:[#allocation5 + $0x38] sm:$0xf] %vm2203, %v2136
      %2219 = vst.msk [vmem:[#allocation5 + $0x3c] sm:$0xf] %vm2203, %v2138
      %2220 = vst.msk [vmem:[#allocation5 + $0x40] sm:$0xf] %vm2203, %v2140
      %2221 = vst.msk [vmem:[#allocation5 + $0x44] sm:$0xf] %vm2203, %v2142
      %2222 = vst.msk [vmem:[#allocation5 + $0x48] sm:$0xf] %vm2203, %v2144
      %2223 = vst.msk [vmem:[#allocation5 + $0x4c] sm:$0xf] %vm2203, %v2146
      %2224 = vst.msk [vmem:[#allocation5 + $0x50] sm:$0xf] %vm2203, %v2148
      %2225 = vst.msk [vmem:[#allocation5 + $0x54] sm:$0xf] %vm2203, %v2150
      %2226 = vst.msk [vmem:[#allocation5 + $0x58] sm:$0xf] %vm2203, %v2152
      %2227 = vst.msk [vmem:[#allocation5 + $0x5c] sm:$0xf] %vm2203, %v2154
      %2228 = vst.msk [vmem:[#allocation5 + $0x60] sm:$0xf] %vm2203, %v2156
      %2229 = vst.msk [vmem:[#allocation5 + $0x64] sm:$0xf] %vm2203, %v2158
      %2230 = vst.msk [vmem:[#allocation5 + $0x68] sm:$0xf] %vm2203, %v2160
      %2231 = vst.msk [vmem:[#allocation5 + $0x6c] sm:$0xf] %vm2203, %v2162
      %2232 = vst.msk [vmem:[#allocation5 + $0x70] sm:$0xf] %vm2203, %v2164
      %2233 = vst.msk [vmem:[#allocation5 + $0x74] sm:$0xf] %vm2203, %v2166
      %2234 = vst.msk [vmem:[#allocation5 + $0x78] sm:$0xf] %vm2203, %v2168
      %2235 = vst.msk [vmem:[#allocation5 + $0x7c] sm:$0xf] %vm2203, %v2170
      %v2236 = vld [vmem:[#allocation2 + $0x19] sm:$0xff]
      %v2237 = vld [vmem:[#allocation2 + $0x21] sm:$0xff]
      %v2238 = vld [vmem:[#allocation2 + $0x29] sm:$0xff]
      %v2239 = vld [vmem:[#allocation2 + $0x31] sm:$0xff]
      %v2240 = vld [vmem:[#allocation2 + $0x39] sm:$0xff]
      %v2241 = vld [vmem:[#allocation2 + $0x41] sm:$0xff]
      %v2242 = vld [vmem:[#allocation2 + $0x49] sm:$0xff]
      %v2243 = vld [vmem:[#allocation2 + $0x51] sm:$0xff]
      %v2244 = vld [vmem:[#allocation2 + $0x59] sm:$0xff]
      %v2245 = vld [vmem:[#allocation2 + $0x61] sm:$0xff]
      %v2246 = vld [vmem:[#allocation2 + $0x69] sm:$0xff]
      %v2247 = vld [vmem:[#allocation2 + $0x71] sm:$0xff]
      %v2248 = vld [vmem:[#allocation2 + $0x79] sm:$0xff]
      %v2249 = vld [vmem:[#allocation2 + $0x81] sm:$0xff]
      %v2250 = vld [vmem:[#allocation2 + $0x89] sm:$0xff]
      %v2251 = vld [vmem:[#allocation2 + $0x91] sm:$0xff]
      %v2252 = vld [vmem:[#allocation2 + $0x99] sm:$0xff]
      %v2253 = vld [vmem:[#allocation2 + $0xa1] sm:$0xff]
      %v2254 = vld [vmem:[#allocation2 + $0xa9] sm:$0xff]
      %v2255 = vld [vmem:[#allocation2 + $0xb1] sm:$0xff]
      %v2256 = vld [vmem:[#allocation2 + $0xb9] sm:$0xff]
      %v2257 = vld [vmem:[#allocation2 + $0xc1] sm:$0xff]
      %v2258 = vld [vmem:[#allocation2 + $0xc9] sm:$0xff]
      %v2259 = vld [vmem:[#allocation2 + $0xd1] sm:$0xff]
      %v2260 = vld [vmem:[#allocation2 + $0xd9] sm:$0xff]
      %v2261 = vld [vmem:[#allocation2 + $0xe1] sm:$0xff]
      %v2262 = vld [vmem:[#allocation2 + $0xe9] sm:$0xff]
      %v2263 = vld [vmem:[#allocation2 + $0xf1] sm:$0xff]
      %v2264 = vld [vmem:[#allocation2 + $0xf9] sm:$0xff]
      %v2265 = vld [vmem:[#allocation2 + $0x101] sm:$0xff]
      %v2266 = vld [vmem:[#allocation2 + $0x109] sm:$0xff]
      %v2267 = vld [vmem:[#allocation2 + $0x111] sm:$0xff]
      %v2268 = vsel %vm1401, %v2236, 0.0
      %v2269 = vsel %vm1402, %v2237, 0.0
      %v2270 = vsel %vm1403, %v2238, 0.0
      %v2271 = vsel %vm1404, %v2239, 0.0
      %v2272 = vsel %vm1405, %v2240, 0.0
      %v2273 = vsel %vm1406, %v2241, 0.0
      %v2274 = vsel %vm1407, %v2242, 0.0
      %v2275 = vsel %vm1408, %v2243, 0.0
      %v2276 = vsel %vm1409, %v2244, 0.0
      %v2277 = vsel %vm1410, %v2245, 0.0
      %v2278 = vsel %vm1411, %v2246, 0.0
      %v2279 = vsel %vm1412, %v2247, 0.0
      %v2280 = vsel %vm1413, %v2248, 0.0
      %v2281 = vsel %vm1414, %v2249, 0.0
      %v2282 = vsel %vm1415, %v2250, 0.0
      %v2283 = vsel %vm1416, %v2251, 0.0
      %v2284 = vsel %vm1417, %v2252, 0.0
      %v2285 = vsel %vm1418, %v2253, 0.0
      %v2286 = vsel %vm1419, %v2254, 0.0
      %v2287 = vsel %vm1420, %v2255, 0.0
      %v2288 = vsel %vm1421, %v2256, 0.0
      %v2289 = vsel %vm1422, %v2257, 0.0
      %v2290 = vsel %vm1423, %v2258, 0.0
      %v2291 = vsel %vm1424, %v2259, 0.0
      %v2292 = vsel %vm1425, %v2260, 0.0
      %v2293 = vsel %vm1426, %v2261, 0.0
      %v2294 = vsel %vm1427, %v2262, 0.0
      %v2295 = vsel %vm1428, %v2263, 0.0
      %v2296 = vsel %vm1429, %v2264, 0.0
      %v2297 = vsel %vm1430, %v2265, 0.0
      %v2298 = vsel %vm1431, %v2266, 0.0
      %v2299 = vsel %vm1432, %v2267, 0.0
      %v2300 = vpack.c.bf16 %v2269, %v2268
      %v2301 = vpack.c.bf16 %v2271, %v2270
      %v2302 = vpack.c.bf16 %v2273, %v2272
      %v2303 = vpack.c.bf16 %v2275, %v2274
      %v2304 = vpack.c.bf16 %v2277, %v2276
      %v2305 = vpack.c.bf16 %v2279, %v2278
      %v2306 = vpack.c.bf16 %v2281, %v2280
      %v2307 = vpack.c.bf16 %v2283, %v2282
      %v2308 = vpack.c.bf16 %v2285, %v2284
      %v2309 = vpack.c.bf16 %v2287, %v2286
      %v2310 = vpack.c.bf16 %v2289, %v2288
      %v2311 = vpack.c.bf16 %v2291, %v2290
      %v2312 = vpack.c.bf16 %v2293, %v2292
      %v2313 = vpack.c.bf16 %v2295, %v2294
      %v2314 = vpack.c.bf16 %v2297, %v2296
      %v2315 = vpack.c.bf16 %v2299, %v2298
      %v2332 = vunpack.c.l.b16 %v2300
      %v2333 = vunpack.c.h.b16 %v2300
      %v2334 = vunpack.c.l.b16 %v2301
      %v2335 = vunpack.c.h.b16 %v2301
      %v2336 = vunpack.c.l.b16 %v2302
      %v2337 = vunpack.c.h.b16 %v2302
      %v2338 = vunpack.c.l.b16 %v2303
      %v2339 = vunpack.c.h.b16 %v2303
      %v2340 = vunpack.c.l.b16 %v2304
      %v2341 = vunpack.c.h.b16 %v2304
      %v2342 = vunpack.c.l.b16 %v2305
      %v2343 = vunpack.c.h.b16 %v2305
      %v2344 = vunpack.c.l.b16 %v2306
      %v2345 = vunpack.c.h.b16 %v2306
      %v2346 = vunpack.c.l.b16 %v2307
      %v2347 = vunpack.c.h.b16 %v2307
      %v2348 = vunpack.c.l.b16 %v2308
      %v2349 = vunpack.c.h.b16 %v2308
      %v2350 = vunpack.c.l.b16 %v2309
      %v2351 = vunpack.c.h.b16 %v2309
      %v2352 = vunpack.c.l.b16 %v2310
      %v2353 = vunpack.c.h.b16 %v2310
      %v2354 = vunpack.c.l.b16 %v2311
      %v2355 = vunpack.c.h.b16 %v2311
      %v2356 = vunpack.c.l.b16 %v2312
      %v2357 = vunpack.c.h.b16 %v2312
      %v2358 = vunpack.c.l.b16 %v2313
      %v2359 = vunpack.c.h.b16 %v2313
      %v2360 = vunpack.c.l.b16 %v2314
      %v2361 = vunpack.c.h.b16 %v2314
      %v2362 = vunpack.c.l.b16 %v2315
      %v2363 = vunpack.c.h.b16 %v2315
      %v2364 = vpack.c.b16 %v2332, %v2332
      %v2365 = vpack.c.b16 %v2333, %v2333
      %v2366 = vpack.c.b16 %v2334, %v2334
      %v2367 = vpack.c.b16 %v2335, %v2335
      %v2368 = vpack.c.b16 %v2336, %v2336
      %v2369 = vpack.c.b16 %v2337, %v2337
      %v2370 = vpack.c.b16 %v2338, %v2338
      %v2371 = vpack.c.b16 %v2339, %v2339
      %v2372 = vpack.c.b16 %v2340, %v2340
      %v2373 = vpack.c.b16 %v2341, %v2341
      %v2374 = vpack.c.b16 %v2342, %v2342
      %v2375 = vpack.c.b16 %v2343, %v2343
      %v2376 = vpack.c.b16 %v2344, %v2344
      %v2377 = vpack.c.b16 %v2345, %v2345
      %v2378 = vpack.c.b16 %v2346, %v2346
      %v2379 = vpack.c.b16 %v2347, %v2347
      %v2380 = vpack.c.b16 %v2348, %v2348
      %v2381 = vpack.c.b16 %v2349, %v2349
      %v2382 = vpack.c.b16 %v2350, %v2350
      %v2383 = vpack.c.b16 %v2351, %v2351
      %v2384 = vpack.c.b16 %v2352, %v2352
      %v2385 = vpack.c.b16 %v2353, %v2353
      %v2386 = vpack.c.b16 %v2354, %v2354
      %v2387 = vpack.c.b16 %v2355, %v2355
      %v2388 = vpack.c.b16 %v2356, %v2356
      %v2389 = vpack.c.b16 %v2357, %v2357
      %v2390 = vpack.c.b16 %v2358, %v2358
      %v2391 = vpack.c.b16 %v2359, %v2359
      %v2392 = vpack.c.b16 %v2360, %v2360
      %v2393 = vpack.c.b16 %v2361, %v2361
      %v2394 = vpack.c.b16 %v2362, %v2362
      %v2395 = vpack.c.b16 %v2363, %v2363
      %2396 = vrot.lane.b32.xlu0 %v2364, 40
      %v2397 = vpop.permute.xlu0 %2396
      %2398 = vrot.lane.b32.xlu0 %v2365, 40
      %v2399 = vpop.permute.xlu0 %2398
      %2400 = vrot.lane.b32.xlu0 %v2366, 40
      %v2401 = vpop.permute.xlu0 %2400
      %2402 = vrot.lane.b32.xlu0 %v2367, 40
      %v2403 = vpop.permute.xlu0 %2402
      %2404 = vrot.lane.b32.xlu0 %v2368, 40
      %v2405 = vpop.permute.xlu0 %2404
      %2406 = vrot.lane.b32.xlu0 %v2369, 40
      %v2407 = vpop.permute.xlu0 %2406
      %2408 = vrot.lane.b32.xlu0 %v2370, 40
      %v2409 = vpop.permute.xlu0 %2408
      %2410 = vrot.lane.b32.xlu0 %v2371, 40
      %v2411 = vpop.permute.xlu0 %2410
      %2412 = vrot.lane.b32.xlu0 %v2372, 40
      %v2413 = vpop.permute.xlu0 %2412
      %2414 = vrot.lane.b32.xlu0 %v2373, 40
      %v2415 = vpop.permute.xlu0 %2414
      %2416 = vrot.lane.b32.xlu0 %v2374, 40
      %v2417 = vpop.permute.xlu0 %2416
      %2418 = vrot.lane.b32.xlu0 %v2375, 40
      %v2419 = vpop.permute.xlu0 %2418
      %2420 = vrot.lane.b32.xlu0 %v2376, 40
      %v2421 = vpop.permute.xlu0 %2420
      %2422 = vrot.lane.b32.xlu0 %v2377, 40
      %v2423 = vpop.permute.xlu0 %2422
      %2424 = vrot.lane.b32.xlu0 %v2378, 40
      %v2425 = vpop.permute.xlu0 %2424
      %2426 = vrot.lane.b32.xlu0 %v2379, 40
      %v2427 = vpop.permute.xlu0 %2426
      %2428 = vrot.lane.b32.xlu0 %v2380, 40
      %v2429 = vpop.permute.xlu0 %2428
      %2430 = vrot.lane.b32.xlu0 %v2381, 40
      %v2431 = vpop.permute.xlu0 %2430
      %2432 = vrot.lane.b32.xlu0 %v2382, 40
      %v2433 = vpop.permute.xlu0 %2432
      %2434 = vrot.lane.b32.xlu0 %v2383, 40
      %v2435 = vpop.permute.xlu0 %2434
      %2436 = vrot.lane.b32.xlu0 %v2384, 40
      %v2437 = vpop.permute.xlu0 %2436
      %2438 = vrot.lane.b32.xlu0 %v2385, 40
      %v2439 = vpop.permute.xlu0 %2438
      %2440 = vrot.lane.b32.xlu0 %v2386, 40
      %v2441 = vpop.permute.xlu0 %2440
      %2442 = vrot.lane.b32.xlu0 %v2387, 40
      %v2443 = vpop.permute.xlu0 %2442
      %2444 = vrot.lane.b32.xlu0 %v2388, 40
      %v2445 = vpop.permute.xlu0 %2444
      %2446 = vrot.lane.b32.xlu0 %v2389, 40
      %v2447 = vpop.permute.xlu0 %2446
      %2448 = vrot.lane.b32.xlu0 %v2390, 40
      %v2449 = vpop.permute.xlu0 %2448
      %2450 = vrot.lane.b32.xlu0 %v2391, 40
      %v2451 = vpop.permute.xlu0 %2450
      %2452 = vrot.lane.b32.xlu0 %v2392, 40
      %v2453 = vpop.permute.xlu0 %2452
      %2454 = vrot.lane.b32.xlu0 %v2393, 40
      %v2455 = vpop.permute.xlu0 %2454
      %2456 = vrot.lane.b32.xlu0 %v2394, 40
      %v2457 = vpop.permute.xlu0 %2456
      %2458 = vrot.lane.b32.xlu0 %v2395, 40
      %v2459 = vpop.permute.xlu0 %2458
      %vm2492 = vcmask 388416
      %2493 = vst.msk [vmem:[#allocation5] sm:$0xf] %vm2492, %v2397
      %2494 = vst.msk [vmem:[#allocation5 + $0x4] sm:$0xf] %vm2492, %v2399
      %2495 = vst.msk [vmem:[#allocation5 + $0x8] sm:$0xf] %vm2492, %v2401
      %2496 = vst.msk [vmem:[#allocation5 + $0xc] sm:$0xf] %vm2492, %v2403
      %2497 = vst.msk [vmem:[#allocation5 + $0x10] sm:$0xf] %vm2492, %v2405
      %2498 = vst.msk [vmem:[#allocation5 + $0x14] sm:$0xf] %vm2492, %v2407
      %2499 = vst.msk [vmem:[#allocation5 + $0x18] sm:$0xf] %vm2492, %v2409
      %2500 = vst.msk [vmem:[#allocation5 + $0x1c] sm:$0xf] %vm2492, %v2411
      %2501 = vst.msk [vmem:[#allocation5 + $0x20] sm:$0xf] %vm2492, %v2413
      %2502 = vst.msk [vmem:[#allocation5 + $0x24] sm:$0xf] %vm2492, %v2415
      %2503 = vst.msk [vmem:[#allocation5 + $0x28] sm:$0xf] %vm2492, %v2417
      %2504 = vst.msk [vmem:[#allocation5 + $0x2c] sm:$0xf] %vm2492, %v2419
      %2505 = vst.msk [vmem:[#allocation5 + $0x30] sm:$0xf] %vm2492, %v2421
      %2506 = vst.msk [vmem:[#allocation5 + $0x34] sm:$0xf] %vm2492, %v2423
      %2507 = vst.msk [vmem:[#allocation5 + $0x38] sm:$0xf] %vm2492, %v2425
      %2508 = vst.msk [vmem:[#allocation5 + $0x3c] sm:$0xf] %vm2492, %v2427
      %2509 = vst.msk [vmem:[#allocation5 + $0x40] sm:$0xf] %vm2492, %v2429
      %2510 = vst.msk [vmem:[#allocation5 + $0x44] sm:$0xf] %vm2492, %v2431
      %2511 = vst.msk [vmem:[#allocation5 + $0x48] sm:$0xf] %vm2492, %v2433
      %2512 = vst.msk [vmem:[#allocation5 + $0x4c] sm:$0xf] %vm2492, %v2435
      %2513 = vst.msk [vmem:[#allocation5 + $0x50] sm:$0xf] %vm2492, %v2437
      %2514 = vst.msk [vmem:[#allocation5 + $0x54] sm:$0xf] %vm2492, %v2439
      %2515 = vst.msk [vmem:[#allocation5 + $0x58] sm:$0xf] %vm2492, %v2441
      %2516 = vst.msk [vmem:[#allocation5 + $0x5c] sm:$0xf] %vm2492, %v2443
      %2517 = vst.msk [vmem:[#allocation5 + $0x60] sm:$0xf] %vm2492, %v2445
      %2518 = vst.msk [vmem:[#allocation5 + $0x64] sm:$0xf] %vm2492, %v2447
      %2519 = vst.msk [vmem:[#allocation5 + $0x68] sm:$0xf] %vm2492, %v2449
      %2520 = vst.msk [vmem:[#allocation5 + $0x6c] sm:$0xf] %vm2492, %v2451
      %2521 = vst.msk [vmem:[#allocation5 + $0x70] sm:$0xf] %vm2492, %v2453
      %2522 = vst.msk [vmem:[#allocation5 + $0x74] sm:$0xf] %vm2492, %v2455
      %2523 = vst.msk [vmem:[#allocation5 + $0x78] sm:$0xf] %vm2492, %v2457
      %2524 = vst.msk [vmem:[#allocation5 + $0x7c] sm:$0xf] %vm2492, %v2459
      %v2525 = vld [vmem:[#allocation2 + $0x27] sm:$0xff]
      %v2526 = vld [vmem:[#allocation2 + $0x2f] sm:$0xff]
      %v2527 = vld [vmem:[#allocation2 + $0x37] sm:$0xff]
      %v2528 = vld [vmem:[#allocation2 + $0x3f] sm:$0xff]
      %v2529 = vld [vmem:[#allocation2 + $0x47] sm:$0xff]
      %v2530 = vld [vmem:[#allocation2 + $0x4f] sm:$0xff]
      %v2531 = vld [vmem:[#allocation2 + $0x57] sm:$0xff]
      %v2532 = vld [vmem:[#allocation2 + $0x5f] sm:$0xff]
      %v2533 = vld [vmem:[#allocation2 + $0x67] sm:$0xff]
      %v2534 = vld [vmem:[#allocation2 + $0x6f] sm:$0xff]
      %v2535 = vld [vmem:[#allocation2 + $0x77] sm:$0xff]
      %v2536 = vld [vmem:[#allocation2 + $0x7f] sm:$0xff]
      %v2537 = vld [vmem:[#allocation2 + $0x87] sm:$0xff]
      %v2538 = vld [vmem:[#allocation2 + $0x8f] sm:$0xff]
      %v2539 = vld [vmem:[#allocation2 + $0x97] sm:$0xff]
      %v2540 = vld [vmem:[#allocation2 + $0x9f] sm:$0xff]
      %v2541 = vld [vmem:[#allocation2 + $0xa7] sm:$0xff]
      %v2542 = vld [vmem:[#allocation2 + $0xaf] sm:$0xff]
      %v2543 = vld [vmem:[#allocation2 + $0xb7] sm:$0xff]
      %v2544 = vld [vmem:[#allocation2 + $0xbf] sm:$0xff]
      %v2545 = vld [vmem:[#allocation2 + $0xc7] sm:$0xff]
      %v2546 = vld [vmem:[#allocation2 + $0xcf] sm:$0xff]
      %v2547 = vld [vmem:[#allocation2 + $0xd7] sm:$0xff]
      %v2548 = vld [vmem:[#allocation2 + $0xdf] sm:$0xff]
      %v2549 = vld [vmem:[#allocation2 + $0xe7] sm:$0xff]
      %v2550 = vld [vmem:[#allocation2 + $0xef] sm:$0xff]
      %v2551 = vld [vmem:[#allocation2 + $0xf7] sm:$0xff]
      %v2552 = vld [vmem:[#allocation2 + $0xff] sm:$0xff]
      %v2553 = vld [vmem:[#allocation2 + $0x107] sm:$0xff]
      %v2554 = vld [vmem:[#allocation2 + $0x10f] sm:$0xff]
      %v2555 = vld [vmem:[#allocation2 + $0x117] sm:$0xff]
      %v2556 = vld [vmem:[#allocation2 + $0x11f] sm:$0xff]
      %v2557 = vsel %vm855, %v2525, 0.0
      %v2558 = vsel %vm856, %v2526, 0.0
      %v2559 = vsel %vm857, %v2527, 0.0
      %v2560 = vsel %vm858, %v2528, 0.0
      %v2561 = vsel %vm859, %v2529, 0.0
      %v2562 = vsel %vm860, %v2530, 0.0
      %v2563 = vsel %vm861, %v2531, 0.0
      %v2564 = vsel %vm862, %v2532, 0.0
      %v2565 = vsel %vm863, %v2533, 0.0
      %v2566 = vsel %vm864, %v2534, 0.0
      %v2567 = vsel %vm865, %v2535, 0.0
      %v2568 = vsel %vm866, %v2536, 0.0
      %v2569 = vsel %vm867, %v2537, 0.0
      %v2570 = vsel %vm868, %v2538, 0.0
      %v2571 = vsel %vm869, %v2539, 0.0
      %v2572 = vsel %vm870, %v2540, 0.0
      %v2573 = vsel %vm871, %v2541, 0.0
      %v2574 = vsel %vm872, %v2542, 0.0
      %v2575 = vsel %vm873, %v2543, 0.0
      %v2576 = vsel %vm874, %v2544, 0.0
      %v2577 = vsel %vm875, %v2545, 0.0
      %v2578 = vsel %vm876, %v2546, 0.0
      %v2579 = vsel %vm877, %v2547, 0.0
      %v2580 = vsel %vm878, %v2548, 0.0
      %v2581 = vsel %vm879, %v2549, 0.0
      %v2582 = vsel %vm880, %v2550, 0.0
      %v2583 = vsel %vm881, %v2551, 0.0
      %v2584 = vsel %vm882, %v2552, 0.0
      %v2585 = vsel %vm883, %v2553, 0.0
      %v2586 = vsel %vm884, %v2554, 0.0
      %v2587 = vsel %vm885, %v2555, 0.0
      %v2588 = vsel %vm886, %v2556, 0.0
      %v2589 = vpack.c.bf16 %v2558, %v2557
      %v2590 = vpack.c.bf16 %v2560, %v2559
      %v2591 = vpack.c.bf16 %v2562, %v2561
      %v2592 = vpack.c.bf16 %v2564, %v2563
      %v2593 = vpack.c.bf16 %v2566, %v2565
      %v2594 = vpack.c.bf16 %v2568, %v2567
      %v2595 = vpack.c.bf16 %v2570, %v2569
      %v2596 = vpack.c.bf16 %v2572, %v2571
      %v2597 = vpack.c.bf16 %v2574, %v2573
      %v2598 = vpack.c.bf16 %v2576, %v2575
      %v2599 = vpack.c.bf16 %v2578, %v2577
      %v2600 = vpack.c.bf16 %v2580, %v2579
      %v2601 = vpack.c.bf16 %v2582, %v2581
      %v2602 = vpack.c.bf16 %v2584, %v2583
      %v2603 = vpack.c.bf16 %v2586, %v2585
      %v2604 = vpack.c.bf16 %v2588, %v2587
      %v2621 = vunpack.c.l.b16 %v2589
      %v2622 = vunpack.c.h.b16 %v2589
      %v2623 = vunpack.c.l.b16 %v2590
      %v2624 = vunpack.c.h.b16 %v2590
      %v2625 = vunpack.c.l.b16 %v2591
      %v2626 = vunpack.c.h.b16 %v2591
      %v2627 = vunpack.c.l.b16 %v2592
      %v2628 = vunpack.c.h.b16 %v2592
      %v2629 = vunpack.c.l.b16 %v2593
      %v2630 = vunpack.c.h.b16 %v2593
      %v2631 = vunpack.c.l.b16 %v2594
      %v2632 = vunpack.c.h.b16 %v2594
      %v2633 = vunpack.c.l.b16 %v2595
      %v2634 = vunpack.c.h.b16 %v2595
      %v2635 = vunpack.c.l.b16 %v2596
      %v2636 = vunpack.c.h.b16 %v2596
      %v2637 = vunpack.c.l.b16 %v2597
      %v2638 = vunpack.c.h.b16 %v2597
      %v2639 = vunpack.c.l.b16 %v2598
      %v2640 = vunpack.c.h.b16 %v2598
      %v2641 = vunpack.c.l.b16 %v2599
      %v2642 = vunpack.c.h.b16 %v2599
      %v2643 = vunpack.c.l.b16 %v2600
      %v2644 = vunpack.c.h.b16 %v2600
      %v2645 = vunpack.c.l.b16 %v2601
      %v2646 = vunpack.c.h.b16 %v2601
      %v2647 = vunpack.c.l.b16 %v2602
      %v2648 = vunpack.c.h.b16 %v2602
      %v2649 = vunpack.c.l.b16 %v2603
      %v2650 = vunpack.c.h.b16 %v2603
      %v2651 = vunpack.c.l.b16 %v2604
      %v2652 = vunpack.c.h.b16 %v2604
      %v2653 = vpack.c.b16 %v2621, %v2621
      %v2654 = vpack.c.b16 %v2622, %v2622
      %v2655 = vpack.c.b16 %v2623, %v2623
      %v2656 = vpack.c.b16 %v2624, %v2624
      %v2657 = vpack.c.b16 %v2625, %v2625
      %v2658 = vpack.c.b16 %v2626, %v2626
      %v2659 = vpack.c.b16 %v2627, %v2627
      %v2660 = vpack.c.b16 %v2628, %v2628
      %v2661 = vpack.c.b16 %v2629, %v2629
      %v2662 = vpack.c.b16 %v2630, %v2630
      %v2663 = vpack.c.b16 %v2631, %v2631
      %v2664 = vpack.c.b16 %v2632, %v2632
      %v2665 = vpack.c.b16 %v2633, %v2633
      %v2666 = vpack.c.b16 %v2634, %v2634
      %v2667 = vpack.c.b16 %v2635, %v2635
      %v2668 = vpack.c.b16 %v2636, %v2636
      %v2669 = vpack.c.b16 %v2637, %v2637
      %v2670 = vpack.c.b16 %v2638, %v2638
      %v2671 = vpack.c.b16 %v2639, %v2639
      %v2672 = vpack.c.b16 %v2640, %v2640
      %v2673 = vpack.c.b16 %v2641, %v2641
      %v2674 = vpack.c.b16 %v2642, %v2642
      %v2675 = vpack.c.b16 %v2643, %v2643
      %v2676 = vpack.c.b16 %v2644, %v2644
      %v2677 = vpack.c.b16 %v2645, %v2645
      %v2678 = vpack.c.b16 %v2646, %v2646
      %v2679 = vpack.c.b16 %v2647, %v2647
      %v2680 = vpack.c.b16 %v2648, %v2648
      %v2681 = vpack.c.b16 %v2649, %v2649
      %v2682 = vpack.c.b16 %v2650, %v2650
      %v2683 = vpack.c.b16 %v2651, %v2651
      %v2684 = vpack.c.b16 %v2652, %v2652
      %2685 = vrot.lane.b32.xlu0 %v2653, 48
      %v2686 = vpop.permute.xlu0 %2685
      %2687 = vrot.lane.b32.xlu0 %v2654, 48
      %v2688 = vpop.permute.xlu0 %2687
      %2689 = vrot.lane.b32.xlu0 %v2655, 48
      %v2690 = vpop.permute.xlu0 %2689
      %2691 = vrot.lane.b32.xlu0 %v2656, 48
      %v2692 = vpop.permute.xlu0 %2691
      %2693 = vrot.lane.b32.xlu0 %v2657, 48
      %v2694 = vpop.permute.xlu0 %2693
      %2695 = vrot.lane.b32.xlu0 %v2658, 48
      %v2696 = vpop.permute.xlu0 %2695
      %2697 = vrot.lane.b32.xlu0 %v2659, 48
      %v2698 = vpop.permute.xlu0 %2697
      %2699 = vrot.lane.b32.xlu0 %v2660, 48
      %v2700 = vpop.permute.xlu0 %2699
      %2701 = vrot.lane.b32.xlu0 %v2661, 48
      %v2702 = vpop.permute.xlu0 %2701
      %2703 = vrot.lane.b32.xlu0 %v2662, 48
      %v2704 = vpop.permute.xlu0 %2703
      %2705 = vrot.lane.b32.xlu0 %v2663, 48
      %v2706 = vpop.permute.xlu0 %2705
      %2707 = vrot.lane.b32.xlu0 %v2664, 48
      %v2708 = vpop.permute.xlu0 %2707
      %2709 = vrot.lane.b32.xlu0 %v2665, 48
      %v2710 = vpop.permute.xlu0 %2709
      %2711 = vrot.lane.b32.xlu0 %v2666, 48
      %v2712 = vpop.permute.xlu0 %2711
      %2713 = vrot.lane.b32.xlu0 %v2667, 48
      %v2714 = vpop.permute.xlu0 %2713
      %2715 = vrot.lane.b32.xlu0 %v2668, 48
      %v2716 = vpop.permute.xlu0 %2715
      %2717 = vrot.lane.b32.xlu0 %v2669, 48
      %v2718 = vpop.permute.xlu0 %2717
      %2719 = vrot.lane.b32.xlu0 %v2670, 48
      %v2720 = vpop.permute.xlu0 %2719
      %2721 = vrot.lane.b32.xlu0 %v2671, 48
      %v2722 = vpop.permute.xlu0 %2721
      %2723 = vrot.lane.b32.xlu0 %v2672, 48
      %v2724 = vpop.permute.xlu0 %2723
      %2725 = vrot.lane.b32.xlu0 %v2673, 48
      %v2726 = vpop.permute.xlu0 %2725
      %2727 = vrot.lane.b32.xlu0 %v2674, 48
      %v2728 = vpop.permute.xlu0 %2727
      %2729 = vrot.lane.b32.xlu0 %v2675, 48
      %v2730 = vpop.permute.xlu0 %2729
      %2731 = vrot.lane.b32.xlu0 %v2676, 48
      %v2732 = vpop.permute.xlu0 %2731
      %2733 = vrot.lane.b32.xlu0 %v2677, 48
      %v2734 = vpop.permute.xlu0 %2733
      %2735 = vrot.lane.b32.xlu0 %v2678, 48
      %v2736 = vpop.permute.xlu0 %2735
      %2737 = vrot.lane.b32.xlu0 %v2679, 48
      %v2738 = vpop.permute.xlu0 %2737
      %2739 = vrot.lane.b32.xlu0 %v2680, 48
      %v2740 = vpop.permute.xlu0 %2739
      %2741 = vrot.lane.b32.xlu0 %v2681, 48
      %v2742 = vpop.permute.xlu0 %2741
      %2743 = vrot.lane.b32.xlu0 %v2682, 48
      %v2744 = vpop.permute.xlu0 %2743
      %2745 = vrot.lane.b32.xlu0 %v2683, 48
      %v2746 = vpop.permute.xlu0 %2745
      %2747 = vrot.lane.b32.xlu0 %v2684, 48
      %v2748 = vpop.permute.xlu0 %2747
      %vm2781 = vcmask 454016
      %2782 = vst.msk [vmem:[#allocation5] sm:$0xf] %vm2781, %v2686
      %2783 = vst.msk [vmem:[#allocation5 + $0x4] sm:$0xf] %vm2781, %v2688
      %2784 = vst.msk [vmem:[#allocation5 + $0x8] sm:$0xf] %vm2781, %v2690
      %2785 = vst.msk [vmem:[#allocation5 + $0xc] sm:$0xf] %vm2781, %v2692
      %2786 = vst.msk [vmem:[#allocation5 + $0x10] sm:$0xf] %vm2781, %v2694
      %2787 = vst.msk [vmem:[#allocation5 + $0x14] sm:$0xf] %vm2781, %v2696
      %2788 = vst.msk [vmem:[#allocation5 + $0x18] sm:$0xf] %vm2781, %v2698
      %2789 = vst.msk [vmem:[#allocation5 + $0x1c] sm:$0xf] %vm2781, %v2700
      %2790 = vst.msk [vmem:[#allocation5 + $0x20] sm:$0xf] %vm2781, %v2702
      %2791 = vst.msk [vmem:[#allocation5 + $0x24] sm:$0xf] %vm2781, %v2704
      %2792 = vst.msk [vmem:[#allocation5 + $0x28] sm:$0xf] %vm2781, %v2706
      %2793 = vst.msk [vmem:[#allocation5 + $0x2c] sm:$0xf] %vm2781, %v2708
      %2794 = vst.msk [vmem:[#allocation5 + $0x30] sm:$0xf] %vm2781, %v2710
      %2795 = vst.msk [vmem:[#allocation5 + $0x34] sm:$0xf] %vm2781, %v2712
      %2796 = vst.msk [vmem:[#allocation5 + $0x38] sm:$0xf] %vm2781, %v2714
      %2797 = vst.msk [vmem:[#allocation5 + $0x3c] sm:$0xf] %vm2781, %v2716
      %2798 = vst.msk [vmem:[#allocation5 + $0x40] sm:$0xf] %vm2781, %v2718
      %2799 = vst.msk [vmem:[#allocation5 + $0x44] sm:$0xf] %vm2781, %v2720
      %2800 = vst.msk [vmem:[#allocation5 + $0x48] sm:$0xf] %vm2781, %v2722
      %2801 = vst.msk [vmem:[#allocation5 + $0x4c] sm:$0xf] %vm2781, %v2724
      %2802 = vst.msk [vmem:[#allocation5 + $0x50] sm:$0xf] %vm2781, %v2726
      %2803 = vst.msk [vmem:[#allocation5 + $0x54] sm:$0xf] %vm2781, %v2728
      %2804 = vst.msk [vmem:[#allocation5 + $0x58] sm:$0xf] %vm2781, %v2730
      %2805 = vst.msk [vmem:[#allocation5 + $0x5c] sm:$0xf] %vm2781, %v2732
      %2806 = vst.msk [vmem:[#allocation5 + $0x60] sm:$0xf] %vm2781, %v2734
      %2807 = vst.msk [vmem:[#allocation5 + $0x64] sm:$0xf] %vm2781, %v2736
      %2808 = vst.msk [vmem:[#allocation5 + $0x68] sm:$0xf] %vm2781, %v2738
      %2809 = vst.msk [vmem:[#allocation5 + $0x6c] sm:$0xf] %vm2781, %v2740
      %2810 = vst.msk [vmem:[#allocation5 + $0x70] sm:$0xf] %vm2781, %v2742
      %2811 = vst.msk [vmem:[#allocation5 + $0x74] sm:$0xf] %vm2781, %v2744
      %2812 = vst.msk [vmem:[#allocation5 + $0x78] sm:$0xf] %vm2781, %v2746
      %2813 = vst.msk [vmem:[#allocation5 + $0x7c] sm:$0xf] %vm2781, %v2748
      %v2814 = vld [vmem:[#allocation2 + $0x28] sm:$0xff]
      %v2815 = vld [vmem:[#allocation2 + $0x30] sm:$0xff]
      %v2816 = vld [vmem:[#allocation2 + $0x38] sm:$0xff]
      %v2817 = vld [vmem:[#allocation2 + $0x40] sm:$0xff]
      %v2818 = vld [vmem:[#allocation2 + $0x48] sm:$0xff]
      %v2819 = vld [vmem:[#allocation2 + $0x50] sm:$0xff]
      %v2820 = vld [vmem:[#allocation2 + $0x58] sm:$0xff]
      %v2821 = vld [vmem:[#allocation2 + $0x60] sm:$0xff]
      %v2822 = vld [vmem:[#allocation2 + $0x68] sm:$0xff]
      %v2823 = vld [vmem:[#allocation2 + $0x70] sm:$0xff]
      %v2824 = vld [vmem:[#allocation2 + $0x78] sm:$0xff]
      %v2825 = vld [vmem:[#allocation2 + $0x80] sm:$0xff]
      %v2826 = vld [vmem:[#allocation2 + $0x88] sm:$0xff]
      %v2827 = vld [vmem:[#allocation2 + $0x90] sm:$0xff]
      %v2828 = vld [vmem:[#allocation2 + $0x98] sm:$0xff]
      %v2829 = vld [vmem:[#allocation2 + $0xa0] sm:$0xff]
      %v2830 = vld [vmem:[#allocation2 + $0xa8] sm:$0xff]
      %v2831 = vld [vmem:[#allocation2 + $0xb0] sm:$0xff]
      %v2832 = vld [vmem:[#allocation2 + $0xb8] sm:$0xff]
      %v2833 = vld [vmem:[#allocation2 + $0xc0] sm:$0xff]
      %v2834 = vld [vmem:[#allocation2 + $0xc8] sm:$0xff]
      %v2835 = vld [vmem:[#allocation2 + $0xd0] sm:$0xff]
      %v2836 = vld [vmem:[#allocation2 + $0xd8] sm:$0xff]
      %v2837 = vld [vmem:[#allocation2 + $0xe0] sm:$0xff]
      %v2838 = vld [vmem:[#allocation2 + $0xe8] sm:$0xff]
      %v2839 = vld [vmem:[#allocation2 + $0xf0] sm:$0xff]
      %v2840 = vld [vmem:[#allocation2 + $0xf8] sm:$0xff]
      %v2841 = vld [vmem:[#allocation2 + $0x100] sm:$0xff]
      %v2842 = vld [vmem:[#allocation2 + $0x108] sm:$0xff]
      %v2843 = vld [vmem:[#allocation2 + $0x110] sm:$0xff]
      %v2844 = vld [vmem:[#allocation2 + $0x118] sm:$0xff]
      %v2845 = vld [vmem:[#allocation2 + $0x120] sm:$0xff]
      %v2846 = vpack.c.bf16 %v2815, %v2814
      %v2847 = vpack.c.bf16 %v2817, %v2816
      %v2848 = vpack.c.bf16 %v2819, %v2818
      %v2849 = vpack.c.bf16 %v2821, %v2820
      %v2850 = vpack.c.bf16 %v2823, %v2822
      %v2851 = vpack.c.bf16 %v2825, %v2824
      %v2852 = vpack.c.bf16 %v2827, %v2826
      %v2853 = vpack.c.bf16 %v2829, %v2828
      %v2854 = vpack.c.bf16 %v2831, %v2830
      %v2855 = vpack.c.bf16 %v2833, %v2832
      %v2856 = vpack.c.bf16 %v2835, %v2834
      %v2857 = vpack.c.bf16 %v2837, %v2836
      %v2858 = vpack.c.bf16 %v2839, %v2838
      %v2859 = vpack.c.bf16 %v2841, %v2840
      %v2860 = vpack.c.bf16 %v2843, %v2842
      %v2861 = vpack.c.bf16 %v2845, %v2844
      %v2878 = vunpack.c.l.b16 %v2846
      %v2879 = vunpack.c.h.b16 %v2846
      %v2880 = vunpack.c.l.b16 %v2847
      %v2881 = vunpack.c.h.b16 %v2847
      %v2882 = vunpack.c.l.b16 %v2848
      %v2883 = vunpack.c.h.b16 %v2848
      %v2884 = vunpack.c.l.b16 %v2849
      %v2885 = vunpack.c.h.b16 %v2849
      %v2886 = vunpack.c.l.b16 %v2850
      %v2887 = vunpack.c.h.b16 %v2850
      %v2888 = vunpack.c.l.b16 %v2851
      %v2889 = vunpack.c.h.b16 %v2851
      %v2890 = vunpack.c.l.b16 %v2852
      %v2891 = vunpack.c.h.b16 %v2852
      %v2892 = vunpack.c.l.b16 %v2853
      %v2893 = vunpack.c.h.b16 %v2853
      %v2894 = vunpack.c.l.b16 %v2854
      %v2895 = vunpack.c.h.b16 %v2854
      %v2896 = vunpack.c.l.b16 %v2855
      %v2897 = vunpack.c.h.b16 %v2855
      %v2898 = vunpack.c.l.b16 %v2856
      %v2899 = vunpack.c.h.b16 %v2856
      %v2900 = vunpack.c.l.b16 %v2857
      %v2901 = vunpack.c.h.b16 %v2857
      %v2902 = vunpack.c.l.b16 %v2858
      %v2903 = vunpack.c.h.b16 %v2858
      %v2904 = vunpack.c.l.b16 %v2859
      %v2905 = vunpack.c.h.b16 %v2859
      %v2906 = vunpack.c.l.b16 %v2860
      %v2907 = vunpack.c.h.b16 %v2860
      %v2908 = vunpack.c.l.b16 %v2861
      %v2909 = vunpack.c.h.b16 %v2861
      %v2910 = vpack.c.b16 %v2878, %v2878
      %v2911 = vpack.c.b16 %v2879, %v2879
      %v2912 = vpack.c.b16 %v2880, %v2880
      %v2913 = vpack.c.b16 %v2881, %v2881
      %v2914 = vpack.c.b16 %v2882, %v2882
      %v2915 = vpack.c.b16 %v2883, %v2883
      %v2916 = vpack.c.b16 %v2884, %v2884
      %v2917 = vpack.c.b16 %v2885, %v2885
      %v2918 = vpack.c.b16 %v2886, %v2886
      %v2919 = vpack.c.b16 %v2887, %v2887
      %v2920 = vpack.c.b16 %v2888, %v2888
      %v2921 = vpack.c.b16 %v2889, %v2889
      %v2922 = vpack.c.b16 %v2890, %v2890
      %v2923 = vpack.c.b16 %v2891, %v2891
      %v2924 = vpack.c.b16 %v2892, %v2892
      %v2925 = vpack.c.b16 %v2893, %v2893
      %v2926 = vpack.c.b16 %v2894, %v2894
      %v2927 = vpack.c.b16 %v2895, %v2895
      %v2928 = vpack.c.b16 %v2896, %v2896
      %v2929 = vpack.c.b16 %v2897, %v2897
      %v2930 = vpack.c.b16 %v2898, %v2898
      %v2931 = vpack.c.b16 %v2899, %v2899
      %v2932 = vpack.c.b16 %v2900, %v2900
      %v2933 = vpack.c.b16 %v2901, %v2901
      %v2934 = vpack.c.b16 %v2902, %v2902
      %v2935 = vpack.c.b16 %v2903, %v2903
      %v2936 = vpack.c.b16 %v2904, %v2904
      %v2937 = vpack.c.b16 %v2905, %v2905
      %v2938 = vpack.c.b16 %v2906, %v2906
      %v2939 = vpack.c.b16 %v2907, %v2907
      %v2940 = vpack.c.b16 %v2908, %v2908
      %v2941 = vpack.c.b16 %v2909, %v2909
      %2942 = vrot.lane.b32.xlu0 %v2910, 56
      %v2943 = vpop.permute.xlu0 %2942
      %2944 = vrot.lane.b32.xlu0 %v2911, 56
      %v2945 = vpop.permute.xlu0 %2944
      %2946 = vrot.lane.b32.xlu0 %v2912, 56
      %v2947 = vpop.permute.xlu0 %2946
      %2948 = vrot.lane.b32.xlu0 %v2913, 56
      %v2949 = vpop.permute.xlu0 %2948
      %2950 = vrot.lane.b32.xlu0 %v2914, 56
      %v2951 = vpop.permute.xlu0 %2950
      %2952 = vrot.lane.b32.xlu0 %v2915, 56
      %v2953 = vpop.permute.xlu0 %2952
      %2954 = vrot.lane.b32.xlu0 %v2916, 56
      %v2955 = vpop.permute.xlu0 %2954
      %2956 = vrot.lane.b32.xlu0 %v2917, 56
      %v2957 = vpop.permute.xlu0 %2956
      %2958 = vrot.lane.b32.xlu0 %v2918, 56
      %v2959 = vpop.permute.xlu0 %2958
      %2960 = vrot.lane.b32.xlu0 %v2919, 56
      %v2961 = vpop.permute.xlu0 %2960
      %2962 = vrot.lane.b32.xlu0 %v2920, 56
      %v2963 = vpop.permute.xlu0 %2962
      %2964 = vrot.lane.b32.xlu0 %v2921, 56
      %v2965 = vpop.permute.xlu0 %2964
      %2966 = vrot.lane.b32.xlu0 %v2922, 56
      %v2967 = vpop.permute.xlu0 %2966
      %2968 = vrot.lane.b32.xlu0 %v2923, 56
      %v2969 = vpop.permute.xlu0 %2968
      %2970 = vrot.lane.b32.xlu0 %v2924, 56
      %v2971 = vpop.permute.xlu0 %2970
      %2972 = vrot.lane.b32.xlu0 %v2925, 56
      %v2973 = vpop.permute.xlu0 %2972
      %2974 = vrot.lane.b32.xlu0 %v2926, 56
      %v2975 = vpop.permute.xlu0 %2974
      %2976 = vrot.lane.b32.xlu0 %v2927, 56
      %v2977 = vpop.permute.xlu0 %2976
      %2978 = vrot.lane.b32.xlu0 %v2928, 56
      %v2979 = vpop.permute.xlu0 %2978
      %2980 = vrot.lane.b32.xlu0 %v2929, 56
      %v2981 = vpop.permute.xlu0 %2980
      %2982 = vrot.lane.b32.xlu0 %v2930, 56
      %v2983 = vpop.permute.xlu0 %2982
      %2984 = vrot.lane.b32.xlu0 %v2931, 56
      %v2985 = vpop.permute.xlu0 %2984
      %2986 = vrot.lane.b32.xlu0 %v2932, 56
      %v2987 = vpop.permute.xlu0 %2986
      %2988 = vrot.lane.b32.xlu0 %v2933, 56
      %v2989 = vpop.permute.xlu0 %2988
      %2990 = vrot.lane.b32.xlu0 %v2934, 56
      %v2991 = vpop.permute.xlu0 %2990
      %2992 = vrot.lane.b32.xlu0 %v2935, 56
      %v2993 = vpop.permute.xlu0 %2992
      %2994 = vrot.lane.b32.xlu0 %v2936, 56
      %v2995 = vpop.permute.xlu0 %2994
      %2996 = vrot.lane.b32.xlu0 %v2937, 56
      %v2997 = vpop.permute.xlu0 %2996
      %2998 = vrot.lane.b32.xlu0 %v2938, 56
      %v2999 = vpop.permute.xlu0 %2998
      %3000 = vrot.lane.b32.xlu0 %v2939, 56
      %v3001 = vpop.permute.xlu0 %3000
      %3002 = vrot.lane.b32.xlu0 %v2940, 56
      %v3003 = vpop.permute.xlu0 %3002
      %3004 = vrot.lane.b32.xlu0 %v2941, 56
      %v3005 = vpop.permute.xlu0 %3004
      %vm3038 = vcmask 519616
      %3039 = vst.msk [vmem:[#allocation5] sm:$0xf] %vm3038, %v2943
      %3040 = vst.msk [vmem:[#allocation5 + $0x4] sm:$0xf] %vm3038, %v2945
      %3041 = vst.msk [vmem:[#allocation5 + $0x8] sm:$0xf] %vm3038, %v2947
      %3042 = vst.msk [vmem:[#allocation5 + $0xc] sm:$0xf] %vm3038, %v2949
      %3043 = vst.msk [vmem:[#allocation5 + $0x10] sm:$0xf] %vm3038, %v2951
      %3044 = vst.msk [vmem:[#allocation5 + $0x14] sm:$0xf] %vm3038, %v2953
      %3045 = vst.msk [vmem:[#allocation5 + $0x18] sm:$0xf] %vm3038, %v2955
      %3046 = vst.msk [vmem:[#allocation5 + $0x1c] sm:$0xf] %vm3038, %v2957
      %3047 = vst.msk [vmem:[#allocation5 + $0x20] sm:$0xf] %vm3038, %v2959
      %3048 = vst.msk [vmem:[#allocation5 + $0x24] sm:$0xf] %vm3038, %v2961
      %3049 = vst.msk [vmem:[#allocation5 + $0x28] sm:$0xf] %vm3038, %v2963
      %3050 = vst.msk [vmem:[#allocation5 + $0x2c] sm:$0xf] %vm3038, %v2965
      %3051 = vst.msk [vmem:[#allocation5 + $0x30] sm:$0xf] %vm3038, %v2967
      %3052 = vst.msk [vmem:[#allocation5 + $0x34] sm:$0xf] %vm3038, %v2969
      %3053 = vst.msk [vmem:[#allocation5 + $0x38] sm:$0xf] %vm3038, %v2971
      %3054 = vst.msk [vmem:[#allocation5 + $0x3c] sm:$0xf] %vm3038, %v2973
      %3055 = vst.msk [vmem:[#allocation5 + $0x40] sm:$0xf] %vm3038, %v2975
      %3056 = vst.msk [vmem:[#allocation5 + $0x44] sm:$0xf] %vm3038, %v2977
      %3057 = vst.msk [vmem:[#allocation5 + $0x48] sm:$0xf] %vm3038, %v2979
      %3058 = vst.msk [vmem:[#allocation5 + $0x4c] sm:$0xf] %vm3038, %v2981
      %3059 = vst.msk [vmem:[#allocation5 + $0x50] sm:$0xf] %vm3038, %v2983
      %3060 = vst.msk [vmem:[#allocation5 + $0x54] sm:$0xf] %vm3038, %v2985
      %3061 = vst.msk [vmem:[#allocation5 + $0x58] sm:$0xf] %vm3038, %v2987
      %3062 = vst.msk [vmem:[#allocation5 + $0x5c] sm:$0xf] %vm3038, %v2989
      %3063 = vst.msk [vmem:[#allocation5 + $0x60] sm:$0xf] %vm3038, %v2991
      %3064 = vst.msk [vmem:[#allocation5 + $0x64] sm:$0xf] %vm3038, %v2993
      %3065 = vst.msk [vmem:[#allocation5 + $0x68] sm:$0xf] %vm3038, %v2995
      %3066 = vst.msk [vmem:[#allocation5 + $0x6c] sm:$0xf] %vm3038, %v2997
      %3067 = vst.msk [vmem:[#allocation5 + $0x70] sm:$0xf] %vm3038, %v2999
      %3068 = vst.msk [vmem:[#allocation5 + $0x74] sm:$0xf] %vm3038, %v3001
      %3069 = vst.msk [vmem:[#allocation5 + $0x78] sm:$0xf] %vm3038, %v3003
      %3070 = vst.msk [vmem:[#allocation5 + $0x7c] sm:$0xf] %vm3038, %v3005
      %v3071 = vld [vmem:[#allocation2 + $0x29] sm:$0xff]
      %v3072 = vld [vmem:[#allocation2 + $0x31] sm:$0xff]
      %v3073 = vld [vmem:[#allocation2 + $0x39] sm:$0xff]
      %v3074 = vld [vmem:[#allocation2 + $0x41] sm:$0xff]
      %v3075 = vld [vmem:[#allocation2 + $0x49] sm:$0xff]
      %v3076 = vld [vmem:[#allocation2 + $0x51] sm:$0xff]
      %v3077 = vld [vmem:[#allocation2 + $0x59] sm:$0xff]
      %v3078 = vld [vmem:[#allocation2 + $0x61] sm:$0xff]
      %v3079 = vld [vmem:[#allocation2 + $0x69] sm:$0xff]
      %v3080 = vld [vmem:[#allocation2 + $0x71] sm:$0xff]
      %v3081 = vld [vmem:[#allocation2 + $0x79] sm:$0xff]
      %v3082 = vld [vmem:[#allocation2 + $0x81] sm:$0xff]
      %v3083 = vld [vmem:[#allocation2 + $0x89] sm:$0xff]
      %v3084 = vld [vmem:[#allocation2 + $0x91] sm:$0xff]
      %v3085 = vld [vmem:[#allocation2 + $0x99] sm:$0xff]
      %v3086 = vld [vmem:[#allocation2 + $0xa1] sm:$0xff]
      %v3087 = vld [vmem:[#allocation2 + $0xa9] sm:$0xff]
      %v3088 = vld [vmem:[#allocation2 + $0xb1] sm:$0xff]
      %v3089 = vld [vmem:[#allocation2 + $0xb9] sm:$0xff]
      %v3090 = vld [vmem:[#allocation2 + $0xc1] sm:$0xff]
      %v3091 = vld [vmem:[#allocation2 + $0xc9] sm:$0xff]
      %v3092 = vld [vmem:[#allocation2 + $0xd1] sm:$0xff]
      %v3093 = vld [vmem:[#allocation2 + $0xd9] sm:$0xff]
      %v3094 = vld [vmem:[#allocation2 + $0xe1] sm:$0xff]
      %v3095 = vld [vmem:[#allocation2 + $0xe9] sm:$0xff]
      %v3096 = vld [vmem:[#allocation2 + $0xf1] sm:$0xff]
      %v3097 = vld [vmem:[#allocation2 + $0xf9] sm:$0xff]
      %v3098 = vld [vmem:[#allocation2 + $0x101] sm:$0xff]
      %v3099 = vld [vmem:[#allocation2 + $0x109] sm:$0xff]
      %v3100 = vld [vmem:[#allocation2 + $0x111] sm:$0xff]
      %v3101 = vld [vmem:[#allocation2 + $0x119] sm:$0xff]
      %v3102 = vld [vmem:[#allocation2 + $0x121] sm:$0xff]
      %v3103 = vsel %vm1401, %v3071, 0.0
      %v3104 = vsel %vm1402, %v3072, 0.0
      %v3105 = vsel %vm1403, %v3073, 0.0
      %v3106 = vsel %vm1404, %v3074, 0.0
      %v3107 = vsel %vm1405, %v3075, 0.0
      %v3108 = vsel %vm1406, %v3076, 0.0
      %v3109 = vsel %vm1407, %v3077, 0.0
      %v3110 = vsel %vm1408, %v3078, 0.0
      %v3111 = vsel %vm1409, %v3079, 0.0
      %v3112 = vsel %vm1410, %v3080, 0.0
      %v3113 = vsel %vm1411, %v3081, 0.0
      %v3114 = vsel %vm1412, %v3082, 0.0
      %v3115 = vsel %vm1413, %v3083, 0.0
      %v3116 = vsel %vm1414, %v3084, 0.0
      %v3117 = vsel %vm1415, %v3085, 0.0
      %v3118 = vsel %vm1416, %v3086, 0.0
      %v3119 = vsel %vm1417, %v3087, 0.0
      %v3120 = vsel %vm1418, %v3088, 0.0
      %v3121 = vsel %vm1419, %v3089, 0.0
      %v3122 = vsel %vm1420, %v3090, 0.0
      %v3123 = vsel %vm1421, %v3091, 0.0
      %v3124 = vsel %vm1422, %v3092, 0.0
      %v3125 = vsel %vm1423, %v3093, 0.0
      %v3126 = vsel %vm1424, %v3094, 0.0
      %v3127 = vsel %vm1425, %v3095, 0.0
      %v3128 = vsel %vm1426, %v3096, 0.0
      %v3129 = vsel %vm1427, %v3097, 0.0
      %v3130 = vsel %vm1428, %v3098, 0.0
      %v3131 = vsel %vm1429, %v3099, 0.0
      %v3132 = vsel %vm1430, %v3100, 0.0
      %v3133 = vsel %vm1431, %v3101, 0.0
      %v3134 = vsel %vm1432, %v3102, 0.0
      %v3135 = vpack.c.bf16 %v3104, %v3103
      %v3136 = vpack.c.bf16 %v3106, %v3105
      %v3137 = vpack.c.bf16 %v3108, %v3107
      %v3138 = vpack.c.bf16 %v3110, %v3109
      %v3139 = vpack.c.bf16 %v3112, %v3111
      %v3140 = vpack.c.bf16 %v3114, %v3113
      %v3141 = vpack.c.bf16 %v3116, %v3115
      %v3142 = vpack.c.bf16 %v3118, %v3117
      %v3143 = vpack.c.bf16 %v3120, %v3119
      %v3144 = vpack.c.bf16 %v3122, %v3121
      %v3145 = vpack.c.bf16 %v3124, %v3123
      %v3146 = vpack.c.bf16 %v3126, %v3125
      %v3147 = vpack.c.bf16 %v3128, %v3127
      %v3148 = vpack.c.bf16 %v3130, %v3129
      %v3149 = vpack.c.bf16 %v3132, %v3131
      %v3150 = vpack.c.bf16 %v3134, %v3133
      %v3167 = vunpack.c.l.b16 %v3135
      %v3168 = vunpack.c.h.b16 %v3135
      %v3169 = vunpack.c.l.b16 %v3136
      %v3170 = vunpack.c.h.b16 %v3136
      %v3171 = vunpack.c.l.b16 %v3137
      %v3172 = vunpack.c.h.b16 %v3137
      %v3173 = vunpack.c.l.b16 %v3138
      %v3174 = vunpack.c.h.b16 %v3138
      %v3175 = vunpack.c.l.b16 %v3139
      %v3176 = vunpack.c.h.b16 %v3139
      %v3177 = vunpack.c.l.b16 %v3140
      %v3178 = vunpack.c.h.b16 %v3140
      %v3179 = vunpack.c.l.b16 %v3141
      %v3180 = vunpack.c.h.b16 %v3141
      %v3181 = vunpack.c.l.b16 %v3142
      %v3182 = vunpack.c.h.b16 %v3142
      %v3183 = vunpack.c.l.b16 %v3143
      %v3184 = vunpack.c.h.b16 %v3143
      %v3185 = vunpack.c.l.b16 %v3144
      %v3186 = vunpack.c.h.b16 %v3144
      %v3187 = vunpack.c.l.b16 %v3145
      %v3188 = vunpack.c.h.b16 %v3145
      %v3189 = vunpack.c.l.b16 %v3146
      %v3190 = vunpack.c.h.b16 %v3146
      %v3191 = vunpack.c.l.b16 %v3147
      %v3192 = vunpack.c.h.b16 %v3147
      %v3193 = vunpack.c.l.b16 %v3148
      %v3194 = vunpack.c.h.b16 %v3148
      %v3195 = vunpack.c.l.b16 %v3149
      %v3196 = vunpack.c.h.b16 %v3149
      %v3197 = vunpack.c.l.b16 %v3150
      %v3198 = vunpack.c.h.b16 %v3150
      %v3199 = vpack.c.b16 %v3167, %v3167
      %v3200 = vpack.c.b16 %v3168, %v3168
      %v3201 = vpack.c.b16 %v3169, %v3169
      %v3202 = vpack.c.b16 %v3170, %v3170
      %v3203 = vpack.c.b16 %v3171, %v3171
      %v3204 = vpack.c.b16 %v3172, %v3172
      %v3205 = vpack.c.b16 %v3173, %v3173
      %v3206 = vpack.c.b16 %v3174, %v3174
      %v3207 = vpack.c.b16 %v3175, %v3175
      %v3208 = vpack.c.b16 %v3176, %v3176
      %v3209 = vpack.c.b16 %v3177, %v3177
      %v3210 = vpack.c.b16 %v3178, %v3178
      %v3211 = vpack.c.b16 %v3179, %v3179
      %v3212 = vpack.c.b16 %v3180, %v3180
      %v3213 = vpack.c.b16 %v3181, %v3181
      %v3214 = vpack.c.b16 %v3182, %v3182
      %v3215 = vpack.c.b16 %v3183, %v3183
      %v3216 = vpack.c.b16 %v3184, %v3184
      %v3217 = vpack.c.b16 %v3185, %v3185
      %v3218 = vpack.c.b16 %v3186, %v3186
      %v3219 = vpack.c.b16 %v3187, %v3187
      %v3220 = vpack.c.b16 %v3188, %v3188
      %v3221 = vpack.c.b16 %v3189, %v3189
      %v3222 = vpack.c.b16 %v3190, %v3190
      %v3223 = vpack.c.b16 %v3191, %v3191
      %v3224 = vpack.c.b16 %v3192, %v3192
      %v3225 = vpack.c.b16 %v3193, %v3193
      %v3226 = vpack.c.b16 %v3194, %v3194
      %v3227 = vpack.c.b16 %v3195, %v3195
      %v3228 = vpack.c.b16 %v3196, %v3196
      %v3229 = vpack.c.b16 %v3197, %v3197
      %v3230 = vpack.c.b16 %v3198, %v3198
      %3231 = vrot.lane.b32.xlu0 %v3199, 64
      %v3232 = vpop.permute.xlu0 %3231
      %3233 = vrot.lane.b32.xlu0 %v3200, 64
      %v3234 = vpop.permute.xlu0 %3233
      %3235 = vrot.lane.b32.xlu0 %v3201, 64
      %v3236 = vpop.permute.xlu0 %3235
      %3237 = vrot.lane.b32.xlu0 %v3202, 64
      %v3238 = vpop.permute.xlu0 %3237
      %3239 = vrot.lane.b32.xlu0 %v3203, 64
      %v3240 = vpop.permute.xlu0 %3239
      %3241 = vrot.lane.b32.xlu0 %v3204, 64
      %v3242 = vpop.permute.xlu0 %3241
      %3243 = vrot.lane.b32.xlu0 %v3205, 64
      %v3244 = vpop.permute.xlu0 %3243
      %3245 = vrot.lane.b32.xlu0 %v3206, 64
      %v3246 = vpop.permute.xlu0 %3245
      %3247 = vrot.lane.b32.xlu0 %v3207, 64
      %v3248 = vpop.permute.xlu0 %3247
      %3249 = vrot.lane.b32.xlu0 %v3208, 64
      %v3250 = vpop.permute.xlu0 %3249
      %3251 = vrot.lane.b32.xlu0 %v3209, 64
      %v3252 = vpop.permute.xlu0 %3251
      %3253 = vrot.lane.b32.xlu0 %v3210, 64
      %v3254 = vpop.permute.xlu0 %3253
      %3255 = vrot.lane.b32.xlu0 %v3211, 64
      %v3256 = vpop.permute.xlu0 %3255
      %3257 = vrot.lane.b32.xlu0 %v3212, 64
      %v3258 = vpop.permute.xlu0 %3257
      %3259 = vrot.lane.b32.xlu0 %v3213, 64
      %v3260 = vpop.permute.xlu0 %3259
      %3261 = vrot.lane.b32.xlu0 %v3214, 64
      %v3262 = vpop.permute.xlu0 %3261
      %3263 = vrot.lane.b32.xlu0 %v3215, 64
      %v3264 = vpop.permute.xlu0 %3263
      %3265 = vrot.lane.b32.xlu0 %v3216, 64
      %v3266 = vpop.permute.xlu0 %3265
      %3267 = vrot.lane.b32.xlu0 %v3217, 64
      %v3268 = vpop.permute.xlu0 %3267
      %3269 = vrot.lane.b32.xlu0 %v3218, 64
      %v3270 = vpop.permute.xlu0 %3269
      %3271 = vrot.lane.b32.xlu0 %v3219, 64
      %v3272 = vpop.permute.xlu0 %3271
      %3273 = vrot.lane.b32.xlu0 %v3220, 64
      %v3274 = vpop.permute.xlu0 %3273
      %3275 = vrot.lane.b32.xlu0 %v3221, 64
      %v3276 = vpop.permute.xlu0 %3275
      %3277 = vrot.lane.b32.xlu0 %v3222, 64
      %v3278 = vpop.permute.xlu0 %3277
      %3279 = vrot.lane.b32.xlu0 %v3223, 64
      %v3280 = vpop.permute.xlu0 %3279
      %3281 = vrot.lane.b32.xlu0 %v3224, 64
      %v3282 = vpop.permute.xlu0 %3281
      %3283 = vrot.lane.b32.xlu0 %v3225, 64
      %v3284 = vpop.permute.xlu0 %3283
      %3285 = vrot.lane.b32.xlu0 %v3226, 64
      %v3286 = vpop.permute.xlu0 %3285
      %3287 = vrot.lane.b32.xlu0 %v3227, 64
      %v3288 = vpop.permute.xlu0 %3287
      %3289 = vrot.lane.b32.xlu0 %v3228, 64
      %v3290 = vpop.permute.xlu0 %3289
      %3291 = vrot.lane.b32.xlu0 %v3229, 64
      %v3292 = vpop.permute.xlu0 %3291
      %3293 = vrot.lane.b32.xlu0 %v3230, 64
      %v3294 = vpop.permute.xlu0 %3293
      %vm3327 = vcmask 585216
      %3328 = vst.msk [vmem:[#allocation5] sm:$0xf] %vm3327, %v3232
      %3329 = vst.msk [vmem:[#allocation5 + $0x4] sm:$0xf] %vm3327, %v3234
      %3330 = vst.msk [vmem:[#allocation5 + $0x8] sm:$0xf] %vm3327, %v3236
      %3331 = vst.msk [vmem:[#allocation5 + $0xc] sm:$0xf] %vm3327, %v3238
      %3332 = vst.msk [vmem:[#allocation5 + $0x10] sm:$0xf] %vm3327, %v3240
      %3333 = vst.msk [vmem:[#allocation5 + $0x14] sm:$0xf] %vm3327, %v3242
      %3334 = vst.msk [vmem:[#allocation5 + $0x18] sm:$0xf] %vm3327, %v3244
      %3335 = vst.msk [vmem:[#allocation5 + $0x1c] sm:$0xf] %vm3327, %v3246
      %3336 = vst.msk [vmem:[#allocation5 + $0x20] sm:$0xf] %vm3327, %v3248
      %3337 = vst.msk [vmem:[#allocation5 + $0x24] sm:$0xf] %vm3327, %v3250
      %3338 = vst.msk [vmem:[#allocation5 + $0x28] sm:$0xf] %vm3327, %v3252
      %3339 = vst.msk [vmem:[#allocation5 + $0x2c] sm:$0xf] %vm3327, %v3254
      %3340 = vst.msk [vmem:[#allocation5 + $0x30] sm:$0xf] %vm3327, %v3256
      %3341 = vst.msk [vmem:[#allocation5 + $0x34] sm:$0xf] %vm3327, %v3258
      %3342 = vst.msk [vmem:[#allocation5 + $0x38] sm:$0xf] %vm3327, %v3260
      %3343 = vst.msk [vmem:[#allocation5 + $0x3c] sm:$0xf] %vm3327, %v3262
      %3344 = vst.msk [vmem:[#allocation5 + $0x40] sm:$0xf] %vm3327, %v3264
      %3345 = vst.msk [vmem:[#allocation5 + $0x44] sm:$0xf] %vm3327, %v3266
      %3346 = vst.msk [vmem:[#allocation5 + $0x48] sm:$0xf] %vm3327, %v3268
      %3347 = vst.msk [vmem:[#allocation5 + $0x4c] sm:$0xf] %vm3327, %v3270
      %3348 = vst.msk [vmem:[#allocation5 + $0x50] sm:$0xf] %vm3327, %v3272
      %3349 = vst.msk [vmem:[#allocation5 + $0x54] sm:$0xf] %vm3327, %v3274
      %3350 = vst.msk [vmem:[#allocation5 + $0x58] sm:$0xf] %vm3327, %v3276
      %3351 = vst.msk [vmem:[#allocation5 + $0x5c] sm:$0xf] %vm3327, %v3278
      %3352 = vst.msk [vmem:[#allocation5 + $0x60] sm:$0xf] %vm3327, %v3280
      %3353 = vst.msk [vmem:[#allocation5 + $0x64] sm:$0xf] %vm3327, %v3282
      %3354 = vst.msk [vmem:[#allocation5 + $0x68] sm:$0xf] %vm3327, %v3284
      %3355 = vst.msk [vmem:[#allocation5 + $0x6c] sm:$0xf] %vm3327, %v3286
      %3356 = vst.msk [vmem:[#allocation5 + $0x70] sm:$0xf] %vm3327, %v3288
      %3357 = vst.msk [vmem:[#allocation5 + $0x74] sm:$0xf] %vm3327, %v3290
      %3358 = vst.msk [vmem:[#allocation5 + $0x78] sm:$0xf] %vm3327, %v3292
      %3359 = vst.msk [vmem:[#allocation5 + $0x7c] sm:$0xf] %vm3327, %v3294
      %v3360 = vld [vmem:[%s1] sm:$0xf]
      %v3361 = vld [vmem:[%s1 + $0x4] sm:$0xf]
      %v3362 = vld [vmem:[%s1 + $0x8] sm:$0xf]
      %v3363 = vld [vmem:[%s1 + $0xc] sm:$0xf]
      %v3364 = vld [vmem:[%s1 + $0x10] sm:$0xf]
      %v3365 = vld [vmem:[%s1 + $0x14] sm:$0xf]
      %v3366 = vld [vmem:[%s1 + $0x18] sm:$0xf]
      %v3367 = vld [vmem:[%s1 + $0x1c] sm:$0xf]
      %v3368 = vld [vmem:[%s1 + $0x20] sm:$0xf]
      %v3369 = vld [vmem:[%s2] sm:$0x1]
      %v3370 = vld [vmem:[#allocation5] sm:$0xf]
      %v3371 = vld [vmem:[#allocation5 + $0x4] sm:$0xf]
      %v3372 = vld [vmem:[#allocation5 + $0x8] sm:$0xf]
      %v3373 = vld [vmem:[#allocation5 + $0xc] sm:$0xf]
      %v3374 = vld [vmem:[#allocation5 + $0x10] sm:$0xf]
      %v3375 = vld [vmem:[#allocation5 + $0x14] sm:$0xf]
      %v3376 = vld [vmem:[#allocation5 + $0x18] sm:$0xf]
      %v3377 = vld [vmem:[#allocation5 + $0x1c] sm:$0xf]
      %v3378 = vld [vmem:[#allocation5 + $0x20] sm:$0xf]
      %v3379 = vld [vmem:[#allocation5 + $0x24] sm:$0xf]
      %v3380 = vld [vmem:[#allocation5 + $0x28] sm:$0xf]
      %v3381 = vld [vmem:[#allocation5 + $0x2c] sm:$0xf]
      %v3382 = vld [vmem:[#allocation5 + $0x30] sm:$0xf]
      %v3383 = vld [vmem:[#allocation5 + $0x34] sm:$0xf]
      %v3384 = vld [vmem:[#allocation5 + $0x38] sm:$0xf]
      %v3385 = vld [vmem:[#allocation5 + $0x3c] sm:$0xf]
      %v3386 = vld [vmem:[#allocation5 + $0x40] sm:$0xf]
      %v3387 = vld [vmem:[#allocation5 + $0x44] sm:$0xf]
      %v3388 = vld [vmem:[#allocation5 + $0x48] sm:$0xf]
      %v3389 = vld [vmem:[#allocation5 + $0x4c] sm:$0xf]
      %v3390 = vld [vmem:[#allocation5 + $0x50] sm:$0xf]
      %v3391 = vld [vmem:[#allocation5 + $0x54] sm:$0xf]
      %v3392 = vld [vmem:[#allocation5 + $0x58] sm:$0xf]
      %v3393 = vld [vmem:[#allocation5 + $0x5c] sm:$0xf]
      %v3394 = vld [vmem:[#allocation5 + $0x60] sm:$0xf]
      %v3395 = vld [vmem:[#allocation5 + $0x64] sm:$0xf]
      %v3396 = vld [vmem:[#allocation5 + $0x68] sm:$0xf]
      %v3397 = vld [vmem:[#allocation5 + $0x6c] sm:$0xf]
      %v3398 = vld [vmem:[#allocation5 + $0x70] sm:$0xf]
      %v3399 = vld [vmem:[#allocation5 + $0x74] sm:$0xf]
      %v3400 = vld [vmem:[#allocation5 + $0x78] sm:$0xf]
      %v3401 = vld [vmem:[#allocation5 + $0x7c] sm:$0xf]
      %v3402 = vlaneseq
      %v3403 = vshrl.u32 %v3402, 7
      %v3404 = vsub.s32 0, %v3403
      %v3405 = vrot.slane %v3369, %v3404
      %v3438 = vunpack.c.l.b16 %v3370
      %v3439 = vunpack.c.l.b16 %v3371
      %v3440 = vunpack.c.l.b16 %v3372
      %v3441 = vunpack.c.l.b16 %v3373
      %v3442 = vunpack.c.l.b16 %v3374
      %v3443 = vunpack.c.l.b16 %v3375
      %v3444 = vunpack.c.l.b16 %v3376
      %v3445 = vunpack.c.l.b16 %v3377
      %v3446 = vunpack.c.l.b16 %v3378
      %v3447 = vunpack.c.l.b16 %v3379
      %v3448 = vunpack.c.l.b16 %v3380
      %v3449 = vunpack.c.l.b16 %v3381
      %v3450 = vunpack.c.l.b16 %v3382
      %v3451 = vunpack.c.l.b16 %v3383
      %v3452 = vunpack.c.l.b16 %v3384
      %v3453 = vunpack.c.l.b16 %v3385
      %v3454 = vunpack.c.l.b16 %v3386
      %v3455 = vunpack.c.l.b16 %v3387
      %v3456 = vunpack.c.l.b16 %v3388
      %v3457 = vunpack.c.l.b16 %v3389
      %v3458 = vunpack.c.l.b16 %v3390
      %v3459 = vunpack.c.l.b16 %v3391
      %v3460 = vunpack.c.l.b16 %v3392
      %v3461 = vunpack.c.l.b16 %v3393
      %v3462 = vunpack.c.l.b16 %v3394
      %v3463 = vunpack.c.l.b16 %v3395
      %v3464 = vunpack.c.l.b16 %v3396
      %v3465 = vunpack.c.l.b16 %v3397
      %v3466 = vunpack.c.l.b16 %v3398
      %v3467 = vunpack.c.l.b16 %v3399
      %v3468 = vunpack.c.l.b16 %v3400
      %v3469 = vunpack.c.l.b16 %v3401
      %v3470 = vpack.c.b16 %v3439, %v3438
      %v3471 = vpack.c.b16 %v3441, %v3440
      %v3472 = vpack.c.b16 %v3443, %v3442
      %v3473 = vpack.c.b16 %v3445, %v3444
      %v3474 = vpack.c.b16 %v3447, %v3446
      %v3475 = vpack.c.b16 %v3449, %v3448
      %v3476 = vpack.c.b16 %v3451, %v3450
      %v3477 = vpack.c.b16 %v3453, %v3452
      %v3478 = vpack.c.b16 %v3455, %v3454
      %v3479 = vpack.c.b16 %v3457, %v3456
      %v3480 = vpack.c.b16 %v3459, %v3458
      %v3481 = vpack.c.b16 %v3461, %v3460
      %v3482 = vpack.c.b16 %v3463, %v3462
      %v3483 = vpack.c.b16 %v3465, %v3464
      %v3484 = vpack.c.b16 %v3467, %v3466
      %v3485 = vpack.c.b16 %v3469, %v3468
      %v3495 = vunpack.c.l.b16 %v3360
      %v3496 = vunpack.c.l.b16 %v3361
      %v3497 = vunpack.c.l.b16 %v3362
      %v3498 = vunpack.c.l.b16 %v3363
      %v3499 = vunpack.c.l.b16 %v3364
      %v3500 = vunpack.c.l.b16 %v3365
      %v3501 = vunpack.c.l.b16 %v3366
      %v3502 = vunpack.c.l.b16 %v3367
      %v3503 = vunpack.c.l.b16 %v3368
      %v3504 = vpack.c.b16 %v3496, %v3495
      %v3505 = vpack.c.b16 %v3498, %v3497
      %v3506 = vpack.c.b16 %v3500, %v3499
      %v3507 = vpack.c.b16 %v3502, %v3501
      %v3508 = vpack.c.b16 %v3503, %v3503
      %vm3513 = vcmask 588800
      %v3515 = vsel %vm3513, %v3470, 0
      %v3518 = vsel %vm3513, %v3471, 0
      %v3521 = vsel %vm3513, %v3472, 0
      %v3524 = vsel %vm3513, %v3473, 0
      %v3527 = vsel %vm3513, %v3474, 0
      %v3530 = vsel %vm3513, %v3475, 0
      %v3533 = vsel %vm3513, %v3476, 0
      %v3536 = vsel %vm3513, %v3477, 0
      %v3539 = vsel %vm3513, %v3478, 0
      %v3542 = vsel %vm3513, %v3479, 0
      %v3545 = vsel %vm3513, %v3480, 0
      %v3548 = vsel %vm3513, %v3481, 0
      %v3551 = vsel %vm3513, %v3482, 0
      %v3554 = vsel %vm3513, %v3483, 0
      %v3557 = vsel %vm3513, %v3484, 0
      %v3560 = vsel %vm3513, %v3485, 0
      %vm3562 = vcmask 1043456
      %v3564 = vsel %vm3562, %v3508, 0
      %3566 = vmatprep.subr.bf16.mxu0 0
      %3567 = vmatpush1.bf16.msra.mxu0 0
      %3568 = vmatprep.subr.bf16.mxu0 0
      %3569 = vmatpush1.bf16.msra.mxu0 0
      %3570 = vmatprep.subr.bf16.mxu0 0
      %3571 = vmatpush1.bf16.msra.mxu0 0
      %3572 = vmatprep.subr.bf16.mxu0 0
      %3573 = vmatpush1.bf16.msra.mxu0 %v3564
      %3574 = vmatprep.subr.bf16.mxu0 0
      %3575 = vmatpush1.bf16.msra.mxu0 %v3507
      %3576 = vmatprep.subr.bf16.mxu0 0
      %3577 = vmatpush1.bf16.msra.mxu0 %v3506
      %3578 = vmatprep.subr.bf16.mxu0 0
      %3579 = vmatpush1.bf16.msra.mxu0 %v3505
      %3580 = vmatprep.subr.bf16.mxu0 0
      %3581 = vmatpush1.bf16.msra.mxu0 %v3504
      %3582 = vmatprep.subr.bf16.mxu0 0
      %3583 = vmatpush2.bf16.msra.mxu0 0
      %3584 = vmatprep.subr.bf16.mxu0 0
      %3585 = vmatpush2.bf16.msra.mxu0 0
      %3586 = vmatprep.subr.bf16.mxu0 0
      %3587 = vmatpush2.bf16.msra.mxu0 0
      %3588 = vmatprep.subr.bf16.mxu0 0
      %3589 = vmatpush2.bf16.msra.mxu0 0
      %3590 = vmatprep.subr.bf16.mxu0 0
      %3591 = vmatpush2.bf16.msra.mxu0 0
      %3592 = vmatprep.subr.bf16.mxu0 0
      %3593 = vmatpush2.bf16.msra.mxu0 0
      %3594 = vmatprep.subr.bf16.mxu0 0
      %3595 = vmatpush2.bf16.msra.mxu0 0
      %3596 = vmatprep.subr.bf16.mxu0 0
      %3597 = vmatpush2.bf16.msra.mxu0 0
      %3598 = vmatprep.mubr.bf16.mxu0 0
      %3599 = vmatmul.mubr.bf16.gmra.mxu0 %v3515
      %v3600 = vpop.f32.mrf.mxu0
      %v3601 = vadd.f32 %v3405, %v3600
      %v3602 = vpop.f32.mrf.mxu0
      %v3603 = vpop.f32.mrf.mxu0
      %v3604 = vadd.f32 %v3405, %v3603
      %v3605 = vpop.f32.mrf.mxu0
      %3606 = vmatprep.mubr.bf16.mxu0 0
      %3607 = vmatmul.mubr.bf16.gmra.mxu0 %v3518
      %v3608 = vpop.f32.mrf.mxu0
      %v3609 = vadd.f32 %v3405, %v3608
      %v3610 = vpop.f32.mrf.mxu0
      %v3611 = vpop.f32.mrf.mxu0
      %v3612 = vadd.f32 %v3405, %v3611
      %v3613 = vpop.f32.mrf.mxu0
      %3614 = vmatprep.mubr.bf16.mxu0 0
      %3615 = vmatmul.mubr.bf16.gmra.mxu0 %v3521
      %v3616 = vpop.f32.mrf.mxu0
      %v3617 = vadd.f32 %v3405, %v3616
      %v3618 = vpop.f32.mrf.mxu0
      %v3619 = vpop.f32.mrf.mxu0
      %v3620 = vadd.f32 %v3405, %v3619
      %v3621 = vpop.f32.mrf.mxu0
      %3622 = vmatprep.mubr.bf16.mxu0 0
      %3623 = vmatmul.mubr.bf16.gmra.mxu0 %v3524
      %v3624 = vpop.f32.mrf.mxu0
      %v3625 = vadd.f32 %v3405, %v3624
      %v3626 = vpop.f32.mrf.mxu0
      %v3627 = vpop.f32.mrf.mxu0
      %v3628 = vadd.f32 %v3405, %v3627
      %v3629 = vpop.f32.mrf.mxu0
      %3630 = vmatprep.mubr.bf16.mxu0 0
      %3631 = vmatmul.mubr.bf16.gmra.mxu0 %v3527
      %v3632 = vpop.f32.mrf.mxu0
      %v3633 = vadd.f32 %v3405, %v3632
      %v3634 = vpop.f32.mrf.mxu0
      %v3635 = vpop.f32.mrf.mxu0
      %v3636 = vadd.f32 %v3405, %v3635
      %v3637 = vpop.f32.mrf.mxu0
      %3638 = vmatprep.mubr.bf16.mxu0 0
      %3639 = vmatmul.mubr.bf16.gmra.mxu0 %v3530
      %v3640 = vpop.f32.mrf.mxu0
      %v3641 = vadd.f32 %v3405, %v3640
      %v3642 = vpop.f32.mrf.mxu0
      %v3643 = vpop.f32.mrf.mxu0
      %v3644 = vadd.f32 %v3405, %v3643
      %v3645 = vpop.f32.mrf.mxu0
      %3646 = vmatprep.mubr.bf16.mxu0 0
      %3647 = vmatmul.mubr.bf16.gmra.mxu0 %v3533
      %v3648 = vpop.f32.mrf.mxu0
      %v3649 = vadd.f32 %v3405, %v3648
      %v3650 = vpop.f32.mrf.mxu0
      %v3651 = vpop.f32.mrf.mxu0
      %v3652 = vadd.f32 %v3405, %v3651
      %v3653 = vpop.f32.mrf.mxu0
      %3654 = vmatprep.mubr.bf16.mxu0 0
      %3655 = vmatmul.mubr.bf16.gmra.mxu0 %v3536
      %v3656 = vpop.f32.mrf.mxu0
      %v3657 = vadd.f32 %v3405, %v3656
      %v3658 = vpop.f32.mrf.mxu0
      %v3659 = vpop.f32.mrf.mxu0
      %v3660 = vadd.f32 %v3405, %v3659
      %v3661 = vpop.f32.mrf.mxu0
      %3662 = vmatprep.mubr.bf16.mxu0 0
      %3663 = vmatmul.mubr.bf16.gmra.mxu0 %v3539
      %v3664 = vpop.f32.mrf.mxu0
      %v3665 = vadd.f32 %v3405, %v3664
      %v3666 = vpop.f32.mrf.mxu0
      %v3667 = vpop.f32.mrf.mxu0
      %v3668 = vadd.f32 %v3405, %v3667
      %v3669 = vpop.f32.mrf.mxu0
      %3670 = vmatprep.mubr.bf16.mxu0 0
      %3671 = vmatmul.mubr.bf16.gmra.mxu0 %v3542
      %v3672 = vpop.f32.mrf.mxu0
      %v3673 = vadd.f32 %v3405, %v3672
      %v3674 = vpop.f32.mrf.mxu0
      %v3675 = vpop.f32.mrf.mxu0
      %v3676 = vadd.f32 %v3405, %v3675
      %v3677 = vpop.f32.mrf.mxu0
      %3678 = vmatprep.mubr.bf16.mxu0 0
      %3679 = vmatmul.mubr.bf16.gmra.mxu0 %v3545
      %v3680 = vpop.f32.mrf.mxu0
      %v3681 = vadd.f32 %v3405, %v3680
      %v3682 = vpop.f32.mrf.mxu0
      %v3683 = vpop.f32.mrf.mxu0
      %v3684 = vadd.f32 %v3405, %v3683
      %v3685 = vpop.f32.mrf.mxu0
      %3686 = vmatprep.mubr.bf16.mxu0 0
      %3687 = vmatmul.mubr.bf16.gmra.mxu0 %v3548
      %v3688 = vpop.f32.mrf.mxu0
      %v3689 = vadd.f32 %v3405, %v3688
      %v3690 = vpop.f32.mrf.mxu0
      %v3691 = vpop.f32.mrf.mxu0
      %v3692 = vadd.f32 %v3405, %v3691
      %v3693 = vpop.f32.mrf.mxu0
      %3694 = vmatprep.mubr.bf16.mxu0 0
      %3695 = vmatmul.mubr.bf16.gmra.mxu0 %v3551
      %v3696 = vpop.f32.mrf.mxu0
      %v3697 = vadd.f32 %v3405, %v3696
      %v3698 = vpop.f32.mrf.mxu0
      %v3699 = vpop.f32.mrf.mxu0
      %v3700 = vadd.f32 %v3405, %v3699
      %v3701 = vpop.f32.mrf.mxu0
      %3702 = vmatprep.mubr.bf16.mxu0 0
      %3703 = vmatmul.mubr.bf16.gmra.mxu0 %v3554
      %v3704 = vpop.f32.mrf.mxu0
      %v3705 = vadd.f32 %v3405, %v3704
      %v3706 = vpop.f32.mrf.mxu0
      %v3707 = vpop.f32.mrf.mxu0
      %v3708 = vadd.f32 %v3405, %v3707
      %v3709 = vpop.f32.mrf.mxu0
      %3710 = vmatprep.mubr.bf16.mxu0 0
      %3711 = vmatmul.mubr.bf16.gmra.mxu0 %v3557
      %v3712 = vpop.f32.mrf.mxu0
      %v3713 = vadd.f32 %v3405, %v3712
      %v3714 = vpop.f32.mrf.mxu0
      %v3715 = vpop.f32.mrf.mxu0
      %v3716 = vadd.f32 %v3405, %v3715
      %v3717 = vpop.f32.mrf.mxu0
      %3718 = vmatprep.mubr.bf16.mxu0 0
      %3719 = vmatmul.mubr.bf16.gmra.mxu0 %v3560
      %v3720 = vpop.f32.mrf.mxu0
      %v3721 = vadd.f32 %v3405, %v3720
      %v3722 = vpop.f32.mrf.mxu0
      %v3723 = vpop.f32.mrf.mxu0
      %v3724 = vadd.f32 %v3405, %v3723
      %v3725 = vpop.f32.mrf.mxu0
      %3726 = vdwg.mxu0
      %vm3727 = vcmask 130048
      %3728 = vst.msk [vmem:[#allocation3] sm:$0xff] %vm3727, 0.0
      %3729 = vst.msk [vmem:[#allocation3 + $0x8] sm:$0xff] %vm3727, 0.0
      %3730 = vst.msk [vmem:[#allocation3 + $0x10] sm:$0xff] %vm3727, 0.0
      %3731 = vst.msk [vmem:[#allocation3 + $0x118] sm:$0xff] %vm3727, 0.0
      %3732 = vst.msk [vmem:[#allocation3 + $0x120] sm:$0xff] %vm3727, 0.0
      %3733 = vst.msk [vmem:[#allocation3 + $0x128] sm:$0xff] %vm3727, 0.0
      %v3734 = vmax.f32 %v3601, 0.0
      %v3735 = vmax.f32 %v3604, 0.0
      %v3736 = vmax.f32 %v3609, 0.0
      %v3737 = vmax.f32 %v3612, 0.0
      %v3738 = vmax.f32 %v3617, 0.0
      %v3739 = vmax.f32 %v3620, 0.0
      %v3740 = vmax.f32 %v3625, 0.0
      %v3741 = vmax.f32 %v3628, 0.0
      %v3742 = vmax.f32 %v3633, 0.0
      %v3743 = vmax.f32 %v3636, 0.0
      %v3744 = vmax.f32 %v3641, 0.0
      %v3745 = vmax.f32 %v3644, 0.0
      %v3746 = vmax.f32 %v3649, 0.0
      %v3747 = vmax.f32 %v3652, 0.0
      %v3748 = vmax.f32 %v3657, 0.0
      %v3749 = vmax.f32 %v3660, 0.0
      %v3750 = vmax.f32 %v3665, 0.0
      %v3751 = vmax.f32 %v3668, 0.0
      %v3752 = vmax.f32 %v3673, 0.0
      %v3753 = vmax.f32 %v3676, 0.0
      %v3754 = vmax.f32 %v3681, 0.0
      %v3755 = vmax.f32 %v3684, 0.0
      %v3756 = vmax.f32 %v3689, 0.0
      %v3757 = vmax.f32 %v3692, 0.0
      %v3758 = vmax.f32 %v3697, 0.0
      %v3759 = vmax.f32 %v3700, 0.0
      %v3760 = vmax.f32 %v3705, 0.0
      %v3761 = vmax.f32 %v3708, 0.0
      %v3762 = vmax.f32 %v3713, 0.0
      %v3763 = vmax.f32 %v3716, 0.0
      %v3764 = vmax.f32 %v3721, 0.0
      %v3765 = vmax.f32 %v3724, 0.0
      %3766 = vst.msk [vmem:[#allocation3 + $0x18] sm:$0xff] %vm3727, %v3734
      %3767 = vst.msk [vmem:[#allocation3 + $0x20] sm:$0xff] %vm3727, %v3735
      %3768 = vst.msk [vmem:[#allocation3 + $0x28] sm:$0xff] %vm3727, %v3736
      %3769 = vst.msk [vmem:[#allocation3 + $0x30] sm:$0xff] %vm3727, %v3737
      %3770 = vst.msk [vmem:[#allocation3 + $0x38] sm:$0xff] %vm3727, %v3738
      %3771 = vst.msk [vmem:[#allocation3 + $0x40] sm:$0xff] %vm3727, %v3739
      %3772 = vst.msk [vmem:[#allocation3 + $0x48] sm:$0xff] %vm3727, %v3740
      %3773 = vst.msk [vmem:[#allocation3 + $0x50] sm:$0xff] %vm3727, %v3741
      %3774 = vst.msk [vmem:[#allocation3 + $0x58] sm:$0xff] %vm3727, %v3742
      %3775 = vst.msk [vmem:[#allocation3 + $0x60] sm:$0xff] %vm3727, %v3743
      %3776 = vst.msk [vmem:[#allocation3 + $0x68] sm:$0xff] %vm3727, %v3744
      %3777 = vst.msk [vmem:[#allocation3 + $0x70] sm:$0xff] %vm3727, %v3745
      %3778 = vst.msk [vmem:[#allocation3 + $0x78] sm:$0xff] %vm3727, %v3746
      %3779 = vst.msk [vmem:[#allocation3 + $0x80] sm:$0xff] %vm3727, %v3747
      %3780 = vst.msk [vmem:[#allocation3 + $0x88] sm:$0xff] %vm3727, %v3748
      %3781 = vst.msk [vmem:[#allocation3 + $0x90] sm:$0xff] %vm3727, %v3749
      %3782 = vst.msk [vmem:[#allocation3 + $0x98] sm:$0xff] %vm3727, %v3750
      %3783 = vst.msk [vmem:[#allocation3 + $0xa0] sm:$0xff] %vm3727, %v3751
      %3784 = vst.msk [vmem:[#allocation3 + $0xa8] sm:$0xff] %vm3727, %v3752
      %3785 = vst.msk [vmem:[#allocation3 + $0xb0] sm:$0xff] %vm3727, %v3753
      %3786 = vst.msk [vmem:[#allocation3 + $0xb8] sm:$0xff] %vm3727, %v3754
      %3787 = vst.msk [vmem:[#allocation3 + $0xc0] sm:$0xff] %vm3727, %v3755
      %3788 = vst.msk [vmem:[#allocation3 + $0xc8] sm:$0xff] %vm3727, %v3756
      %3789 = vst.msk [vmem:[#allocation3 + $0xd0] sm:$0xff] %vm3727, %v3757
      %3790 = vst.msk [vmem:[#allocation3 + $0xd8] sm:$0xff] %vm3727, %v3758
      %3791 = vst.msk [vmem:[#allocation3 + $0xe0] sm:$0xff] %vm3727, %v3759
      %3792 = vst.msk [vmem:[#allocation3 + $0xe8] sm:$0xff] %vm3727, %v3760
      %3793 = vst.msk [vmem:[#allocation3 + $0xf0] sm:$0xff] %vm3727, %v3761
      %3794 = vst.msk [vmem:[#allocation3 + $0xf8] sm:$0xff] %vm3727, %v3762
      %3795 = vst.msk [vmem:[#allocation3 + $0x100] sm:$0xff] %vm3727, %v3763
      %3796 = vst.msk [vmem:[#allocation3 + $0x108] sm:$0xff] %vm3727, %v3764
      %3797 = vst.msk [vmem:[#allocation3 + $0x110] sm:$0xff] %vm3727, %v3765
      %v3798 = vld [vmem:[#allocation3 + $0x7] sm:$0xff]
      %v3799 = vld [vmem:[#allocation3 + $0xf] sm:$0xff]
      %v3800 = vld [vmem:[#allocation3 + $0x17] sm:$0xff]
      %v3801 = vld [vmem:[#allocation3 + $0x1f] sm:$0xff]
      %v3802 = vld [vmem:[#allocation3 + $0x27] sm:$0xff]
      %v3803 = vld [vmem:[#allocation3 + $0x2f] sm:$0xff]
      %v3804 = vld [vmem:[#allocation3 + $0x37] sm:$0xff]
      %v3805 = vld [vmem:[#allocation3 + $0x3f] sm:$0xff]
      %v3806 = vld [vmem:[#allocation3 + $0x47] sm:$0xff]
      %v3807 = vld [vmem:[#allocation3 + $0x4f] sm:$0xff]
      %v3808 = vld [vmem:[#allocation3 + $0x57] sm:$0xff]
      %v3809 = vld [vmem:[#allocation3 + $0x5f] sm:$0xff]
      %v3810 = vld [vmem:[#allocation3 + $0x67] sm:$0xff]
      %v3811 = vld [vmem:[#allocation3 + $0x6f] sm:$0xff]
      %v3812 = vld [vmem:[#allocation3 + $0x77] sm:$0xff]
      %v3813 = vld [vmem:[#allocation3 + $0x7f] sm:$0xff]
      %v3814 = vld [vmem:[#allocation3 + $0x87] sm:$0xff]
      %v3815 = vld [vmem:[#allocation3 + $0x8f] sm:$0xff]
      %v3816 = vld [vmem:[#allocation3 + $0x97] sm:$0xff]
      %v3817 = vld [vmem:[#allocation3 + $0x9f] sm:$0xff]
      %v3818 = vld [vmem:[#allocation3 + $0xa7] sm:$0xff]
      %v3819 = vld [vmem:[#allocation3 + $0xaf] sm:$0xff]
      %v3820 = vld [vmem:[#allocation3 + $0xb7] sm:$0xff]
      %v3821 = vld [vmem:[#allocation3 + $0xbf] sm:$0xff]
      %v3822 = vld [vmem:[#allocation3 + $0xc7] sm:$0xff]
      %v3823 = vld [vmem:[#allocation3 + $0xcf] sm:$0xff]
      %v3824 = vld [vmem:[#allocation3 + $0xd7] sm:$0xff]
      %v3825 = vld [vmem:[#allocation3 + $0xdf] sm:$0xff]
      %v3826 = vld [vmem:[#allocation3 + $0xe7] sm:$0xff]
      %v3827 = vld [vmem:[#allocation3 + $0xef] sm:$0xff]
      %v3828 = vld [vmem:[#allocation3 + $0xf7] sm:$0xff]
      %v3829 = vld [vmem:[#allocation3 + $0xff] sm:$0xff]
      %v3830 = vsel %vm855, %v3798, 0.0
      %v3831 = vsel %vm856, %v3799, 0.0
      %v3832 = vsel %vm857, %v3800, 0.0
      %v3833 = vsel %vm858, %v3801, 0.0
      %v3834 = vsel %vm859, %v3802, 0.0
      %v3835 = vsel %vm860, %v3803, 0.0
      %v3836 = vsel %vm861, %v3804, 0.0
      %v3837 = vsel %vm862, %v3805, 0.0
      %v3838 = vsel %vm863, %v3806, 0.0
      %v3839 = vsel %vm864, %v3807, 0.0
      %v3840 = vsel %vm865, %v3808, 0.0
      %v3841 = vsel %vm866, %v3809, 0.0
      %v3842 = vsel %vm867, %v3810, 0.0
      %v3843 = vsel %vm868, %v3811, 0.0
      %v3844 = vsel %vm869, %v3812, 0.0
      %v3845 = vsel %vm870, %v3813, 0.0
      %v3846 = vsel %vm871, %v3814, 0.0
      %v3847 = vsel %vm872, %v3815, 0.0
      %v3848 = vsel %vm873, %v3816, 0.0
      %v3849 = vsel %vm874, %v3817, 0.0
      %v3850 = vsel %vm875, %v3818, 0.0
      %v3851 = vsel %vm876, %v3819, 0.0
      %v3852 = vsel %vm877, %v3820, 0.0
      %v3853 = vsel %vm878, %v3821, 0.0
      %v3854 = vsel %vm879, %v3822, 0.0
      %v3855 = vsel %vm880, %v3823, 0.0
      %v3856 = vsel %vm881, %v3824, 0.0
      %v3857 = vsel %vm882, %v3825, 0.0
      %v3858 = vsel %vm883, %v3826, 0.0
      %v3859 = vsel %vm884, %v3827, 0.0
      %v3860 = vsel %vm885, %v3828, 0.0
      %v3861 = vsel %vm886, %v3829, 0.0
      %v3862 = vpack.c.bf16 %v3831, %v3830
      %v3863 = vpack.c.bf16 %v3833, %v3832
      %v3864 = vpack.c.bf16 %v3835, %v3834
      %v3865 = vpack.c.bf16 %v3837, %v3836
      %v3866 = vpack.c.bf16 %v3839, %v3838
      %v3867 = vpack.c.bf16 %v3841, %v3840
      %v3868 = vpack.c.bf16 %v3843, %v3842
      %v3869 = vpack.c.bf16 %v3845, %v3844
      %v3870 = vpack.c.bf16 %v3847, %v3846
      %v3871 = vpack.c.bf16 %v3849, %v3848
      %v3872 = vpack.c.bf16 %v3851, %v3850
      %v3873 = vpack.c.bf16 %v3853, %v3852
      %v3874 = vpack.c.bf16 %v3855, %v3854
      %v3875 = vpack.c.bf16 %v3857, %v3856
      %v3876 = vpack.c.bf16 %v3859, %v3858
      %v3877 = vpack.c.bf16 %v3861, %v3860
      %v3894 = vunpack.c.l.b16 %v3862
      %v3895 = vunpack.c.h.b16 %v3862
      %v3896 = vunpack.c.l.b16 %v3863
      %v3897 = vunpack.c.h.b16 %v3863
      %v3898 = vunpack.c.l.b16 %v3864
      %v3899 = vunpack.c.h.b16 %v3864
      %v3900 = vunpack.c.l.b16 %v3865
      %v3901 = vunpack.c.h.b16 %v3865
      %v3902 = vunpack.c.l.b16 %v3866
      %v3903 = vunpack.c.h.b16 %v3866
      %v3904 = vunpack.c.l.b16 %v3867
      %v3905 = vunpack.c.h.b16 %v3867
      %v3906 = vunpack.c.l.b16 %v3868
      %v3907 = vunpack.c.h.b16 %v3868
      %v3908 = vunpack.c.l.b16 %v3869
      %v3909 = vunpack.c.h.b16 %v3869
      %v3910 = vunpack.c.l.b16 %v3870
      %v3911 = vunpack.c.h.b16 %v3870
      %v3912 = vunpack.c.l.b16 %v3871
      %v3913 = vunpack.c.h.b16 %v3871
      %v3914 = vunpack.c.l.b16 %v3872
      %v3915 = vunpack.c.h.b16 %v3872
      %v3916 = vunpack.c.l.b16 %v3873
      %v3917 = vunpack.c.h.b16 %v3873
      %v3918 = vunpack.c.l.b16 %v3874
      %v3919 = vunpack.c.h.b16 %v3874
      %v3920 = vunpack.c.l.b16 %v3875
      %v3921 = vunpack.c.h.b16 %v3875
      %v3922 = vunpack.c.l.b16 %v3876
      %v3923 = vunpack.c.h.b16 %v3876
      %v3924 = vunpack.c.l.b16 %v3877
      %v3925 = vunpack.c.h.b16 %v3877
      %v3926 = vpack.c.b16 %v3894, %v3894
      %v3927 = vpack.c.b16 %v3895, %v3895
      %v3928 = vpack.c.b16 %v3896, %v3896
      %v3929 = vpack.c.b16 %v3897, %v3897
      %v3930 = vpack.c.b16 %v3898, %v3898
      %v3931 = vpack.c.b16 %v3899, %v3899
      %v3932 = vpack.c.b16 %v3900, %v3900
      %v3933 = vpack.c.b16 %v3901, %v3901
      %v3934 = vpack.c.b16 %v3902, %v3902
      %v3935 = vpack.c.b16 %v3903, %v3903
      %v3936 = vpack.c.b16 %v3904, %v3904
      %v3937 = vpack.c.b16 %v3905, %v3905
      %v3938 = vpack.c.b16 %v3906, %v3906
      %v3939 = vpack.c.b16 %v3907, %v3907
      %v3940 = vpack.c.b16 %v3908, %v3908
      %v3941 = vpack.c.b16 %v3909, %v3909
      %v3942 = vpack.c.b16 %v3910, %v3910
      %v3943 = vpack.c.b16 %v3911, %v3911
      %v3944 = vpack.c.b16 %v3912, %v3912
      %v3945 = vpack.c.b16 %v3913, %v3913
      %v3946 = vpack.c.b16 %v3914, %v3914
      %v3947 = vpack.c.b16 %v3915, %v3915
      %v3948 = vpack.c.b16 %v3916, %v3916
      %v3949 = vpack.c.b16 %v3917, %v3917
      %v3950 = vpack.c.b16 %v3918, %v3918
      %v3951 = vpack.c.b16 %v3919, %v3919
      %v3952 = vpack.c.b16 %v3920, %v3920
      %v3953 = vpack.c.b16 %v3921, %v3921
      %v3954 = vpack.c.b16 %v3922, %v3922
      %v3955 = vpack.c.b16 %v3923, %v3923
      %v3956 = vpack.c.b16 %v3924, %v3924
      %v3957 = vpack.c.b16 %v3925, %v3925
      %vm3990 = vcmask 125952
      %3991 = vst.msk [vmem:[#allocation6] sm:$0xf] %vm3990, %v3926
      %3992 = vst.msk [vmem:[#allocation6 + $0x8] sm:$0xf] %vm3990, %v3927
      %3993 = vst.msk [vmem:[#allocation6 + $0x10] sm:$0xf] %vm3990, %v3928
      %3994 = vst.msk [vmem:[#allocation6 + $0x18] sm:$0xf] %vm3990, %v3929
      %3995 = vst.msk [vmem:[#allocation6 + $0x20] sm:$0xf] %vm3990, %v3930
      %3996 = vst.msk [vmem:[#allocation6 + $0x28] sm:$0xf] %vm3990, %v3931
      %3997 = vst.msk [vmem:[#allocation6 + $0x30] sm:$0xf] %vm3990, %v3932
      %3998 = vst.msk [vmem:[#allocation6 + $0x38] sm:$0xf] %vm3990, %v3933
      %3999 = vst.msk [vmem:[#allocation6 + $0x40] sm:$0xf] %vm3990, %v3934
      %4000 = vst.msk [vmem:[#allocation6 + $0x48] sm:$0xf] %vm3990, %v3935
      %4001 = vst.msk [vmem:[#allocation6 + $0x50] sm:$0xf] %vm3990, %v3936
      %4002 = vst.msk [vmem:[#allocation6 + $0x58] sm:$0xf] %vm3990, %v3937
      %4003 = vst.msk [vmem:[#allocation6 + $0x60] sm:$0xf] %vm3990, %v3938
      %4004 = vst.msk [vmem:[#allocation6 + $0x68] sm:$0xf] %vm3990, %v3939
      %4005 = vst.msk [vmem:[#allocation6 + $0x70] sm:$0xf] %vm3990, %v3940
      %4006 = vst.msk [vmem:[#allocation6 + $0x78] sm:$0xf] %vm3990, %v3941
      %4007 = vst.msk [vmem:[#allocation6 + $0x80] sm:$0xf] %vm3990, %v3942
      %4008 = vst.msk [vmem:[#allocation6 + $0x88] sm:$0xf] %vm3990, %v3943
      %4009 = vst.msk [vmem:[#allocation6 + $0x90] sm:$0xf] %vm3990, %v3944
      %4010 = vst.msk [vmem:[#allocation6 + $0x98] sm:$0xf] %vm3990, %v3945
      %4011 = vst.msk [vmem:[#allocation6 + $0xa0] sm:$0xf] %vm3990, %v3946
      %4012 = vst.msk [vmem:[#allocation6 + $0xa8] sm:$0xf] %vm3990, %v3947
      %4013 = vst.msk [vmem:[#allocation6 + $0xb0] sm:$0xf] %vm3990, %v3948
      %4014 = vst.msk [vmem:[#allocation6 + $0xb8] sm:$0xf] %vm3990, %v3949
      %4015 = vst.msk [vmem:[#allocation6 + $0xc0] sm:$0xf] %vm3990, %v3950
      %4016 = vst.msk [vmem:[#allocation6 + $0xc8] sm:$0xf] %vm3990, %v3951
      %4017 = vst.msk [vmem:[#allocation6 + $0xd0] sm:$0xf] %vm3990, %v3952
      %4018 = vst.msk [vmem:[#allocation6 + $0xd8] sm:$0xf] %vm3990, %v3953
      %4019 = vst.msk [vmem:[#allocation6 + $0xe0] sm:$0xf] %vm3990, %v3954
      %4020 = vst.msk [vmem:[#allocation6 + $0xe8] sm:$0xf] %vm3990, %v3955
      %4021 = vst.msk [vmem:[#allocation6 + $0xf0] sm:$0xf] %vm3990, %v3956
      %4022 = vst.msk [vmem:[#allocation6 + $0xf8] sm:$0xf] %vm3990, %v3957
      %v4023 = vld [vmem:[#allocation3 + $0x8] sm:$0xff]
      %v4024 = vld [vmem:[#allocation3 + $0x10] sm:$0xff]
      %v4025 = vld [vmem:[#allocation3 + $0x18] sm:$0xff]
      %v4026 = vld [vmem:[#allocation3 + $0x20] sm:$0xff]
      %v4027 = vld [vmem:[#allocation3 + $0x28] sm:$0xff]
      %v4028 = vld [vmem:[#allocation3 + $0x30] sm:$0xff]
      %v4029 = vld [vmem:[#allocation3 + $0x38] sm:$0xff]
      %v4030 = vld [vmem:[#allocation3 + $0x40] sm:$0xff]
      %v4031 = vld [vmem:[#allocation3 + $0x48] sm:$0xff]
      %v4032 = vld [vmem:[#allocation3 + $0x50] sm:$0xff]
      %v4033 = vld [vmem:[#allocation3 + $0x58] sm:$0xff]
      %v4034 = vld [vmem:[#allocation3 + $0x60] sm:$0xff]
      %v4035 = vld [vmem:[#allocation3 + $0x68] sm:$0xff]
      %v4036 = vld [vmem:[#allocation3 + $0x70] sm:$0xff]
      %v4037 = vld [vmem:[#allocation3 + $0x78] sm:$0xff]
      %v4038 = vld [vmem:[#allocation3 + $0x80] sm:$0xff]
      %v4039 = vld [vmem:[#allocation3 + $0x88] sm:$0xff]
      %v4040 = vld [vmem:[#allocation3 + $0x90] sm:$0xff]
      %v4041 = vld [vmem:[#allocation3 + $0x98] sm:$0xff]
      %v4042 = vld [vmem:[#allocation3 + $0xa0] sm:$0xff]
      %v4043 = vld [vmem:[#allocation3 + $0xa8] sm:$0xff]
      %v4044 = vld [vmem:[#allocation3 + $0xb0] sm:$0xff]
      %v4045 = vld [vmem:[#allocation3 + $0xb8] sm:$0xff]
      %v4046 = vld [vmem:[#allocation3 + $0xc0] sm:$0xff]
      %v4047 = vld [vmem:[#allocation3 + $0xc8] sm:$0xff]
      %v4048 = vld [vmem:[#allocation3 + $0xd0] sm:$0xff]
      %v4049 = vld [vmem:[#allocation3 + $0xd8] sm:$0xff]
      %v4050 = vld [vmem:[#allocation3 + $0xe0] sm:$0xff]
      %v4051 = vld [vmem:[#allocation3 + $0xe8] sm:$0xff]
      %v4052 = vld [vmem:[#allocation3 + $0xf0] sm:$0xff]
      %v4053 = vld [vmem:[#allocation3 + $0xf8] sm:$0xff]
      %v4054 = vld [vmem:[#allocation3 + $0x100] sm:$0xff]
      %v4055 = vpack.c.bf16 %v4024, %v4023
      %v4056 = vpack.c.bf16 %v4026, %v4025
      %v4057 = vpack.c.bf16 %v4028, %v4027
      %v4058 = vpack.c.bf16 %v4030, %v4029
      %v4059 = vpack.c.bf16 %v4032, %v4031
      %v4060 = vpack.c.bf16 %v4034, %v4033
      %v4061 = vpack.c.bf16 %v4036, %v4035
      %v4062 = vpack.c.bf16 %v4038, %v4037
      %v4063 = vpack.c.bf16 %v4040, %v4039
      %v4064 = vpack.c.bf16 %v4042, %v4041
      %v4065 = vpack.c.bf16 %v4044, %v4043
      %v4066 = vpack.c.bf16 %v4046, %v4045
      %v4067 = vpack.c.bf16 %v4048, %v4047
      %v4068 = vpack.c.bf16 %v4050, %v4049
      %v4069 = vpack.c.bf16 %v4052, %v4051
      %v4070 = vpack.c.bf16 %v4054, %v4053
      %v4087 = vunpack.c.l.b16 %v4055
      %v4088 = vunpack.c.h.b16 %v4055
      %v4089 = vunpack.c.l.b16 %v4056
      %v4090 = vunpack.c.h.b16 %v4056
      %v4091 = vunpack.c.l.b16 %v4057
      %v4092 = vunpack.c.h.b16 %v4057
      %v4093 = vunpack.c.l.b16 %v4058
      %v4094 = vunpack.c.h.b16 %v4058
      %v4095 = vunpack.c.l.b16 %v4059
      %v4096 = vunpack.c.h.b16 %v4059
      %v4097 = vunpack.c.l.b16 %v4060
      %v4098 = vunpack.c.h.b16 %v4060
      %v4099 = vunpack.c.l.b16 %v4061
      %v4100 = vunpack.c.h.b16 %v4061
      %v4101 = vunpack.c.l.b16 %v4062
      %v4102 = vunpack.c.h.b16 %v4062
      %v4103 = vunpack.c.l.b16 %v4063
      %v4104 = vunpack.c.h.b16 %v4063
      %v4105 = vunpack.c.l.b16 %v4064
      %v4106 = vunpack.c.h.b16 %v4064
      %v4107 = vunpack.c.l.b16 %v4065
      %v4108 = vunpack.c.h.b16 %v4065
      %v4109 = vunpack.c.l.b16 %v4066
      %v4110 = vunpack.c.h.b16 %v4066
      %v4111 = vunpack.c.l.b16 %v4067
      %v4112 = vunpack.c.h.b16 %v4067
      %v4113 = vunpack.c.l.b16 %v4068
      %v4114 = vunpack.c.h.b16 %v4068
      %v4115 = vunpack.c.l.b16 %v4069
      %v4116 = vunpack.c.h.b16 %v4069
      %v4117 = vunpack.c.l.b16 %v4070
      %v4118 = vunpack.c.h.b16 %v4070
      %v4119 = vpack.c.b16 %v4087, %v4087
      %v4120 = vpack.c.b16 %v4088, %v4088
      %v4121 = vpack.c.b16 %v4089, %v4089
      %v4122 = vpack.c.b16 %v4090, %v4090
      %v4123 = vpack.c.b16 %v4091, %v4091
      %v4124 = vpack.c.b16 %v4092, %v4092
      %v4125 = vpack.c.b16 %v4093, %v4093
      %v4126 = vpack.c.b16 %v4094, %v4094
      %v4127 = vpack.c.b16 %v4095, %v4095
      %v4128 = vpack.c.b16 %v4096, %v4096
      %v4129 = vpack.c.b16 %v4097, %v4097
      %v4130 = vpack.c.b16 %v4098, %v4098
      %v4131 = vpack.c.b16 %v4099, %v4099
      %v4132 = vpack.c.b16 %v4100, %v4100
      %v4133 = vpack.c.b16 %v4101, %v4101
      %v4134 = vpack.c.b16 %v4102, %v4102
      %v4135 = vpack.c.b16 %v4103, %v4103
      %v4136 = vpack.c.b16 %v4104, %v4104
      %v4137 = vpack.c.b16 %v4105, %v4105
      %v4138 = vpack.c.b16 %v4106, %v4106
      %v4139 = vpack.c.b16 %v4107, %v4107
      %v4140 = vpack.c.b16 %v4108, %v4108
      %v4141 = vpack.c.b16 %v4109, %v4109
      %v4142 = vpack.c.b16 %v4110, %v4110
      %v4143 = vpack.c.b16 %v4111, %v4111
      %v4144 = vpack.c.b16 %v4112, %v4112
      %v4145 = vpack.c.b16 %v4113, %v4113
      %v4146 = vpack.c.b16 %v4114, %v4114
      %v4147 = vpack.c.b16 %v4115, %v4115
      %v4148 = vpack.c.b16 %v4116, %v4116
      %v4149 = vpack.c.b16 %v4117, %v4117
      %v4150 = vpack.c.b16 %v4118, %v4118
      %4151 = vrot.lane.b32.xlu0 %v4119, 16
      %v4152 = vpop.permute.xlu0 %4151
      %4153 = vrot.lane.b32.xlu0 %v4120, 16
      %v4154 = vpop.permute.xlu0 %4153
      %4155 = vrot.lane.b32.xlu0 %v4121, 16
      %v4156 = vpop.permute.xlu0 %4155
      %4157 = vrot.lane.b32.xlu0 %v4122, 16
      %v4158 = vpop.permute.xlu0 %4157
      %4159 = vrot.lane.b32.xlu0 %v4123, 16
      %v4160 = vpop.permute.xlu0 %4159
      %4161 = vrot.lane.b32.xlu0 %v4124, 16
      %v4162 = vpop.permute.xlu0 %4161
      %4163 = vrot.lane.b32.xlu0 %v4125, 16
      %v4164 = vpop.permute.xlu0 %4163
      %4165 = vrot.lane.b32.xlu0 %v4126, 16
      %v4166 = vpop.permute.xlu0 %4165
      %4167 = vrot.lane.b32.xlu0 %v4127, 16
      %v4168 = vpop.permute.xlu0 %4167
      %4169 = vrot.lane.b32.xlu0 %v4128, 16
      %v4170 = vpop.permute.xlu0 %4169
      %4171 = vrot.lane.b32.xlu0 %v4129, 16
      %v4172 = vpop.permute.xlu0 %4171
      %4173 = vrot.lane.b32.xlu0 %v4130, 16
      %v4174 = vpop.permute.xlu0 %4173
      %4175 = vrot.lane.b32.xlu0 %v4131, 16
      %v4176 = vpop.permute.xlu0 %4175
      %4177 = vrot.lane.b32.xlu0 %v4132, 16
      %v4178 = vpop.permute.xlu0 %4177
      %4179 = vrot.lane.b32.xlu0 %v4133, 16
      %v4180 = vpop.permute.xlu0 %4179
      %4181 = vrot.lane.b32.xlu0 %v4134, 16
      %v4182 = vpop.permute.xlu0 %4181
      %4183 = vrot.lane.b32.xlu0 %v4135, 16
      %v4184 = vpop.permute.xlu0 %4183
      %4185 = vrot.lane.b32.xlu0 %v4136, 16
      %v4186 = vpop.permute.xlu0 %4185
      %4187 = vrot.lane.b32.xlu0 %v4137, 16
      %v4188 = vpop.permute.xlu0 %4187
      %4189 = vrot.lane.b32.xlu0 %v4138, 16
      %v4190 = vpop.permute.xlu0 %4189
      %4191 = vrot.lane.b32.xlu0 %v4139, 16
      %v4192 = vpop.permute.xlu0 %4191
      %4193 = vrot.lane.b32.xlu0 %v4140, 16
      %v4194 = vpop.permute.xlu0 %4193
      %4195 = vrot.lane.b32.xlu0 %v4141, 16
      %v4196 = vpop.permute.xlu0 %4195
      %4197 = vrot.lane.b32.xlu0 %v4142, 16
      %v4198 = vpop.permute.xlu0 %4197
      %4199 = vrot.lane.b32.xlu0 %v4143, 16
      %v4200 = vpop.permute.xlu0 %4199
      %4201 = vrot.lane.b32.xlu0 %v4144, 16
      %v4202 = vpop.permute.xlu0 %4201
      %4203 = vrot.lane.b32.xlu0 %v4145, 16
      %v4204 = vpop.permute.xlu0 %4203
      %4205 = vrot.lane.b32.xlu0 %v4146, 16
      %v4206 = vpop.permute.xlu0 %4205
      %4207 = vrot.lane.b32.xlu0 %v4147, 16
      %v4208 = vpop.permute.xlu0 %4207
      %4209 = vrot.lane.b32.xlu0 %v4148, 16
      %v4210 = vpop.permute.xlu0 %4209
      %4211 = vrot.lane.b32.xlu0 %v4149, 16
      %v4212 = vpop.permute.xlu0 %4211
      %4213 = vrot.lane.b32.xlu0 %v4150, 16
      %v4214 = vpop.permute.xlu0 %4213
      %vm4247 = vcmask 257152
      %4248 = vst.msk [vmem:[#allocation6] sm:$0xf] %vm4247, %v4152
      %4249 = vst.msk [vmem:[#allocation6 + $0x8] sm:$0xf] %vm4247, %v4154
      %4250 = vst.msk [vmem:[#allocation6 + $0x10] sm:$0xf] %vm4247, %v4156
      %4251 = vst.msk [vmem:[#allocation6 + $0x18] sm:$0xf] %vm4247, %v4158
      %4252 = vst.msk [vmem:[#allocation6 + $0x20] sm:$0xf] %vm4247, %v4160
      %4253 = vst.msk [vmem:[#allocation6 + $0x28] sm:$0xf] %vm4247, %v4162
      %4254 = vst.msk [vmem:[#allocation6 + $0x30] sm:$0xf] %vm4247, %v4164
      %4255 = vst.msk [vmem:[#allocation6 + $0x38] sm:$0xf] %vm4247, %v4166
      %4256 = vst.msk [vmem:[#allocation6 + $0x40] sm:$0xf] %vm4247, %v4168
      %4257 = vst.msk [vmem:[#allocation6 + $0x48] sm:$0xf] %vm4247, %v4170
      %4258 = vst.msk [vmem:[#allocation6 + $0x50] sm:$0xf] %vm4247, %v4172
      %4259 = vst.msk [vmem:[#allocation6 + $0x58] sm:$0xf] %vm4247, %v4174
      %4260 = vst.msk [vmem:[#allocation6 + $0x60] sm:$0xf] %vm4247, %v4176
      %4261 = vst.msk [vmem:[#allocation6 + $0x68] sm:$0xf] %vm4247, %v4178
      %4262 = vst.msk [vmem:[#allocation6 + $0x70] sm:$0xf] %vm4247, %v4180
      %4263 = vst.msk [vmem:[#allocation6 + $0x78] sm:$0xf] %vm4247, %v4182
      %4264 = vst.msk [vmem:[#allocation6 + $0x80] sm:$0xf] %vm4247, %v4184
      %4265 = vst.msk [vmem:[#allocation6 + $0x88] sm:$0xf] %vm4247, %v4186
      %4266 = vst.msk [vmem:[#allocation6 + $0x90] sm:$0xf] %vm4247, %v4188
      %4267 = vst.msk [vmem:[#allocation6 + $0x98] sm:$0xf] %vm4247, %v4190
      %4268 = vst.msk [vmem:[#allocation6 + $0xa0] sm:$0xf] %vm4247, %v4192
      %4269 = vst.msk [vmem:[#allocation6 + $0xa8] sm:$0xf] %vm4247, %v4194
      %4270 = vst.msk [vmem:[#allocation6 + $0xb0] sm:$0xf] %vm4247, %v4196
      %4271 = vst.msk [vmem:[#allocation6 + $0xb8] sm:$0xf] %vm4247, %v4198
      %4272 = vst.msk [vmem:[#allocation6 + $0xc0] sm:$0xf] %vm4247, %v4200
      %4273 = vst.msk [vmem:[#allocation6 + $0xc8] sm:$0xf] %vm4247, %v4202
      %4274 = vst.msk [vmem:[#allocation6 + $0xd0] sm:$0xf] %vm4247, %v4204
      %4275 = vst.msk [vmem:[#allocation6 + $0xd8] sm:$0xf] %vm4247, %v4206
      %4276 = vst.msk [vmem:[#allocation6 + $0xe0] sm:$0xf] %vm4247, %v4208
      %4277 = vst.msk [vmem:[#allocation6 + $0xe8] sm:$0xf] %vm4247, %v4210
      %4278 = vst.msk [vmem:[#allocation6 + $0xf0] sm:$0xf] %vm4247, %v4212
      %4279 = vst.msk [vmem:[#allocation6 + $0xf8] sm:$0xf] %vm4247, %v4214
      %v4280 = vld [vmem:[#allocation3 + $0x9] sm:$0xff]
      %v4281 = vld [vmem:[#allocation3 + $0x11] sm:$0xff]
      %v4282 = vld [vmem:[#allocation3 + $0x19] sm:$0xff]
      %v4283 = vld [vmem:[#allocation3 + $0x21] sm:$0xff]
      %v4284 = vld [vmem:[#allocation3 + $0x29] sm:$0xff]
      %v4285 = vld [vmem:[#allocation3 + $0x31] sm:$0xff]
      %v4286 = vld [vmem:[#allocation3 + $0x39] sm:$0xff]
      %v4287 = vld [vmem:[#allocation3 + $0x41] sm:$0xff]
      %v4288 = vld [vmem:[#allocation3 + $0x49] sm:$0xff]
      %v4289 = vld [vmem:[#allocation3 + $0x51] sm:$0xff]
      %v4290 = vld [vmem:[#allocation3 + $0x59] sm:$0xff]
      %v4291 = vld [vmem:[#allocation3 + $0x61] sm:$0xff]
      %v4292 = vld [vmem:[#allocation3 + $0x69] sm:$0xff]
      %v4293 = vld [vmem:[#allocation3 + $0x71] sm:$0xff]
      %v4294 = vld [vmem:[#allocation3 + $0x79] sm:$0xff]
      %v4295 = vld [vmem:[#allocation3 + $0x81] sm:$0xff]
      %v4296 = vld [vmem:[#allocation3 + $0x89] sm:$0xff]
      %v4297 = vld [vmem:[#allocation3 + $0x91] sm:$0xff]
      %v4298 = vld [vmem:[#allocation3 + $0x99] sm:$0xff]
      %v4299 = vld [vmem:[#allocation3 + $0xa1] sm:$0xff]
      %v4300 = vld [vmem:[#allocation3 + $0xa9] sm:$0xff]
      %v4301 = vld [vmem:[#allocation3 + $0xb1] sm:$0xff]
      %v4302 = vld [vmem:[#allocation3 + $0xb9] sm:$0xff]
      %v4303 = vld [vmem:[#allocation3 + $0xc1] sm:$0xff]
      %v4304 = vld [vmem:[#allocation3 + $0xc9] sm:$0xff]
      %v4305 = vld [vmem:[#allocation3 + $0xd1] sm:$0xff]
      %v4306 = vld [vmem:[#allocation3 + $0xd9] sm:$0xff]
      %v4307 = vld [vmem:[#allocation3 + $0xe1] sm:$0xff]
      %v4308 = vld [vmem:[#allocation3 + $0xe9] sm:$0xff]
      %v4309 = vld [vmem:[#allocation3 + $0xf1] sm:$0xff]
      %v4310 = vld [vmem:[#allocation3 + $0xf9] sm:$0xff]
      %v4311 = vld [vmem:[#allocation3 + $0x101] sm:$0xff]
      %v4312 = vsel %vm1401, %v4280, 0.0
      %v4313 = vsel %vm1402, %v4281, 0.0
      %v4314 = vsel %vm1403, %v4282, 0.0
      %v4315 = vsel %vm1404, %v4283, 0.0
      %v4316 = vsel %vm1405, %v4284, 0.0
      %v4317 = vsel %vm1406, %v4285, 0.0
      %v4318 = vsel %vm1407, %v4286, 0.0
      %v4319 = vsel %vm1408, %v4287, 0.0
      %v4320 = vsel %vm1409, %v4288, 0.0
      %v4321 = vsel %vm1410, %v4289, 0.0
      %v4322 = vsel %vm1411, %v4290, 0.0
      %v4323 = vsel %vm1412, %v4291, 0.0
      %v4324 = vsel %vm1413, %v4292, 0.0
      %v4325 = vsel %vm1414, %v4293, 0.0
      %v4326 = vsel %vm1415, %v4294, 0.0
      %v4327 = vsel %vm1416, %v4295, 0.0
      %v4328 = vsel %vm1417, %v4296, 0.0
      %v4329 = vsel %vm1418, %v4297, 0.0
      %v4330 = vsel %vm1419, %v4298, 0.0
      %v4331 = vsel %vm1420, %v4299, 0.0
      %v4332 = vsel %vm1421, %v4300, 0.0
      %v4333 = vsel %vm1422, %v4301, 0.0
      %v4334 = vsel %vm1423, %v4302, 0.0
      %v4335 = vsel %vm1424, %v4303, 0.0
      %v4336 = vsel %vm1425, %v4304, 0.0
      %v4337 = vsel %vm1426, %v4305, 0.0
      %v4338 = vsel %vm1427, %v4306, 0.0
      %v4339 = vsel %vm1428, %v4307, 0.0
      %v4340 = vsel %vm1429, %v4308, 0.0
      %v4341 = vsel %vm1430, %v4309, 0.0
      %v4342 = vsel %vm1431, %v4310, 0.0
      %v4343 = vsel %vm1432, %v4311, 0.0
      %v4344 = vpack.c.bf16 %v4313, %v4312
      %v4345 = vpack.c.bf16 %v4315, %v4314
      %v4346 = vpack.c.bf16 %v4317, %v4316
      %v4347 = vpack.c.bf16 %v4319, %v4318
      %v4348 = vpack.c.bf16 %v4321, %v4320
      %v4349 = vpack.c.bf16 %v4323, %v4322
      %v4350 = vpack.c.bf16 %v4325, %v4324
      %v4351 = vpack.c.bf16 %v4327, %v4326
      %v4352 = vpack.c.bf16 %v4329, %v4328
      %v4353 = vpack.c.bf16 %v4331, %v4330
      %v4354 = vpack.c.bf16 %v4333, %v4332
      %v4355 = vpack.c.bf16 %v4335, %v4334
      %v4356 = vpack.c.bf16 %v4337, %v4336
      %v4357 = vpack.c.bf16 %v4339, %v4338
      %v4358 = vpack.c.bf16 %v4341, %v4340
      %v4359 = vpack.c.bf16 %v4343, %v4342
      %v4376 = vunpack.c.l.b16 %v4344
      %v4377 = vunpack.c.h.b16 %v4344
      %v4378 = vunpack.c.l.b16 %v4345
      %v4379 = vunpack.c.h.b16 %v4345
      %v4380 = vunpack.c.l.b16 %v4346
      %v4381 = vunpack.c.h.b16 %v4346
      %v4382 = vunpack.c.l.b16 %v4347
      %v4383 = vunpack.c.h.b16 %v4347
      %v4384 = vunpack.c.l.b16 %v4348
      %v4385 = vunpack.c.h.b16 %v4348
      %v4386 = vunpack.c.l.b16 %v4349
      %v4387 = vunpack.c.h.b16 %v4349
      %v4388 = vunpack.c.l.b16 %v4350
      %v4389 = vunpack.c.h.b16 %v4350
      %v4390 = vunpack.c.l.b16 %v4351
      %v4391 = vunpack.c.h.b16 %v4351
      %v4392 = vunpack.c.l.b16 %v4352
      %v4393 = vunpack.c.h.b16 %v4352
      %v4394 = vunpack.c.l.b16 %v4353
      %v4395 = vunpack.c.h.b16 %v4353
      %v4396 = vunpack.c.l.b16 %v4354
      %v4397 = vunpack.c.h.b16 %v4354
      %v4398 = vunpack.c.l.b16 %v4355
      %v4399 = vunpack.c.h.b16 %v4355
      %v4400 = vunpack.c.l.b16 %v4356
      %v4401 = vunpack.c.h.b16 %v4356
      %v4402 = vunpack.c.l.b16 %v4357
      %v4403 = vunpack.c.h.b16 %v4357
      %v4404 = vunpack.c.l.b16 %v4358
      %v4405 = vunpack.c.h.b16 %v4358
      %v4406 = vunpack.c.l.b16 %v4359
      %v4407 = vunpack.c.h.b16 %v4359
      %v4408 = vpack.c.b16 %v4376, %v4376
      %v4409 = vpack.c.b16 %v4377, %v4377
      %v4410 = vpack.c.b16 %v4378, %v4378
      %v4411 = vpack.c.b16 %v4379, %v4379
      %v4412 = vpack.c.b16 %v4380, %v4380
      %v4413 = vpack.c.b16 %v4381, %v4381
      %v4414 = vpack.c.b16 %v4382, %v4382
      %v4415 = vpack.c.b16 %v4383, %v4383
      %v4416 = vpack.c.b16 %v4384, %v4384
      %v4417 = vpack.c.b16 %v4385, %v4385
      %v4418 = vpack.c.b16 %v4386, %v4386
      %v4419 = vpack.c.b16 %v4387, %v4387
      %v4420 = vpack.c.b16 %v4388, %v4388
      %v4421 = vpack.c.b16 %v4389, %v4389
      %v4422 = vpack.c.b16 %v4390, %v4390
      %v4423 = vpack.c.b16 %v4391, %v4391
      %v4424 = vpack.c.b16 %v4392, %v4392
      %v4425 = vpack.c.b16 %v4393, %v4393
      %v4426 = vpack.c.b16 %v4394, %v4394
      %v4427 = vpack.c.b16 %v4395, %v4395
      %v4428 = vpack.c.b16 %v4396, %v4396
      %v4429 = vpack.c.b16 %v4397, %v4397
      %v4430 = vpack.c.b16 %v4398, %v4398
      %v4431 = vpack.c.b16 %v4399, %v4399
      %v4432 = vpack.c.b16 %v4400, %v4400
      %v4433 = vpack.c.b16 %v4401, %v4401
      %v4434 = vpack.c.b16 %v4402, %v4402
      %v4435 = vpack.c.b16 %v4403, %v4403
      %v4436 = vpack.c.b16 %v4404, %v4404
      %v4437 = vpack.c.b16 %v4405, %v4405
      %v4438 = vpack.c.b16 %v4406, %v4406
      %v4439 = vpack.c.b16 %v4407, %v4407
      %4440 = vrot.lane.b32.xlu0 %v4408, 32
      %v4441 = vpop.permute.xlu0 %4440
      %4442 = vrot.lane.b32.xlu0 %v4409, 32
      %v4443 = vpop.permute.xlu0 %4442
      %4444 = vrot.lane.b32.xlu0 %v4410, 32
      %v4445 = vpop.permute.xlu0 %4444
      %4446 = vrot.lane.b32.xlu0 %v4411, 32
      %v4447 = vpop.permute.xlu0 %4446
      %4448 = vrot.lane.b32.xlu0 %v4412, 32
      %v4449 = vpop.permute.xlu0 %4448
      %4450 = vrot.lane.b32.xlu0 %v4413, 32
      %v4451 = vpop.permute.xlu0 %4450
      %4452 = vrot.lane.b32.xlu0 %v4414, 32
      %v4453 = vpop.permute.xlu0 %4452
      %4454 = vrot.lane.b32.xlu0 %v4415, 32
      %v4455 = vpop.permute.xlu0 %4454
      %4456 = vrot.lane.b32.xlu0 %v4416, 32
      %v4457 = vpop.permute.xlu0 %4456
      %4458 = vrot.lane.b32.xlu0 %v4417, 32
      %v4459 = vpop.permute.xlu0 %4458
      %4460 = vrot.lane.b32.xlu0 %v4418, 32
      %v4461 = vpop.permute.xlu0 %4460
      %4462 = vrot.lane.b32.xlu0 %v4419, 32
      %v4463 = vpop.permute.xlu0 %4462
      %4464 = vrot.lane.b32.xlu0 %v4420, 32
      %v4465 = vpop.permute.xlu0 %4464
      %4466 = vrot.lane.b32.xlu0 %v4421, 32
      %v4467 = vpop.permute.xlu0 %4466
      %4468 = vrot.lane.b32.xlu0 %v4422, 32
      %v4469 = vpop.permute.xlu0 %4468
      %4470 = vrot.lane.b32.xlu0 %v4423, 32
      %v4471 = vpop.permute.xlu0 %4470
      %4472 = vrot.lane.b32.xlu0 %v4424, 32
      %v4473 = vpop.permute.xlu0 %4472
      %4474 = vrot.lane.b32.xlu0 %v4425, 32
      %v4475 = vpop.permute.xlu0 %4474
      %4476 = vrot.lane.b32.xlu0 %v4426, 32
      %v4477 = vpop.permute.xlu0 %4476
      %4478 = vrot.lane.b32.xlu0 %v4427, 32
      %v4479 = vpop.permute.xlu0 %4478
      %4480 = vrot.lane.b32.xlu0 %v4428, 32
      %v4481 = vpop.permute.xlu0 %4480
      %4482 = vrot.lane.b32.xlu0 %v4429, 32
      %v4483 = vpop.permute.xlu0 %4482
      %4484 = vrot.lane.b32.xlu0 %v4430, 32
      %v4485 = vpop.permute.xlu0 %4484
      %4486 = vrot.lane.b32.xlu0 %v4431, 32
      %v4487 = vpop.permute.xlu0 %4486
      %4488 = vrot.lane.b32.xlu0 %v4432, 32
      %v4489 = vpop.permute.xlu0 %4488
      %4490 = vrot.lane.b32.xlu0 %v4433, 32
      %v4491 = vpop.permute.xlu0 %4490
      %4492 = vrot.lane.b32.xlu0 %v4434, 32
      %v4493 = vpop.permute.xlu0 %4492
      %4494 = vrot.lane.b32.xlu0 %v4435, 32
      %v4495 = vpop.permute.xlu0 %4494
      %4496 = vrot.lane.b32.xlu0 %v4436, 32
      %v4497 = vpop.permute.xlu0 %4496
      %4498 = vrot.lane.b32.xlu0 %v4437, 32
      %v4499 = vpop.permute.xlu0 %4498
      %4500 = vrot.lane.b32.xlu0 %v4438, 32
      %v4501 = vpop.permute.xlu0 %4500
      %4502 = vrot.lane.b32.xlu0 %v4439, 32
      %v4503 = vpop.permute.xlu0 %4502
      %vm4536 = vcmask 388352
      %4537 = vst.msk [vmem:[#allocation6] sm:$0xf] %vm4536, %v4441
      %4538 = vst.msk [vmem:[#allocation6 + $0x8] sm:$0xf] %vm4536, %v4443
      %4539 = vst.msk [vmem:[#allocation6 + $0x10] sm:$0xf] %vm4536, %v4445
      %4540 = vst.msk [vmem:[#allocation6 + $0x18] sm:$0xf] %vm4536, %v4447
      %4541 = vst.msk [vmem:[#allocation6 + $0x20] sm:$0xf] %vm4536, %v4449
      %4542 = vst.msk [vmem:[#allocation6 + $0x28] sm:$0xf] %vm4536, %v4451
      %4543 = vst.msk [vmem:[#allocation6 + $0x30] sm:$0xf] %vm4536, %v4453
      %4544 = vst.msk [vmem:[#allocation6 + $0x38] sm:$0xf] %vm4536, %v4455
      %4545 = vst.msk [vmem:[#allocation6 + $0x40] sm:$0xf] %vm4536, %v4457
      %4546 = vst.msk [vmem:[#allocation6 + $0x48] sm:$0xf] %vm4536, %v4459
      %4547 = vst.msk [vmem:[#allocation6 + $0x50] sm:$0xf] %vm4536, %v4461
      %4548 = vst.msk [vmem:[#allocation6 + $0x58] sm:$0xf] %vm4536, %v4463
      %4549 = vst.msk [vmem:[#allocation6 + $0x60] sm:$0xf] %vm4536, %v4465
      %4550 = vst.msk [vmem:[#allocation6 + $0x68] sm:$0xf] %vm4536, %v4467
      %4551 = vst.msk [vmem:[#allocation6 + $0x70] sm:$0xf] %vm4536, %v4469
      %4552 = vst.msk [vmem:[#allocation6 + $0x78] sm:$0xf] %vm4536, %v4471
      %4553 = vst.msk [vmem:[#allocation6 + $0x80] sm:$0xf] %vm4536, %v4473
      %4554 = vst.msk [vmem:[#allocation6 + $0x88] sm:$0xf] %vm4536, %v4475
      %4555 = vst.msk [vmem:[#allocation6 + $0x90] sm:$0xf] %vm4536, %v4477
      %4556 = vst.msk [vmem:[#allocation6 + $0x98] sm:$0xf] %vm4536, %v4479
      %4557 = vst.msk [vmem:[#allocation6 + $0xa0] sm:$0xf] %vm4536, %v4481
      %4558 = vst.msk [vmem:[#allocation6 + $0xa8] sm:$0xf] %vm4536, %v4483
      %4559 = vst.msk [vmem:[#allocation6 + $0xb0] sm:$0xf] %vm4536, %v4485
      %4560 = vst.msk [vmem:[#allocation6 + $0xb8] sm:$0xf] %vm4536, %v4487
      %4561 = vst.msk [vmem:[#allocation6 + $0xc0] sm:$0xf] %vm4536, %v4489
      %4562 = vst.msk [vmem:[#allocation6 + $0xc8] sm:$0xf] %vm4536, %v4491
      %4563 = vst.msk [vmem:[#allocation6 + $0xd0] sm:$0xf] %vm4536, %v4493
      %4564 = vst.msk [vmem:[#allocation6 + $0xd8] sm:$0xf] %vm4536, %v4495
      %4565 = vst.msk [vmem:[#allocation6 + $0xe0] sm:$0xf] %vm4536, %v4497
      %4566 = vst.msk [vmem:[#allocation6 + $0xe8] sm:$0xf] %vm4536, %v4499
      %4567 = vst.msk [vmem:[#allocation6 + $0xf0] sm:$0xf] %vm4536, %v4501
      %4568 = vst.msk [vmem:[#allocation6 + $0xf8] sm:$0xf] %vm4536, %v4503
      %v4569 = vld [vmem:[#allocation3 + $0x17] sm:$0xff]
      %v4570 = vld [vmem:[#allocation3 + $0x1f] sm:$0xff]
      %v4571 = vld [vmem:[#allocation3 + $0x27] sm:$0xff]
      %v4572 = vld [vmem:[#allocation3 + $0x2f] sm:$0xff]
      %v4573 = vld [vmem:[#allocation3 + $0x37] sm:$0xff]
      %v4574 = vld [vmem:[#allocation3 + $0x3f] sm:$0xff]
      %v4575 = vld [vmem:[#allocation3 + $0x47] sm:$0xff]
      %v4576 = vld [vmem:[#allocation3 + $0x4f] sm:$0xff]
      %v4577 = vld [vmem:[#allocation3 + $0x57] sm:$0xff]
      %v4578 = vld [vmem:[#allocation3 + $0x5f] sm:$0xff]
      %v4579 = vld [vmem:[#allocation3 + $0x67] sm:$0xff]
      %v4580 = vld [vmem:[#allocation3 + $0x6f] sm:$0xff]
      %v4581 = vld [vmem:[#allocation3 + $0x77] sm:$0xff]
      %v4582 = vld [vmem:[#allocation3 + $0x7f] sm:$0xff]
      %v4583 = vld [vmem:[#allocation3 + $0x87] sm:$0xff]
      %v4584 = vld [vmem:[#allocation3 + $0x8f] sm:$0xff]
      %v4585 = vld [vmem:[#allocation3 + $0x97] sm:$0xff]
      %v4586 = vld [vmem:[#allocation3 + $0x9f] sm:$0xff]
      %v4587 = vld [vmem:[#allocation3 + $0xa7] sm:$0xff]
      %v4588 = vld [vmem:[#allocation3 + $0xaf] sm:$0xff]
      %v4589 = vld [vmem:[#allocation3 + $0xb7] sm:$0xff]
      %v4590 = vld [vmem:[#allocation3 + $0xbf] sm:$0xff]
      %v4591 = vld [vmem:[#allocation3 + $0xc7] sm:$0xff]
      %v4592 = vld [vmem:[#allocation3 + $0xcf] sm:$0xff]
      %v4593 = vld [vmem:[#allocation3 + $0xd7] sm:$0xff]
      %v4594 = vld [vmem:[#allocation3 + $0xdf] sm:$0xff]
      %v4595 = vld [vmem:[#allocation3 + $0xe7] sm:$0xff]
      %v4596 = vld [vmem:[#allocation3 + $0xef] sm:$0xff]
      %v4597 = vld [vmem:[#allocation3 + $0xf7] sm:$0xff]
      %v4598 = vld [vmem:[#allocation3 + $0xff] sm:$0xff]
      %v4599 = vld [vmem:[#allocation3 + $0x107] sm:$0xff]
      %v4600 = vld [vmem:[#allocation3 + $0x10f] sm:$0xff]
      %v4601 = vsel %vm855, %v4569, 0.0
      %v4602 = vsel %vm856, %v4570, 0.0
      %v4603 = vsel %vm857, %v4571, 0.0
      %v4604 = vsel %vm858, %v4572, 0.0
      %v4605 = vsel %vm859, %v4573, 0.0
      %v4606 = vsel %vm860, %v4574, 0.0
      %v4607 = vsel %vm861, %v4575, 0.0
      %v4608 = vsel %vm862, %v4576, 0.0
      %v4609 = vsel %vm863, %v4577, 0.0
      %v4610 = vsel %vm864, %v4578, 0.0
      %v4611 = vsel %vm865, %v4579, 0.0
      %v4612 = vsel %vm866, %v4580, 0.0
      %v4613 = vsel %vm867, %v4581, 0.0
      %v4614 = vsel %vm868, %v4582, 0.0
      %v4615 = vsel %vm869, %v4583, 0.0
      %v4616 = vsel %vm870, %v4584, 0.0
      %v4617 = vsel %vm871, %v4585, 0.0
      %v4618 = vsel %vm872, %v4586, 0.0
      %v4619 = vsel %vm873, %v4587, 0.0
      %v4620 = vsel %vm874, %v4588, 0.0
      %v4621 = vsel %vm875, %v4589, 0.0
      %v4622 = vsel %vm876, %v4590, 0.0
      %v4623 = vsel %vm877, %v4591, 0.0
      %v4624 = vsel %vm878, %v4592, 0.0
      %v4625 = vsel %vm879, %v4593, 0.0
      %v4626 = vsel %vm880, %v4594, 0.0
      %v4627 = vsel %vm881, %v4595, 0.0
      %v4628 = vsel %vm882, %v4596, 0.0
      %v4629 = vsel %vm883, %v4597, 0.0
      %v4630 = vsel %vm884, %v4598, 0.0
      %v4631 = vsel %vm885, %v4599, 0.0
      %v4632 = vsel %vm886, %v4600, 0.0
      %v4633 = vpack.c.bf16 %v4602, %v4601
      %v4634 = vpack.c.bf16 %v4604, %v4603
      %v4635 = vpack.c.bf16 %v4606, %v4605
      %v4636 = vpack.c.bf16 %v4608, %v4607
      %v4637 = vpack.c.bf16 %v4610, %v4609
      %v4638 = vpack.c.bf16 %v4612, %v4611
      %v4639 = vpack.c.bf16 %v4614, %v4613
      %v4640 = vpack.c.bf16 %v4616, %v4615
      %v4641 = vpack.c.bf16 %v4618, %v4617
      %v4642 = vpack.c.bf16 %v4620, %v4619
      %v4643 = vpack.c.bf16 %v4622, %v4621
      %v4644 = vpack.c.bf16 %v4624, %v4623
      %v4645 = vpack.c.bf16 %v4626, %v4625
      %v4646 = vpack.c.bf16 %v4628, %v4627
      %v4647 = vpack.c.bf16 %v4630, %v4629
      %v4648 = vpack.c.bf16 %v4632, %v4631
      %v4665 = vunpack.c.l.b16 %v4633
      %v4666 = vunpack.c.h.b16 %v4633
      %v4667 = vunpack.c.l.b16 %v4634
      %v4668 = vunpack.c.h.b16 %v4634
      %v4669 = vunpack.c.l.b16 %v4635
      %v4670 = vunpack.c.h.b16 %v4635
      %v4671 = vunpack.c.l.b16 %v4636
      %v4672 = vunpack.c.h.b16 %v4636
      %v4673 = vunpack.c.l.b16 %v4637
      %v4674 = vunpack.c.h.b16 %v4637
      %v4675 = vunpack.c.l.b16 %v4638
      %v4676 = vunpack.c.h.b16 %v4638
      %v4677 = vunpack.c.l.b16 %v4639
      %v4678 = vunpack.c.h.b16 %v4639
      %v4679 = vunpack.c.l.b16 %v4640
      %v4680 = vunpack.c.h.b16 %v4640
      %v4681 = vunpack.c.l.b16 %v4641
      %v4682 = vunpack.c.h.b16 %v4641
      %v4683 = vunpack.c.l.b16 %v4642
      %v4684 = vunpack.c.h.b16 %v4642
      %v4685 = vunpack.c.l.b16 %v4643
      %v4686 = vunpack.c.h.b16 %v4643
      %v4687 = vunpack.c.l.b16 %v4644
      %v4688 = vunpack.c.h.b16 %v4644
      %v4689 = vunpack.c.l.b16 %v4645
      %v4690 = vunpack.c.h.b16 %v4645
      %v4691 = vunpack.c.l.b16 %v4646
      %v4692 = vunpack.c.h.b16 %v4646
      %v4693 = vunpack.c.l.b16 %v4647
      %v4694 = vunpack.c.h.b16 %v4647
      %v4695 = vunpack.c.l.b16 %v4648
      %v4696 = vunpack.c.h.b16 %v4648
      %v4697 = vpack.c.b16 %v4665, %v4665
      %v4698 = vpack.c.b16 %v4666, %v4666
      %v4699 = vpack.c.b16 %v4667, %v4667
      %v4700 = vpack.c.b16 %v4668, %v4668
      %v4701 = vpack.c.b16 %v4669, %v4669
      %v4702 = vpack.c.b16 %v4670, %v4670
      %v4703 = vpack.c.b16 %v4671, %v4671
      %v4704 = vpack.c.b16 %v4672, %v4672
      %v4705 = vpack.c.b16 %v4673, %v4673
      %v4706 = vpack.c.b16 %v4674, %v4674
      %v4707 = vpack.c.b16 %v4675, %v4675
      %v4708 = vpack.c.b16 %v4676, %v4676
      %v4709 = vpack.c.b16 %v4677, %v4677
      %v4710 = vpack.c.b16 %v4678, %v4678
      %v4711 = vpack.c.b16 %v4679, %v4679
      %v4712 = vpack.c.b16 %v4680, %v4680
      %v4713 = vpack.c.b16 %v4681, %v4681
      %v4714 = vpack.c.b16 %v4682, %v4682
      %v4715 = vpack.c.b16 %v4683, %v4683
      %v4716 = vpack.c.b16 %v4684, %v4684
      %v4717 = vpack.c.b16 %v4685, %v4685
      %v4718 = vpack.c.b16 %v4686, %v4686
      %v4719 = vpack.c.b16 %v4687, %v4687
      %v4720 = vpack.c.b16 %v4688, %v4688
      %v4721 = vpack.c.b16 %v4689, %v4689
      %v4722 = vpack.c.b16 %v4690, %v4690
      %v4723 = vpack.c.b16 %v4691, %v4691
      %v4724 = vpack.c.b16 %v4692, %v4692
      %v4725 = vpack.c.b16 %v4693, %v4693
      %v4726 = vpack.c.b16 %v4694, %v4694
      %v4727 = vpack.c.b16 %v4695, %v4695
      %v4728 = vpack.c.b16 %v4696, %v4696
      %4729 = vrot.lane.b32.xlu0 %v4697, 48
      %v4730 = vpop.permute.xlu0 %4729
      %4731 = vrot.lane.b32.xlu0 %v4698, 48
      %v4732 = vpop.permute.xlu0 %4731
      %4733 = vrot.lane.b32.xlu0 %v4699, 48
      %v4734 = vpop.permute.xlu0 %4733
      %4735 = vrot.lane.b32.xlu0 %v4700, 48
      %v4736 = vpop.permute.xlu0 %4735
      %4737 = vrot.lane.b32.xlu0 %v4701, 48
      %v4738 = vpop.permute.xlu0 %4737
      %4739 = vrot.lane.b32.xlu0 %v4702, 48
      %v4740 = vpop.permute.xlu0 %4739
      %4741 = vrot.lane.b32.xlu0 %v4703, 48
      %v4742 = vpop.permute.xlu0 %4741
      %4743 = vrot.lane.b32.xlu0 %v4704, 48
      %v4744 = vpop.permute.xlu0 %4743
      %4745 = vrot.lane.b32.xlu0 %v4705, 48
      %v4746 = vpop.permute.xlu0 %4745
      %4747 = vrot.lane.b32.xlu0 %v4706, 48
      %v4748 = vpop.permute.xlu0 %4747
      %4749 = vrot.lane.b32.xlu0 %v4707, 48
      %v4750 = vpop.permute.xlu0 %4749
      %4751 = vrot.lane.b32.xlu0 %v4708, 48
      %v4752 = vpop.permute.xlu0 %4751
      %4753 = vrot.lane.b32.xlu0 %v4709, 48
      %v4754 = vpop.permute.xlu0 %4753
      %4755 = vrot.lane.b32.xlu0 %v4710, 48
      %v4756 = vpop.permute.xlu0 %4755
      %4757 = vrot.lane.b32.xlu0 %v4711, 48
      %v4758 = vpop.permute.xlu0 %4757
      %4759 = vrot.lane.b32.xlu0 %v4712, 48
      %v4760 = vpop.permute.xlu0 %4759
      %4761 = vrot.lane.b32.xlu0 %v4713, 48
      %v4762 = vpop.permute.xlu0 %4761
      %4763 = vrot.lane.b32.xlu0 %v4714, 48
      %v4764 = vpop.permute.xlu0 %4763
      %4765 = vrot.lane.b32.xlu0 %v4715, 48
      %v4766 = vpop.permute.xlu0 %4765
      %4767 = vrot.lane.b32.xlu0 %v4716, 48
      %v4768 = vpop.permute.xlu0 %4767
      %4769 = vrot.lane.b32.xlu0 %v4717, 48
      %v4770 = vpop.permute.xlu0 %4769
      %4771 = vrot.lane.b32.xlu0 %v4718, 48
      %v4772 = vpop.permute.xlu0 %4771
      %4773 = vrot.lane.b32.xlu0 %v4719, 48
      %v4774 = vpop.permute.xlu0 %4773
      %4775 = vrot.lane.b32.xlu0 %v4720, 48
      %v4776 = vpop.permute.xlu0 %4775
      %4777 = vrot.lane.b32.xlu0 %v4721, 48
      %v4778 = vpop.permute.xlu0 %4777
      %4779 = vrot.lane.b32.xlu0 %v4722, 48
      %v4780 = vpop.permute.xlu0 %4779
      %4781 = vrot.lane.b32.xlu0 %v4723, 48
      %v4782 = vpop.permute.xlu0 %4781
      %4783 = vrot.lane.b32.xlu0 %v4724, 48
      %v4784 = vpop.permute.xlu0 %4783
      %4785 = vrot.lane.b32.xlu0 %v4725, 48
      %v4786 = vpop.permute.xlu0 %4785
      %4787 = vrot.lane.b32.xlu0 %v4726, 48
      %v4788 = vpop.permute.xlu0 %4787
      %4789 = vrot.lane.b32.xlu0 %v4727, 48
      %v4790 = vpop.permute.xlu0 %4789
      %4791 = vrot.lane.b32.xlu0 %v4728, 48
      %v4792 = vpop.permute.xlu0 %4791
      %vm4825 = vcmask 519552
      %4826 = vst.msk [vmem:[#allocation6] sm:$0xf] %vm4825, %v4730
      %4827 = vst.msk [vmem:[#allocation6 + $0x8] sm:$0xf] %vm4825, %v4732
      %4828 = vst.msk [vmem:[#allocation6 + $0x10] sm:$0xf] %vm4825, %v4734
      %4829 = vst.msk [vmem:[#allocation6 + $0x18] sm:$0xf] %vm4825, %v4736
      %4830 = vst.msk [vmem:[#allocation6 + $0x20] sm:$0xf] %vm4825, %v4738
      %4831 = vst.msk [vmem:[#allocation6 + $0x28] sm:$0xf] %vm4825, %v4740
      %4832 = vst.msk [vmem:[#allocation6 + $0x30] sm:$0xf] %vm4825, %v4742
      %4833 = vst.msk [vmem:[#allocation6 + $0x38] sm:$0xf] %vm4825, %v4744
      %4834 = vst.msk [vmem:[#allocation6 + $0x40] sm:$0xf] %vm4825, %v4746
      %4835 = vst.msk [vmem:[#allocation6 + $0x48] sm:$0xf] %vm4825, %v4748
      %4836 = vst.msk [vmem:[#allocation6 + $0x50] sm:$0xf] %vm4825, %v4750
      %4837 = vst.msk [vmem:[#allocation6 + $0x58] sm:$0xf] %vm4825, %v4752
      %4838 = vst.msk [vmem:[#allocation6 + $0x60] sm:$0xf] %vm4825, %v4754
      %4839 = vst.msk [vmem:[#allocation6 + $0x68] sm:$0xf] %vm4825, %v4756
      %4840 = vst.msk [vmem:[#allocation6 + $0x70] sm:$0xf] %vm4825, %v4758
      %4841 = vst.msk [vmem:[#allocation6 + $0x78] sm:$0xf] %vm4825, %v4760
      %4842 = vst.msk [vmem:[#allocation6 + $0x80] sm:$0xf] %vm4825, %v4762
      %4843 = vst.msk [vmem:[#allocation6 + $0x88] sm:$0xf] %vm4825, %v4764
      %4844 = vst.msk [vmem:[#allocation6 + $0x90] sm:$0xf] %vm4825, %v4766
      %4845 = vst.msk [vmem:[#allocation6 + $0x98] sm:$0xf] %vm4825, %v4768
      %4846 = vst.msk [vmem:[#allocation6 + $0xa0] sm:$0xf] %vm4825, %v4770
      %4847 = vst.msk [vmem:[#allocation6 + $0xa8] sm:$0xf] %vm4825, %v4772
      %4848 = vst.msk [vmem:[#allocation6 + $0xb0] sm:$0xf] %vm4825, %v4774
      %4849 = vst.msk [vmem:[#allocation6 + $0xb8] sm:$0xf] %vm4825, %v4776
      %4850 = vst.msk [vmem:[#allocation6 + $0xc0] sm:$0xf] %vm4825, %v4778
      %4851 = vst.msk [vmem:[#allocation6 + $0xc8] sm:$0xf] %vm4825, %v4780
      %4852 = vst.msk [vmem:[#allocation6 + $0xd0] sm:$0xf] %vm4825, %v4782
      %4853 = vst.msk [vmem:[#allocation6 + $0xd8] sm:$0xf] %vm4825, %v4784
      %4854 = vst.msk [vmem:[#allocation6 + $0xe0] sm:$0xf] %vm4825, %v4786
      %4855 = vst.msk [vmem:[#allocation6 + $0xe8] sm:$0xf] %vm4825, %v4788
      %4856 = vst.msk [vmem:[#allocation6 + $0xf0] sm:$0xf] %vm4825, %v4790
      %4857 = vst.msk [vmem:[#allocation6 + $0xf8] sm:$0xf] %vm4825, %v4792
      %v4858 = vld [vmem:[#allocation3 + $0x18] sm:$0xff]
      %v4859 = vld [vmem:[#allocation3 + $0x20] sm:$0xff]
      %v4860 = vld [vmem:[#allocation3 + $0x28] sm:$0xff]
      %v4861 = vld [vmem:[#allocation3 + $0x30] sm:$0xff]
      %v4862 = vld [vmem:[#allocation3 + $0x38] sm:$0xff]
      %v4863 = vld [vmem:[#allocation3 + $0x40] sm:$0xff]
      %v4864 = vld [vmem:[#allocation3 + $0x48] sm:$0xff]
      %v4865 = vld [vmem:[#allocation3 + $0x50] sm:$0xff]
      %v4866 = vld [vmem:[#allocation3 + $0x58] sm:$0xff]
      %v4867 = vld [vmem:[#allocation3 + $0x60] sm:$0xff]
      %v4868 = vld [vmem:[#allocation3 + $0x68] sm:$0xff]
      %v4869 = vld [vmem:[#allocation3 + $0x70] sm:$0xff]
      %v4870 = vld [vmem:[#allocation3 + $0x78] sm:$0xff]
      %v4871 = vld [vmem:[#allocation3 + $0x80] sm:$0xff]
      %v4872 = vld [vmem:[#allocation3 + $0x88] sm:$0xff]
      %v4873 = vld [vmem:[#allocation3 + $0x90] sm:$0xff]
      %v4874 = vld [vmem:[#allocation3 + $0x98] sm:$0xff]
      %v4875 = vld [vmem:[#allocation3 + $0xa0] sm:$0xff]
      %v4876 = vld [vmem:[#allocation3 + $0xa8] sm:$0xff]
      %v4877 = vld [vmem:[#allocation3 + $0xb0] sm:$0xff]
      %v4878 = vld [vmem:[#allocation3 + $0xb8] sm:$0xff]
      %v4879 = vld [vmem:[#allocation3 + $0xc0] sm:$0xff]
      %v4880 = vld [vmem:[#allocation3 + $0xc8] sm:$0xff]
      %v4881 = vld [vmem:[#allocation3 + $0xd0] sm:$0xff]
      %v4882 = vld [vmem:[#allocation3 + $0xd8] sm:$0xff]
      %v4883 = vld [vmem:[#allocation3 + $0xe0] sm:$0xff]
      %v4884 = vld [vmem:[#allocation3 + $0xe8] sm:$0xff]
      %v4885 = vld [vmem:[#allocation3 + $0xf0] sm:$0xff]
      %v4886 = vld [vmem:[#allocation3 + $0xf8] sm:$0xff]
      %v4887 = vld [vmem:[#allocation3 + $0x100] sm:$0xff]
      %v4888 = vld [vmem:[#allocation3 + $0x108] sm:$0xff]
      %v4889 = vld [vmem:[#allocation3 + $0x110] sm:$0xff]
      %v4890 = vpack.c.bf16 %v4859, %v4858
      %v4891 = vpack.c.bf16 %v4861, %v4860
      %v4892 = vpack.c.bf16 %v4863, %v4862
      %v4893 = vpack.c.bf16 %v4865, %v4864
      %v4894 = vpack.c.bf16 %v4867, %v4866
      %v4895 = vpack.c.bf16 %v4869, %v4868
      %v4896 = vpack.c.bf16 %v4871, %v4870
      %v4897 = vpack.c.bf16 %v4873, %v4872
      %v4898 = vpack.c.bf16 %v4875, %v4874
      %v4899 = vpack.c.bf16 %v4877, %v4876
      %v4900 = vpack.c.bf16 %v4879, %v4878
      %v4901 = vpack.c.bf16 %v4881, %v4880
      %v4902 = vpack.c.bf16 %v4883, %v4882
      %v4903 = vpack.c.bf16 %v4885, %v4884
      %v4904 = vpack.c.bf16 %v4887, %v4886
      %v4905 = vpack.c.bf16 %v4889, %v4888
      %v4922 = vunpack.c.l.b16 %v4890
      %v4923 = vunpack.c.h.b16 %v4890
      %v4924 = vunpack.c.l.b16 %v4891
      %v4925 = vunpack.c.h.b16 %v4891
      %v4926 = vunpack.c.l.b16 %v4892
      %v4927 = vunpack.c.h.b16 %v4892
      %v4928 = vunpack.c.l.b16 %v4893
      %v4929 = vunpack.c.h.b16 %v4893
      %v4930 = vunpack.c.l.b16 %v4894
      %v4931 = vunpack.c.h.b16 %v4894
      %v4932 = vunpack.c.l.b16 %v4895
      %v4933 = vunpack.c.h.b16 %v4895
      %v4934 = vunpack.c.l.b16 %v4896
      %v4935 = vunpack.c.h.b16 %v4896
      %v4936 = vunpack.c.l.b16 %v4897
      %v4937 = vunpack.c.h.b16 %v4897
      %v4938 = vunpack.c.l.b16 %v4898
      %v4939 = vunpack.c.h.b16 %v4898
      %v4940 = vunpack.c.l.b16 %v4899
      %v4941 = vunpack.c.h.b16 %v4899
      %v4942 = vunpack.c.l.b16 %v4900
      %v4943 = vunpack.c.h.b16 %v4900
      %v4944 = vunpack.c.l.b16 %v4901
      %v4945 = vunpack.c.h.b16 %v4901
      %v4946 = vunpack.c.l.b16 %v4902
      %v4947 = vunpack.c.h.b16 %v4902
      %v4948 = vunpack.c.l.b16 %v4903
      %v4949 = vunpack.c.h.b16 %v4903
      %v4950 = vunpack.c.l.b16 %v4904
      %v4951 = vunpack.c.h.b16 %v4904
      %v4952 = vunpack.c.l.b16 %v4905
      %v4953 = vunpack.c.h.b16 %v4905
      %v4954 = vpack.c.b16 %v4922, %v4922
      %v4955 = vpack.c.b16 %v4923, %v4923
      %v4956 = vpack.c.b16 %v4924, %v4924
      %v4957 = vpack.c.b16 %v4925, %v4925
      %v4958 = vpack.c.b16 %v4926, %v4926
      %v4959 = vpack.c.b16 %v4927, %v4927
      %v4960 = vpack.c.b16 %v4928, %v4928
      %v4961 = vpack.c.b16 %v4929, %v4929
      %v4962 = vpack.c.b16 %v4930, %v4930
      %v4963 = vpack.c.b16 %v4931, %v4931
      %v4964 = vpack.c.b16 %v4932, %v4932
      %v4965 = vpack.c.b16 %v4933, %v4933
      %v4966 = vpack.c.b16 %v4934, %v4934
      %v4967 = vpack.c.b16 %v4935, %v4935
      %v4968 = vpack.c.b16 %v4936, %v4936
      %v4969 = vpack.c.b16 %v4937, %v4937
      %v4970 = vpack.c.b16 %v4938, %v4938
      %v4971 = vpack.c.b16 %v4939, %v4939
      %v4972 = vpack.c.b16 %v4940, %v4940
      %v4973 = vpack.c.b16 %v4941, %v4941
      %v4974 = vpack.c.b16 %v4942, %v4942
      %v4975 = vpack.c.b16 %v4943, %v4943
      %v4976 = vpack.c.b16 %v4944, %v4944
      %v4977 = vpack.c.b16 %v4945, %v4945
      %v4978 = vpack.c.b16 %v4946, %v4946
      %v4979 = vpack.c.b16 %v4947, %v4947
      %v4980 = vpack.c.b16 %v4948, %v4948
      %v4981 = vpack.c.b16 %v4949, %v4949
      %v4982 = vpack.c.b16 %v4950, %v4950
      %v4983 = vpack.c.b16 %v4951, %v4951
      %v4984 = vpack.c.b16 %v4952, %v4952
      %v4985 = vpack.c.b16 %v4953, %v4953
      %4986 = vrot.lane.b32.xlu0 %v4954, 64
      %v4987 = vpop.permute.xlu0 %4986
      %4988 = vrot.lane.b32.xlu0 %v4955, 64
      %v4989 = vpop.permute.xlu0 %4988
      %4990 = vrot.lane.b32.xlu0 %v4956, 64
      %v4991 = vpop.permute.xlu0 %4990
      %4992 = vrot.lane.b32.xlu0 %v4957, 64
      %v4993 = vpop.permute.xlu0 %4992
      %4994 = vrot.lane.b32.xlu0 %v4958, 64
      %v4995 = vpop.permute.xlu0 %4994
      %4996 = vrot.lane.b32.xlu0 %v4959, 64
      %v4997 = vpop.permute.xlu0 %4996
      %4998 = vrot.lane.b32.xlu0 %v4960, 64
      %v4999 = vpop.permute.xlu0 %4998
      %5000 = vrot.lane.b32.xlu0 %v4961, 64
      %v5001 = vpop.permute.xlu0 %5000
      %5002 = vrot.lane.b32.xlu0 %v4962, 64
      %v5003 = vpop.permute.xlu0 %5002
      %5004 = vrot.lane.b32.xlu0 %v4963, 64
      %v5005 = vpop.permute.xlu0 %5004
      %5006 = vrot.lane.b32.xlu0 %v4964, 64
      %v5007 = vpop.permute.xlu0 %5006
      %5008 = vrot.lane.b32.xlu0 %v4965, 64
      %v5009 = vpop.permute.xlu0 %5008
      %5010 = vrot.lane.b32.xlu0 %v4966, 64
      %v5011 = vpop.permute.xlu0 %5010
      %5012 = vrot.lane.b32.xlu0 %v4967, 64
      %v5013 = vpop.permute.xlu0 %5012
      %5014 = vrot.lane.b32.xlu0 %v4968, 64
      %v5015 = vpop.permute.xlu0 %5014
      %5016 = vrot.lane.b32.xlu0 %v4969, 64
      %v5017 = vpop.permute.xlu0 %5016
      %5018 = vrot.lane.b32.xlu0 %v4970, 64
      %v5019 = vpop.permute.xlu0 %5018
      %5020 = vrot.lane.b32.xlu0 %v4971, 64
      %v5021 = vpop.permute.xlu0 %5020
      %5022 = vrot.lane.b32.xlu0 %v4972, 64
      %v5023 = vpop.permute.xlu0 %5022
      %5024 = vrot.lane.b32.xlu0 %v4973, 64
      %v5025 = vpop.permute.xlu0 %5024
      %5026 = vrot.lane.b32.xlu0 %v4974, 64
      %v5027 = vpop.permute.xlu0 %5026
      %5028 = vrot.lane.b32.xlu0 %v4975, 64
      %v5029 = vpop.permute.xlu0 %5028
      %5030 = vrot.lane.b32.xlu0 %v4976, 64
      %v5031 = vpop.permute.xlu0 %5030
      %5032 = vrot.lane.b32.xlu0 %v4977, 64
      %v5033 = vpop.permute.xlu0 %5032
      %5034 = vrot.lane.b32.xlu0 %v4978, 64
      %v5035 = vpop.permute.xlu0 %5034
      %5036 = vrot.lane.b32.xlu0 %v4979, 64
      %v5037 = vpop.permute.xlu0 %5036
      %5038 = vrot.lane.b32.xlu0 %v4980, 64
      %v5039 = vpop.permute.xlu0 %5038
      %5040 = vrot.lane.b32.xlu0 %v4981, 64
      %v5041 = vpop.permute.xlu0 %5040
      %5042 = vrot.lane.b32.xlu0 %v4982, 64
      %v5043 = vpop.permute.xlu0 %5042
      %5044 = vrot.lane.b32.xlu0 %v4983, 64
      %v5045 = vpop.permute.xlu0 %5044
      %5046 = vrot.lane.b32.xlu0 %v4984, 64
      %v5047 = vpop.permute.xlu0 %5046
      %5048 = vrot.lane.b32.xlu0 %v4985, 64
      %v5049 = vpop.permute.xlu0 %5048
      %vm5082 = vcmask 650752
      %5083 = vst.msk [vmem:[#allocation6] sm:$0xf] %vm5082, %v4987
      %5084 = vst.msk [vmem:[#allocation6 + $0x8] sm:$0xf] %vm5082, %v4989
      %5085 = vst.msk [vmem:[#allocation6 + $0x10] sm:$0xf] %vm5082, %v4991
      %5086 = vst.msk [vmem:[#allocation6 + $0x18] sm:$0xf] %vm5082, %v4993
      %5087 = vst.msk [vmem:[#allocation6 + $0x20] sm:$0xf] %vm5082, %v4995
      %5088 = vst.msk [vmem:[#allocation6 + $0x28] sm:$0xf] %vm5082, %v4997
      %5089 = vst.msk [vmem:[#allocation6 + $0x30] sm:$0xf] %vm5082, %v4999
      %5090 = vst.msk [vmem:[#allocation6 + $0x38] sm:$0xf] %vm5082, %v5001
      %5091 = vst.msk [vmem:[#allocation6 + $0x40] sm:$0xf] %vm5082, %v5003
      %5092 = vst.msk [vmem:[#allocation6 + $0x48] sm:$0xf] %vm5082, %v5005
      %5093 = vst.msk [vmem:[#allocation6 + $0x50] sm:$0xf] %vm5082, %v5007
      %5094 = vst.msk [vmem:[#allocation6 + $0x58] sm:$0xf] %vm5082, %v5009
      %5095 = vst.msk [vmem:[#allocation6 + $0x60] sm:$0xf] %vm5082, %v5011
      %5096 = vst.msk [vmem:[#allocation6 + $0x68] sm:$0xf] %vm5082, %v5013
      %5097 = vst.msk [vmem:[#allocation6 + $0x70] sm:$0xf] %vm5082, %v5015
      %5098 = vst.msk [vmem:[#allocation6 + $0x78] sm:$0xf] %vm5082, %v5017
      %5099 = vst.msk [vmem:[#allocation6 + $0x80] sm:$0xf] %vm5082, %v5019
      %5100 = vst.msk [vmem:[#allocation6 + $0x88] sm:$0xf] %vm5082, %v5021
      %5101 = vst.msk [vmem:[#allocation6 + $0x90] sm:$0xf] %vm5082, %v5023
      %5102 = vst.msk [vmem:[#allocation6 + $0x98] sm:$0xf] %vm5082, %v5025
      %5103 = vst.msk [vmem:[#allocation6 + $0xa0] sm:$0xf] %vm5082, %v5027
      %5104 = vst.msk [vmem:[#allocation6 + $0xa8] sm:$0xf] %vm5082, %v5029
      %5105 = vst.msk [vmem:[#allocation6 + $0xb0] sm:$0xf] %vm5082, %v5031
      %5106 = vst.msk [vmem:[#allocation6 + $0xb8] sm:$0xf] %vm5082, %v5033
      %5107 = vst.msk [vmem:[#allocation6 + $0xc0] sm:$0xf] %vm5082, %v5035
      %5108 = vst.msk [vmem:[#allocation6 + $0xc8] sm:$0xf] %vm5082, %v5037
      %5109 = vst.msk [vmem:[#allocation6 + $0xd0] sm:$0xf] %vm5082, %v5039
      %5110 = vst.msk [vmem:[#allocation6 + $0xd8] sm:$0xf] %vm5082, %v5041
      %5111 = vst.msk [vmem:[#allocation6 + $0xe0] sm:$0xf] %vm5082, %v5043
      %5112 = vst.msk [vmem:[#allocation6 + $0xe8] sm:$0xf] %vm5082, %v5045
      %5113 = vst.msk [vmem:[#allocation6 + $0xf0] sm:$0xf] %vm5082, %v5047
      %5114 = vst.msk [vmem:[#allocation6 + $0xf8] sm:$0xf] %vm5082, %v5049
      %v5115 = vld [vmem:[#allocation3 + $0x19] sm:$0xff]
      %v5116 = vld [vmem:[#allocation3 + $0x21] sm:$0xff]
      %v5117 = vld [vmem:[#allocation3 + $0x29] sm:$0xff]
      %v5118 = vld [vmem:[#allocation3 + $0x31] sm:$0xff]
      %v5119 = vld [vmem:[#allocation3 + $0x39] sm:$0xff]
      %v5120 = vld [vmem:[#allocation3 + $0x41] sm:$0xff]
      %v5121 = vld [vmem:[#allocation3 + $0x49] sm:$0xff]
      %v5122 = vld [vmem:[#allocation3 + $0x51] sm:$0xff]
      %v5123 = vld [vmem:[#allocation3 + $0x59] sm:$0xff]
      %v5124 = vld [vmem:[#allocation3 + $0x61] sm:$0xff]
      %v5125 = vld [vmem:[#allocation3 + $0x69] sm:$0xff]
      %v5126 = vld [vmem:[#allocation3 + $0x71] sm:$0xff]
      %v5127 = vld [vmem:[#allocation3 + $0x79] sm:$0xff]
      %v5128 = vld [vmem:[#allocation3 + $0x81] sm:$0xff]
      %v5129 = vld [vmem:[#allocation3 + $0x89] sm:$0xff]
      %v5130 = vld [vmem:[#allocation3 + $0x91] sm:$0xff]
      %v5131 = vld [vmem:[#allocation3 + $0x99] sm:$0xff]
      %v5132 = vld [vmem:[#allocation3 + $0xa1] sm:$0xff]
      %v5133 = vld [vmem:[#allocation3 + $0xa9] sm:$0xff]
      %v5134 = vld [vmem:[#allocation3 + $0xb1] sm:$0xff]
      %v5135 = vld [vmem:[#allocation3 + $0xb9] sm:$0xff]
      %v5136 = vld [vmem:[#allocation3 + $0xc1] sm:$0xff]
      %v5137 = vld [vmem:[#allocation3 + $0xc9] sm:$0xff]
      %v5138 = vld [vmem:[#allocation3 + $0xd1] sm:$0xff]
      %v5139 = vld [vmem:[#allocation3 + $0xd9] sm:$0xff]
      %v5140 = vld [vmem:[#allocation3 + $0xe1] sm:$0xff]
      %v5141 = vld [vmem:[#allocation3 + $0xe9] sm:$0xff]
      %v5142 = vld [vmem:[#allocation3 + $0xf1] sm:$0xff]
      %v5143 = vld [vmem:[#allocation3 + $0xf9] sm:$0xff]
      %v5144 = vld [vmem:[#allocation3 + $0x101] sm:$0xff]
      %v5145 = vld [vmem:[#allocation3 + $0x109] sm:$0xff]
      %v5146 = vld [vmem:[#allocation3 + $0x111] sm:$0xff]
      %v5147 = vsel %vm1401, %v5115, 0.0
      %v5148 = vsel %vm1402, %v5116, 0.0
      %v5149 = vsel %vm1403, %v5117, 0.0
      %v5150 = vsel %vm1404, %v5118, 0.0
      %v5151 = vsel %vm1405, %v5119, 0.0
      %v5152 = vsel %vm1406, %v5120, 0.0
      %v5153 = vsel %vm1407, %v5121, 0.0
      %v5154 = vsel %vm1408, %v5122, 0.0
      %v5155 = vsel %vm1409, %v5123, 0.0
      %v5156 = vsel %vm1410, %v5124, 0.0
      %v5157 = vsel %vm1411, %v5125, 0.0
      %v5158 = vsel %vm1412, %v5126, 0.0
      %v5159 = vsel %vm1413, %v5127, 0.0
      %v5160 = vsel %vm1414, %v5128, 0.0
      %v5161 = vsel %vm1415, %v5129, 0.0
      %v5162 = vsel %vm1416, %v5130, 0.0
      %v5163 = vsel %vm1417, %v5131, 0.0
      %v5164 = vsel %vm1418, %v5132, 0.0
      %v5165 = vsel %vm1419, %v5133, 0.0
      %v5166 = vsel %vm1420, %v5134, 0.0
      %v5167 = vsel %vm1421, %v5135, 0.0
      %v5168 = vsel %vm1422, %v5136, 0.0
      %v5169 = vsel %vm1423, %v5137, 0.0
      %v5170 = vsel %vm1424, %v5138, 0.0
      %v5171 = vsel %vm1425, %v5139, 0.0
      %v5172 = vsel %vm1426, %v5140, 0.0
      %v5173 = vsel %vm1427, %v5141, 0.0
      %v5174 = vsel %vm1428, %v5142, 0.0
      %v5175 = vsel %vm1429, %v5143, 0.0
      %v5176 = vsel %vm1430, %v5144, 0.0
      %v5177 = vsel %vm1431, %v5145, 0.0
      %v5178 = vsel %vm1432, %v5146, 0.0
      %v5179 = vpack.c.bf16 %v5148, %v5147
      %v5180 = vpack.c.bf16 %v5150, %v5149
      %v5181 = vpack.c.bf16 %v5152, %v5151
      %v5182 = vpack.c.bf16 %v5154, %v5153
      %v5183 = vpack.c.bf16 %v5156, %v5155
      %v5184 = vpack.c.bf16 %v5158, %v5157
      %v5185 = vpack.c.bf16 %v5160, %v5159
      %v5186 = vpack.c.bf16 %v5162, %v5161
      %v5187 = vpack.c.bf16 %v5164, %v5163
      %v5188 = vpack.c.bf16 %v5166, %v5165
      %v5189 = vpack.c.bf16 %v5168, %v5167
      %v5190 = vpack.c.bf16 %v5170, %v5169
      %v5191 = vpack.c.bf16 %v5172, %v5171
      %v5192 = vpack.c.bf16 %v5174, %v5173
      %v5193 = vpack.c.bf16 %v5176, %v5175
      %v5194 = vpack.c.bf16 %v5178, %v5177
      %v5211 = vunpack.c.l.b16 %v5179
      %v5212 = vunpack.c.h.b16 %v5179
      %v5213 = vunpack.c.l.b16 %v5180
      %v5214 = vunpack.c.h.b16 %v5180
      %v5215 = vunpack.c.l.b16 %v5181
      %v5216 = vunpack.c.h.b16 %v5181
      %v5217 = vunpack.c.l.b16 %v5182
      %v5218 = vunpack.c.h.b16 %v5182
      %v5219 = vunpack.c.l.b16 %v5183
      %v5220 = vunpack.c.h.b16 %v5183
      %v5221 = vunpack.c.l.b16 %v5184
      %v5222 = vunpack.c.h.b16 %v5184
      %v5223 = vunpack.c.l.b16 %v5185
      %v5224 = vunpack.c.h.b16 %v5185
      %v5225 = vunpack.c.l.b16 %v5186
      %v5226 = vunpack.c.h.b16 %v5186
      %v5227 = vunpack.c.l.b16 %v5187
      %v5228 = vunpack.c.h.b16 %v5187
      %v5229 = vunpack.c.l.b16 %v5188
      %v5230 = vunpack.c.h.b16 %v5188
      %v5231 = vunpack.c.l.b16 %v5189
      %v5232 = vunpack.c.h.b16 %v5189
      %v5233 = vunpack.c.l.b16 %v5190
      %v5234 = vunpack.c.h.b16 %v5190
      %v5235 = vunpack.c.l.b16 %v5191
      %v5236 = vunpack.c.h.b16 %v5191
      %v5237 = vunpack.c.l.b16 %v5192
      %v5238 = vunpack.c.h.b16 %v5192
      %v5239 = vunpack.c.l.b16 %v5193
      %v5240 = vunpack.c.h.b16 %v5193
      %v5241 = vunpack.c.l.b16 %v5194
      %v5242 = vunpack.c.h.b16 %v5194
      %v5243 = vpack.c.b16 %v5211, %v5211
      %v5244 = vpack.c.b16 %v5212, %v5212
      %v5245 = vpack.c.b16 %v5213, %v5213
      %v5246 = vpack.c.b16 %v5214, %v5214
      %v5247 = vpack.c.b16 %v5215, %v5215
      %v5248 = vpack.c.b16 %v5216, %v5216
      %v5249 = vpack.c.b16 %v5217, %v5217
      %v5250 = vpack.c.b16 %v5218, %v5218
      %v5251 = vpack.c.b16 %v5219, %v5219
      %v5252 = vpack.c.b16 %v5220, %v5220
      %v5253 = vpack.c.b16 %v5221, %v5221
      %v5254 = vpack.c.b16 %v5222, %v5222
      %v5255 = vpack.c.b16 %v5223, %v5223
      %v5256 = vpack.c.b16 %v5224, %v5224
      %v5257 = vpack.c.b16 %v5225, %v5225
      %v5258 = vpack.c.b16 %v5226, %v5226
      %v5259 = vpack.c.b16 %v5227, %v5227
      %v5260 = vpack.c.b16 %v5228, %v5228
      %v5261 = vpack.c.b16 %v5229, %v5229
      %v5262 = vpack.c.b16 %v5230, %v5230
      %v5263 = vpack.c.b16 %v5231, %v5231
      %v5264 = vpack.c.b16 %v5232, %v5232
      %v5265 = vpack.c.b16 %v5233, %v5233
      %v5266 = vpack.c.b16 %v5234, %v5234
      %v5267 = vpack.c.b16 %v5235, %v5235
      %v5268 = vpack.c.b16 %v5236, %v5236
      %v5269 = vpack.c.b16 %v5237, %v5237
      %v5270 = vpack.c.b16 %v5238, %v5238
      %v5271 = vpack.c.b16 %v5239, %v5239
      %v5272 = vpack.c.b16 %v5240, %v5240
      %v5273 = vpack.c.b16 %v5241, %v5241
      %v5274 = vpack.c.b16 %v5242, %v5242
      %5275 = vrot.lane.b32.xlu0 %v5243, 80
      %v5276 = vpop.permute.xlu0 %5275
      %5277 = vrot.lane.b32.xlu0 %v5244, 80
      %v5278 = vpop.permute.xlu0 %5277
      %5279 = vrot.lane.b32.xlu0 %v5245, 80
      %v5280 = vpop.permute.xlu0 %5279
      %5281 = vrot.lane.b32.xlu0 %v5246, 80
      %v5282 = vpop.permute.xlu0 %5281
      %5283 = vrot.lane.b32.xlu0 %v5247, 80
      %v5284 = vpop.permute.xlu0 %5283
      %5285 = vrot.lane.b32.xlu0 %v5248, 80
      %v5286 = vpop.permute.xlu0 %5285
      %5287 = vrot.lane.b32.xlu0 %v5249, 80
      %v5288 = vpop.permute.xlu0 %5287
      %5289 = vrot.lane.b32.xlu0 %v5250, 80
      %v5290 = vpop.permute.xlu0 %5289
      %5291 = vrot.lane.b32.xlu0 %v5251, 80
      %v5292 = vpop.permute.xlu0 %5291
      %5293 = vrot.lane.b32.xlu0 %v5252, 80
      %v5294 = vpop.permute.xlu0 %5293
      %5295 = vrot.lane.b32.xlu0 %v5253, 80
      %v5296 = vpop.permute.xlu0 %5295
      %5297 = vrot.lane.b32.xlu0 %v5254, 80
      %v5298 = vpop.permute.xlu0 %5297
      %5299 = vrot.lane.b32.xlu0 %v5255, 80
      %v5300 = vpop.permute.xlu0 %5299
      %5301 = vrot.lane.b32.xlu0 %v5256, 80
      %v5302 = vpop.permute.xlu0 %5301
      %5303 = vrot.lane.b32.xlu0 %v5257, 80
      %v5304 = vpop.permute.xlu0 %5303
      %5305 = vrot.lane.b32.xlu0 %v5258, 80
      %v5306 = vpop.permute.xlu0 %5305
      %5307 = vrot.lane.b32.xlu0 %v5259, 80
      %v5308 = vpop.permute.xlu0 %5307
      %5309 = vrot.lane.b32.xlu0 %v5260, 80
      %v5310 = vpop.permute.xlu0 %5309
      %5311 = vrot.lane.b32.xlu0 %v5261, 80
      %v5312 = vpop.permute.xlu0 %5311
      %5313 = vrot.lane.b32.xlu0 %v5262, 80
      %v5314 = vpop.permute.xlu0 %5313
      %5315 = vrot.lane.b32.xlu0 %v5263, 80
      %v5316 = vpop.permute.xlu0 %5315
      %5317 = vrot.lane.b32.xlu0 %v5264, 80
      %v5318 = vpop.permute.xlu0 %5317
      %5319 = vrot.lane.b32.xlu0 %v5265, 80
      %v5320 = vpop.permute.xlu0 %5319
      %5321 = vrot.lane.b32.xlu0 %v5266, 80
      %v5322 = vpop.permute.xlu0 %5321
      %5323 = vrot.lane.b32.xlu0 %v5267, 80
      %v5324 = vpop.permute.xlu0 %5323
      %5325 = vrot.lane.b32.xlu0 %v5268, 80
      %v5326 = vpop.permute.xlu0 %5325
      %5327 = vrot.lane.b32.xlu0 %v5269, 80
      %v5328 = vpop.permute.xlu0 %5327
      %5329 = vrot.lane.b32.xlu0 %v5270, 80
      %v5330 = vpop.permute.xlu0 %5329
      %5331 = vrot.lane.b32.xlu0 %v5271, 80
      %v5332 = vpop.permute.xlu0 %5331
      %5333 = vrot.lane.b32.xlu0 %v5272, 80
      %v5334 = vpop.permute.xlu0 %5333
      %5335 = vrot.lane.b32.xlu0 %v5273, 80
      %v5336 = vpop.permute.xlu0 %5335
      %5337 = vrot.lane.b32.xlu0 %v5274, 80
      %v5338 = vpop.permute.xlu0 %5337
      %vm5371 = vcmask 781952
      %5372 = vst.msk [vmem:[#allocation6] sm:$0xf] %vm5371, %v5276
      %5373 = vst.msk [vmem:[#allocation6 + $0x8] sm:$0xf] %vm5371, %v5278
      %5374 = vst.msk [vmem:[#allocation6 + $0x10] sm:$0xf] %vm5371, %v5280
      %5375 = vst.msk [vmem:[#allocation6 + $0x18] sm:$0xf] %vm5371, %v5282
      %5376 = vst.msk [vmem:[#allocation6 + $0x20] sm:$0xf] %vm5371, %v5284
      %5377 = vst.msk [vmem:[#allocation6 + $0x28] sm:$0xf] %vm5371, %v5286
      %5378 = vst.msk [vmem:[#allocation6 + $0x30] sm:$0xf] %vm5371, %v5288
      %5379 = vst.msk [vmem:[#allocation6 + $0x38] sm:$0xf] %vm5371, %v5290
      %5380 = vst.msk [vmem:[#allocation6 + $0x40] sm:$0xf] %vm5371, %v5292
      %5381 = vst.msk [vmem:[#allocation6 + $0x48] sm:$0xf] %vm5371, %v5294
      %5382 = vst.msk [vmem:[#allocation6 + $0x50] sm:$0xf] %vm5371, %v5296
      %5383 = vst.msk [vmem:[#allocation6 + $0x58] sm:$0xf] %vm5371, %v5298
      %5384 = vst.msk [vmem:[#allocation6 + $0x60] sm:$0xf] %vm5371, %v5300
      %5385 = vst.msk [vmem:[#allocation6 + $0x68] sm:$0xf] %vm5371, %v5302
      %5386 = vst.msk [vmem:[#allocation6 + $0x70] sm:$0xf] %vm5371, %v5304
      %5387 = vst.msk [vmem:[#allocation6 + $0x78] sm:$0xf] %vm5371, %v5306
      %5388 = vst.msk [vmem:[#allocation6 + $0x80] sm:$0xf] %vm5371, %v5308
      %5389 = vst.msk [vmem:[#allocation6 + $0x88] sm:$0xf] %vm5371, %v5310
      %5390 = vst.msk [vmem:[#allocation6 + $0x90] sm:$0xf] %vm5371, %v5312
      %5391 = vst.msk [vmem:[#allocation6 + $0x98] sm:$0xf] %vm5371, %v5314
      %5392 = vst.msk [vmem:[#allocation6 + $0xa0] sm:$0xf] %vm5371, %v5316
      %5393 = vst.msk [vmem:[#allocation6 + $0xa8] sm:$0xf] %vm5371, %v5318
      %5394 = vst.msk [vmem:[#allocation6 + $0xb0] sm:$0xf] %vm5371, %v5320
      %5395 = vst.msk [vmem:[#allocation6 + $0xb8] sm:$0xf] %vm5371, %v5322
      %5396 = vst.msk [vmem:[#allocation6 + $0xc0] sm:$0xf] %vm5371, %v5324
      %5397 = vst.msk [vmem:[#allocation6 + $0xc8] sm:$0xf] %vm5371, %v5326
      %5398 = vst.msk [vmem:[#allocation6 + $0xd0] sm:$0xf] %vm5371, %v5328
      %5399 = vst.msk [vmem:[#allocation6 + $0xd8] sm:$0xf] %vm5371, %v5330
      %5400 = vst.msk [vmem:[#allocation6 + $0xe0] sm:$0xf] %vm5371, %v5332
      %5401 = vst.msk [vmem:[#allocation6 + $0xe8] sm:$0xf] %vm5371, %v5334
      %5402 = vst.msk [vmem:[#allocation6 + $0xf0] sm:$0xf] %vm5371, %v5336
      %5403 = vst.msk [vmem:[#allocation6 + $0xf8] sm:$0xf] %vm5371, %v5338
      %v5404 = vld [vmem:[#allocation3 + $0x27] sm:$0xff]
      %v5405 = vld [vmem:[#allocation3 + $0x2f] sm:$0xff]
      %v5406 = vld [vmem:[#allocation3 + $0x37] sm:$0xff]
      %v5407 = vld [vmem:[#allocation3 + $0x3f] sm:$0xff]
      %v5408 = vld [vmem:[#allocation3 + $0x47] sm:$0xff]
      %v5409 = vld [vmem:[#allocation3 + $0x4f] sm:$0xff]
      %v5410 = vld [vmem:[#allocation3 + $0x57] sm:$0xff]
      %v5411 = vld [vmem:[#allocation3 + $0x5f] sm:$0xff]
      %v5412 = vld [vmem:[#allocation3 + $0x67] sm:$0xff]
      %v5413 = vld [vmem:[#allocation3 + $0x6f] sm:$0xff]
      %v5414 = vld [vmem:[#allocation3 + $0x77] sm:$0xff]
      %v5415 = vld [vmem:[#allocation3 + $0x7f] sm:$0xff]
      %v5416 = vld [vmem:[#allocation3 + $0x87] sm:$0xff]
      %v5417 = vld [vmem:[#allocation3 + $0x8f] sm:$0xff]
      %v5418 = vld [vmem:[#allocation3 + $0x97] sm:$0xff]
      %v5419 = vld [vmem:[#allocation3 + $0x9f] sm:$0xff]
      %v5420 = vld [vmem:[#allocation3 + $0xa7] sm:$0xff]
      %v5421 = vld [vmem:[#allocation3 + $0xaf] sm:$0xff]
      %v5422 = vld [vmem:[#allocation3 + $0xb7] sm:$0xff]
      %v5423 = vld [vmem:[#allocation3 + $0xbf] sm:$0xff]
      %v5424 = vld [vmem:[#allocation3 + $0xc7] sm:$0xff]
      %v5425 = vld [vmem:[#allocation3 + $0xcf] sm:$0xff]
      %v5426 = vld [vmem:[#allocation3 + $0xd7] sm:$0xff]
      %v5427 = vld [vmem:[#allocation3 + $0xdf] sm:$0xff]
      %v5428 = vld [vmem:[#allocation3 + $0xe7] sm:$0xff]
      %v5429 = vld [vmem:[#allocation3 + $0xef] sm:$0xff]
      %v5430 = vld [vmem:[#allocation3 + $0xf7] sm:$0xff]
      %v5431 = vld [vmem:[#allocation3 + $0xff] sm:$0xff]
      %v5432 = vld [vmem:[#allocation3 + $0x107] sm:$0xff]
      %v5433 = vld [vmem:[#allocation3 + $0x10f] sm:$0xff]
      %v5434 = vld [vmem:[#allocation3 + $0x117] sm:$0xff]
      %v5435 = vld [vmem:[#allocation3 + $0x11f] sm:$0xff]
      %v5436 = vsel %vm855, %v5404, 0.0
      %v5437 = vsel %vm856, %v5405, 0.0
      %v5438 = vsel %vm857, %v5406, 0.0
      %v5439 = vsel %vm858, %v5407, 0.0
      %v5440 = vsel %vm859, %v5408, 0.0
      %v5441 = vsel %vm860, %v5409, 0.0
      %v5442 = vsel %vm861, %v5410, 0.0
      %v5443 = vsel %vm862, %v5411, 0.0
      %v5444 = vsel %vm863, %v5412, 0.0
      %v5445 = vsel %vm864, %v5413, 0.0
      %v5446 = vsel %vm865, %v5414, 0.0
      %v5447 = vsel %vm866, %v5415, 0.0
      %v5448 = vsel %vm867, %v5416, 0.0
      %v5449 = vsel %vm868, %v5417, 0.0
      %v5450 = vsel %vm869, %v5418, 0.0
      %v5451 = vsel %vm870, %v5419, 0.0
      %v5452 = vsel %vm871, %v5420, 0.0
      %v5453 = vsel %vm872, %v5421, 0.0
      %v5454 = vsel %vm873, %v5422, 0.0
      %v5455 = vsel %vm874, %v5423, 0.0
      %v5456 = vsel %vm875, %v5424, 0.0
      %v5457 = vsel %vm876, %v5425, 0.0
      %v5458 = vsel %vm877, %v5426, 0.0
      %v5459 = vsel %vm878, %v5427, 0.0
      %v5460 = vsel %vm879, %v5428, 0.0
      %v5461 = vsel %vm880, %v5429, 0.0
      %v5462 = vsel %vm881, %v5430, 0.0
      %v5463 = vsel %vm882, %v5431, 0.0
      %v5464 = vsel %vm883, %v5432, 0.0
      %v5465 = vsel %vm884, %v5433, 0.0
      %v5466 = vsel %vm885, %v5434, 0.0
      %v5467 = vsel %vm886, %v5435, 0.0
      %v5468 = vpack.c.bf16 %v5437, %v5436
      %v5469 = vpack.c.bf16 %v5439, %v5438
      %v5470 = vpack.c.bf16 %v5441, %v5440
      %v5471 = vpack.c.bf16 %v5443, %v5442
      %v5472 = vpack.c.bf16 %v5445, %v5444
      %v5473 = vpack.c.bf16 %v5447, %v5446
      %v5474 = vpack.c.bf16 %v5449, %v5448
      %v5475 = vpack.c.bf16 %v5451, %v5450
      %v5476 = vpack.c.bf16 %v5453, %v5452
      %v5477 = vpack.c.bf16 %v5455, %v5454
      %v5478 = vpack.c.bf16 %v5457, %v5456
      %v5479 = vpack.c.bf16 %v5459, %v5458
      %v5480 = vpack.c.bf16 %v5461, %v5460
      %v5481 = vpack.c.bf16 %v5463, %v5462
      %v5482 = vpack.c.bf16 %v5465, %v5464
      %v5483 = vpack.c.bf16 %v5467, %v5466
      %v5500 = vunpack.c.l.b16 %v5468
      %v5501 = vunpack.c.h.b16 %v5468
      %v5502 = vunpack.c.l.b16 %v5469
      %v5503 = vunpack.c.h.b16 %v5469
      %v5504 = vunpack.c.l.b16 %v5470
      %v5505 = vunpack.c.h.b16 %v5470
      %v5506 = vunpack.c.l.b16 %v5471
      %v5507 = vunpack.c.h.b16 %v5471
      %v5508 = vunpack.c.l.b16 %v5472
      %v5509 = vunpack.c.h.b16 %v5472
      %v5510 = vunpack.c.l.b16 %v5473
      %v5511 = vunpack.c.h.b16 %v5473
      %v5512 = vunpack.c.l.b16 %v5474
      %v5513 = vunpack.c.h.b16 %v5474
      %v5514 = vunpack.c.l.b16 %v5475
      %v5515 = vunpack.c.h.b16 %v5475
      %v5516 = vunpack.c.l.b16 %v5476
      %v5517 = vunpack.c.h.b16 %v5476
      %v5518 = vunpack.c.l.b16 %v5477
      %v5519 = vunpack.c.h.b16 %v5477
      %v5520 = vunpack.c.l.b16 %v5478
      %v5521 = vunpack.c.h.b16 %v5478
      %v5522 = vunpack.c.l.b16 %v5479
      %v5523 = vunpack.c.h.b16 %v5479
      %v5524 = vunpack.c.l.b16 %v5480
      %v5525 = vunpack.c.h.b16 %v5480
      %v5526 = vunpack.c.l.b16 %v5481
      %v5527 = vunpack.c.h.b16 %v5481
      %v5528 = vunpack.c.l.b16 %v5482
      %v5529 = vunpack.c.h.b16 %v5482
      %v5530 = vunpack.c.l.b16 %v5483
      %v5531 = vunpack.c.h.b16 %v5483
      %v5532 = vpack.c.b16 %v5500, %v5500
      %v5533 = vpack.c.b16 %v5501, %v5501
      %v5534 = vpack.c.b16 %v5502, %v5502
      %v5535 = vpack.c.b16 %v5503, %v5503
      %v5536 = vpack.c.b16 %v5504, %v5504
      %v5537 = vpack.c.b16 %v5505, %v5505
      %v5538 = vpack.c.b16 %v5506, %v5506
      %v5539 = vpack.c.b16 %v5507, %v5507
      %v5540 = vpack.c.b16 %v5508, %v5508
      %v5541 = vpack.c.b16 %v5509, %v5509
      %v5542 = vpack.c.b16 %v5510, %v5510
      %v5543 = vpack.c.b16 %v5511, %v5511
      %v5544 = vpack.c.b16 %v5512, %v5512
      %v5545 = vpack.c.b16 %v5513, %v5513
      %v5546 = vpack.c.b16 %v5514, %v5514
      %v5547 = vpack.c.b16 %v5515, %v5515
      %v5548 = vpack.c.b16 %v5516, %v5516
      %v5549 = vpack.c.b16 %v5517, %v5517
      %v5550 = vpack.c.b16 %v5518, %v5518
      %v5551 = vpack.c.b16 %v5519, %v5519
      %v5552 = vpack.c.b16 %v5520, %v5520
      %v5553 = vpack.c.b16 %v5521, %v5521
      %v5554 = vpack.c.b16 %v5522, %v5522
      %v5555 = vpack.c.b16 %v5523, %v5523
      %v5556 = vpack.c.b16 %v5524, %v5524
      %v5557 = vpack.c.b16 %v5525, %v5525
      %v5558 = vpack.c.b16 %v5526, %v5526
      %v5559 = vpack.c.b16 %v5527, %v5527
      %v5560 = vpack.c.b16 %v5528, %v5528
      %v5561 = vpack.c.b16 %v5529, %v5529
      %v5562 = vpack.c.b16 %v5530, %v5530
      %v5563 = vpack.c.b16 %v5531, %v5531
      %5564 = vrot.lane.b32.xlu0 %v5532, 96
      %v5565 = vpop.permute.xlu0 %5564
      %5566 = vrot.lane.b32.xlu0 %v5533, 96
      %v5567 = vpop.permute.xlu0 %5566
      %5568 = vrot.lane.b32.xlu0 %v5534, 96
      %v5569 = vpop.permute.xlu0 %5568
      %5570 = vrot.lane.b32.xlu0 %v5535, 96
      %v5571 = vpop.permute.xlu0 %5570
      %5572 = vrot.lane.b32.xlu0 %v5536, 96
      %v5573 = vpop.permute.xlu0 %5572
      %5574 = vrot.lane.b32.xlu0 %v5537, 96
      %v5575 = vpop.permute.xlu0 %5574
      %5576 = vrot.lane.b32.xlu0 %v5538, 96
      %v5577 = vpop.permute.xlu0 %5576
      %5578 = vrot.lane.b32.xlu0 %v5539, 96
      %v5579 = vpop.permute.xlu0 %5578
      %5580 = vrot.lane.b32.xlu0 %v5540, 96
      %v5581 = vpop.permute.xlu0 %5580
      %5582 = vrot.lane.b32.xlu0 %v5541, 96
      %v5583 = vpop.permute.xlu0 %5582
      %5584 = vrot.lane.b32.xlu0 %v5542, 96
      %v5585 = vpop.permute.xlu0 %5584
      %5586 = vrot.lane.b32.xlu0 %v5543, 96
      %v5587 = vpop.permute.xlu0 %5586
      %5588 = vrot.lane.b32.xlu0 %v5544, 96
      %v5589 = vpop.permute.xlu0 %5588
      %5590 = vrot.lane.b32.xlu0 %v5545, 96
      %v5591 = vpop.permute.xlu0 %5590
      %5592 = vrot.lane.b32.xlu0 %v5546, 96
      %v5593 = vpop.permute.xlu0 %5592
      %5594 = vrot.lane.b32.xlu0 %v5547, 96
      %v5595 = vpop.permute.xlu0 %5594
      %5596 = vrot.lane.b32.xlu0 %v5548, 96
      %v5597 = vpop.permute.xlu0 %5596
      %5598 = vrot.lane.b32.xlu0 %v5549, 96
      %v5599 = vpop.permute.xlu0 %5598
      %5600 = vrot.lane.b32.xlu0 %v5550, 96
      %v5601 = vpop.permute.xlu0 %5600
      %5602 = vrot.lane.b32.xlu0 %v5551, 96
      %v5603 = vpop.permute.xlu0 %5602
      %5604 = vrot.lane.b32.xlu0 %v5552, 96
      %v5605 = vpop.permute.xlu0 %5604
      %5606 = vrot.lane.b32.xlu0 %v5553, 96
      %v5607 = vpop.permute.xlu0 %5606
      %5608 = vrot.lane.b32.xlu0 %v5554, 96
      %v5609 = vpop.permute.xlu0 %5608
      %5610 = vrot.lane.b32.xlu0 %v5555, 96
      %v5611 = vpop.permute.xlu0 %5610
      %5612 = vrot.lane.b32.xlu0 %v5556, 96
      %v5613 = vpop.permute.xlu0 %5612
      %5614 = vrot.lane.b32.xlu0 %v5557, 96
      %v5615 = vpop.permute.xlu0 %5614
      %5616 = vrot.lane.b32.xlu0 %v5558, 96
      %v5617 = vpop.permute.xlu0 %5616
      %5618 = vrot.lane.b32.xlu0 %v5559, 96
      %v5619 = vpop.permute.xlu0 %5618
      %5620 = vrot.lane.b32.xlu0 %v5560, 96
      %v5621 = vpop.permute.xlu0 %5620
      %5622 = vrot.lane.b32.xlu0 %v5561, 96
      %v5623 = vpop.permute.xlu0 %5622
      %5624 = vrot.lane.b32.xlu0 %v5562, 96
      %v5625 = vpop.permute.xlu0 %5624
      %5626 = vrot.lane.b32.xlu0 %v5563, 96
      %v5627 = vpop.permute.xlu0 %5626
      %vm5660 = vcmask 913152
      %5661 = vst.msk [vmem:[#allocation6] sm:$0xf] %vm5660, %v5565
      %5662 = vst.msk [vmem:[#allocation6 + $0x8] sm:$0xf] %vm5660, %v5567
      %5663 = vst.msk [vmem:[#allocation6 + $0x10] sm:$0xf] %vm5660, %v5569
      %5664 = vst.msk [vmem:[#allocation6 + $0x18] sm:$0xf] %vm5660, %v5571
      %5665 = vst.msk [vmem:[#allocation6 + $0x20] sm:$0xf] %vm5660, %v5573
      %5666 = vst.msk [vmem:[#allocation6 + $0x28] sm:$0xf] %vm5660, %v5575
      %5667 = vst.msk [vmem:[#allocation6 + $0x30] sm:$0xf] %vm5660, %v5577
      %5668 = vst.msk [vmem:[#allocation6 + $0x38] sm:$0xf] %vm5660, %v5579
      %5669 = vst.msk [vmem:[#allocation6 + $0x40] sm:$0xf] %vm5660, %v5581
      %5670 = vst.msk [vmem:[#allocation6 + $0x48] sm:$0xf] %vm5660, %v5583
      %5671 = vst.msk [vmem:[#allocation6 + $0x50] sm:$0xf] %vm5660, %v5585
      %5672 = vst.msk [vmem:[#allocation6 + $0x58] sm:$0xf] %vm5660, %v5587
      %5673 = vst.msk [vmem:[#allocation6 + $0x60] sm:$0xf] %vm5660, %v5589
      %5674 = vst.msk [vmem:[#allocation6 + $0x68] sm:$0xf] %vm5660, %v5591
      %5675 = vst.msk [vmem:[#allocation6 + $0x70] sm:$0xf] %vm5660, %v5593
      %5676 = vst.msk [vmem:[#allocation6 + $0x78] sm:$0xf] %vm5660, %v5595
      %5677 = vst.msk [vmem:[#allocation6 + $0x80] sm:$0xf] %vm5660, %v5597
      %5678 = vst.msk [vmem:[#allocation6 + $0x88] sm:$0xf] %vm5660, %v5599
      %5679 = vst.msk [vmem:[#allocation6 + $0x90] sm:$0xf] %vm5660, %v5601
      %5680 = vst.msk [vmem:[#allocation6 + $0x98] sm:$0xf] %vm5660, %v5603
      %5681 = vst.msk [vmem:[#allocation6 + $0xa0] sm:$0xf] %vm5660, %v5605
      %5682 = vst.msk [vmem:[#allocation6 + $0xa8] sm:$0xf] %vm5660, %v5607
      %5683 = vst.msk [vmem:[#allocation6 + $0xb0] sm:$0xf] %vm5660, %v5609
      %5684 = vst.msk [vmem:[#allocation6 + $0xb8] sm:$0xf] %vm5660, %v5611
      %5685 = vst.msk [vmem:[#allocation6 + $0xc0] sm:$0xf] %vm5660, %v5613
      %5686 = vst.msk [vmem:[#allocation6 + $0xc8] sm:$0xf] %vm5660, %v5615
      %5687 = vst.msk [vmem:[#allocation6 + $0xd0] sm:$0xf] %vm5660, %v5617
      %5688 = vst.msk [vmem:[#allocation6 + $0xd8] sm:$0xf] %vm5660, %v5619
      %5689 = vst.msk [vmem:[#allocation6 + $0xe0] sm:$0xf] %vm5660, %v5621
      %5690 = vst.msk [vmem:[#allocation6 + $0xe8] sm:$0xf] %vm5660, %v5623
      %5691 = vst.msk [vmem:[#allocation6 + $0xf0] sm:$0xf] %vm5660, %v5625
      %5692 = vst.msk [vmem:[#allocation6 + $0xf8] sm:$0xf] %vm5660, %v5627
      %v5693 = vld [vmem:[#allocation3 + $0x28] sm:$0xff]
      %v5694 = vld [vmem:[#allocation3 + $0x30] sm:$0xff]
      %v5695 = vld [vmem:[#allocation3 + $0x38] sm:$0xff]
      %v5696 = vld [vmem:[#allocation3 + $0x40] sm:$0xff]
      %v5697 = vld [vmem:[#allocation3 + $0x48] sm:$0xff]
      %v5698 = vld [vmem:[#allocation3 + $0x50] sm:$0xff]
      %v5699 = vld [vmem:[#allocation3 + $0x58] sm:$0xff]
      %v5700 = vld [vmem:[#allocation3 + $0x60] sm:$0xff]
      %v5701 = vld [vmem:[#allocation3 + $0x68] sm:$0xff]
      %v5702 = vld [vmem:[#allocation3 + $0x70] sm:$0xff]
      %v5703 = vld [vmem:[#allocation3 + $0x78] sm:$0xff]
      %v5704 = vld [vmem:[#allocation3 + $0x80] sm:$0xff]
      %v5705 = vld [vmem:[#allocation3 + $0x88] sm:$0xff]
      %v5706 = vld [vmem:[#allocation3 + $0x90] sm:$0xff]
      %v5707 = vld [vmem:[#allocation3 + $0x98] sm:$0xff]
      %v5708 = vld [vmem:[#allocation3 + $0xa0] sm:$0xff]
      %v5709 = vld [vmem:[#allocation3 + $0xa8] sm:$0xff]
      %v5710 = vld [vmem:[#allocation3 + $0xb0] sm:$0xff]
      %v5711 = vld [vmem:[#allocation3 + $0xb8] sm:$0xff]
      %v5712 = vld [vmem:[#allocation3 + $0xc0] sm:$0xff]
      %v5713 = vld [vmem:[#allocation3 + $0xc8] sm:$0xff]
      %v5714 = vld [vmem:[#allocation3 + $0xd0] sm:$0xff]
      %v5715 = vld [vmem:[#allocation3 + $0xd8] sm:$0xff]
      %v5716 = vld [vmem:[#allocation3 + $0xe0] sm:$0xff]
      %v5717 = vld [vmem:[#allocation3 + $0xe8] sm:$0xff]
      %v5718 = vld [vmem:[#allocation3 + $0xf0] sm:$0xff]
      %v5719 = vld [vmem:[#allocation3 + $0xf8] sm:$0xff]
      %v5720 = vld [vmem:[#allocation3 + $0x100] sm:$0xff]
      %v5721 = vld [vmem:[#allocation3 + $0x108] sm:$0xff]
      %v5722 = vld [vmem:[#allocation3 + $0x110] sm:$0xff]
      %v5723 = vld [vmem:[#allocation3 + $0x118] sm:$0xff]
      %v5724 = vld [vmem:[#allocation3 + $0x120] sm:$0xff]
      %v5725 = vpack.c.bf16 %v5694, %v5693
      %v5726 = vpack.c.bf16 %v5696, %v5695
      %v5727 = vpack.c.bf16 %v5698, %v5697
      %v5728 = vpack.c.bf16 %v5700, %v5699
      %v5729 = vpack.c.bf16 %v5702, %v5701
      %v5730 = vpack.c.bf16 %v5704, %v5703
      %v5731 = vpack.c.bf16 %v5706, %v5705
      %v5732 = vpack.c.bf16 %v5708, %v5707
      %v5733 = vpack.c.bf16 %v5710, %v5709
      %v5734 = vpack.c.bf16 %v5712, %v5711
      %v5735 = vpack.c.bf16 %v5714, %v5713
      %v5736 = vpack.c.bf16 %v5716, %v5715
      %v5737 = vpack.c.bf16 %v5718, %v5717
      %v5738 = vpack.c.bf16 %v5720, %v5719
      %v5739 = vpack.c.bf16 %v5722, %v5721
      %v5740 = vpack.c.bf16 %v5724, %v5723
      %v5757 = vunpack.c.l.b16 %v5725
      %v5758 = vunpack.c.h.b16 %v5725
      %v5759 = vunpack.c.l.b16 %v5726
      %v5760 = vunpack.c.h.b16 %v5726
      %v5761 = vunpack.c.l.b16 %v5727
      %v5762 = vunpack.c.h.b16 %v5727
      %v5763 = vunpack.c.l.b16 %v5728
      %v5764 = vunpack.c.h.b16 %v5728
      %v5765 = vunpack.c.l.b16 %v5729
      %v5766 = vunpack.c.h.b16 %v5729
      %v5767 = vunpack.c.l.b16 %v5730
      %v5768 = vunpack.c.h.b16 %v5730
      %v5769 = vunpack.c.l.b16 %v5731
      %v5770 = vunpack.c.h.b16 %v5731
      %v5771 = vunpack.c.l.b16 %v5732
      %v5772 = vunpack.c.h.b16 %v5732
      %v5773 = vunpack.c.l.b16 %v5733
      %v5774 = vunpack.c.h.b16 %v5733
      %v5775 = vunpack.c.l.b16 %v5734
      %v5776 = vunpack.c.h.b16 %v5734
      %v5777 = vunpack.c.l.b16 %v5735
      %v5778 = vunpack.c.h.b16 %v5735
      %v5779 = vunpack.c.l.b16 %v5736
      %v5780 = vunpack.c.h.b16 %v5736
      %v5781 = vunpack.c.l.b16 %v5737
      %v5782 = vunpack.c.h.b16 %v5737
      %v5783 = vunpack.c.l.b16 %v5738
      %v5784 = vunpack.c.h.b16 %v5738
      %v5785 = vunpack.c.l.b16 %v5739
      %v5786 = vunpack.c.h.b16 %v5739
      %v5787 = vunpack.c.l.b16 %v5740
      %v5788 = vunpack.c.h.b16 %v5740
      %v5789 = vpack.c.b16 %v5757, %v5757
      %v5790 = vpack.c.b16 %v5758, %v5758
      %v5791 = vpack.c.b16 %v5759, %v5759
      %v5792 = vpack.c.b16 %v5760, %v5760
      %v5793 = vpack.c.b16 %v5761, %v5761
      %v5794 = vpack.c.b16 %v5762, %v5762
      %v5795 = vpack.c.b16 %v5763, %v5763
      %v5796 = vpack.c.b16 %v5764, %v5764
      %v5797 = vpack.c.b16 %v5765, %v5765
      %v5798 = vpack.c.b16 %v5766, %v5766
      %v5799 = vpack.c.b16 %v5767, %v5767
      %v5800 = vpack.c.b16 %v5768, %v5768
      %v5801 = vpack.c.b16 %v5769, %v5769
      %v5802 = vpack.c.b16 %v5770, %v5770
      %v5803 = vpack.c.b16 %v5771, %v5771
      %v5804 = vpack.c.b16 %v5772, %v5772
      %v5805 = vpack.c.b16 %v5773, %v5773
      %v5806 = vpack.c.b16 %v5774, %v5774
      %v5807 = vpack.c.b16 %v5775, %v5775
      %v5808 = vpack.c.b16 %v5776, %v5776
      %v5809 = vpack.c.b16 %v5777, %v5777
      %v5810 = vpack.c.b16 %v5778, %v5778
      %v5811 = vpack.c.b16 %v5779, %v5779
      %v5812 = vpack.c.b16 %v5780, %v5780
      %v5813 = vpack.c.b16 %v5781, %v5781
      %v5814 = vpack.c.b16 %v5782, %v5782
      %v5815 = vpack.c.b16 %v5783, %v5783
      %v5816 = vpack.c.b16 %v5784, %v5784
      %v5817 = vpack.c.b16 %v5785, %v5785
      %v5818 = vpack.c.b16 %v5786, %v5786
      %v5819 = vpack.c.b16 %v5787, %v5787
      %v5820 = vpack.c.b16 %v5788, %v5788
      %5821 = vrot.lane.b32.xlu0 %v5789, 112
      %v5822 = vpop.permute.xlu0 %5821
      %5823 = vrot.lane.b32.xlu0 %v5790, 112
      %v5824 = vpop.permute.xlu0 %5823
      %5825 = vrot.lane.b32.xlu0 %v5791, 112
      %v5826 = vpop.permute.xlu0 %5825
      %5827 = vrot.lane.b32.xlu0 %v5792, 112
      %v5828 = vpop.permute.xlu0 %5827
      %5829 = vrot.lane.b32.xlu0 %v5793, 112
      %v5830 = vpop.permute.xlu0 %5829
      %5831 = vrot.lane.b32.xlu0 %v5794, 112
      %v5832 = vpop.permute.xlu0 %5831
      %5833 = vrot.lane.b32.xlu0 %v5795, 112
      %v5834 = vpop.permute.xlu0 %5833
      %5835 = vrot.lane.b32.xlu0 %v5796, 112
      %v5836 = vpop.permute.xlu0 %5835
      %5837 = vrot.lane.b32.xlu0 %v5797, 112
      %v5838 = vpop.permute.xlu0 %5837
      %5839 = vrot.lane.b32.xlu0 %v5798, 112
      %v5840 = vpop.permute.xlu0 %5839
      %5841 = vrot.lane.b32.xlu0 %v5799, 112
      %v5842 = vpop.permute.xlu0 %5841
      %5843 = vrot.lane.b32.xlu0 %v5800, 112
      %v5844 = vpop.permute.xlu0 %5843
      %5845 = vrot.lane.b32.xlu0 %v5801, 112
      %v5846 = vpop.permute.xlu0 %5845
      %5847 = vrot.lane.b32.xlu0 %v5802, 112
      %v5848 = vpop.permute.xlu0 %5847
      %5849 = vrot.lane.b32.xlu0 %v5803, 112
      %v5850 = vpop.permute.xlu0 %5849
      %5851 = vrot.lane.b32.xlu0 %v5804, 112
      %v5852 = vpop.permute.xlu0 %5851
      %5853 = vrot.lane.b32.xlu0 %v5805, 112
      %v5854 = vpop.permute.xlu0 %5853
      %5855 = vrot.lane.b32.xlu0 %v5806, 112
      %v5856 = vpop.permute.xlu0 %5855
      %5857 = vrot.lane.b32.xlu0 %v5807, 112
      %v5858 = vpop.permute.xlu0 %5857
      %5859 = vrot.lane.b32.xlu0 %v5808, 112
      %v5860 = vpop.permute.xlu0 %5859
      %5861 = vrot.lane.b32.xlu0 %v5809, 112
      %v5862 = vpop.permute.xlu0 %5861
      %5863 = vrot.lane.b32.xlu0 %v5810, 112
      %v5864 = vpop.permute.xlu0 %5863
      %5865 = vrot.lane.b32.xlu0 %v5811, 112
      %v5866 = vpop.permute.xlu0 %5865
      %5867 = vrot.lane.b32.xlu0 %v5812, 112
      %v5868 = vpop.permute.xlu0 %5867
      %5869 = vrot.lane.b32.xlu0 %v5813, 112
      %v5870 = vpop.permute.xlu0 %5869
      %5871 = vrot.lane.b32.xlu0 %v5814, 112
      %v5872 = vpop.permute.xlu0 %5871
      %5873 = vrot.lane.b32.xlu0 %v5815, 112
      %v5874 = vpop.permute.xlu0 %5873
      %5875 = vrot.lane.b32.xlu0 %v5816, 112
      %v5876 = vpop.permute.xlu0 %5875
      %5877 = vrot.lane.b32.xlu0 %v5817, 112
      %v5878 = vpop.permute.xlu0 %5877
      %5879 = vrot.lane.b32.xlu0 %v5818, 112
      %v5880 = vpop.permute.xlu0 %5879
      %5881 = vrot.lane.b32.xlu0 %v5819, 112
      %v5882 = vpop.permute.xlu0 %5881
      %5883 = vrot.lane.b32.xlu0 %v5820, 112
      %v5884 = vpop.permute.xlu0 %5883
      %vm5917 = vcmask 1044352
      %5918 = vst.msk [vmem:[#allocation6] sm:$0xf] %vm5917, %v5822
      %5919 = vst.msk [vmem:[#allocation6 + $0x8] sm:$0xf] %vm5917, %v5824
      %5920 = vst.msk [vmem:[#allocation6 + $0x10] sm:$0xf] %vm5917, %v5826
      %5921 = vst.msk [vmem:[#allocation6 + $0x18] sm:$0xf] %vm5917, %v5828
      %5922 = vst.msk [vmem:[#allocation6 + $0x20] sm:$0xf] %vm5917, %v5830
      %5923 = vst.msk [vmem:[#allocation6 + $0x28] sm:$0xf] %vm5917, %v5832
      %5924 = vst.msk [vmem:[#allocation6 + $0x30] sm:$0xf] %vm5917, %v5834
      %5925 = vst.msk [vmem:[#allocation6 + $0x38] sm:$0xf] %vm5917, %v5836
      %5926 = vst.msk [vmem:[#allocation6 + $0x40] sm:$0xf] %vm5917, %v5838
      %5927 = vst.msk [vmem:[#allocation6 + $0x48] sm:$0xf] %vm5917, %v5840
      %5928 = vst.msk [vmem:[#allocation6 + $0x50] sm:$0xf] %vm5917, %v5842
      %5929 = vst.msk [vmem:[#allocation6 + $0x58] sm:$0xf] %vm5917, %v5844
      %5930 = vst.msk [vmem:[#allocation6 + $0x60] sm:$0xf] %vm5917, %v5846
      %5931 = vst.msk [vmem:[#allocation6 + $0x68] sm:$0xf] %vm5917, %v5848
      %5932 = vst.msk [vmem:[#allocation6 + $0x70] sm:$0xf] %vm5917, %v5850
      %5933 = vst.msk [vmem:[#allocation6 + $0x78] sm:$0xf] %vm5917, %v5852
      %5934 = vst.msk [vmem:[#allocation6 + $0x80] sm:$0xf] %vm5917, %v5854
      %5935 = vst.msk [vmem:[#allocation6 + $0x88] sm:$0xf] %vm5917, %v5856
      %5936 = vst.msk [vmem:[#allocation6 + $0x90] sm:$0xf] %vm5917, %v5858
      %5937 = vst.msk [vmem:[#allocation6 + $0x98] sm:$0xf] %vm5917, %v5860
      %5938 = vst.msk [vmem:[#allocation6 + $0xa0] sm:$0xf] %vm5917, %v5862
      %5939 = vst.msk [vmem:[#allocation6 + $0xa8] sm:$0xf] %vm5917, %v5864
      %5940 = vst.msk [vmem:[#allocation6 + $0xb0] sm:$0xf] %vm5917, %v5866
      %5941 = vst.msk [vmem:[#allocation6 + $0xb8] sm:$0xf] %vm5917, %v5868
      %5942 = vst.msk [vmem:[#allocation6 + $0xc0] sm:$0xf] %vm5917, %v5870
      %5943 = vst.msk [vmem:[#allocation6 + $0xc8] sm:$0xf] %vm5917, %v5872
      %5944 = vst.msk [vmem:[#allocation6 + $0xd0] sm:$0xf] %vm5917, %v5874
      %5945 = vst.msk [vmem:[#allocation6 + $0xd8] sm:$0xf] %vm5917, %v5876
      %5946 = vst.msk [vmem:[#allocation6 + $0xe0] sm:$0xf] %vm5917, %v5878
      %5947 = vst.msk [vmem:[#allocation6 + $0xe8] sm:$0xf] %vm5917, %v5880
      %5948 = vst.msk [vmem:[#allocation6 + $0xf0] sm:$0xf] %vm5917, %v5882
      %5949 = vst.msk [vmem:[#allocation6 + $0xf8] sm:$0xf] %vm5917, %v5884
      %v5950 = vld [vmem:[#allocation3 + $0x29] sm:$0xff]
      %v5951 = vld [vmem:[#allocation3 + $0x31] sm:$0xff]
      %v5952 = vld [vmem:[#allocation3 + $0x39] sm:$0xff]
      %v5953 = vld [vmem:[#allocation3 + $0x41] sm:$0xff]
      %v5954 = vld [vmem:[#allocation3 + $0x49] sm:$0xff]
      %v5955 = vld [vmem:[#allocation3 + $0x51] sm:$0xff]
      %v5956 = vld [vmem:[#allocation3 + $0x59] sm:$0xff]
      %v5957 = vld [vmem:[#allocation3 + $0x61] sm:$0xff]
      %v5958 = vld [vmem:[#allocation3 + $0x69] sm:$0xff]
      %v5959 = vld [vmem:[#allocation3 + $0x71] sm:$0xff]
      %v5960 = vld [vmem:[#allocation3 + $0x79] sm:$0xff]
      %v5961 = vld [vmem:[#allocation3 + $0x81] sm:$0xff]
      %v5962 = vld [vmem:[#allocation3 + $0x89] sm:$0xff]
      %v5963 = vld [vmem:[#allocation3 + $0x91] sm:$0xff]
      %v5964 = vld [vmem:[#allocation3 + $0x99] sm:$0xff]
      %v5965 = vld [vmem:[#allocation3 + $0xa1] sm:$0xff]
      %v5966 = vld [vmem:[#allocation3 + $0xa9] sm:$0xff]
      %v5967 = vld [vmem:[#allocation3 + $0xb1] sm:$0xff]
      %v5968 = vld [vmem:[#allocation3 + $0xb9] sm:$0xff]
      %v5969 = vld [vmem:[#allocation3 + $0xc1] sm:$0xff]
      %v5970 = vld [vmem:[#allocation3 + $0xc9] sm:$0xff]
      %v5971 = vld [vmem:[#allocation3 + $0xd1] sm:$0xff]
      %v5972 = vld [vmem:[#allocation3 + $0xd9] sm:$0xff]
      %v5973 = vld [vmem:[#allocation3 + $0xe1] sm:$0xff]
      %v5974 = vld [vmem:[#allocation3 + $0xe9] sm:$0xff]
      %v5975 = vld [vmem:[#allocation3 + $0xf1] sm:$0xff]
      %v5976 = vld [vmem:[#allocation3 + $0xf9] sm:$0xff]
      %v5977 = vld [vmem:[#allocation3 + $0x101] sm:$0xff]
      %v5978 = vld [vmem:[#allocation3 + $0x109] sm:$0xff]
      %v5979 = vld [vmem:[#allocation3 + $0x111] sm:$0xff]
      %v5980 = vld [vmem:[#allocation3 + $0x119] sm:$0xff]
      %v5981 = vld [vmem:[#allocation3 + $0x121] sm:$0xff]
      %v5982 = vsel %vm1401, %v5950, 0.0
      %v5983 = vsel %vm1402, %v5951, 0.0
      %v5984 = vsel %vm1403, %v5952, 0.0
      %v5985 = vsel %vm1404, %v5953, 0.0
      %v5986 = vsel %vm1405, %v5954, 0.0
      %v5987 = vsel %vm1406, %v5955, 0.0
      %v5988 = vsel %vm1407, %v5956, 0.0
      %v5989 = vsel %vm1408, %v5957, 0.0
      %v5990 = vsel %vm1409, %v5958, 0.0
      %v5991 = vsel %vm1410, %v5959, 0.0
      %v5992 = vsel %vm1411, %v5960, 0.0
      %v5993 = vsel %vm1412, %v5961, 0.0
      %v5994 = vsel %vm1413, %v5962, 0.0
      %v5995 = vsel %vm1414, %v5963, 0.0
      %v5996 = vsel %vm1415, %v5964, 0.0
      %v5997 = vsel %vm1416, %v5965, 0.0
      %v5998 = vsel %vm1417, %v5966, 0.0
      %v5999 = vsel %vm1418, %v5967, 0.0
      %v6000 = vsel %vm1419, %v5968, 0.0
      %v6001 = vsel %vm1420, %v5969, 0.0
      %v6002 = vsel %vm1421, %v5970, 0.0
      %v6003 = vsel %vm1422, %v5971, 0.0
      %v6004 = vsel %vm1423, %v5972, 0.0
      %v6005 = vsel %vm1424, %v5973, 0.0
      %v6006 = vsel %vm1425, %v5974, 0.0
      %v6007 = vsel %vm1426, %v5975, 0.0
      %v6008 = vsel %vm1427, %v5976, 0.0
      %v6009 = vsel %vm1428, %v5977, 0.0
      %v6010 = vsel %vm1429, %v5978, 0.0
      %v6011 = vsel %vm1430, %v5979, 0.0
      %v6012 = vsel %vm1431, %v5980, 0.0
      %v6013 = vsel %vm1432, %v5981, 0.0
      %v6014 = vpack.c.bf16 %v5983, %v5982
      %v6015 = vpack.c.bf16 %v5985, %v5984
      %v6016 = vpack.c.bf16 %v5987, %v5986
      %v6017 = vpack.c.bf16 %v5989, %v5988
      %v6018 = vpack.c.bf16 %v5991, %v5990
      %v6019 = vpack.c.bf16 %v5993, %v5992
      %v6020 = vpack.c.bf16 %v5995, %v5994
      %v6021 = vpack.c.bf16 %v5997, %v5996
      %v6022 = vpack.c.bf16 %v5999, %v5998
      %v6023 = vpack.c.bf16 %v6001, %v6000
      %v6024 = vpack.c.bf16 %v6003, %v6002
      %v6025 = vpack.c.bf16 %v6005, %v6004
      %v6026 = vpack.c.bf16 %v6007, %v6006
      %v6027 = vpack.c.bf16 %v6009, %v6008
      %v6028 = vpack.c.bf16 %v6011, %v6010
      %v6029 = vpack.c.bf16 %v6013, %v6012
      %v6046 = vunpack.c.l.b16 %v6014
      %v6047 = vunpack.c.h.b16 %v6014
      %v6048 = vunpack.c.l.b16 %v6015
      %v6049 = vunpack.c.h.b16 %v6015
      %v6050 = vunpack.c.l.b16 %v6016
      %v6051 = vunpack.c.h.b16 %v6016
      %v6052 = vunpack.c.l.b16 %v6017
      %v6053 = vunpack.c.h.b16 %v6017
      %v6054 = vunpack.c.l.b16 %v6018
      %v6055 = vunpack.c.h.b16 %v6018
      %v6056 = vunpack.c.l.b16 %v6019
      %v6057 = vunpack.c.h.b16 %v6019
      %v6058 = vunpack.c.l.b16 %v6020
      %v6059 = vunpack.c.h.b16 %v6020
      %v6060 = vunpack.c.l.b16 %v6021
      %v6061 = vunpack.c.h.b16 %v6021
      %v6062 = vunpack.c.l.b16 %v6022
      %v6063 = vunpack.c.h.b16 %v6022
      %v6064 = vunpack.c.l.b16 %v6023
      %v6065 = vunpack.c.h.b16 %v6023
      %v6066 = vunpack.c.l.b16 %v6024
      %v6067 = vunpack.c.h.b16 %v6024
      %v6068 = vunpack.c.l.b16 %v6025
      %v6069 = vunpack.c.h.b16 %v6025
      %v6070 = vunpack.c.l.b16 %v6026
      %v6071 = vunpack.c.h.b16 %v6026
      %v6072 = vunpack.c.l.b16 %v6027
      %v6073 = vunpack.c.h.b16 %v6027
      %v6074 = vunpack.c.l.b16 %v6028
      %v6075 = vunpack.c.h.b16 %v6028
      %v6076 = vunpack.c.l.b16 %v6029
      %v6077 = vunpack.c.h.b16 %v6029
      %v6078 = vpack.c.b16 %v6046, %v6046
      %v6079 = vpack.c.b16 %v6047, %v6047
      %v6080 = vpack.c.b16 %v6048, %v6048
      %v6081 = vpack.c.b16 %v6049, %v6049
      %v6082 = vpack.c.b16 %v6050, %v6050
      %v6083 = vpack.c.b16 %v6051, %v6051
      %v6084 = vpack.c.b16 %v6052, %v6052
      %v6085 = vpack.c.b16 %v6053, %v6053
      %v6086 = vpack.c.b16 %v6054, %v6054
      %v6087 = vpack.c.b16 %v6055, %v6055
      %v6088 = vpack.c.b16 %v6056, %v6056
      %v6089 = vpack.c.b16 %v6057, %v6057
      %v6090 = vpack.c.b16 %v6058, %v6058
      %v6091 = vpack.c.b16 %v6059, %v6059
      %v6092 = vpack.c.b16 %v6060, %v6060
      %v6093 = vpack.c.b16 %v6061, %v6061
      %v6094 = vpack.c.b16 %v6062, %v6062
      %v6095 = vpack.c.b16 %v6063, %v6063
      %v6096 = vpack.c.b16 %v6064, %v6064
      %v6097 = vpack.c.b16 %v6065, %v6065
      %v6098 = vpack.c.b16 %v6066, %v6066
      %v6099 = vpack.c.b16 %v6067, %v6067
      %v6100 = vpack.c.b16 %v6068, %v6068
      %v6101 = vpack.c.b16 %v6069, %v6069
      %v6102 = vpack.c.b16 %v6070, %v6070
      %v6103 = vpack.c.b16 %v6071, %v6071
      %v6104 = vpack.c.b16 %v6072, %v6072
      %v6105 = vpack.c.b16 %v6073, %v6073
      %v6106 = vpack.c.b16 %v6074, %v6074
      %v6107 = vpack.c.b16 %v6075, %v6075
      %v6108 = vpack.c.b16 %v6076, %v6076
      %v6109 = vpack.c.b16 %v6077, %v6077
      %6142 = vst.msk [vmem:[#allocation6 + $0x4] sm:$0xf] %vm3990, %v6078
      %6143 = vst.msk [vmem:[#allocation6 + $0xc] sm:$0xf] %vm3990, %v6079
      %6144 = vst.msk [vmem:[#allocation6 + $0x14] sm:$0xf] %vm3990, %v6080
      %6145 = vst.msk [vmem:[#allocation6 + $0x1c] sm:$0xf] %vm3990, %v6081
      %6146 = vst.msk [vmem:[#allocation6 + $0x24] sm:$0xf] %vm3990, %v6082
      %6147 = vst.msk [vmem:[#allocation6 + $0x2c] sm:$0xf] %vm3990, %v6083
      %6148 = vst.msk [vmem:[#allocation6 + $0x34] sm:$0xf] %vm3990, %v6084
      %6149 = vst.msk [vmem:[#allocation6 + $0x3c] sm:$0xf] %vm3990, %v6085
      %6150 = vst.msk [vmem:[#allocation6 + $0x44] sm:$0xf] %vm3990, %v6086
      %6151 = vst.msk [vmem:[#allocation6 + $0x4c] sm:$0xf] %vm3990, %v6087
      %6152 = vst.msk [vmem:[#allocation6 + $0x54] sm:$0xf] %vm3990, %v6088
      %6153 = vst.msk [vmem:[#allocation6 + $0x5c] sm:$0xf] %vm3990, %v6089
      %6154 = vst.msk [vmem:[#allocation6 + $0x64] sm:$0xf] %vm3990, %v6090
      %6155 = vst.msk [vmem:[#allocation6 + $0x6c] sm:$0xf] %vm3990, %v6091
      %6156 = vst.msk [vmem:[#allocation6 + $0x74] sm:$0xf] %vm3990, %v6092
      %6157 = vst.msk [vmem:[#allocation6 + $0x7c] sm:$0xf] %vm3990, %v6093
      %6158 = vst.msk [vmem:[#allocation6 + $0x84] sm:$0xf] %vm3990, %v6094
      %6159 = vst.msk [vmem:[#allocation6 + $0x8c] sm:$0xf] %vm3990, %v6095
      %6160 = vst.msk [vmem:[#allocation6 + $0x94] sm:$0xf] %vm3990, %v6096
      %6161 = vst.msk [vmem:[#allocation6 + $0x9c] sm:$0xf] %vm3990, %v6097
      %6162 = vst.msk [vmem:[#allocation6 + $0xa4] sm:$0xf] %vm3990, %v6098
      %6163 = vst.msk [vmem:[#allocation6 + $0xac] sm:$0xf] %vm3990, %v6099
      %6164 = vst.msk [vmem:[#allocation6 + $0xb4] sm:$0xf] %vm3990, %v6100
      %6165 = vst.msk [vmem:[#allocation6 + $0xbc] sm:$0xf] %vm3990, %v6101
      %6166 = vst.msk [vmem:[#allocation6 + $0xc4] sm:$0xf] %vm3990, %v6102
      %6167 = vst.msk [vmem:[#allocation6 + $0xcc] sm:$0xf] %vm3990, %v6103
      %6168 = vst.msk [vmem:[#allocation6 + $0xd4] sm:$0xf] %vm3990, %v6104
      %6169 = vst.msk [vmem:[#allocation6 + $0xdc] sm:$0xf] %vm3990, %v6105
      %6170 = vst.msk [vmem:[#allocation6 + $0xe4] sm:$0xf] %vm3990, %v6106
      %6171 = vst.msk [vmem:[#allocation6 + $0xec] sm:$0xf] %vm3990, %v6107
      %6172 = vst.msk [vmem:[#allocation6 + $0xf4] sm:$0xf] %vm3990, %v6108
      %6173 = vst.msk [vmem:[#allocation6 + $0xfc] sm:$0xf] %vm3990, %v6109
      %s6174 = scalar_lea.vmem %s1, 76
      %v6175 = vld [vmem:[%s6174] sm:$0xf]
      %v6176 = vld [vmem:[%s6174 + $0x4] sm:$0xf]
      %v6177 = vld [vmem:[%s6174 + $0x8] sm:$0xf]
      %v6178 = vld [vmem:[%s6174 + $0xc] sm:$0xf]
      %v6179 = vld [vmem:[%s6174 + $0x10] sm:$0xf]
      %v6180 = vld [vmem:[%s6174 + $0x14] sm:$0xf]
      %v6181 = vld [vmem:[%s6174 + $0x18] sm:$0xf]
      %v6182 = vld [vmem:[%s6174 + $0x1c] sm:$0xf]
      %v6183 = vld [vmem:[%s6174 + $0x20] sm:$0xf]
      %v6184 = vld [vmem:[%s6174 + $0x24] sm:$0xf]
      %v6185 = vld [vmem:[%s6174 + $0x28] sm:$0xf]
      %v6186 = vld [vmem:[%s6174 + $0x2c] sm:$0xf]
      %v6187 = vld [vmem:[%s6174 + $0x30] sm:$0xf]
      %v6188 = vld [vmem:[%s6174 + $0x34] sm:$0xf]
      %v6189 = vld [vmem:[%s6174 + $0x38] sm:$0xf]
      %v6190 = vld [vmem:[%s6174 + $0x3c] sm:$0xf]
      %v6191 = vld [vmem:[%s6174 + $0x40] sm:$0xf]
      %v6192 = vld [vmem:[%s6174 + $0x44] sm:$0xf]
      %v6193 = vld [vmem:[%s2 + $0x1] sm:$0x1]
      %v6194 = vld [vmem:[#allocation6] sm:$0xff]
      %v6195 = vld [vmem:[#allocation6 + $0x8] sm:$0xff]
      %v6196 = vld [vmem:[#allocation6 + $0x10] sm:$0xff]
      %v6197 = vld [vmem:[#allocation6 + $0x18] sm:$0xff]
      %v6198 = vld [vmem:[#allocation6 + $0x20] sm:$0xff]
      %v6199 = vld [vmem:[#allocation6 + $0x28] sm:$0xff]
      %v6200 = vld [vmem:[#allocation6 + $0x30] sm:$0xff]
      %v6201 = vld [vmem:[#allocation6 + $0x38] sm:$0xff]
      %v6202 = vld [vmem:[#allocation6 + $0x40] sm:$0xff]
      %v6203 = vld [vmem:[#allocation6 + $0x48] sm:$0xff]
      %v6204 = vld [vmem:[#allocation6 + $0x50] sm:$0xff]
      %v6205 = vld [vmem:[#allocation6 + $0x58] sm:$0xff]
      %v6206 = vld [vmem:[#allocation6 + $0x60] sm:$0xff]
      %v6207 = vld [vmem:[#allocation6 + $0x68] sm:$0xff]
      %v6208 = vld [vmem:[#allocation6 + $0x70] sm:$0xff]
      %v6209 = vld [vmem:[#allocation6 + $0x78] sm:$0xff]
      %v6210 = vld [vmem:[#allocation6 + $0x80] sm:$0xff]
      %v6211 = vld [vmem:[#allocation6 + $0x88] sm:$0xff]
      %v6212 = vld [vmem:[#allocation6 + $0x90] sm:$0xff]
      %v6213 = vld [vmem:[#allocation6 + $0x98] sm:$0xff]
      %v6214 = vld [vmem:[#allocation6 + $0xa0] sm:$0xff]
      %v6215 = vld [vmem:[#allocation6 + $0xa8] sm:$0xff]
      %v6216 = vld [vmem:[#allocation6 + $0xb0] sm:$0xff]
      %v6217 = vld [vmem:[#allocation6 + $0xb8] sm:$0xff]
      %v6218 = vld [vmem:[#allocation6 + $0xc0] sm:$0xff]
      %v6219 = vld [vmem:[#allocation6 + $0xc8] sm:$0xff]
      %v6220 = vld [vmem:[#allocation6 + $0xd0] sm:$0xff]
      %v6221 = vld [vmem:[#allocation6 + $0xd8] sm:$0xff]
      %v6222 = vld [vmem:[#allocation6 + $0xe0] sm:$0xff]
      %v6223 = vld [vmem:[#allocation6 + $0xe8] sm:$0xff]
      %v6224 = vld [vmem:[#allocation6 + $0xf0] sm:$0xff]
      %v6225 = vld [vmem:[#allocation6 + $0xf8] sm:$0xff]
      %v6226 = vlaneseq
      %v6227 = vshrl.u32 %v6226, 7
      %v6228 = vsub.s32 0, %v6227
      %v6229 = vrot.slane %v6193, %v6228
      %v6262 = vunpack.c.l.b16 %v6194
      %v6263 = vunpack.c.h.b16 %v6194
      %v6264 = vunpack.c.l.b16 %v6195
      %v6265 = vunpack.c.h.b16 %v6195
      %v6266 = vunpack.c.l.b16 %v6196
      %v6267 = vunpack.c.h.b16 %v6196
      %v6268 = vunpack.c.l.b16 %v6197
      %v6269 = vunpack.c.h.b16 %v6197
      %v6270 = vunpack.c.l.b16 %v6198
      %v6271 = vunpack.c.h.b16 %v6198
      %v6272 = vunpack.c.l.b16 %v6199
      %v6273 = vunpack.c.h.b16 %v6199
      %v6274 = vunpack.c.l.b16 %v6200
      %v6275 = vunpack.c.h.b16 %v6200
      %v6276 = vunpack.c.l.b16 %v6201
      %v6277 = vunpack.c.h.b16 %v6201
      %v6278 = vunpack.c.l.b16 %v6202
      %v6279 = vunpack.c.h.b16 %v6202
      %v6280 = vunpack.c.l.b16 %v6203
      %v6281 = vunpack.c.h.b16 %v6203
      %v6282 = vunpack.c.l.b16 %v6204
      %v6283 = vunpack.c.h.b16 %v6204
      %v6284 = vunpack.c.l.b16 %v6205
      %v6285 = vunpack.c.h.b16 %v6205
      %v6286 = vunpack.c.l.b16 %v6206
      %v6287 = vunpack.c.h.b16 %v6206
      %v6288 = vunpack.c.l.b16 %v6207
      %v6289 = vunpack.c.h.b16 %v6207
      %v6290 = vunpack.c.l.b16 %v6208
      %v6291 = vunpack.c.h.b16 %v6208
      %v6292 = vunpack.c.l.b16 %v6209
      %v6293 = vunpack.c.h.b16 %v6209
      %v6294 = vunpack.c.l.b16 %v6210
      %v6295 = vunpack.c.h.b16 %v6210
      %v6296 = vunpack.c.l.b16 %v6211
      %v6297 = vunpack.c.h.b16 %v6211
      %v6298 = vunpack.c.l.b16 %v6212
      %v6299 = vunpack.c.h.b16 %v6212
      %v6300 = vunpack.c.l.b16 %v6213
      %v6301 = vunpack.c.h.b16 %v6213
      %v6302 = vunpack.c.l.b16 %v6214
      %v6303 = vunpack.c.h.b16 %v6214
      %v6304 = vunpack.c.l.b16 %v6215
      %v6305 = vunpack.c.h.b16 %v6215
      %v6306 = vunpack.c.l.b16 %v6216
      %v6307 = vunpack.c.h.b16 %v6216
      %v6308 = vunpack.c.l.b16 %v6217
      %v6309 = vunpack.c.h.b16 %v6217
      %v6310 = vunpack.c.l.b16 %v6218
      %v6311 = vunpack.c.h.b16 %v6218
      %v6312 = vunpack.c.l.b16 %v6219
      %v6313 = vunpack.c.h.b16 %v6219
      %v6314 = vunpack.c.l.b16 %v6220
      %v6315 = vunpack.c.h.b16 %v6220
      %v6316 = vunpack.c.l.b16 %v6221
      %v6317 = vunpack.c.h.b16 %v6221
      %v6318 = vunpack.c.l.b16 %v6222
      %v6319 = vunpack.c.h.b16 %v6222
      %v6320 = vunpack.c.l.b16 %v6223
      %v6321 = vunpack.c.h.b16 %v6223
      %v6322 = vunpack.c.l.b16 %v6224
      %v6323 = vunpack.c.h.b16 %v6224
      %v6324 = vunpack.c.l.b16 %v6225
      %v6325 = vunpack.c.h.b16 %v6225
      %v6326 = vpack.c.b16 %v6264, %v6262
      %v6327 = vpack.c.b16 %v6265, %v6263
      %v6328 = vpack.c.b16 %v6268, %v6266
      %v6329 = vpack.c.b16 %v6269, %v6267
      %v6330 = vpack.c.b16 %v6272, %v6270
      %v6331 = vpack.c.b16 %v6273, %v6271
      %v6332 = vpack.c.b16 %v6276, %v6274
      %v6333 = vpack.c.b16 %v6277, %v6275
      %v6334 = vpack.c.b16 %v6280, %v6278
      %v6335 = vpack.c.b16 %v6281, %v6279
      %v6336 = vpack.c.b16 %v6284, %v6282
      %v6337 = vpack.c.b16 %v6285, %v6283
      %v6338 = vpack.c.b16 %v6288, %v6286
      %v6339 = vpack.c.b16 %v6289, %v6287
      %v6340 = vpack.c.b16 %v6292, %v6290
      %v6341 = vpack.c.b16 %v6293, %v6291
      %v6342 = vpack.c.b16 %v6296, %v6294
      %v6343 = vpack.c.b16 %v6297, %v6295
      %v6344 = vpack.c.b16 %v6300, %v6298
      %v6345 = vpack.c.b16 %v6301, %v6299
      %v6346 = vpack.c.b16 %v6304, %v6302
      %v6347 = vpack.c.b16 %v6305, %v6303
      %v6348 = vpack.c.b16 %v6308, %v6306
      %v6349 = vpack.c.b16 %v6309, %v6307
      %v6350 = vpack.c.b16 %v6312, %v6310
      %v6351 = vpack.c.b16 %v6313, %v6311
      %v6352 = vpack.c.b16 %v6316, %v6314
      %v6353 = vpack.c.b16 %v6317, %v6315
      %v6354 = vpack.c.b16 %v6320, %v6318
      %v6355 = vpack.c.b16 %v6321, %v6319
      %v6356 = vpack.c.b16 %v6324, %v6322
      %v6357 = vpack.c.b16 %v6325, %v6323
      %v6392 = vunpack.c.l.b16 %v6175
      %v6393 = vunpack.c.l.b16 %v6176
      %v6394 = vunpack.c.l.b16 %v6177
      %v6395 = vunpack.c.l.b16 %v6178
      %v6396 = vunpack.c.l.b16 %v6179
      %v6397 = vunpack.c.l.b16 %v6180
      %v6398 = vunpack.c.l.b16 %v6181
      %v6399 = vunpack.c.l.b16 %v6182
      %v6400 = vunpack.c.l.b16 %v6183
      %v6401 = vunpack.c.l.b16 %v6184
      %v6402 = vunpack.c.l.b16 %v6185
      %v6403 = vunpack.c.l.b16 %v6186
      %v6404 = vunpack.c.l.b16 %v6187
      %v6405 = vunpack.c.l.b16 %v6188
      %v6406 = vunpack.c.l.b16 %v6189
      %v6407 = vunpack.c.l.b16 %v6190
      %v6408 = vunpack.c.l.b16 %v6191
      %v6409 = vunpack.c.l.b16 %v6192
      %v6410 = vpack.c.b16 %v6393, %v6392
      %v6411 = vpack.c.b16 %v6395, %v6394
      %v6412 = vpack.c.b16 %v6397, %v6396
      %v6413 = vpack.c.b16 %v6399, %v6398
      %v6414 = vpack.c.b16 %v6401, %v6400
      %v6415 = vpack.c.b16 %v6403, %v6402
      %v6416 = vpack.c.b16 %v6405, %v6404
      %v6417 = vpack.c.b16 %v6407, %v6406
      %v6418 = vpack.c.b16 %v6409, %v6408
      %v6429 = vsel %vm3727, %v6327, 0
      %v6432 = vsel %vm3727, %v6329, 0
      %v6435 = vsel %vm3727, %v6331, 0
      %v6438 = vsel %vm3727, %v6333, 0
      %v6441 = vsel %vm3727, %v6335, 0
      %v6444 = vsel %vm3727, %v6337, 0
      %v6447 = vsel %vm3727, %v6339, 0
      %v6450 = vsel %vm3727, %v6341, 0
      %v6453 = vsel %vm3727, %v6343, 0
      %v6456 = vsel %vm3727, %v6345, 0
      %v6459 = vsel %vm3727, %v6347, 0
      %v6462 = vsel %vm3727, %v6349, 0
      %v6465 = vsel %vm3727, %v6351, 0
      %v6468 = vsel %vm3727, %v6353, 0
      %v6471 = vsel %vm3727, %v6355, 0
      %v6474 = vsel %vm3727, %v6357, 0
      %6476 = vmatprep.subr.bf16.mxu0 0
      %6477 = vmatpush1.bf16.msra.mxu0 %v6417
      %6478 = vmatprep.subr.bf16.mxu0 0
      %6479 = vmatpush1.bf16.msra.mxu0 %v6416
      %6480 = vmatprep.subr.bf16.mxu0 0
      %6481 = vmatpush1.bf16.msra.mxu0 %v6415
      %6482 = vmatprep.subr.bf16.mxu0 0
      %6483 = vmatpush1.bf16.msra.mxu0 %v6414
      %6484 = vmatprep.subr.bf16.mxu0 0
      %6485 = vmatpush1.bf16.msra.mxu0 %v6413
      %6486 = vmatprep.subr.bf16.mxu0 0
      %6487 = vmatpush1.bf16.msra.mxu0 %v6412
      %6488 = vmatprep.subr.bf16.mxu0 0
      %6489 = vmatpush1.bf16.msra.mxu0 %v6411
      %6490 = vmatprep.subr.bf16.mxu0 0
      %6491 = vmatpush1.bf16.msra.mxu0 %v6410
      %6492 = vmatprep.subr.bf16.mxu0 0
      %6493 = vmatpush2.bf16.msra.mxu0 0
      %6494 = vmatprep.subr.bf16.mxu0 0
      %6495 = vmatpush2.bf16.msra.mxu0 0
      %6496 = vmatprep.subr.bf16.mxu0 0
      %6497 = vmatpush2.bf16.msra.mxu0 0
      %6498 = vmatprep.subr.bf16.mxu0 0
      %6499 = vmatpush2.bf16.msra.mxu0 0
      %6500 = vmatprep.subr.bf16.mxu0 0
      %6501 = vmatpush2.bf16.msra.mxu0 0
      %6502 = vmatprep.subr.bf16.mxu0 0
      %6503 = vmatpush2.bf16.msra.mxu0 0
      %6504 = vmatprep.subr.bf16.mxu0 0
      %6505 = vmatpush2.bf16.msra.mxu0 0
      %6506 = vmatprep.subr.bf16.mxu0 0
      %6507 = vmatpush2.bf16.msra.mxu0 %v6418
      %6508 = vmatprep.mubr.bf16.mxu0 %v6429
      %6509 = vmatmul.mubr.bf16.gmra.mxu0 %v6326
      %v6510 = vpop.f32.mrf.mxu0
      %v6511 = vadd.f32 %v6229, %v6510
      %v6512 = vpop.f32.mrf.mxu0
      %v6513 = vpop.f32.mrf.mxu0
      %v6514 = vadd.f32 %v6229, %v6513
      %v6515 = vpop.f32.mrf.mxu0
      %6516 = vmatprep.mubr.bf16.mxu0 %v6432
      %6517 = vmatmul.mubr.bf16.gmra.mxu0 %v6328
      %v6518 = vpop.f32.mrf.mxu0
      %v6519 = vadd.f32 %v6229, %v6518
      %v6520 = vpop.f32.mrf.mxu0
      %v6521 = vpop.f32.mrf.mxu0
      %v6522 = vadd.f32 %v6229, %v6521
      %v6523 = vpop.f32.mrf.mxu0
      %6524 = vmatprep.mubr.bf16.mxu0 %v6435
      %6525 = vmatmul.mubr.bf16.gmra.mxu0 %v6330
      %v6526 = vpop.f32.mrf.mxu0
      %v6527 = vadd.f32 %v6229, %v6526
      %v6528 = vpop.f32.mrf.mxu0
      %v6529 = vpop.f32.mrf.mxu0
      %v6530 = vadd.f32 %v6229, %v6529
      %v6531 = vpop.f32.mrf.mxu0
      %6532 = vmatprep.mubr.bf16.mxu0 %v6438
      %6533 = vmatmul.mubr.bf16.gmra.mxu0 %v6332
      %v6534 = vpop.f32.mrf.mxu0
      %v6535 = vadd.f32 %v6229, %v6534
      %v6536 = vpop.f32.mrf.mxu0
      %v6537 = vpop.f32.mrf.mxu0
      %v6538 = vadd.f32 %v6229, %v6537
      %v6539 = vpop.f32.mrf.mxu0
      %6540 = vmatprep.mubr.bf16.mxu0 %v6441
      %6541 = vmatmul.mubr.bf16.gmra.mxu0 %v6334
      %v6542 = vpop.f32.mrf.mxu0
      %v6543 = vadd.f32 %v6229, %v6542
      %v6544 = vpop.f32.mrf.mxu0
      %v6545 = vpop.f32.mrf.mxu0
      %v6546 = vadd.f32 %v6229, %v6545
      %v6547 = vpop.f32.mrf.mxu0
      %6548 = vmatprep.mubr.bf16.mxu0 %v6444
      %6549 = vmatmul.mubr.bf16.gmra.mxu0 %v6336
      %v6550 = vpop.f32.mrf.mxu0
      %v6551 = vadd.f32 %v6229, %v6550
      %v6552 = vpop.f32.mrf.mxu0
      %v6553 = vpop.f32.mrf.mxu0
      %v6554 = vadd.f32 %v6229, %v6553
      %v6555 = vpop.f32.mrf.mxu0
      %6556 = vmatprep.mubr.bf16.mxu0 %v6447
      %6557 = vmatmul.mubr.bf16.gmra.mxu0 %v6338
      %v6558 = vpop.f32.mrf.mxu0
      %v6559 = vadd.f32 %v6229, %v6558
      %v6560 = vpop.f32.mrf.mxu0
      %v6561 = vpop.f32.mrf.mxu0
      %v6562 = vadd.f32 %v6229, %v6561
      %v6563 = vpop.f32.mrf.mxu0
      %6564 = vmatprep.mubr.bf16.mxu0 %v6450
      %6565 = vmatmul.mubr.bf16.gmra.mxu0 %v6340
      %v6566 = vpop.f32.mrf.mxu0
      %v6567 = vadd.f32 %v6229, %v6566
      %v6568 = vpop.f32.mrf.mxu0
      %v6569 = vpop.f32.mrf.mxu0
      %v6570 = vadd.f32 %v6229, %v6569
      %v6571 = vpop.f32.mrf.mxu0
      %6572 = vmatprep.mubr.bf16.mxu0 %v6453
      %6573 = vmatmul.mubr.bf16.gmra.mxu0 %v6342
      %v6574 = vpop.f32.mrf.mxu0
      %v6575 = vadd.f32 %v6229, %v6574
      %v6576 = vpop.f32.mrf.mxu0
      %v6577 = vpop.f32.mrf.mxu0
      %v6578 = vadd.f32 %v6229, %v6577
      %v6579 = vpop.f32.mrf.mxu0
      %6580 = vmatprep.mubr.bf16.mxu0 %v6456
      %6581 = vmatmul.mubr.bf16.gmra.mxu0 %v6344
      %v6582 = vpop.f32.mrf.mxu0
      %v6583 = vadd.f32 %v6229, %v6582
      %v6584 = vpop.f32.mrf.mxu0
      %v6585 = vpop.f32.mrf.mxu0
      %v6586 = vadd.f32 %v6229, %v6585
      %v6587 = vpop.f32.mrf.mxu0
      %6588 = vmatprep.mubr.bf16.mxu0 %v6459
      %6589 = vmatmul.mubr.bf16.gmra.mxu0 %v6346
      %v6590 = vpop.f32.mrf.mxu0
      %v6591 = vadd.f32 %v6229, %v6590
      %v6592 = vpop.f32.mrf.mxu0
      %v6593 = vpop.f32.mrf.mxu0
      %v6594 = vadd.f32 %v6229, %v6593
      %v6595 = vpop.f32.mrf.mxu0
      %6596 = vmatprep.mubr.bf16.mxu0 %v6462
      %6597 = vmatmul.mubr.bf16.gmra.mxu0 %v6348
      %v6598 = vpop.f32.mrf.mxu0
      %v6599 = vadd.f32 %v6229, %v6598
      %v6600 = vpop.f32.mrf.mxu0
      %v6601 = vpop.f32.mrf.mxu0
      %v6602 = vadd.f32 %v6229, %v6601
      %v6603 = vpop.f32.mrf.mxu0
      %6604 = vmatprep.mubr.bf16.mxu0 %v6465
      %6605 = vmatmul.mubr.bf16.gmra.mxu0 %v6350
      %v6606 = vpop.f32.mrf.mxu0
      %v6607 = vadd.f32 %v6229, %v6606
      %v6608 = vpop.f32.mrf.mxu0
      %v6609 = vpop.f32.mrf.mxu0
      %v6610 = vadd.f32 %v6229, %v6609
      %v6611 = vpop.f32.mrf.mxu0
      %6612 = vmatprep.mubr.bf16.mxu0 %v6468
      %6613 = vmatmul.mubr.bf16.gmra.mxu0 %v6352
      %v6614 = vpop.f32.mrf.mxu0
      %v6615 = vadd.f32 %v6229, %v6614
      %v6616 = vpop.f32.mrf.mxu0
      %v6617 = vpop.f32.mrf.mxu0
      %v6618 = vadd.f32 %v6229, %v6617
      %v6619 = vpop.f32.mrf.mxu0
      %6620 = vmatprep.mubr.bf16.mxu0 %v6471
      %6621 = vmatmul.mubr.bf16.gmra.mxu0 %v6354
      %v6622 = vpop.f32.mrf.mxu0
      %v6623 = vadd.f32 %v6229, %v6622
      %v6624 = vpop.f32.mrf.mxu0
      %v6625 = vpop.f32.mrf.mxu0
      %v6626 = vadd.f32 %v6229, %v6625
      %v6627 = vpop.f32.mrf.mxu0
      %6628 = vmatprep.mubr.bf16.mxu0 %v6474
      %6629 = vmatmul.mubr.bf16.gmra.mxu0 %v6356
      %v6630 = vpop.f32.mrf.mxu0
      %v6631 = vadd.f32 %v6229, %v6630
      %v6632 = vpop.f32.mrf.mxu0
      %v6633 = vpop.f32.mrf.mxu0
      %v6634 = vadd.f32 %v6229, %v6633
      %v6635 = vpop.f32.mrf.mxu0
      %6636 = vdwg.mxu0
      %6637 = vst.msk [vmem:[#allocation4] sm:$0xff] %vm3727, 0.0
      %6638 = vst.msk [vmem:[#allocation4 + $0x8] sm:$0xff] %vm3727, 0.0
      %6639 = vst.msk [vmem:[#allocation4 + $0x10] sm:$0xff] %vm3727, 0.0
      %6640 = vst.msk [vmem:[#allocation4 + $0x118] sm:$0xff] %vm3727, 0.0
      %6641 = vst.msk [vmem:[#allocation4 + $0x120] sm:$0xff] %vm3727, 0.0
      %6642 = vst.msk [vmem:[#allocation4 + $0x128] sm:$0xff] %vm3727, 0.0
      %v6643 = vmax.f32 %v6511, 0.0
      %v6644 = vmax.f32 %v6514, 0.0
      %v6645 = vmax.f32 %v6519, 0.0
      %v6646 = vmax.f32 %v6522, 0.0
      %v6647 = vmax.f32 %v6527, 0.0
      %v6648 = vmax.f32 %v6530, 0.0
      %v6649 = vmax.f32 %v6535, 0.0
      %v6650 = vmax.f32 %v6538, 0.0
      %v6651 = vmax.f32 %v6543, 0.0
      %v6652 = vmax.f32 %v6546, 0.0
      %v6653 = vmax.f32 %v6551, 0.0
      %v6654 = vmax.f32 %v6554, 0.0
      %v6655 = vmax.f32 %v6559, 0.0
      %v6656 = vmax.f32 %v6562, 0.0
      %v6657 = vmax.f32 %v6567, 0.0
      %v6658 = vmax.f32 %v6570, 0.0
      %v6659 = vmax.f32 %v6575, 0.0
      %v6660 = vmax.f32 %v6578, 0.0
      %v6661 = vmax.f32 %v6583, 0.0
      %v6662 = vmax.f32 %v6586, 0.0
      %v6663 = vmax.f32 %v6591, 0.0
      %v6664 = vmax.f32 %v6594, 0.0
      %v6665 = vmax.f32 %v6599, 0.0
      %v6666 = vmax.f32 %v6602, 0.0
      %v6667 = vmax.f32 %v6607, 0.0
      %v6668 = vmax.f32 %v6610, 0.0
      %v6669 = vmax.f32 %v6615, 0.0
      %v6670 = vmax.f32 %v6618, 0.0
      %v6671 = vmax.f32 %v6623, 0.0
      %v6672 = vmax.f32 %v6626, 0.0
      %v6673 = vmax.f32 %v6631, 0.0
      %v6674 = vmax.f32 %v6634, 0.0
      %6675 = vst.msk [vmem:[#allocation4 + $0x18] sm:$0xff] %vm3727, %v6643
      %6676 = vst.msk [vmem:[#allocation4 + $0x20] sm:$0xff] %vm3727, %v6644
      %6677 = vst.msk [vmem:[#allocation4 + $0x28] sm:$0xff] %vm3727, %v6645
      %6678 = vst.msk [vmem:[#allocation4 + $0x30] sm:$0xff] %vm3727, %v6646
      %6679 = vst.msk [vmem:[#allocation4 + $0x38] sm:$0xff] %vm3727, %v6647
      %6680 = vst.msk [vmem:[#allocation4 + $0x40] sm:$0xff] %vm3727, %v6648
      %6681 = vst.msk [vmem:[#allocation4 + $0x48] sm:$0xff] %vm3727, %v6649
      %6682 = vst.msk [vmem:[#allocation4 + $0x50] sm:$0xff] %vm3727, %v6650
      %6683 = vst.msk [vmem:[#allocation4 + $0x58] sm:$0xff] %vm3727, %v6651
      %6684 = vst.msk [vmem:[#allocation4 + $0x60] sm:$0xff] %vm3727, %v6652
      %6685 = vst.msk [vmem:[#allocation4 + $0x68] sm:$0xff] %vm3727, %v6653
      %6686 = vst.msk [vmem:[#allocation4 + $0x70] sm:$0xff] %vm3727, %v6654
      %6687 = vst.msk [vmem:[#allocation4 + $0x78] sm:$0xff] %vm3727, %v6655
      %6688 = vst.msk [vmem:[#allocation4 + $0x80] sm:$0xff] %vm3727, %v6656
      %6689 = vst.msk [vmem:[#allocation4 + $0x88] sm:$0xff] %vm3727, %v6657
      %6690 = vst.msk [vmem:[#allocation4 + $0x90] sm:$0xff] %vm3727, %v6658
      %6691 = vst.msk [vmem:[#allocation4 + $0x98] sm:$0xff] %vm3727, %v6659
      %6692 = vst.msk [vmem:[#allocation4 + $0xa0] sm:$0xff] %vm3727, %v6660
      %6693 = vst.msk [vmem:[#allocation4 + $0xa8] sm:$0xff] %vm3727, %v6661
      %6694 = vst.msk [vmem:[#allocation4 + $0xb0] sm:$0xff] %vm3727, %v6662
      %6695 = vst.msk [vmem:[#allocation4 + $0xb8] sm:$0xff] %vm3727, %v6663
      %6696 = vst.msk [vmem:[#allocation4 + $0xc0] sm:$0xff] %vm3727, %v6664
      %6697 = vst.msk [vmem:[#allocation4 + $0xc8] sm:$0xff] %vm3727, %v6665
      %6698 = vst.msk [vmem:[#allocation4 + $0xd0] sm:$0xff] %vm3727, %v6666
      %6699 = vst.msk [vmem:[#allocation4 + $0xd8] sm:$0xff] %vm3727, %v6667
      %6700 = vst.msk [vmem:[#allocation4 + $0xe0] sm:$0xff] %vm3727, %v6668
      %6701 = vst.msk [vmem:[#allocation4 + $0xe8] sm:$0xff] %vm3727, %v6669
      %6702 = vst.msk [vmem:[#allocation4 + $0xf0] sm:$0xff] %vm3727, %v6670
      %6703 = vst.msk [vmem:[#allocation4 + $0xf8] sm:$0xff] %vm3727, %v6671
      %6704 = vst.msk [vmem:[#allocation4 + $0x100] sm:$0xff] %vm3727, %v6672
      %6705 = vst.msk [vmem:[#allocation4 + $0x108] sm:$0xff] %vm3727, %v6673
      %6706 = vst.msk [vmem:[#allocation4 + $0x110] sm:$0xff] %vm3727, %v6674
      %v6707 = vld [vmem:[#allocation4 + $0x7] sm:$0xff]
      %v6708 = vld [vmem:[#allocation4 + $0xf] sm:$0xff]
      %v6709 = vld [vmem:[#allocation4 + $0x17] sm:$0xff]
      %v6710 = vld [vmem:[#allocation4 + $0x1f] sm:$0xff]
      %v6711 = vld [vmem:[#allocation4 + $0x27] sm:$0xff]
      %v6712 = vld [vmem:[#allocation4 + $0x2f] sm:$0xff]
      %v6713 = vld [vmem:[#allocation4 + $0x37] sm:$0xff]
      %v6714 = vld [vmem:[#allocation4 + $0x3f] sm:$0xff]
      %v6715 = vld [vmem:[#allocation4 + $0x47] sm:$0xff]
      %v6716 = vld [vmem:[#allocation4 + $0x4f] sm:$0xff]
      %v6717 = vld [vmem:[#allocation4 + $0x57] sm:$0xff]
      %v6718 = vld [vmem:[#allocation4 + $0x5f] sm:$0xff]
      %v6719 = vld [vmem:[#allocation4 + $0x67] sm:$0xff]
      %v6720 = vld [vmem:[#allocation4 + $0x6f] sm:$0xff]
      %v6721 = vld [vmem:[#allocation4 + $0x77] sm:$0xff]
      %v6722 = vld [vmem:[#allocation4 + $0x7f] sm:$0xff]
      %v6723 = vld [vmem:[#allocation4 + $0x87] sm:$0xff]
      %v6724 = vld [vmem:[#allocation4 + $0x8f] sm:$0xff]
      %v6725 = vld [vmem:[#allocation4 + $0x97] sm:$0xff]
      %v6726 = vld [vmem:[#allocation4 + $0x9f] sm:$0xff]
      %v6727 = vld [vmem:[#allocation4 + $0xa7] sm:$0xff]
      %v6728 = vld [vmem:[#allocation4 + $0xaf] sm:$0xff]
      %v6729 = vld [vmem:[#allocation4 + $0xb7] sm:$0xff]
      %v6730 = vld [vmem:[#allocation4 + $0xbf] sm:$0xff]
      %v6731 = vld [vmem:[#allocation4 + $0xc7] sm:$0xff]
      %v6732 = vld [vmem:[#allocation4 + $0xcf] sm:$0xff]
      %v6733 = vld [vmem:[#allocation4 + $0xd7] sm:$0xff]
      %v6734 = vld [vmem:[#allocation4 + $0xdf] sm:$0xff]
      %v6735 = vld [vmem:[#allocation4 + $0xe7] sm:$0xff]
      %v6736 = vld [vmem:[#allocation4 + $0xef] sm:$0xff]
      %v6737 = vld [vmem:[#allocation4 + $0xf7] sm:$0xff]
      %v6738 = vld [vmem:[#allocation4 + $0xff] sm:$0xff]
      %v6739 = vsel %vm855, %v6707, 0.0
      %v6740 = vsel %vm856, %v6708, 0.0
      %v6741 = vsel %vm857, %v6709, 0.0
      %v6742 = vsel %vm858, %v6710, 0.0
      %v6743 = vsel %vm859, %v6711, 0.0
      %v6744 = vsel %vm860, %v6712, 0.0
      %v6745 = vsel %vm861, %v6713, 0.0
      %v6746 = vsel %vm862, %v6714, 0.0
      %v6747 = vsel %vm863, %v6715, 0.0
      %v6748 = vsel %vm864, %v6716, 0.0
      %v6749 = vsel %vm865, %v6717, 0.0
      %v6750 = vsel %vm866, %v6718, 0.0
      %v6751 = vsel %vm867, %v6719, 0.0
      %v6752 = vsel %vm868, %v6720, 0.0
      %v6753 = vsel %vm869, %v6721, 0.0
      %v6754 = vsel %vm870, %v6722, 0.0
      %v6755 = vsel %vm871, %v6723, 0.0
      %v6756 = vsel %vm872, %v6724, 0.0
      %v6757 = vsel %vm873, %v6725, 0.0
      %v6758 = vsel %vm874, %v6726, 0.0
      %v6759 = vsel %vm875, %v6727, 0.0
      %v6760 = vsel %vm876, %v6728, 0.0
      %v6761 = vsel %vm877, %v6729, 0.0
      %v6762 = vsel %vm878, %v6730, 0.0
      %v6763 = vsel %vm879, %v6731, 0.0
      %v6764 = vsel %vm880, %v6732, 0.0
      %v6765 = vsel %vm881, %v6733, 0.0
      %v6766 = vsel %vm882, %v6734, 0.0
      %v6767 = vsel %vm883, %v6735, 0.0
      %v6768 = vsel %vm884, %v6736, 0.0
      %v6769 = vsel %vm885, %v6737, 0.0
      %v6770 = vsel %vm886, %v6738, 0.0
      %v6771 = vpack.c.bf16 %v6740, %v6739
      %v6772 = vpack.c.bf16 %v6742, %v6741
      %v6773 = vpack.c.bf16 %v6744, %v6743
      %v6774 = vpack.c.bf16 %v6746, %v6745
      %v6775 = vpack.c.bf16 %v6748, %v6747
      %v6776 = vpack.c.bf16 %v6750, %v6749
      %v6777 = vpack.c.bf16 %v6752, %v6751
      %v6778 = vpack.c.bf16 %v6754, %v6753
      %v6779 = vpack.c.bf16 %v6756, %v6755
      %v6780 = vpack.c.bf16 %v6758, %v6757
      %v6781 = vpack.c.bf16 %v6760, %v6759
      %v6782 = vpack.c.bf16 %v6762, %v6761
      %v6783 = vpack.c.bf16 %v6764, %v6763
      %v6784 = vpack.c.bf16 %v6766, %v6765
      %v6785 = vpack.c.bf16 %v6768, %v6767
      %v6786 = vpack.c.bf16 %v6770, %v6769
      %v6803 = vunpack.c.l.b16 %v6771
      %v6804 = vunpack.c.h.b16 %v6771
      %v6805 = vunpack.c.l.b16 %v6772
      %v6806 = vunpack.c.h.b16 %v6772
      %v6807 = vunpack.c.l.b16 %v6773
      %v6808 = vunpack.c.h.b16 %v6773
      %v6809 = vunpack.c.l.b16 %v6774
      %v6810 = vunpack.c.h.b16 %v6774
      %v6811 = vunpack.c.l.b16 %v6775
      %v6812 = vunpack.c.h.b16 %v6775
      %v6813 = vunpack.c.l.b16 %v6776
      %v6814 = vunpack.c.h.b16 %v6776
      %v6815 = vunpack.c.l.b16 %v6777
      %v6816 = vunpack.c.h.b16 %v6777
      %v6817 = vunpack.c.l.b16 %v6778
      %v6818 = vunpack.c.h.b16 %v6778
      %v6819 = vunpack.c.l.b16 %v6779
      %v6820 = vunpack.c.h.b16 %v6779
      %v6821 = vunpack.c.l.b16 %v6780
      %v6822 = vunpack.c.h.b16 %v6780
      %v6823 = vunpack.c.l.b16 %v6781
      %v6824 = vunpack.c.h.b16 %v6781
      %v6825 = vunpack.c.l.b16 %v6782
      %v6826 = vunpack.c.h.b16 %v6782
      %v6827 = vunpack.c.l.b16 %v6783
      %v6828 = vunpack.c.h.b16 %v6783
      %v6829 = vunpack.c.l.b16 %v6784
      %v6830 = vunpack.c.h.b16 %v6784
      %v6831 = vunpack.c.l.b16 %v6785
      %v6832 = vunpack.c.h.b16 %v6785
      %v6833 = vunpack.c.l.b16 %v6786
      %v6834 = vunpack.c.h.b16 %v6786
      %v6835 = vpack.c.b16 %v6803, %v6803
      %v6836 = vpack.c.b16 %v6804, %v6804
      %v6837 = vpack.c.b16 %v6805, %v6805
      %v6838 = vpack.c.b16 %v6806, %v6806
      %v6839 = vpack.c.b16 %v6807, %v6807
      %v6840 = vpack.c.b16 %v6808, %v6808
      %v6841 = vpack.c.b16 %v6809, %v6809
      %v6842 = vpack.c.b16 %v6810, %v6810
      %v6843 = vpack.c.b16 %v6811, %v6811
      %v6844 = vpack.c.b16 %v6812, %v6812
      %v6845 = vpack.c.b16 %v6813, %v6813
      %v6846 = vpack.c.b16 %v6814, %v6814
      %v6847 = vpack.c.b16 %v6815, %v6815
      %v6848 = vpack.c.b16 %v6816, %v6816
      %v6849 = vpack.c.b16 %v6817, %v6817
      %v6850 = vpack.c.b16 %v6818, %v6818
      %v6851 = vpack.c.b16 %v6819, %v6819
      %v6852 = vpack.c.b16 %v6820, %v6820
      %v6853 = vpack.c.b16 %v6821, %v6821
      %v6854 = vpack.c.b16 %v6822, %v6822
      %v6855 = vpack.c.b16 %v6823, %v6823
      %v6856 = vpack.c.b16 %v6824, %v6824
      %v6857 = vpack.c.b16 %v6825, %v6825
      %v6858 = vpack.c.b16 %v6826, %v6826
      %v6859 = vpack.c.b16 %v6827, %v6827
      %v6860 = vpack.c.b16 %v6828, %v6828
      %v6861 = vpack.c.b16 %v6829, %v6829
      %v6862 = vpack.c.b16 %v6830, %v6830
      %v6863 = vpack.c.b16 %v6831, %v6831
      %v6864 = vpack.c.b16 %v6832, %v6832
      %v6865 = vpack.c.b16 %v6833, %v6833
      %v6866 = vpack.c.b16 %v6834, %v6834
      %6899 = vst.msk [vmem:[#allocation7] sm:$0xf] %vm3990, %v6835
      %6900 = vst.msk [vmem:[#allocation7 + $0x8] sm:$0xf] %vm3990, %v6836
      %6901 = vst.msk [vmem:[#allocation7 + $0x10] sm:$0xf] %vm3990, %v6837
      %6902 = vst.msk [vmem:[#allocation7 + $0x18] sm:$0xf] %vm3990, %v6838
      %6903 = vst.msk [vmem:[#allocation7 + $0x20] sm:$0xf] %vm3990, %v6839
      %6904 = vst.msk [vmem:[#allocation7 + $0x28] sm:$0xf] %vm3990, %v6840
      %6905 = vst.msk [vmem:[#allocation7 + $0x30] sm:$0xf] %vm3990, %v6841
      %6906 = vst.msk [vmem:[#allocation7 + $0x38] sm:$0xf] %vm3990, %v6842
      %6907 = vst.msk [vmem:[#allocation7 + $0x40] sm:$0xf] %vm3990, %v6843
      %6908 = vst.msk [vmem:[#allocation7 + $0x48] sm:$0xf] %vm3990, %v6844
      %6909 = vst.msk [vmem:[#allocation7 + $0x50] sm:$0xf] %vm3990, %v6845
      %6910 = vst.msk [vmem:[#allocation7 + $0x58] sm:$0xf] %vm3990, %v6846
      %6911 = vst.msk [vmem:[#allocation7 + $0x60] sm:$0xf] %vm3990, %v6847
      %6912 = vst.msk [vmem:[#allocation7 + $0x68] sm:$0xf] %vm3990, %v6848
      %6913 = vst.msk [vmem:[#allocation7 + $0x70] sm:$0xf] %vm3990, %v6849
      %6914 = vst.msk [vmem:[#allocation7 + $0x78] sm:$0xf] %vm3990, %v6850
      %6915 = vst.msk [vmem:[#allocation7 + $0x80] sm:$0xf] %vm3990, %v6851
      %6916 = vst.msk [vmem:[#allocation7 + $0x88] sm:$0xf] %vm3990, %v6852
      %6917 = vst.msk [vmem:[#allocation7 + $0x90] sm:$0xf] %vm3990, %v6853
      %6918 = vst.msk [vmem:[#allocation7 + $0x98] sm:$0xf] %vm3990, %v6854
      %6919 = vst.msk [vmem:[#allocation7 + $0xa0] sm:$0xf] %vm3990, %v6855
      %6920 = vst.msk [vmem:[#allocation7 + $0xa8] sm:$0xf] %vm3990, %v6856
      %6921 = vst.msk [vmem:[#allocation7 + $0xb0] sm:$0xf] %vm3990, %v6857
      %6922 = vst.msk [vmem:[#allocation7 + $0xb8] sm:$0xf] %vm3990, %v6858
      %6923 = vst.msk [vmem:[#allocation7 + $0xc0] sm:$0xf] %vm3990, %v6859
      %6924 = vst.msk [vmem:[#allocation7 + $0xc8] sm:$0xf] %vm3990, %v6860
      %6925 = vst.msk [vmem:[#allocation7 + $0xd0] sm:$0xf] %vm3990, %v6861
      %6926 = vst.msk [vmem:[#allocation7 + $0xd8] sm:$0xf] %vm3990, %v6862
      %6927 = vst.msk [vmem:[#allocation7 + $0xe0] sm:$0xf] %vm3990, %v6863
      %6928 = vst.msk [vmem:[#allocation7 + $0xe8] sm:$0xf] %vm3990, %v6864
      %6929 = vst.msk [vmem:[#allocation7 + $0xf0] sm:$0xf] %vm3990, %v6865
      %6930 = vst.msk [vmem:[#allocation7 + $0xf8] sm:$0xf] %vm3990, %v6866
      %v6931 = vld [vmem:[#allocation4 + $0x8] sm:$0xff]
      %v6932 = vld [vmem:[#allocation4 + $0x10] sm:$0xff]
      %v6933 = vld [vmem:[#allocation4 + $0x18] sm:$0xff]
      %v6934 = vld [vmem:[#allocation4 + $0x20] sm:$0xff]
      %v6935 = vld [vmem:[#allocation4 + $0x28] sm:$0xff]
      %v6936 = vld [vmem:[#allocation4 + $0x30] sm:$0xff]
      %v6937 = vld [vmem:[#allocation4 + $0x38] sm:$0xff]
      %v6938 = vld [vmem:[#allocation4 + $0x40] sm:$0xff]
      %v6939 = vld [vmem:[#allocation4 + $0x48] sm:$0xff]
      %v6940 = vld [vmem:[#allocation4 + $0x50] sm:$0xff]
      %v6941 = vld [vmem:[#allocation4 + $0x58] sm:$0xff]
      %v6942 = vld [vmem:[#allocation4 + $0x60] sm:$0xff]
      %v6943 = vld [vmem:[#allocation4 + $0x68] sm:$0xff]
      %v6944 = vld [vmem:[#allocation4 + $0x70] sm:$0xff]
      %v6945 = vld [vmem:[#allocation4 + $0x78] sm:$0xff]
      %v6946 = vld [vmem:[#allocation4 + $0x80] sm:$0xff]
      %v6947 = vld [vmem:[#allocation4 + $0x88] sm:$0xff]
      %v6948 = vld [vmem:[#allocation4 + $0x90] sm:$0xff]
      %v6949 = vld [vmem:[#allocation4 + $0x98] sm:$0xff]
      %v6950 = vld [vmem:[#allocation4 + $0xa0] sm:$0xff]
      %v6951 = vld [vmem:[#allocation4 + $0xa8] sm:$0xff]
      %v6952 = vld [vmem:[#allocation4 + $0xb0] sm:$0xff]
      %v6953 = vld [vmem:[#allocation4 + $0xb8] sm:$0xff]
      %v6954 = vld [vmem:[#allocation4 + $0xc0] sm:$0xff]
      %v6955 = vld [vmem:[#allocation4 + $0xc8] sm:$0xff]
      %v6956 = vld [vmem:[#allocation4 + $0xd0] sm:$0xff]
      %v6957 = vld [vmem:[#allocation4 + $0xd8] sm:$0xff]
      %v6958 = vld [vmem:[#allocation4 + $0xe0] sm:$0xff]
      %v6959 = vld [vmem:[#allocation4 + $0xe8] sm:$0xff]
      %v6960 = vld [vmem:[#allocation4 + $0xf0] sm:$0xff]
      %v6961 = vld [vmem:[#allocation4 + $0xf8] sm:$0xff]
      %v6962 = vld [vmem:[#allocation4 + $0x100] sm:$0xff]
      %v6963 = vpack.c.bf16 %v6932, %v6931
      %v6964 = vpack.c.bf16 %v6934, %v6933
      %v6965 = vpack.c.bf16 %v6936, %v6935
      %v6966 = vpack.c.bf16 %v6938, %v6937
      %v6967 = vpack.c.bf16 %v6940, %v6939
      %v6968 = vpack.c.bf16 %v6942, %v6941
      %v6969 = vpack.c.bf16 %v6944, %v6943
      %v6970 = vpack.c.bf16 %v6946, %v6945
      %v6971 = vpack.c.bf16 %v6948, %v6947
      %v6972 = vpack.c.bf16 %v6950, %v6949
      %v6973 = vpack.c.bf16 %v6952, %v6951
      %v6974 = vpack.c.bf16 %v6954, %v6953
      %v6975 = vpack.c.bf16 %v6956, %v6955
      %v6976 = vpack.c.bf16 %v6958, %v6957
      %v6977 = vpack.c.bf16 %v6960, %v6959
      %v6978 = vpack.c.bf16 %v6962, %v6961
      %v6995 = vunpack.c.l.b16 %v6963
      %v6996 = vunpack.c.h.b16 %v6963
      %v6997 = vunpack.c.l.b16 %v6964
      %v6998 = vunpack.c.h.b16 %v6964
      %v6999 = vunpack.c.l.b16 %v6965
      %v7000 = vunpack.c.h.b16 %v6965
      %v7001 = vunpack.c.l.b16 %v6966
      %v7002 = vunpack.c.h.b16 %v6966
      %v7003 = vunpack.c.l.b16 %v6967
      %v7004 = vunpack.c.h.b16 %v6967
      %v7005 = vunpack.c.l.b16 %v6968
      %v7006 = vunpack.c.h.b16 %v6968
      %v7007 = vunpack.c.l.b16 %v6969
      %v7008 = vunpack.c.h.b16 %v6969
      %v7009 = vunpack.c.l.b16 %v6970
      %v7010 = vunpack.c.h.b16 %v6970
      %v7011 = vunpack.c.l.b16 %v6971
      %v7012 = vunpack.c.h.b16 %v6971
      %v7013 = vunpack.c.l.b16 %v6972
      %v7014 = vunpack.c.h.b16 %v6972
      %v7015 = vunpack.c.l.b16 %v6973
      %v7016 = vunpack.c.h.b16 %v6973
      %v7017 = vunpack.c.l.b16 %v6974
      %v7018 = vunpack.c.h.b16 %v6974
      %v7019 = vunpack.c.l.b16 %v6975
      %v7020 = vunpack.c.h.b16 %v6975
      %v7021 = vunpack.c.l.b16 %v6976
      %v7022 = vunpack.c.h.b16 %v6976
      %v7023 = vunpack.c.l.b16 %v6977
      %v7024 = vunpack.c.h.b16 %v6977
      %v7025 = vunpack.c.l.b16 %v6978
      %v7026 = vunpack.c.h.b16 %v6978
      %v7027 = vpack.c.b16 %v6995, %v6995
      %v7028 = vpack.c.b16 %v6996, %v6996
      %v7029 = vpack.c.b16 %v6997, %v6997
      %v7030 = vpack.c.b16 %v6998, %v6998
      %v7031 = vpack.c.b16 %v6999, %v6999
      %v7032 = vpack.c.b16 %v7000, %v7000
      %v7033 = vpack.c.b16 %v7001, %v7001
      %v7034 = vpack.c.b16 %v7002, %v7002
      %v7035 = vpack.c.b16 %v7003, %v7003
      %v7036 = vpack.c.b16 %v7004, %v7004
      %v7037 = vpack.c.b16 %v7005, %v7005
      %v7038 = vpack.c.b16 %v7006, %v7006
      %v7039 = vpack.c.b16 %v7007, %v7007
      %v7040 = vpack.c.b16 %v7008, %v7008
      %v7041 = vpack.c.b16 %v7009, %v7009
      %v7042 = vpack.c.b16 %v7010, %v7010
      %v7043 = vpack.c.b16 %v7011, %v7011
      %v7044 = vpack.c.b16 %v7012, %v7012
      %v7045 = vpack.c.b16 %v7013, %v7013
      %v7046 = vpack.c.b16 %v7014, %v7014
      %v7047 = vpack.c.b16 %v7015, %v7015
      %v7048 = vpack.c.b16 %v7016, %v7016
      %v7049 = vpack.c.b16 %v7017, %v7017
      %v7050 = vpack.c.b16 %v7018, %v7018
      %v7051 = vpack.c.b16 %v7019, %v7019
      %v7052 = vpack.c.b16 %v7020, %v7020
      %v7053 = vpack.c.b16 %v7021, %v7021
      %v7054 = vpack.c.b16 %v7022, %v7022
      %v7055 = vpack.c.b16 %v7023, %v7023
      %v7056 = vpack.c.b16 %v7024, %v7024
      %v7057 = vpack.c.b16 %v7025, %v7025
      %v7058 = vpack.c.b16 %v7026, %v7026
      %7059 = vrot.lane.b32.xlu0 %v7027, 16
      %v7060 = vpop.permute.xlu0 %7059
      %7061 = vrot.lane.b32.xlu0 %v7028, 16
      %v7062 = vpop.permute.xlu0 %7061
      %7063 = vrot.lane.b32.xlu0 %v7029, 16
      %v7064 = vpop.permute.xlu0 %7063
      %7065 = vrot.lane.b32.xlu0 %v7030, 16
      %v7066 = vpop.permute.xlu0 %7065
      %7067 = vrot.lane.b32.xlu0 %v7031, 16
      %v7068 = vpop.permute.xlu0 %7067
      %7069 = vrot.lane.b32.xlu0 %v7032, 16
      %v7070 = vpop.permute.xlu0 %7069
      %7071 = vrot.lane.b32.xlu0 %v7033, 16
      %v7072 = vpop.permute.xlu0 %7071
      %7073 = vrot.lane.b32.xlu0 %v7034, 16
      %v7074 = vpop.permute.xlu0 %7073
      %7075 = vrot.lane.b32.xlu0 %v7035, 16
      %v7076 = vpop.permute.xlu0 %7075
      %7077 = vrot.lane.b32.xlu0 %v7036, 16
      %v7078 = vpop.permute.xlu0 %7077
      %7079 = vrot.lane.b32.xlu0 %v7037, 16
      %v7080 = vpop.permute.xlu0 %7079
      %7081 = vrot.lane.b32.xlu0 %v7038, 16
      %v7082 = vpop.permute.xlu0 %7081
      %7083 = vrot.lane.b32.xlu0 %v7039, 16
      %v7084 = vpop.permute.xlu0 %7083
      %7085 = vrot.lane.b32.xlu0 %v7040, 16
      %v7086 = vpop.permute.xlu0 %7085
      %7087 = vrot.lane.b32.xlu0 %v7041, 16
      %v7088 = vpop.permute.xlu0 %7087
      %7089 = vrot.lane.b32.xlu0 %v7042, 16
      %v7090 = vpop.permute.xlu0 %7089
      %7091 = vrot.lane.b32.xlu0 %v7043, 16
      %v7092 = vpop.permute.xlu0 %7091
      %7093 = vrot.lane.b32.xlu0 %v7044, 16
      %v7094 = vpop.permute.xlu0 %7093
      %7095 = vrot.lane.b32.xlu0 %v7045, 16
      %v7096 = vpop.permute.xlu0 %7095
      %7097 = vrot.lane.b32.xlu0 %v7046, 16
      %v7098 = vpop.permute.xlu0 %7097
      %7099 = vrot.lane.b32.xlu0 %v7047, 16
      %v7100 = vpop.permute.xlu0 %7099
      %7101 = vrot.lane.b32.xlu0 %v7048, 16
      %v7102 = vpop.permute.xlu0 %7101
      %7103 = vrot.lane.b32.xlu0 %v7049, 16
      %v7104 = vpop.permute.xlu0 %7103
      %7105 = vrot.lane.b32.xlu0 %v7050, 16
      %v7106 = vpop.permute.xlu0 %7105
      %7107 = vrot.lane.b32.xlu0 %v7051, 16
      %v7108 = vpop.permute.xlu0 %7107
      %7109 = vrot.lane.b32.xlu0 %v7052, 16
      %v7110 = vpop.permute.xlu0 %7109
      %7111 = vrot.lane.b32.xlu0 %v7053, 16
      %v7112 = vpop.permute.xlu0 %7111
      %7113 = vrot.lane.b32.xlu0 %v7054, 16
      %v7114 = vpop.permute.xlu0 %7113
      %7115 = vrot.lane.b32.xlu0 %v7055, 16
      %v7116 = vpop.permute.xlu0 %7115
      %7117 = vrot.lane.b32.xlu0 %v7056, 16
      %v7118 = vpop.permute.xlu0 %7117
      %7119 = vrot.lane.b32.xlu0 %v7057, 16
      %v7120 = vpop.permute.xlu0 %7119
      %7121 = vrot.lane.b32.xlu0 %v7058, 16
      %v7122 = vpop.permute.xlu0 %7121
      %7155 = vst.msk [vmem:[#allocation7] sm:$0xf] %vm4247, %v7060
      %7156 = vst.msk [vmem:[#allocation7 + $0x8] sm:$0xf] %vm4247, %v7062
      %7157 = vst.msk [vmem:[#allocation7 + $0x10] sm:$0xf] %vm4247, %v7064
      %7158 = vst.msk [vmem:[#allocation7 + $0x18] sm:$0xf] %vm4247, %v7066
      %7159 = vst.msk [vmem:[#allocation7 + $0x20] sm:$0xf] %vm4247, %v7068
      %7160 = vst.msk [vmem:[#allocation7 + $0x28] sm:$0xf] %vm4247, %v7070
      %7161 = vst.msk [vmem:[#allocation7 + $0x30] sm:$0xf] %vm4247, %v7072
      %7162 = vst.msk [vmem:[#allocation7 + $0x38] sm:$0xf] %vm4247, %v7074
      %7163 = vst.msk [vmem:[#allocation7 + $0x40] sm:$0xf] %vm4247, %v7076
      %7164 = vst.msk [vmem:[#allocation7 + $0x48] sm:$0xf] %vm4247, %v7078
      %7165 = vst.msk [vmem:[#allocation7 + $0x50] sm:$0xf] %vm4247, %v7080
      %7166 = vst.msk [vmem:[#allocation7 + $0x58] sm:$0xf] %vm4247, %v7082
      %7167 = vst.msk [vmem:[#allocation7 + $0x60] sm:$0xf] %vm4247, %v7084
      %7168 = vst.msk [vmem:[#allocation7 + $0x68] sm:$0xf] %vm4247, %v7086
      %7169 = vst.msk [vmem:[#allocation7 + $0x70] sm:$0xf] %vm4247, %v7088
      %7170 = vst.msk [vmem:[#allocation7 + $0x78] sm:$0xf] %vm4247, %v7090
      %7171 = vst.msk [vmem:[#allocation7 + $0x80] sm:$0xf] %vm4247, %v7092
      %7172 = vst.msk [vmem:[#allocation7 + $0x88] sm:$0xf] %vm4247, %v7094
      %7173 = vst.msk [vmem:[#allocation7 + $0x90] sm:$0xf] %vm4247, %v7096
      %7174 = vst.msk [vmem:[#allocation7 + $0x98] sm:$0xf] %vm4247, %v7098
      %7175 = vst.msk [vmem:[#allocation7 + $0xa0] sm:$0xf] %vm4247, %v7100
      %7176 = vst.msk [vmem:[#allocation7 + $0xa8] sm:$0xf] %vm4247, %v7102
      %7177 = vst.msk [vmem:[#allocation7 + $0xb0] sm:$0xf] %vm4247, %v7104
      %7178 = vst.msk [vmem:[#allocation7 + $0xb8] sm:$0xf] %vm4247, %v7106
      %7179 = vst.msk [vmem:[#allocation7 + $0xc0] sm:$0xf] %vm4247, %v7108
      %7180 = vst.msk [vmem:[#allocation7 + $0xc8] sm:$0xf] %vm4247, %v7110
      %7181 = vst.msk [vmem:[#allocation7 + $0xd0] sm:$0xf] %vm4247, %v7112
      %7182 = vst.msk [vmem:[#allocation7 + $0xd8] sm:$0xf] %vm4247, %v7114
      %7183 = vst.msk [vmem:[#allocation7 + $0xe0] sm:$0xf] %vm4247, %v7116
      %7184 = vst.msk [vmem:[#allocation7 + $0xe8] sm:$0xf] %vm4247, %v7118
      %7185 = vst.msk [vmem:[#allocation7 + $0xf0] sm:$0xf] %vm4247, %v7120
      %7186 = vst.msk [vmem:[#allocation7 + $0xf8] sm:$0xf] %vm4247, %v7122
      %v7187 = vld [vmem:[#allocation4 + $0x9] sm:$0xff]
      %v7188 = vld [vmem:[#allocation4 + $0x11] sm:$0xff]
      %v7189 = vld [vmem:[#allocation4 + $0x19] sm:$0xff]
      %v7190 = vld [vmem:[#allocation4 + $0x21] sm:$0xff]
      %v7191 = vld [vmem:[#allocation4 + $0x29] sm:$0xff]
      %v7192 = vld [vmem:[#allocation4 + $0x31] sm:$0xff]
      %v7193 = vld [vmem:[#allocation4 + $0x39] sm:$0xff]
      %v7194 = vld [vmem:[#allocation4 + $0x41] sm:$0xff]
      %v7195 = vld [vmem:[#allocation4 + $0x49] sm:$0xff]
      %v7196 = vld [vmem:[#allocation4 + $0x51] sm:$0xff]
      %v7197 = vld [vmem:[#allocation4 + $0x59] sm:$0xff]
      %v7198 = vld [vmem:[#allocation4 + $0x61] sm:$0xff]
      %v7199 = vld [vmem:[#allocation4 + $0x69] sm:$0xff]
      %v7200 = vld [vmem:[#allocation4 + $0x71] sm:$0xff]
      %v7201 = vld [vmem:[#allocation4 + $0x79] sm:$0xff]
      %v7202 = vld [vmem:[#allocation4 + $0x81] sm:$0xff]
      %v7203 = vld [vmem:[#allocation4 + $0x89] sm:$0xff]
      %v7204 = vld [vmem:[#allocation4 + $0x91] sm:$0xff]
      %v7205 = vld [vmem:[#allocation4 + $0x99] sm:$0xff]
      %v7206 = vld [vmem:[#allocation4 + $0xa1] sm:$0xff]
      %v7207 = vld [vmem:[#allocation4 + $0xa9] sm:$0xff]
      %v7208 = vld [vmem:[#allocation4 + $0xb1] sm:$0xff]
      %v7209 = vld [vmem:[#allocation4 + $0xb9] sm:$0xff]
      %v7210 = vld [vmem:[#allocation4 + $0xc1] sm:$0xff]
      %v7211 = vld [vmem:[#allocation4 + $0xc9] sm:$0xff]
      %v7212 = vld [vmem:[#allocation4 + $0xd1] sm:$0xff]
      %v7213 = vld [vmem:[#allocation4 + $0xd9] sm:$0xff]
      %v7214 = vld [vmem:[#allocation4 + $0xe1] sm:$0xff]
      %v7215 = vld [vmem:[#allocation4 + $0xe9] sm:$0xff]
      %v7216 = vld [vmem:[#allocation4 + $0xf1] sm:$0xff]
      %v7217 = vld [vmem:[#allocation4 + $0xf9] sm:$0xff]
      %v7218 = vld [vmem:[#allocation4 + $0x101] sm:$0xff]
      %v7219 = vsel %vm1401, %v7187, 0.0
      %v7220 = vsel %vm1402, %v7188, 0.0
      %v7221 = vsel %vm1403, %v7189, 0.0
      %v7222 = vsel %vm1404, %v7190, 0.0
      %v7223 = vsel %vm1405, %v7191, 0.0
      %v7224 = vsel %vm1406, %v7192, 0.0
      %v7225 = vsel %vm1407, %v7193, 0.0
      %v7226 = vsel %vm1408, %v7194, 0.0
      %v7227 = vsel %vm1409, %v7195, 0.0
      %v7228 = vsel %vm1410, %v7196, 0.0
      %v7229 = vsel %vm1411, %v7197, 0.0
      %v7230 = vsel %vm1412, %v7198, 0.0
      %v7231 = vsel %vm1413, %v7199, 0.0
      %v7232 = vsel %vm1414, %v7200, 0.0
      %v7233 = vsel %vm1415, %v7201, 0.0
      %v7234 = vsel %vm1416, %v7202, 0.0
      %v7235 = vsel %vm1417, %v7203, 0.0
      %v7236 = vsel %vm1418, %v7204, 0.0
      %v7237 = vsel %vm1419, %v7205, 0.0
      %v7238 = vsel %vm1420, %v7206, 0.0
      %v7239 = vsel %vm1421, %v7207, 0.0
      %v7240 = vsel %vm1422, %v7208, 0.0
      %v7241 = vsel %vm1423, %v7209, 0.0
      %v7242 = vsel %vm1424, %v7210, 0.0
      %v7243 = vsel %vm1425, %v7211, 0.0
      %v7244 = vsel %vm1426, %v7212, 0.0
      %v7245 = vsel %vm1427, %v7213, 0.0
      %v7246 = vsel %vm1428, %v7214, 0.0
      %v7247 = vsel %vm1429, %v7215, 0.0
      %v7248 = vsel %vm1430, %v7216, 0.0
      %v7249 = vsel %vm1431, %v7217, 0.0
      %v7250 = vsel %vm1432, %v7218, 0.0
      %v7251 = vpack.c.bf16 %v7220, %v7219
      %v7252 = vpack.c.bf16 %v7222, %v7221
      %v7253 = vpack.c.bf16 %v7224, %v7223
      %v7254 = vpack.c.bf16 %v7226, %v7225
      %v7255 = vpack.c.bf16 %v7228, %v7227
      %v7256 = vpack.c.bf16 %v7230, %v7229
      %v7257 = vpack.c.bf16 %v7232, %v7231
      %v7258 = vpack.c.bf16 %v7234, %v7233
      %v7259 = vpack.c.bf16 %v7236, %v7235
      %v7260 = vpack.c.bf16 %v7238, %v7237
      %v7261 = vpack.c.bf16 %v7240, %v7239
      %v7262 = vpack.c.bf16 %v7242, %v7241
      %v7263 = vpack.c.bf16 %v7244, %v7243
      %v7264 = vpack.c.bf16 %v7246, %v7245
      %v7265 = vpack.c.bf16 %v7248, %v7247
      %v7266 = vpack.c.bf16 %v7250, %v7249
      %v7283 = vunpack.c.l.b16 %v7251
      %v7284 = vunpack.c.h.b16 %v7251
      %v7285 = vunpack.c.l.b16 %v7252
      %v7286 = vunpack.c.h.b16 %v7252
      %v7287 = vunpack.c.l.b16 %v7253
      %v7288 = vunpack.c.h.b16 %v7253
      %v7289 = vunpack.c.l.b16 %v7254
      %v7290 = vunpack.c.h.b16 %v7254
      %v7291 = vunpack.c.l.b16 %v7255
      %v7292 = vunpack.c.h.b16 %v7255
      %v7293 = vunpack.c.l.b16 %v7256
      %v7294 = vunpack.c.h.b16 %v7256
      %v7295 = vunpack.c.l.b16 %v7257
      %v7296 = vunpack.c.h.b16 %v7257
      %v7297 = vunpack.c.l.b16 %v7258
      %v7298 = vunpack.c.h.b16 %v7258
      %v7299 = vunpack.c.l.b16 %v7259
      %v7300 = vunpack.c.h.b16 %v7259
      %v7301 = vunpack.c.l.b16 %v7260
      %v7302 = vunpack.c.h.b16 %v7260
      %v7303 = vunpack.c.l.b16 %v7261
      %v7304 = vunpack.c.h.b16 %v7261
      %v7305 = vunpack.c.l.b16 %v7262
      %v7306 = vunpack.c.h.b16 %v7262
      %v7307 = vunpack.c.l.b16 %v7263
      %v7308 = vunpack.c.h.b16 %v7263
      %v7309 = vunpack.c.l.b16 %v7264
      %v7310 = vunpack.c.h.b16 %v7264
      %v7311 = vunpack.c.l.b16 %v7265
      %v7312 = vunpack.c.h.b16 %v7265
      %v7313 = vunpack.c.l.b16 %v7266
      %v7314 = vunpack.c.h.b16 %v7266
      %v7315 = vpack.c.b16 %v7283, %v7283
      %v7316 = vpack.c.b16 %v7284, %v7284
      %v7317 = vpack.c.b16 %v7285, %v7285
      %v7318 = vpack.c.b16 %v7286, %v7286
      %v7319 = vpack.c.b16 %v7287, %v7287
      %v7320 = vpack.c.b16 %v7288, %v7288
      %v7321 = vpack.c.b16 %v7289, %v7289
      %v7322 = vpack.c.b16 %v7290, %v7290
      %v7323 = vpack.c.b16 %v7291, %v7291
      %v7324 = vpack.c.b16 %v7292, %v7292
      %v7325 = vpack.c.b16 %v7293, %v7293
      %v7326 = vpack.c.b16 %v7294, %v7294
      %v7327 = vpack.c.b16 %v7295, %v7295
      %v7328 = vpack.c.b16 %v7296, %v7296
      %v7329 = vpack.c.b16 %v7297, %v7297
      %v7330 = vpack.c.b16 %v7298, %v7298
      %v7331 = vpack.c.b16 %v7299, %v7299
      %v7332 = vpack.c.b16 %v7300, %v7300
      %v7333 = vpack.c.b16 %v7301, %v7301
      %v7334 = vpack.c.b16 %v7302, %v7302
      %v7335 = vpack.c.b16 %v7303, %v7303
      %v7336 = vpack.c.b16 %v7304, %v7304
      %v7337 = vpack.c.b16 %v7305, %v7305
      %v7338 = vpack.c.b16 %v7306, %v7306
      %v7339 = vpack.c.b16 %v7307, %v7307
      %v7340 = vpack.c.b16 %v7308, %v7308
      %v7341 = vpack.c.b16 %v7309, %v7309
      %v7342 = vpack.c.b16 %v7310, %v7310
      %v7343 = vpack.c.b16 %v7311, %v7311
      %v7344 = vpack.c.b16 %v7312, %v7312
      %v7345 = vpack.c.b16 %v7313, %v7313
      %v7346 = vpack.c.b16 %v7314, %v7314
      %7347 = vrot.lane.b32.xlu0 %v7315, 32
      %v7348 = vpop.permute.xlu0 %7347
      %7349 = vrot.lane.b32.xlu0 %v7316, 32
      %v7350 = vpop.permute.xlu0 %7349
      %7351 = vrot.lane.b32.xlu0 %v7317, 32
      %v7352 = vpop.permute.xlu0 %7351
      %7353 = vrot.lane.b32.xlu0 %v7318, 32
      %v7354 = vpop.permute.xlu0 %7353
      %7355 = vrot.lane.b32.xlu0 %v7319, 32
      %v7356 = vpop.permute.xlu0 %7355
      %7357 = vrot.lane.b32.xlu0 %v7320, 32
      %v7358 = vpop.permute.xlu0 %7357
      %7359 = vrot.lane.b32.xlu0 %v7321, 32
      %v7360 = vpop.permute.xlu0 %7359
      %7361 = vrot.lane.b32.xlu0 %v7322, 32
      %v7362 = vpop.permute.xlu0 %7361
      %7363 = vrot.lane.b32.xlu0 %v7323, 32
      %v7364 = vpop.permute.xlu0 %7363
      %7365 = vrot.lane.b32.xlu0 %v7324, 32
      %v7366 = vpop.permute.xlu0 %7365
      %7367 = vrot.lane.b32.xlu0 %v7325, 32
      %v7368 = vpop.permute.xlu0 %7367
      %7369 = vrot.lane.b32.xlu0 %v7326, 32
      %v7370 = vpop.permute.xlu0 %7369
      %7371 = vrot.lane.b32.xlu0 %v7327, 32
      %v7372 = vpop.permute.xlu0 %7371
      %7373 = vrot.lane.b32.xlu0 %v7328, 32
      %v7374 = vpop.permute.xlu0 %7373
      %7375 = vrot.lane.b32.xlu0 %v7329, 32
      %v7376 = vpop.permute.xlu0 %7375
      %7377 = vrot.lane.b32.xlu0 %v7330, 32
      %v7378 = vpop.permute.xlu0 %7377
      %7379 = vrot.lane.b32.xlu0 %v7331, 32
      %v7380 = vpop.permute.xlu0 %7379
      %7381 = vrot.lane.b32.xlu0 %v7332, 32
      %v7382 = vpop.permute.xlu0 %7381
      %7383 = vrot.lane.b32.xlu0 %v7333, 32
      %v7384 = vpop.permute.xlu0 %7383
      %7385 = vrot.lane.b32.xlu0 %v7334, 32
      %v7386 = vpop.permute.xlu0 %7385
      %7387 = vrot.lane.b32.xlu0 %v7335, 32
      %v7388 = vpop.permute.xlu0 %7387
      %7389 = vrot.lane.b32.xlu0 %v7336, 32
      %v7390 = vpop.permute.xlu0 %7389
      %7391 = vrot.lane.b32.xlu0 %v7337, 32
      %v7392 = vpop.permute.xlu0 %7391
      %7393 = vrot.lane.b32.xlu0 %v7338, 32
      %v7394 = vpop.permute.xlu0 %7393
      %7395 = vrot.lane.b32.xlu0 %v7339, 32
      %v7396 = vpop.permute.xlu0 %7395
      %7397 = vrot.lane.b32.xlu0 %v7340, 32
      %v7398 = vpop.permute.xlu0 %7397
      %7399 = vrot.lane.b32.xlu0 %v7341, 32
      %v7400 = vpop.permute.xlu0 %7399
      %7401 = vrot.lane.b32.xlu0 %v7342, 32
      %v7402 = vpop.permute.xlu0 %7401
      %7403 = vrot.lane.b32.xlu0 %v7343, 32
      %v7404 = vpop.permute.xlu0 %7403
      %7405 = vrot.lane.b32.xlu0 %v7344, 32
      %v7406 = vpop.permute.xlu0 %7405
      %7407 = vrot.lane.b32.xlu0 %v7345, 32
      %v7408 = vpop.permute.xlu0 %7407
      %7409 = vrot.lane.b32.xlu0 %v7346, 32
      %v7410 = vpop.permute.xlu0 %7409
      %7443 = vst.msk [vmem:[#allocation7] sm:$0xf] %vm4536, %v7348
      %7444 = vst.msk [vmem:[#allocation7 + $0x8] sm:$0xf] %vm4536, %v7350
      %7445 = vst.msk [vmem:[#allocation7 + $0x10] sm:$0xf] %vm4536, %v7352
      %7446 = vst.msk [vmem:[#allocation7 + $0x18] sm:$0xf] %vm4536, %v7354
      %7447 = vst.msk [vmem:[#allocation7 + $0x20] sm:$0xf] %vm4536, %v7356
      %7448 = vst.msk [vmem:[#allocation7 + $0x28] sm:$0xf] %vm4536, %v7358
      %7449 = vst.msk [vmem:[#allocation7 + $0x30] sm:$0xf] %vm4536, %v7360
      %7450 = vst.msk [vmem:[#allocation7 + $0x38] sm:$0xf] %vm4536, %v7362
      %7451 = vst.msk [vmem:[#allocation7 + $0x40] sm:$0xf] %vm4536, %v7364
      %7452 = vst.msk [vmem:[#allocation7 + $0x48] sm:$0xf] %vm4536, %v7366
      %7453 = vst.msk [vmem:[#allocation7 + $0x50] sm:$0xf] %vm4536, %v7368
      %7454 = vst.msk [vmem:[#allocation7 + $0x58] sm:$0xf] %vm4536, %v7370
      %7455 = vst.msk [vmem:[#allocation7 + $0x60] sm:$0xf] %vm4536, %v7372
      %7456 = vst.msk [vmem:[#allocation7 + $0x68] sm:$0xf] %vm4536, %v7374
      %7457 = vst.msk [vmem:[#allocation7 + $0x70] sm:$0xf] %vm4536, %v7376
      %7458 = vst.msk [vmem:[#allocation7 + $0x78] sm:$0xf] %vm4536, %v7378
      %7459 = vst.msk [vmem:[#allocation7 + $0x80] sm:$0xf] %vm4536, %v7380
      %7460 = vst.msk [vmem:[#allocation7 + $0x88] sm:$0xf] %vm4536, %v7382
      %7461 = vst.msk [vmem:[#allocation7 + $0x90] sm:$0xf] %vm4536, %v7384
      %7462 = vst.msk [vmem:[#allocation7 + $0x98] sm:$0xf] %vm4536, %v7386
      %7463 = vst.msk [vmem:[#allocation7 + $0xa0] sm:$0xf] %vm4536, %v7388
      %7464 = vst.msk [vmem:[#allocation7 + $0xa8] sm:$0xf] %vm4536, %v7390
      %7465 = vst.msk [vmem:[#allocation7 + $0xb0] sm:$0xf] %vm4536, %v7392
      %7466 = vst.msk [vmem:[#allocation7 + $0xb8] sm:$0xf] %vm4536, %v7394
      %7467 = vst.msk [vmem:[#allocation7 + $0xc0] sm:$0xf] %vm4536, %v7396
      %7468 = vst.msk [vmem:[#allocation7 + $0xc8] sm:$0xf] %vm4536, %v7398
      %7469 = vst.msk [vmem:[#allocation7 + $0xd0] sm:$0xf] %vm4536, %v7400
      %7470 = vst.msk [vmem:[#allocation7 + $0xd8] sm:$0xf] %vm4536, %v7402
      %7471 = vst.msk [vmem:[#allocation7 + $0xe0] sm:$0xf] %vm4536, %v7404
      %7472 = vst.msk [vmem:[#allocation7 + $0xe8] sm:$0xf] %vm4536, %v7406
      %7473 = vst.msk [vmem:[#allocation7 + $0xf0] sm:$0xf] %vm4536, %v7408
      %7474 = vst.msk [vmem:[#allocation7 + $0xf8] sm:$0xf] %vm4536, %v7410
      %v7475 = vld [vmem:[#allocation4 + $0x17] sm:$0xff]
      %v7476 = vld [vmem:[#allocation4 + $0x1f] sm:$0xff]
      %v7477 = vld [vmem:[#allocation4 + $0x27] sm:$0xff]
      %v7478 = vld [vmem:[#allocation4 + $0x2f] sm:$0xff]
      %v7479 = vld [vmem:[#allocation4 + $0x37] sm:$0xff]
      %v7480 = vld [vmem:[#allocation4 + $0x3f] sm:$0xff]
      %v7481 = vld [vmem:[#allocation4 + $0x47] sm:$0xff]
      %v7482 = vld [vmem:[#allocation4 + $0x4f] sm:$0xff]
      %v7483 = vld [vmem:[#allocation4 + $0x57] sm:$0xff]
      %v7484 = vld [vmem:[#allocation4 + $0x5f] sm:$0xff]
      %v7485 = vld [vmem:[#allocation4 + $0x67] sm:$0xff]
      %v7486 = vld [vmem:[#allocation4 + $0x6f] sm:$0xff]
      %v7487 = vld [vmem:[#allocation4 + $0x77] sm:$0xff]
      %v7488 = vld [vmem:[#allocation4 + $0x7f] sm:$0xff]
      %v7489 = vld [vmem:[#allocation4 + $0x87] sm:$0xff]
      %v7490 = vld [vmem:[#allocation4 + $0x8f] sm:$0xff]
      %v7491 = vld [vmem:[#allocation4 + $0x97] sm:$0xff]
      %v7492 = vld [vmem:[#allocation4 + $0x9f] sm:$0xff]
      %v7493 = vld [vmem:[#allocation4 + $0xa7] sm:$0xff]
      %v7494 = vld [vmem:[#allocation4 + $0xaf] sm:$0xff]
      %v7495 = vld [vmem:[#allocation4 + $0xb7] sm:$0xff]
      %v7496 = vld [vmem:[#allocation4 + $0xbf] sm:$0xff]
      %v7497 = vld [vmem:[#allocation4 + $0xc7] sm:$0xff]
      %v7498 = vld [vmem:[#allocation4 + $0xcf] sm:$0xff]
      %v7499 = vld [vmem:[#allocation4 + $0xd7] sm:$0xff]
      %v7500 = vld [vmem:[#allocation4 + $0xdf] sm:$0xff]
      %v7501 = vld [vmem:[#allocation4 + $0xe7] sm:$0xff]
      %v7502 = vld [vmem:[#allocation4 + $0xef] sm:$0xff]
      %v7503 = vld [vmem:[#allocation4 + $0xf7] sm:$0xff]
      %v7504 = vld [vmem:[#allocation4 + $0xff] sm:$0xff]
      %v7505 = vld [vmem:[#allocation4 + $0x107] sm:$0xff]
      %v7506 = vld [vmem:[#allocation4 + $0x10f] sm:$0xff]
      %v7507 = vsel %vm855, %v7475, 0.0
      %v7508 = vsel %vm856, %v7476, 0.0
      %v7509 = vsel %vm857, %v7477, 0.0
      %v7510 = vsel %vm858, %v7478, 0.0
      %v7511 = vsel %vm859, %v7479, 0.0
      %v7512 = vsel %vm860, %v7480, 0.0
      %v7513 = vsel %vm861, %v7481, 0.0
      %v7514 = vsel %vm862, %v7482, 0.0
      %v7515 = vsel %vm863, %v7483, 0.0
      %v7516 = vsel %vm864, %v7484, 0.0
      %v7517 = vsel %vm865, %v7485, 0.0
      %v7518 = vsel %vm866, %v7486, 0.0
      %v7519 = vsel %vm867, %v7487, 0.0
      %v7520 = vsel %vm868, %v7488, 0.0
      %v7521 = vsel %vm869, %v7489, 0.0
      %v7522 = vsel %vm870, %v7490, 0.0
      %v7523 = vsel %vm871, %v7491, 0.0
      %v7524 = vsel %vm872, %v7492, 0.0
      %v7525 = vsel %vm873, %v7493, 0.0
      %v7526 = vsel %vm874, %v7494, 0.0
      %v7527 = vsel %vm875, %v7495, 0.0
      %v7528 = vsel %vm876, %v7496, 0.0
      %v7529 = vsel %vm877, %v7497, 0.0
      %v7530 = vsel %vm878, %v7498, 0.0
      %v7531 = vsel %vm879, %v7499, 0.0
      %v7532 = vsel %vm880, %v7500, 0.0
      %v7533 = vsel %vm881, %v7501, 0.0
      %v7534 = vsel %vm882, %v7502, 0.0
      %v7535 = vsel %vm883, %v7503, 0.0
      %v7536 = vsel %vm884, %v7504, 0.0
      %v7537 = vsel %vm885, %v7505, 0.0
      %v7538 = vsel %vm886, %v7506, 0.0
      %v7539 = vpack.c.bf16 %v7508, %v7507
      %v7540 = vpack.c.bf16 %v7510, %v7509
      %v7541 = vpack.c.bf16 %v7512, %v7511
      %v7542 = vpack.c.bf16 %v7514, %v7513
      %v7543 = vpack.c.bf16 %v7516, %v7515
      %v7544 = vpack.c.bf16 %v7518, %v7517
      %v7545 = vpack.c.bf16 %v7520, %v7519
      %v7546 = vpack.c.bf16 %v7522, %v7521
      %v7547 = vpack.c.bf16 %v7524, %v7523
      %v7548 = vpack.c.bf16 %v7526, %v7525
      %v7549 = vpack.c.bf16 %v7528, %v7527
      %v7550 = vpack.c.bf16 %v7530, %v7529
      %v7551 = vpack.c.bf16 %v7532, %v7531
      %v7552 = vpack.c.bf16 %v7534, %v7533
      %v7553 = vpack.c.bf16 %v7536, %v7535
      %v7554 = vpack.c.bf16 %v7538, %v7537
      %v7571 = vunpack.c.l.b16 %v7539
      %v7572 = vunpack.c.h.b16 %v7539
      %v7573 = vunpack.c.l.b16 %v7540
      %v7574 = vunpack.c.h.b16 %v7540
      %v7575 = vunpack.c.l.b16 %v7541
      %v7576 = vunpack.c.h.b16 %v7541
      %v7577 = vunpack.c.l.b16 %v7542
      %v7578 = vunpack.c.h.b16 %v7542
      %v7579 = vunpack.c.l.b16 %v7543
      %v7580 = vunpack.c.h.b16 %v7543
      %v7581 = vunpack.c.l.b16 %v7544
      %v7582 = vunpack.c.h.b16 %v7544
      %v7583 = vunpack.c.l.b16 %v7545
      %v7584 = vunpack.c.h.b16 %v7545
      %v7585 = vunpack.c.l.b16 %v7546
      %v7586 = vunpack.c.h.b16 %v7546
      %v7587 = vunpack.c.l.b16 %v7547
      %v7588 = vunpack.c.h.b16 %v7547
      %v7589 = vunpack.c.l.b16 %v7548
      %v7590 = vunpack.c.h.b16 %v7548
      %v7591 = vunpack.c.l.b16 %v7549
      %v7592 = vunpack.c.h.b16 %v7549
      %v7593 = vunpack.c.l.b16 %v7550
      %v7594 = vunpack.c.h.b16 %v7550
      %v7595 = vunpack.c.l.b16 %v7551
      %v7596 = vunpack.c.h.b16 %v7551
      %v7597 = vunpack.c.l.b16 %v7552
      %v7598 = vunpack.c.h.b16 %v7552
      %v7599 = vunpack.c.l.b16 %v7553
      %v7600 = vunpack.c.h.b16 %v7553
      %v7601 = vunpack.c.l.b16 %v7554
      %v7602 = vunpack.c.h.b16 %v7554
      %v7603 = vpack.c.b16 %v7571, %v7571
      %v7604 = vpack.c.b16 %v7572, %v7572
      %v7605 = vpack.c.b16 %v7573, %v7573
      %v7606 = vpack.c.b16 %v7574, %v7574
      %v7607 = vpack.c.b16 %v7575, %v7575
      %v7608 = vpack.c.b16 %v7576, %v7576
      %v7609 = vpack.c.b16 %v7577, %v7577
      %v7610 = vpack.c.b16 %v7578, %v7578
      %v7611 = vpack.c.b16 %v7579, %v7579
      %v7612 = vpack.c.b16 %v7580, %v7580
      %v7613 = vpack.c.b16 %v7581, %v7581
      %v7614 = vpack.c.b16 %v7582, %v7582
      %v7615 = vpack.c.b16 %v7583, %v7583
      %v7616 = vpack.c.b16 %v7584, %v7584
      %v7617 = vpack.c.b16 %v7585, %v7585
      %v7618 = vpack.c.b16 %v7586, %v7586
      %v7619 = vpack.c.b16 %v7587, %v7587
      %v7620 = vpack.c.b16 %v7588, %v7588
      %v7621 = vpack.c.b16 %v7589, %v7589
      %v7622 = vpack.c.b16 %v7590, %v7590
      %v7623 = vpack.c.b16 %v7591, %v7591
      %v7624 = vpack.c.b16 %v7592, %v7592
      %v7625 = vpack.c.b16 %v7593, %v7593
      %v7626 = vpack.c.b16 %v7594, %v7594
      %v7627 = vpack.c.b16 %v7595, %v7595
      %v7628 = vpack.c.b16 %v7596, %v7596
      %v7629 = vpack.c.b16 %v7597, %v7597
      %v7630 = vpack.c.b16 %v7598, %v7598
      %v7631 = vpack.c.b16 %v7599, %v7599
      %v7632 = vpack.c.b16 %v7600, %v7600
      %v7633 = vpack.c.b16 %v7601, %v7601
      %v7634 = vpack.c.b16 %v7602, %v7602
      %7635 = vrot.lane.b32.xlu0 %v7603, 48
      %v7636 = vpop.permute.xlu0 %7635
      %7637 = vrot.lane.b32.xlu0 %v7604, 48
      %v7638 = vpop.permute.xlu0 %7637
      %7639 = vrot.lane.b32.xlu0 %v7605, 48
      %v7640 = vpop.permute.xlu0 %7639
      %7641 = vrot.lane.b32.xlu0 %v7606, 48
      %v7642 = vpop.permute.xlu0 %7641
      %7643 = vrot.lane.b32.xlu0 %v7607, 48
      %v7644 = vpop.permute.xlu0 %7643
      %7645 = vrot.lane.b32.xlu0 %v7608, 48
      %v7646 = vpop.permute.xlu0 %7645
      %7647 = vrot.lane.b32.xlu0 %v7609, 48
      %v7648 = vpop.permute.xlu0 %7647
      %7649 = vrot.lane.b32.xlu0 %v7610, 48
      %v7650 = vpop.permute.xlu0 %7649
      %7651 = vrot.lane.b32.xlu0 %v7611, 48
      %v7652 = vpop.permute.xlu0 %7651
      %7653 = vrot.lane.b32.xlu0 %v7612, 48
      %v7654 = vpop.permute.xlu0 %7653
      %7655 = vrot.lane.b32.xlu0 %v7613, 48
      %v7656 = vpop.permute.xlu0 %7655
      %7657 = vrot.lane.b32.xlu0 %v7614, 48
      %v7658 = vpop.permute.xlu0 %7657
      %7659 = vrot.lane.b32.xlu0 %v7615, 48
      %v7660 = vpop.permute.xlu0 %7659
      %7661 = vrot.lane.b32.xlu0 %v7616, 48
      %v7662 = vpop.permute.xlu0 %7661
      %7663 = vrot.lane.b32.xlu0 %v7617, 48
      %v7664 = vpop.permute.xlu0 %7663
      %7665 = vrot.lane.b32.xlu0 %v7618, 48
      %v7666 = vpop.permute.xlu0 %7665
      %7667 = vrot.lane.b32.xlu0 %v7619, 48
      %v7668 = vpop.permute.xlu0 %7667
      %7669 = vrot.lane.b32.xlu0 %v7620, 48
      %v7670 = vpop.permute.xlu0 %7669
      %7671 = vrot.lane.b32.xlu0 %v7621, 48
      %v7672 = vpop.permute.xlu0 %7671
      %7673 = vrot.lane.b32.xlu0 %v7622, 48
      %v7674 = vpop.permute.xlu0 %7673
      %7675 = vrot.lane.b32.xlu0 %v7623, 48
      %v7676 = vpop.permute.xlu0 %7675
      %7677 = vrot.lane.b32.xlu0 %v7624, 48
      %v7678 = vpop.permute.xlu0 %7677
      %7679 = vrot.lane.b32.xlu0 %v7625, 48
      %v7680 = vpop.permute.xlu0 %7679
      %7681 = vrot.lane.b32.xlu0 %v7626, 48
      %v7682 = vpop.permute.xlu0 %7681
      %7683 = vrot.lane.b32.xlu0 %v7627, 48
      %v7684 = vpop.permute.xlu0 %7683
      %7685 = vrot.lane.b32.xlu0 %v7628, 48
      %v7686 = vpop.permute.xlu0 %7685
      %7687 = vrot.lane.b32.xlu0 %v7629, 48
      %v7688 = vpop.permute.xlu0 %7687
      %7689 = vrot.lane.b32.xlu0 %v7630, 48
      %v7690 = vpop.permute.xlu0 %7689
      %7691 = vrot.lane.b32.xlu0 %v7631, 48
      %v7692 = vpop.permute.xlu0 %7691
      %7693 = vrot.lane.b32.xlu0 %v7632, 48
      %v7694 = vpop.permute.xlu0 %7693
      %7695 = vrot.lane.b32.xlu0 %v7633, 48
      %v7696 = vpop.permute.xlu0 %7695
      %7697 = vrot.lane.b32.xlu0 %v7634, 48
      %v7698 = vpop.permute.xlu0 %7697
      %7731 = vst.msk [vmem:[#allocation7] sm:$0xf] %vm4825, %v7636
      %7732 = vst.msk [vmem:[#allocation7 + $0x8] sm:$0xf] %vm4825, %v7638
      %7733 = vst.msk [vmem:[#allocation7 + $0x10] sm:$0xf] %vm4825, %v7640
      %7734 = vst.msk [vmem:[#allocation7 + $0x18] sm:$0xf] %vm4825, %v7642
      %7735 = vst.msk [vmem:[#allocation7 + $0x20] sm:$0xf] %vm4825, %v7644
      %7736 = vst.msk [vmem:[#allocation7 + $0x28] sm:$0xf] %vm4825, %v7646
      %7737 = vst.msk [vmem:[#allocation7 + $0x30] sm:$0xf] %vm4825, %v7648
      %7738 = vst.msk [vmem:[#allocation7 + $0x38] sm:$0xf] %vm4825, %v7650
      %7739 = vst.msk [vmem:[#allocation7 + $0x40] sm:$0xf] %vm4825, %v7652
      %7740 = vst.msk [vmem:[#allocation7 + $0x48] sm:$0xf] %vm4825, %v7654
      %7741 = vst.msk [vmem:[#allocation7 + $0x50] sm:$0xf] %vm4825, %v7656
      %7742 = vst.msk [vmem:[#allocation7 + $0x58] sm:$0xf] %vm4825, %v7658
      %7743 = vst.msk [vmem:[#allocation7 + $0x60] sm:$0xf] %vm4825, %v7660
      %7744 = vst.msk [vmem:[#allocation7 + $0x68] sm:$0xf] %vm4825, %v7662
      %7745 = vst.msk [vmem:[#allocation7 + $0x70] sm:$0xf] %vm4825, %v7664
      %7746 = vst.msk [vmem:[#allocation7 + $0x78] sm:$0xf] %vm4825, %v7666
      %7747 = vst.msk [vmem:[#allocation7 + $0x80] sm:$0xf] %vm4825, %v7668
      %7748 = vst.msk [vmem:[#allocation7 + $0x88] sm:$0xf] %vm4825, %v7670
      %7749 = vst.msk [vmem:[#allocation7 + $0x90] sm:$0xf] %vm4825, %v7672
      %7750 = vst.msk [vmem:[#allocation7 + $0x98] sm:$0xf] %vm4825, %v7674
      %7751 = vst.msk [vmem:[#allocation7 + $0xa0] sm:$0xf] %vm4825, %v7676
      %7752 = vst.msk [vmem:[#allocation7 + $0xa8] sm:$0xf] %vm4825, %v7678
      %7753 = vst.msk [vmem:[#allocation7 + $0xb0] sm:$0xf] %vm4825, %v7680
      %7754 = vst.msk [vmem:[#allocation7 + $0xb8] sm:$0xf] %vm4825, %v7682
      %7755 = vst.msk [vmem:[#allocation7 + $0xc0] sm:$0xf] %vm4825, %v7684
      %7756 = vst.msk [vmem:[#allocation7 + $0xc8] sm:$0xf] %vm4825, %v7686
      %7757 = vst.msk [vmem:[#allocation7 + $0xd0] sm:$0xf] %vm4825, %v7688
      %7758 = vst.msk [vmem:[#allocation7 + $0xd8] sm:$0xf] %vm4825, %v7690
      %7759 = vst.msk [vmem:[#allocation7 + $0xe0] sm:$0xf] %vm4825, %v7692
      %7760 = vst.msk [vmem:[#allocation7 + $0xe8] sm:$0xf] %vm4825, %v7694
      %7761 = vst.msk [vmem:[#allocation7 + $0xf0] sm:$0xf] %vm4825, %v7696
      %7762 = vst.msk [vmem:[#allocation7 + $0xf8] sm:$0xf] %vm4825, %v7698
      %v7763 = vld [vmem:[#allocation4 + $0x18] sm:$0xff]
      %v7764 = vld [vmem:[#allocation4 + $0x20] sm:$0xff]
      %v7765 = vld [vmem:[#allocation4 + $0x28] sm:$0xff]
      %v7766 = vld [vmem:[#allocation4 + $0x30] sm:$0xff]
      %v7767 = vld [vmem:[#allocation4 + $0x38] sm:$0xff]
      %v7768 = vld [vmem:[#allocation4 + $0x40] sm:$0xff]
      %v7769 = vld [vmem:[#allocation4 + $0x48] sm:$0xff]
      %v7770 = vld [vmem:[#allocation4 + $0x50] sm:$0xff]
      %v7771 = vld [vmem:[#allocation4 + $0x58] sm:$0xff]
      %v7772 = vld [vmem:[#allocation4 + $0x60] sm:$0xff]
      %v7773 = vld [vmem:[#allocation4 + $0x68] sm:$0xff]
      %v7774 = vld [vmem:[#allocation4 + $0x70] sm:$0xff]
      %v7775 = vld [vmem:[#allocation4 + $0x78] sm:$0xff]
      %v7776 = vld [vmem:[#allocation4 + $0x80] sm:$0xff]
      %v7777 = vld [vmem:[#allocation4 + $0x88] sm:$0xff]
      %v7778 = vld [vmem:[#allocation4 + $0x90] sm:$0xff]
      %v7779 = vld [vmem:[#allocation4 + $0x98] sm:$0xff]
      %v7780 = vld [vmem:[#allocation4 + $0xa0] sm:$0xff]
      %v7781 = vld [vmem:[#allocation4 + $0xa8] sm:$0xff]
      %v7782 = vld [vmem:[#allocation4 + $0xb0] sm:$0xff]
      %v7783 = vld [vmem:[#allocation4 + $0xb8] sm:$0xff]
      %v7784 = vld [vmem:[#allocation4 + $0xc0] sm:$0xff]
      %v7785 = vld [vmem:[#allocation4 + $0xc8] sm:$0xff]
      %v7786 = vld [vmem:[#allocation4 + $0xd0] sm:$0xff]
      %v7787 = vld [vmem:[#allocation4 + $0xd8] sm:$0xff]
      %v7788 = vld [vmem:[#allocation4 + $0xe0] sm:$0xff]
      %v7789 = vld [vmem:[#allocation4 + $0xe8] sm:$0xff]
      %v7790 = vld [vmem:[#allocation4 + $0xf0] sm:$0xff]
      %v7791 = vld [vmem:[#allocation4 + $0xf8] sm:$0xff]
      %v7792 = vld [vmem:[#allocation4 + $0x100] sm:$0xff]
      %v7793 = vld [vmem:[#allocation4 + $0x108] sm:$0xff]
      %v7794 = vld [vmem:[#allocation4 + $0x110] sm:$0xff]
      %v7795 = vpack.c.bf16 %v7764, %v7763
      %v7796 = vpack.c.bf16 %v7766, %v7765
      %v7797 = vpack.c.bf16 %v7768, %v7767
      %v7798 = vpack.c.bf16 %v7770, %v7769
      %v7799 = vpack.c.bf16 %v7772, %v7771
      %v7800 = vpack.c.bf16 %v7774, %v7773
      %v7801 = vpack.c.bf16 %v7776, %v7775
      %v7802 = vpack.c.bf16 %v7778, %v7777
      %v7803 = vpack.c.bf16 %v7780, %v7779
      %v7804 = vpack.c.bf16 %v7782, %v7781
      %v7805 = vpack.c.bf16 %v7784, %v7783
      %v7806 = vpack.c.bf16 %v7786, %v7785
      %v7807 = vpack.c.bf16 %v7788, %v7787
      %v7808 = vpack.c.bf16 %v7790, %v7789
      %v7809 = vpack.c.bf16 %v7792, %v7791
      %v7810 = vpack.c.bf16 %v7794, %v7793
      %v7827 = vunpack.c.l.b16 %v7795
      %v7828 = vunpack.c.h.b16 %v7795
      %v7829 = vunpack.c.l.b16 %v7796
      %v7830 = vunpack.c.h.b16 %v7796
      %v7831 = vunpack.c.l.b16 %v7797
      %v7832 = vunpack.c.h.b16 %v7797
      %v7833 = vunpack.c.l.b16 %v7798
      %v7834 = vunpack.c.h.b16 %v7798
      %v7835 = vunpack.c.l.b16 %v7799
      %v7836 = vunpack.c.h.b16 %v7799
      %v7837 = vunpack.c.l.b16 %v7800
      %v7838 = vunpack.c.h.b16 %v7800
      %v7839 = vunpack.c.l.b16 %v7801
      %v7840 = vunpack.c.h.b16 %v7801
      %v7841 = vunpack.c.l.b16 %v7802
      %v7842 = vunpack.c.h.b16 %v7802
      %v7843 = vunpack.c.l.b16 %v7803
      %v7844 = vunpack.c.h.b16 %v7803
      %v7845 = vunpack.c.l.b16 %v7804
      %v7846 = vunpack.c.h.b16 %v7804
      %v7847 = vunpack.c.l.b16 %v7805
      %v7848 = vunpack.c.h.b16 %v7805
      %v7849 = vunpack.c.l.b16 %v7806
      %v7850 = vunpack.c.h.b16 %v7806
      %v7851 = vunpack.c.l.b16 %v7807
      %v7852 = vunpack.c.h.b16 %v7807
      %v7853 = vunpack.c.l.b16 %v7808
      %v7854 = vunpack.c.h.b16 %v7808
      %v7855 = vunpack.c.l.b16 %v7809
      %v7856 = vunpack.c.h.b16 %v7809
      %v7857 = vunpack.c.l.b16 %v7810
      %v7858 = vunpack.c.h.b16 %v7810
      %v7859 = vpack.c.b16 %v7827, %v7827
      %v7860 = vpack.c.b16 %v7828, %v7828
      %v7861 = vpack.c.b16 %v7829, %v7829
      %v7862 = vpack.c.b16 %v7830, %v7830
      %v7863 = vpack.c.b16 %v7831, %v7831
      %v7864 = vpack.c.b16 %v7832, %v7832
      %v7865 = vpack.c.b16 %v7833, %v7833
      %v7866 = vpack.c.b16 %v7834, %v7834
      %v7867 = vpack.c.b16 %v7835, %v7835
      %v7868 = vpack.c.b16 %v7836, %v7836
      %v7869 = vpack.c.b16 %v7837, %v7837
      %v7870 = vpack.c.b16 %v7838, %v7838
      %v7871 = vpack.c.b16 %v7839, %v7839
      %v7872 = vpack.c.b16 %v7840, %v7840
      %v7873 = vpack.c.b16 %v7841, %v7841
      %v7874 = vpack.c.b16 %v7842, %v7842
      %v7875 = vpack.c.b16 %v7843, %v7843
      %v7876 = vpack.c.b16 %v7844, %v7844
      %v7877 = vpack.c.b16 %v7845, %v7845
      %v7878 = vpack.c.b16 %v7846, %v7846
      %v7879 = vpack.c.b16 %v7847, %v7847
      %v7880 = vpack.c.b16 %v7848, %v7848
      %v7881 = vpack.c.b16 %v7849, %v7849
      %v7882 = vpack.c.b16 %v7850, %v7850
      %v7883 = vpack.c.b16 %v7851, %v7851
      %v7884 = vpack.c.b16 %v7852, %v7852
      %v7885 = vpack.c.b16 %v7853, %v7853
      %v7886 = vpack.c.b16 %v7854, %v7854
      %v7887 = vpack.c.b16 %v7855, %v7855
      %v7888 = vpack.c.b16 %v7856, %v7856
      %v7889 = vpack.c.b16 %v7857, %v7857
      %v7890 = vpack.c.b16 %v7858, %v7858
      %7891 = vrot.lane.b32.xlu0 %v7859, 64
      %v7892 = vpop.permute.xlu0 %7891
      %7893 = vrot.lane.b32.xlu0 %v7860, 64
      %v7894 = vpop.permute.xlu0 %7893
      %7895 = vrot.lane.b32.xlu0 %v7861, 64
      %v7896 = vpop.permute.xlu0 %7895
      %7897 = vrot.lane.b32.xlu0 %v7862, 64
      %v7898 = vpop.permute.xlu0 %7897
      %7899 = vrot.lane.b32.xlu0 %v7863, 64
      %v7900 = vpop.permute.xlu0 %7899
      %7901 = vrot.lane.b32.xlu0 %v7864, 64
      %v7902 = vpop.permute.xlu0 %7901
      %7903 = vrot.lane.b32.xlu0 %v7865, 64
      %v7904 = vpop.permute.xlu0 %7903
      %7905 = vrot.lane.b32.xlu0 %v7866, 64
      %v7906 = vpop.permute.xlu0 %7905
      %7907 = vrot.lane.b32.xlu0 %v7867, 64
      %v7908 = vpop.permute.xlu0 %7907
      %7909 = vrot.lane.b32.xlu0 %v7868, 64
      %v7910 = vpop.permute.xlu0 %7909
      %7911 = vrot.lane.b32.xlu0 %v7869, 64
      %v7912 = vpop.permute.xlu0 %7911
      %7913 = vrot.lane.b32.xlu0 %v7870, 64
      %v7914 = vpop.permute.xlu0 %7913
      %7915 = vrot.lane.b32.xlu0 %v7871, 64
      %v7916 = vpop.permute.xlu0 %7915
      %7917 = vrot.lane.b32.xlu0 %v7872, 64
      %v7918 = vpop.permute.xlu0 %7917
      %7919 = vrot.lane.b32.xlu0 %v7873, 64
      %v7920 = vpop.permute.xlu0 %7919
      %7921 = vrot.lane.b32.xlu0 %v7874, 64
      %v7922 = vpop.permute.xlu0 %7921
      %7923 = vrot.lane.b32.xlu0 %v7875, 64
      %v7924 = vpop.permute.xlu0 %7923
      %7925 = vrot.lane.b32.xlu0 %v7876, 64
      %v7926 = vpop.permute.xlu0 %7925
      %7927 = vrot.lane.b32.xlu0 %v7877, 64
      %v7928 = vpop.permute.xlu0 %7927
      %7929 = vrot.lane.b32.xlu0 %v7878, 64
      %v7930 = vpop.permute.xlu0 %7929
      %7931 = vrot.lane.b32.xlu0 %v7879, 64
      %v7932 = vpop.permute.xlu0 %7931
      %7933 = vrot.lane.b32.xlu0 %v7880, 64
      %v7934 = vpop.permute.xlu0 %7933
      %7935 = vrot.lane.b32.xlu0 %v7881, 64
      %v7936 = vpop.permute.xlu0 %7935
      %7937 = vrot.lane.b32.xlu0 %v7882, 64
      %v7938 = vpop.permute.xlu0 %7937
      %7939 = vrot.lane.b32.xlu0 %v7883, 64
      %v7940 = vpop.permute.xlu0 %7939
      %7941 = vrot.lane.b32.xlu0 %v7884, 64
      %v7942 = vpop.permute.xlu0 %7941
      %7943 = vrot.lane.b32.xlu0 %v7885, 64
      %v7944 = vpop.permute.xlu0 %7943
      %7945 = vrot.lane.b32.xlu0 %v7886, 64
      %v7946 = vpop.permute.xlu0 %7945
      %7947 = vrot.lane.b32.xlu0 %v7887, 64
      %v7948 = vpop.permute.xlu0 %7947
      %7949 = vrot.lane.b32.xlu0 %v7888, 64
      %v7950 = vpop.permute.xlu0 %7949
      %7951 = vrot.lane.b32.xlu0 %v7889, 64
      %v7952 = vpop.permute.xlu0 %7951
      %7953 = vrot.lane.b32.xlu0 %v7890, 64
      %v7954 = vpop.permute.xlu0 %7953
      %7987 = vst.msk [vmem:[#allocation7] sm:$0xf] %vm5082, %v7892
      %7988 = vst.msk [vmem:[#allocation7 + $0x8] sm:$0xf] %vm5082, %v7894
      %7989 = vst.msk [vmem:[#allocation7 + $0x10] sm:$0xf] %vm5082, %v7896
      %7990 = vst.msk [vmem:[#allocation7 + $0x18] sm:$0xf] %vm5082, %v7898
      %7991 = vst.msk [vmem:[#allocation7 + $0x20] sm:$0xf] %vm5082, %v7900
      %7992 = vst.msk [vmem:[#allocation7 + $0x28] sm:$0xf] %vm5082, %v7902
      %7993 = vst.msk [vmem:[#allocation7 + $0x30] sm:$0xf] %vm5082, %v7904
      %7994 = vst.msk [vmem:[#allocation7 + $0x38] sm:$0xf] %vm5082, %v7906
      %7995 = vst.msk [vmem:[#allocation7 + $0x40] sm:$0xf] %vm5082, %v7908
      %7996 = vst.msk [vmem:[#allocation7 + $0x48] sm:$0xf] %vm5082, %v7910
      %7997 = vst.msk [vmem:[#allocation7 + $0x50] sm:$0xf] %vm5082, %v7912
      %7998 = vst.msk [vmem:[#allocation7 + $0x58] sm:$0xf] %vm5082, %v7914
      %7999 = vst.msk [vmem:[#allocation7 + $0x60] sm:$0xf] %vm5082, %v7916
      %8000 = vst.msk [vmem:[#allocation7 + $0x68] sm:$0xf] %vm5082, %v7918
      %8001 = vst.msk [vmem:[#allocation7 + $0x70] sm:$0xf] %vm5082, %v7920
      %8002 = vst.msk [vmem:[#allocation7 + $0x78] sm:$0xf] %vm5082, %v7922
      %8003 = vst.msk [vmem:[#allocation7 + $0x80] sm:$0xf] %vm5082, %v7924
      %8004 = vst.msk [vmem:[#allocation7 + $0x88] sm:$0xf] %vm5082, %v7926
      %8005 = vst.msk [vmem:[#allocation7 + $0x90] sm:$0xf] %vm5082, %v7928
      %8006 = vst.msk [vmem:[#allocation7 + $0x98] sm:$0xf] %vm5082, %v7930
      %8007 = vst.msk [vmem:[#allocation7 + $0xa0] sm:$0xf] %vm5082, %v7932
      %8008 = vst.msk [vmem:[#allocation7 + $0xa8] sm:$0xf] %vm5082, %v7934
      %8009 = vst.msk [vmem:[#allocation7 + $0xb0] sm:$0xf] %vm5082, %v7936
      %8010 = vst.msk [vmem:[#allocation7 + $0xb8] sm:$0xf] %vm5082, %v7938
      %8011 = vst.msk [vmem:[#allocation7 + $0xc0] sm:$0xf] %vm5082, %v7940
      %8012 = vst.msk [vmem:[#allocation7 + $0xc8] sm:$0xf] %vm5082, %v7942
      %8013 = vst.msk [vmem:[#allocation7 + $0xd0] sm:$0xf] %vm5082, %v7944
      %8014 = vst.msk [vmem:[#allocation7 + $0xd8] sm:$0xf] %vm5082, %v7946
      %8015 = vst.msk [vmem:[#allocation7 + $0xe0] sm:$0xf] %vm5082, %v7948
      %8016 = vst.msk [vmem:[#allocation7 + $0xe8] sm:$0xf] %vm5082, %v7950
      %8017 = vst.msk [vmem:[#allocation7 + $0xf0] sm:$0xf] %vm5082, %v7952
      %8018 = vst.msk [vmem:[#allocation7 + $0xf8] sm:$0xf] %vm5082, %v7954
      %v8019 = vld [vmem:[#allocation4 + $0x19] sm:$0xff]
      %v8020 = vld [vmem:[#allocation4 + $0x21] sm:$0xff]
      %v8021 = vld [vmem:[#allocation4 + $0x29] sm:$0xff]
      %v8022 = vld [vmem:[#allocation4 + $0x31] sm:$0xff]
      %v8023 = vld [vmem:[#allocation4 + $0x39] sm:$0xff]
      %v8024 = vld [vmem:[#allocation4 + $0x41] sm:$0xff]
      %v8025 = vld [vmem:[#allocation4 + $0x49] sm:$0xff]
      %v8026 = vld [vmem:[#allocation4 + $0x51] sm:$0xff]
      %v8027 = vld [vmem:[#allocation4 + $0x59] sm:$0xff]
      %v8028 = vld [vmem:[#allocation4 + $0x61] sm:$0xff]
      %v8029 = vld [vmem:[#allocation4 + $0x69] sm:$0xff]
      %v8030 = vld [vmem:[#allocation4 + $0x71] sm:$0xff]
      %v8031 = vld [vmem:[#allocation4 + $0x79] sm:$0xff]
      %v8032 = vld [vmem:[#allocation4 + $0x81] sm:$0xff]
      %v8033 = vld [vmem:[#allocation4 + $0x89] sm:$0xff]
      %v8034 = vld [vmem:[#allocation4 + $0x91] sm:$0xff]
      %v8035 = vld [vmem:[#allocation4 + $0x99] sm:$0xff]
      %v8036 = vld [vmem:[#allocation4 + $0xa1] sm:$0xff]
      %v8037 = vld [vmem:[#allocation4 + $0xa9] sm:$0xff]
      %v8038 = vld [vmem:[#allocation4 + $0xb1] sm:$0xff]
      %v8039 = vld [vmem:[#allocation4 + $0xb9] sm:$0xff]
      %v8040 = vld [vmem:[#allocation4 + $0xc1] sm:$0xff]
      %v8041 = vld [vmem:[#allocation4 + $0xc9] sm:$0xff]
      %v8042 = vld [vmem:[#allocation4 + $0xd1] sm:$0xff]
      %v8043 = vld [vmem:[#allocation4 + $0xd9] sm:$0xff]
      %v8044 = vld [vmem:[#allocation4 + $0xe1] sm:$0xff]
      %v8045 = vld [vmem:[#allocation4 + $0xe9] sm:$0xff]
      %v8046 = vld [vmem:[#allocation4 + $0xf1] sm:$0xff]
      %v8047 = vld [vmem:[#allocation4 + $0xf9] sm:$0xff]
      %v8048 = vld [vmem:[#allocation4 + $0x101] sm:$0xff]
      %v8049 = vld [vmem:[#allocation4 + $0x109] sm:$0xff]
      %v8050 = vld [vmem:[#allocation4 + $0x111] sm:$0xff]
      %v8051 = vsel %vm1401, %v8019, 0.0
      %v8052 = vsel %vm1402, %v8020, 0.0
      %v8053 = vsel %vm1403, %v8021, 0.0
      %v8054 = vsel %vm1404, %v8022, 0.0
      %v8055 = vsel %vm1405, %v8023, 0.0
      %v8056 = vsel %vm1406, %v8024, 0.0
      %v8057 = vsel %vm1407, %v8025, 0.0
      %v8058 = vsel %vm1408, %v8026, 0.0
      %v8059 = vsel %vm1409, %v8027, 0.0
      %v8060 = vsel %vm1410, %v8028, 0.0
      %v8061 = vsel %vm1411, %v8029, 0.0
      %v8062 = vsel %vm1412, %v8030, 0.0
      %v8063 = vsel %vm1413, %v8031, 0.0
      %v8064 = vsel %vm1414, %v8032, 0.0
      %v8065 = vsel %vm1415, %v8033, 0.0
      %v8066 = vsel %vm1416, %v8034, 0.0
      %v8067 = vsel %vm1417, %v8035, 0.0
      %v8068 = vsel %vm1418, %v8036, 0.0
      %v8069 = vsel %vm1419, %v8037, 0.0
      %v8070 = vsel %vm1420, %v8038, 0.0
      %v8071 = vsel %vm1421, %v8039, 0.0
      %v8072 = vsel %vm1422, %v8040, 0.0
      %v8073 = vsel %vm1423, %v8041, 0.0
      %v8074 = vsel %vm1424, %v8042, 0.0
      %v8075 = vsel %vm1425, %v8043, 0.0
      %v8076 = vsel %vm1426, %v8044, 0.0
      %v8077 = vsel %vm1427, %v8045, 0.0
      %v8078 = vsel %vm1428, %v8046, 0.0
      %v8079 = vsel %vm1429, %v8047, 0.0
      %v8080 = vsel %vm1430, %v8048, 0.0
      %v8081 = vsel %vm1431, %v8049, 0.0
      %v8082 = vsel %vm1432, %v8050, 0.0
      %v8083 = vpack.c.bf16 %v8052, %v8051
      %v8084 = vpack.c.bf16 %v8054, %v8053
      %v8085 = vpack.c.bf16 %v8056, %v8055
      %v8086 = vpack.c.bf16 %v8058, %v8057
      %v8087 = vpack.c.bf16 %v8060, %v8059
      %v8088 = vpack.c.bf16 %v8062, %v8061
      %v8089 = vpack.c.bf16 %v8064, %v8063
      %v8090 = vpack.c.bf16 %v8066, %v8065
      %v8091 = vpack.c.bf16 %v8068, %v8067
      %v8092 = vpack.c.bf16 %v8070, %v8069
      %v8093 = vpack.c.bf16 %v8072, %v8071
      %v8094 = vpack.c.bf16 %v8074, %v8073
      %v8095 = vpack.c.bf16 %v8076, %v8075
      %v8096 = vpack.c.bf16 %v8078, %v8077
      %v8097 = vpack.c.bf16 %v8080, %v8079
      %v8098 = vpack.c.bf16 %v8082, %v8081
      %v8115 = vunpack.c.l.b16 %v8083
      %v8116 = vunpack.c.h.b16 %v8083
      %v8117 = vunpack.c.l.b16 %v8084
      %v8118 = vunpack.c.h.b16 %v8084
      %v8119 = vunpack.c.l.b16 %v8085
      %v8120 = vunpack.c.h.b16 %v8085
      %v8121 = vunpack.c.l.b16 %v8086
      %v8122 = vunpack.c.h.b16 %v8086
      %v8123 = vunpack.c.l.b16 %v8087
      %v8124 = vunpack.c.h.b16 %v8087
      %v8125 = vunpack.c.l.b16 %v8088
      %v8126 = vunpack.c.h.b16 %v8088
      %v8127 = vunpack.c.l.b16 %v8089
      %v8128 = vunpack.c.h.b16 %v8089
      %v8129 = vunpack.c.l.b16 %v8090
      %v8130 = vunpack.c.h.b16 %v8090
      %v8131 = vunpack.c.l.b16 %v8091
      %v8132 = vunpack.c.h.b16 %v8091
      %v8133 = vunpack.c.l.b16 %v8092
      %v8134 = vunpack.c.h.b16 %v8092
      %v8135 = vunpack.c.l.b16 %v8093
      %v8136 = vunpack.c.h.b16 %v8093
      %v8137 = vunpack.c.l.b16 %v8094
      %v8138 = vunpack.c.h.b16 %v8094
      %v8139 = vunpack.c.l.b16 %v8095
      %v8140 = vunpack.c.h.b16 %v8095
      %v8141 = vunpack.c.l.b16 %v8096
      %v8142 = vunpack.c.h.b16 %v8096
      %v8143 = vunpack.c.l.b16 %v8097
      %v8144 = vunpack.c.h.b16 %v8097
      %v8145 = vunpack.c.l.b16 %v8098
      %v8146 = vunpack.c.h.b16 %v8098
      %v8147 = vpack.c.b16 %v8115, %v8115
      %v8148 = vpack.c.b16 %v8116, %v8116
      %v8149 = vpack.c.b16 %v8117, %v8117
      %v8150 = vpack.c.b16 %v8118, %v8118
      %v8151 = vpack.c.b16 %v8119, %v8119
      %v8152 = vpack.c.b16 %v8120, %v8120
      %v8153 = vpack.c.b16 %v8121, %v8121
      %v8154 = vpack.c.b16 %v8122, %v8122
      %v8155 = vpack.c.b16 %v8123, %v8123
      %v8156 = vpack.c.b16 %v8124, %v8124
      %v8157 = vpack.c.b16 %v8125, %v8125
      %v8158 = vpack.c.b16 %v8126, %v8126
      %v8159 = vpack.c.b16 %v8127, %v8127
      %v8160 = vpack.c.b16 %v8128, %v8128
      %v8161 = vpack.c.b16 %v8129, %v8129
      %v8162 = vpack.c.b16 %v8130, %v8130
      %v8163 = vpack.c.b16 %v8131, %v8131
      %v8164 = vpack.c.b16 %v8132, %v8132
      %v8165 = vpack.c.b16 %v8133, %v8133
      %v8166 = vpack.c.b16 %v8134, %v8134
      %v8167 = vpack.c.b16 %v8135, %v8135
      %v8168 = vpack.c.b16 %v8136, %v8136
      %v8169 = vpack.c.b16 %v8137, %v8137
      %v8170 = vpack.c.b16 %v8138, %v8138
      %v8171 = vpack.c.b16 %v8139, %v8139
      %v8172 = vpack.c.b16 %v8140, %v8140
      %v8173 = vpack.c.b16 %v8141, %v8141
      %v8174 = vpack.c.b16 %v8142, %v8142
      %v8175 = vpack.c.b16 %v8143, %v8143
      %v8176 = vpack.c.b16 %v8144, %v8144
      %v8177 = vpack.c.b16 %v8145, %v8145
      %v8178 = vpack.c.b16 %v8146, %v8146
      %8179 = vrot.lane.b32.xlu0 %v8147, 80
      %v8180 = vpop.permute.xlu0 %8179
      %8181 = vrot.lane.b32.xlu0 %v8148, 80
      %v8182 = vpop.permute.xlu0 %8181
      %8183 = vrot.lane.b32.xlu0 %v8149, 80
      %v8184 = vpop.permute.xlu0 %8183
      %8185 = vrot.lane.b32.xlu0 %v8150, 80
      %v8186 = vpop.permute.xlu0 %8185
      %8187 = vrot.lane.b32.xlu0 %v8151, 80
      %v8188 = vpop.permute.xlu0 %8187
      %8189 = vrot.lane.b32.xlu0 %v8152, 80
      %v8190 = vpop.permute.xlu0 %8189
      %8191 = vrot.lane.b32.xlu0 %v8153, 80
      %v8192 = vpop.permute.xlu0 %8191
      %8193 = vrot.lane.b32.xlu0 %v8154, 80
      %v8194 = vpop.permute.xlu0 %8193
      %8195 = vrot.lane.b32.xlu0 %v8155, 80
      %v8196 = vpop.permute.xlu0 %8195
      %8197 = vrot.lane.b32.xlu0 %v8156, 80
      %v8198 = vpop.permute.xlu0 %8197
      %8199 = vrot.lane.b32.xlu0 %v8157, 80
      %v8200 = vpop.permute.xlu0 %8199
      %8201 = vrot.lane.b32.xlu0 %v8158, 80
      %v8202 = vpop.permute.xlu0 %8201
      %8203 = vrot.lane.b32.xlu0 %v8159, 80
      %v8204 = vpop.permute.xlu0 %8203
      %8205 = vrot.lane.b32.xlu0 %v8160, 80
      %v8206 = vpop.permute.xlu0 %8205
      %8207 = vrot.lane.b32.xlu0 %v8161, 80
      %v8208 = vpop.permute.xlu0 %8207
      %8209 = vrot.lane.b32.xlu0 %v8162, 80
      %v8210 = vpop.permute.xlu0 %8209
      %8211 = vrot.lane.b32.xlu0 %v8163, 80
      %v8212 = vpop.permute.xlu0 %8211
      %8213 = vrot.lane.b32.xlu0 %v8164, 80
      %v8214 = vpop.permute.xlu0 %8213
      %8215 = vrot.lane.b32.xlu0 %v8165, 80
      %v8216 = vpop.permute.xlu0 %8215
      %8217 = vrot.lane.b32.xlu0 %v8166, 80
      %v8218 = vpop.permute.xlu0 %8217
      %8219 = vrot.lane.b32.xlu0 %v8167, 80
      %v8220 = vpop.permute.xlu0 %8219
      %8221 = vrot.lane.b32.xlu0 %v8168, 80
      %v8222 = vpop.permute.xlu0 %8221
      %8223 = vrot.lane.b32.xlu0 %v8169, 80
      %v8224 = vpop.permute.xlu0 %8223
      %8225 = vrot.lane.b32.xlu0 %v8170, 80
      %v8226 = vpop.permute.xlu0 %8225
      %8227 = vrot.lane.b32.xlu0 %v8171, 80
      %v8228 = vpop.permute.xlu0 %8227
      %8229 = vrot.lane.b32.xlu0 %v8172, 80
      %v8230 = vpop.permute.xlu0 %8229
      %8231 = vrot.lane.b32.xlu0 %v8173, 80
      %v8232 = vpop.permute.xlu0 %8231
      %8233 = vrot.lane.b32.xlu0 %v8174, 80
      %v8234 = vpop.permute.xlu0 %8233
      %8235 = vrot.lane.b32.xlu0 %v8175, 80
      %v8236 = vpop.permute.xlu0 %8235
      %8237 = vrot.lane.b32.xlu0 %v8176, 80
      %v8238 = vpop.permute.xlu0 %8237
      %8239 = vrot.lane.b32.xlu0 %v8177, 80
      %v8240 = vpop.permute.xlu0 %8239
      %8241 = vrot.lane.b32.xlu0 %v8178, 80
      %v8242 = vpop.permute.xlu0 %8241
      %8275 = vst.msk [vmem:[#allocation7] sm:$0xf] %vm5371, %v8180
      %8276 = vst.msk [vmem:[#allocation7 + $0x8] sm:$0xf] %vm5371, %v8182
      %8277 = vst.msk [vmem:[#allocation7 + $0x10] sm:$0xf] %vm5371, %v8184
      %8278 = vst.msk [vmem:[#allocation7 + $0x18] sm:$0xf] %vm5371, %v8186
      %8279 = vst.msk [vmem:[#allocation7 + $0x20] sm:$0xf] %vm5371, %v8188
      %8280 = vst.msk [vmem:[#allocation7 + $0x28] sm:$0xf] %vm5371, %v8190
      %8281 = vst.msk [vmem:[#allocation7 + $0x30] sm:$0xf] %vm5371, %v8192
      %8282 = vst.msk [vmem:[#allocation7 + $0x38] sm:$0xf] %vm5371, %v8194
      %8283 = vst.msk [vmem:[#allocation7 + $0x40] sm:$0xf] %vm5371, %v8196
      %8284 = vst.msk [vmem:[#allocation7 + $0x48] sm:$0xf] %vm5371, %v8198
      %8285 = vst.msk [vmem:[#allocation7 + $0x50] sm:$0xf] %vm5371, %v8200
      %8286 = vst.msk [vmem:[#allocation7 + $0x58] sm:$0xf] %vm5371, %v8202
      %8287 = vst.msk [vmem:[#allocation7 + $0x60] sm:$0xf] %vm5371, %v8204
      %8288 = vst.msk [vmem:[#allocation7 + $0x68] sm:$0xf] %vm5371, %v8206
      %8289 = vst.msk [vmem:[#allocation7 + $0x70] sm:$0xf] %vm5371, %v8208
      %8290 = vst.msk [vmem:[#allocation7 + $0x78] sm:$0xf] %vm5371, %v8210
      %8291 = vst.msk [vmem:[#allocation7 + $0x80] sm:$0xf] %vm5371, %v8212
      %8292 = vst.msk [vmem:[#allocation7 + $0x88] sm:$0xf] %vm5371, %v8214
      %8293 = vst.msk [vmem:[#allocation7 + $0x90] sm:$0xf] %vm5371, %v8216
      %8294 = vst.msk [vmem:[#allocation7 + $0x98] sm:$0xf] %vm5371, %v8218
      %8295 = vst.msk [vmem:[#allocation7 + $0xa0] sm:$0xf] %vm5371, %v8220
      %8296 = vst.msk [vmem:[#allocation7 + $0xa8] sm:$0xf] %vm5371, %v8222
      %8297 = vst.msk [vmem:[#allocation7 + $0xb0] sm:$0xf] %vm5371, %v8224
      %8298 = vst.msk [vmem:[#allocation7 + $0xb8] sm:$0xf] %vm5371, %v8226
      %8299 = vst.msk [vmem:[#allocation7 + $0xc0] sm:$0xf] %vm5371, %v8228
      %8300 = vst.msk [vmem:[#allocation7 + $0xc8] sm:$0xf] %vm5371, %v8230
      %8301 = vst.msk [vmem:[#allocation7 + $0xd0] sm:$0xf] %vm5371, %v8232
      %8302 = vst.msk [vmem:[#allocation7 + $0xd8] sm:$0xf] %vm5371, %v8234
      %8303 = vst.msk [vmem:[#allocation7 + $0xe0] sm:$0xf] %vm5371, %v8236
      %8304 = vst.msk [vmem:[#allocation7 + $0xe8] sm:$0xf] %vm5371, %v8238
      %8305 = vst.msk [vmem:[#allocation7 + $0xf0] sm:$0xf] %vm5371, %v8240
      %8306 = vst.msk [vmem:[#allocation7 + $0xf8] sm:$0xf] %vm5371, %v8242
      %v8307 = vld [vmem:[#allocation4 + $0x27] sm:$0xff]
      %v8308 = vld [vmem:[#allocation4 + $0x2f] sm:$0xff]
      %v8309 = vld [vmem:[#allocation4 + $0x37] sm:$0xff]
      %v8310 = vld [vmem:[#allocation4 + $0x3f] sm:$0xff]
      %v8311 = vld [vmem:[#allocation4 + $0x47] sm:$0xff]
      %v8312 = vld [vmem:[#allocation4 + $0x4f] sm:$0xff]
      %v8313 = vld [vmem:[#allocation4 + $0x57] sm:$0xff]
      %v8314 = vld [vmem:[#allocation4 + $0x5f] sm:$0xff]
      %v8315 = vld [vmem:[#allocation4 + $0x67] sm:$0xff]
      %v8316 = vld [vmem:[#allocation4 + $0x6f] sm:$0xff]
      %v8317 = vld [vmem:[#allocation4 + $0x77] sm:$0xff]
      %v8318 = vld [vmem:[#allocation4 + $0x7f] sm:$0xff]
      %v8319 = vld [vmem:[#allocation4 + $0x87] sm:$0xff]
      %v8320 = vld [vmem:[#allocation4 + $0x8f] sm:$0xff]
      %v8321 = vld [vmem:[#allocation4 + $0x97] sm:$0xff]
      %v8322 = vld [vmem:[#allocation4 + $0x9f] sm:$0xff]
      %v8323 = vld [vmem:[#allocation4 + $0xa7] sm:$0xff]
      %v8324 = vld [vmem:[#allocation4 + $0xaf] sm:$0xff]
      %v8325 = vld [vmem:[#allocation4 + $0xb7] sm:$0xff]
      %v8326 = vld [vmem:[#allocation4 + $0xbf] sm:$0xff]
      %v8327 = vld [vmem:[#allocation4 + $0xc7] sm:$0xff]
      %v8328 = vld [vmem:[#allocation4 + $0xcf] sm:$0xff]
      %v8329 = vld [vmem:[#allocation4 + $0xd7] sm:$0xff]
      %v8330 = vld [vmem:[#allocation4 + $0xdf] sm:$0xff]
      %v8331 = vld [vmem:[#allocation4 + $0xe7] sm:$0xff]
      %v8332 = vld [vmem:[#allocation4 + $0xef] sm:$0xff]
      %v8333 = vld [vmem:[#allocation4 + $0xf7] sm:$0xff]
      %v8334 = vld [vmem:[#allocation4 + $0xff] sm:$0xff]
      %v8335 = vld [vmem:[#allocation4 + $0x107] sm:$0xff]
      %v8336 = vld [vmem:[#allocation4 + $0x10f] sm:$0xff]
      %v8337 = vld [vmem:[#allocation4 + $0x117] sm:$0xff]
      %v8338 = vld [vmem:[#allocation4 + $0x11f] sm:$0xff]
      %v8339 = vsel %vm855, %v8307, 0.0
      %v8340 = vsel %vm856, %v8308, 0.0
      %v8341 = vsel %vm857, %v8309, 0.0
      %v8342 = vsel %vm858, %v8310, 0.0
      %v8343 = vsel %vm859, %v8311, 0.0
      %v8344 = vsel %vm860, %v8312, 0.0
      %v8345 = vsel %vm861, %v8313, 0.0
      %v8346 = vsel %vm862, %v8314, 0.0
      %v8347 = vsel %vm863, %v8315, 0.0
      %v8348 = vsel %vm864, %v8316, 0.0
      %v8349 = vsel %vm865, %v8317, 0.0
      %v8350 = vsel %vm866, %v8318, 0.0
      %v8351 = vsel %vm867, %v8319, 0.0
      %v8352 = vsel %vm868, %v8320, 0.0
      %v8353 = vsel %vm869, %v8321, 0.0
      %v8354 = vsel %vm870, %v8322, 0.0
      %v8355 = vsel %vm871, %v8323, 0.0
      %v8356 = vsel %vm872, %v8324, 0.0
      %v8357 = vsel %vm873, %v8325, 0.0
      %v8358 = vsel %vm874, %v8326, 0.0
      %v8359 = vsel %vm875, %v8327, 0.0
      %v8360 = vsel %vm876, %v8328, 0.0
      %v8361 = vsel %vm877, %v8329, 0.0
      %v8362 = vsel %vm878, %v8330, 0.0
      %v8363 = vsel %vm879, %v8331, 0.0
      %v8364 = vsel %vm880, %v8332, 0.0
      %v8365 = vsel %vm881, %v8333, 0.0
      %v8366 = vsel %vm882, %v8334, 0.0
      %v8367 = vsel %vm883, %v8335, 0.0
      %v8368 = vsel %vm884, %v8336, 0.0
      %v8369 = vsel %vm885, %v8337, 0.0
      %v8370 = vsel %vm886, %v8338, 0.0
      %v8371 = vpack.c.bf16 %v8340, %v8339
      %v8372 = vpack.c.bf16 %v8342, %v8341
      %v8373 = vpack.c.bf16 %v8344, %v8343
      %v8374 = vpack.c.bf16 %v8346, %v8345
      %v8375 = vpack.c.bf16 %v8348, %v8347
      %v8376 = vpack.c.bf16 %v8350, %v8349
      %v8377 = vpack.c.bf16 %v8352, %v8351
      %v8378 = vpack.c.bf16 %v8354, %v8353
      %v8379 = vpack.c.bf16 %v8356, %v8355
      %v8380 = vpack.c.bf16 %v8358, %v8357
      %v8381 = vpack.c.bf16 %v8360, %v8359
      %v8382 = vpack.c.bf16 %v8362, %v8361
      %v8383 = vpack.c.bf16 %v8364, %v8363
      %v8384 = vpack.c.bf16 %v8366, %v8365
      %v8385 = vpack.c.bf16 %v8368, %v8367
      %v8386 = vpack.c.bf16 %v8370, %v8369
      %v8403 = vunpack.c.l.b16 %v8371
      %v8404 = vunpack.c.h.b16 %v8371
      %v8405 = vunpack.c.l.b16 %v8372
      %v8406 = vunpack.c.h.b16 %v8372
      %v8407 = vunpack.c.l.b16 %v8373
      %v8408 = vunpack.c.h.b16 %v8373
      %v8409 = vunpack.c.l.b16 %v8374
      %v8410 = vunpack.c.h.b16 %v8374
      %v8411 = vunpack.c.l.b16 %v8375
      %v8412 = vunpack.c.h.b16 %v8375
      %v8413 = vunpack.c.l.b16 %v8376
      %v8414 = vunpack.c.h.b16 %v8376
      %v8415 = vunpack.c.l.b16 %v8377
      %v8416 = vunpack.c.h.b16 %v8377
      %v8417 = vunpack.c.l.b16 %v8378
      %v8418 = vunpack.c.h.b16 %v8378
      %v8419 = vunpack.c.l.b16 %v8379
      %v8420 = vunpack.c.h.b16 %v8379
      %v8421 = vunpack.c.l.b16 %v8380
      %v8422 = vunpack.c.h.b16 %v8380
      %v8423 = vunpack.c.l.b16 %v8381
      %v8424 = vunpack.c.h.b16 %v8381
      %v8425 = vunpack.c.l.b16 %v8382
      %v8426 = vunpack.c.h.b16 %v8382
      %v8427 = vunpack.c.l.b16 %v8383
      %v8428 = vunpack.c.h.b16 %v8383
      %v8429 = vunpack.c.l.b16 %v8384
      %v8430 = vunpack.c.h.b16 %v8384
      %v8431 = vunpack.c.l.b16 %v8385
      %v8432 = vunpack.c.h.b16 %v8385
      %v8433 = vunpack.c.l.b16 %v8386
      %v8434 = vunpack.c.h.b16 %v8386
      %v8435 = vpack.c.b16 %v8403, %v8403
      %v8436 = vpack.c.b16 %v8404, %v8404
      %v8437 = vpack.c.b16 %v8405, %v8405
      %v8438 = vpack.c.b16 %v8406, %v8406
      %v8439 = vpack.c.b16 %v8407, %v8407
      %v8440 = vpack.c.b16 %v8408, %v8408
      %v8441 = vpack.c.b16 %v8409, %v8409
      %v8442 = vpack.c.b16 %v8410, %v8410
      %v8443 = vpack.c.b16 %v8411, %v8411
      %v8444 = vpack.c.b16 %v8412, %v8412
      %v8445 = vpack.c.b16 %v8413, %v8413
      %v8446 = vpack.c.b16 %v8414, %v8414
      %v8447 = vpack.c.b16 %v8415, %v8415
      %v8448 = vpack.c.b16 %v8416, %v8416
      %v8449 = vpack.c.b16 %v8417, %v8417
      %v8450 = vpack.c.b16 %v8418, %v8418
      %v8451 = vpack.c.b16 %v8419, %v8419
      %v8452 = vpack.c.b16 %v8420, %v8420
      %v8453 = vpack.c.b16 %v8421, %v8421
      %v8454 = vpack.c.b16 %v8422, %v8422
      %v8455 = vpack.c.b16 %v8423, %v8423
      %v8456 = vpack.c.b16 %v8424, %v8424
      %v8457 = vpack.c.b16 %v8425, %v8425
      %v8458 = vpack.c.b16 %v8426, %v8426
      %v8459 = vpack.c.b16 %v8427, %v8427
      %v8460 = vpack.c.b16 %v8428, %v8428
      %v8461 = vpack.c.b16 %v8429, %v8429
      %v8462 = vpack.c.b16 %v8430, %v8430
      %v8463 = vpack.c.b16 %v8431, %v8431
      %v8464 = vpack.c.b16 %v8432, %v8432
      %v8465 = vpack.c.b16 %v8433, %v8433
      %v8466 = vpack.c.b16 %v8434, %v8434
      %8467 = vrot.lane.b32.xlu0 %v8435, 96
      %v8468 = vpop.permute.xlu0 %8467
      %8469 = vrot.lane.b32.xlu0 %v8436, 96
      %v8470 = vpop.permute.xlu0 %8469
      %8471 = vrot.lane.b32.xlu0 %v8437, 96
      %v8472 = vpop.permute.xlu0 %8471
      %8473 = vrot.lane.b32.xlu0 %v8438, 96
      %v8474 = vpop.permute.xlu0 %8473
      %8475 = vrot.lane.b32.xlu0 %v8439, 96
      %v8476 = vpop.permute.xlu0 %8475
      %8477 = vrot.lane.b32.xlu0 %v8440, 96
      %v8478 = vpop.permute.xlu0 %8477
      %8479 = vrot.lane.b32.xlu0 %v8441, 96
      %v8480 = vpop.permute.xlu0 %8479
      %8481 = vrot.lane.b32.xlu0 %v8442, 96
      %v8482 = vpop.permute.xlu0 %8481
      %8483 = vrot.lane.b32.xlu0 %v8443, 96
      %v8484 = vpop.permute.xlu0 %8483
      %8485 = vrot.lane.b32.xlu0 %v8444, 96
      %v8486 = vpop.permute.xlu0 %8485
      %8487 = vrot.lane.b32.xlu0 %v8445, 96
      %v8488 = vpop.permute.xlu0 %8487
      %8489 = vrot.lane.b32.xlu0 %v8446, 96
      %v8490 = vpop.permute.xlu0 %8489
      %8491 = vrot.lane.b32.xlu0 %v8447, 96
      %v8492 = vpop.permute.xlu0 %8491
      %8493 = vrot.lane.b32.xlu0 %v8448, 96
      %v8494 = vpop.permute.xlu0 %8493
      %8495 = vrot.lane.b32.xlu0 %v8449, 96
      %v8496 = vpop.permute.xlu0 %8495
      %8497 = vrot.lane.b32.xlu0 %v8450, 96
      %v8498 = vpop.permute.xlu0 %8497
      %8499 = vrot.lane.b32.xlu0 %v8451, 96
      %v8500 = vpop.permute.xlu0 %8499
      %8501 = vrot.lane.b32.xlu0 %v8452, 96
      %v8502 = vpop.permute.xlu0 %8501
      %8503 = vrot.lane.b32.xlu0 %v8453, 96
      %v8504 = vpop.permute.xlu0 %8503
      %8505 = vrot.lane.b32.xlu0 %v8454, 96
      %v8506 = vpop.permute.xlu0 %8505
      %8507 = vrot.lane.b32.xlu0 %v8455, 96
      %v8508 = vpop.permute.xlu0 %8507
      %8509 = vrot.lane.b32.xlu0 %v8456, 96
      %v8510 = vpop.permute.xlu0 %8509
      %8511 = vrot.lane.b32.xlu0 %v8457, 96
      %v8512 = vpop.permute.xlu0 %8511
      %8513 = vrot.lane.b32.xlu0 %v8458, 96
      %v8514 = vpop.permute.xlu0 %8513
      %8515 = vrot.lane.b32.xlu0 %v8459, 96
      %v8516 = vpop.permute.xlu0 %8515
      %8517 = vrot.lane.b32.xlu0 %v8460, 96
      %v8518 = vpop.permute.xlu0 %8517
      %8519 = vrot.lane.b32.xlu0 %v8461, 96
      %v8520 = vpop.permute.xlu0 %8519
      %8521 = vrot.lane.b32.xlu0 %v8462, 96
      %v8522 = vpop.permute.xlu0 %8521
      %8523 = vrot.lane.b32.xlu0 %v8463, 96
      %v8524 = vpop.permute.xlu0 %8523
      %8525 = vrot.lane.b32.xlu0 %v8464, 96
      %v8526 = vpop.permute.xlu0 %8525
      %8527 = vrot.lane.b32.xlu0 %v8465, 96
      %v8528 = vpop.permute.xlu0 %8527
      %8529 = vrot.lane.b32.xlu0 %v8466, 96
      %v8530 = vpop.permute.xlu0 %8529
      %8563 = vst.msk [vmem:[#allocation7] sm:$0xf] %vm5660, %v8468
      %8564 = vst.msk [vmem:[#allocation7 + $0x8] sm:$0xf] %vm5660, %v8470
      %8565 = vst.msk [vmem:[#allocation7 + $0x10] sm:$0xf] %vm5660, %v8472
      %8566 = vst.msk [vmem:[#allocation7 + $0x18] sm:$0xf] %vm5660, %v8474
      %8567 = vst.msk [vmem:[#allocation7 + $0x20] sm:$0xf] %vm5660, %v8476
      %8568 = vst.msk [vmem:[#allocation7 + $0x28] sm:$0xf] %vm5660, %v8478
      %8569 = vst.msk [vmem:[#allocation7 + $0x30] sm:$0xf] %vm5660, %v8480
      %8570 = vst.msk [vmem:[#allocation7 + $0x38] sm:$0xf] %vm5660, %v8482
      %8571 = vst.msk [vmem:[#allocation7 + $0x40] sm:$0xf] %vm5660, %v8484
      %8572 = vst.msk [vmem:[#allocation7 + $0x48] sm:$0xf] %vm5660, %v8486
      %8573 = vst.msk [vmem:[#allocation7 + $0x50] sm:$0xf] %vm5660, %v8488
      %8574 = vst.msk [vmem:[#allocation7 + $0x58] sm:$0xf] %vm5660, %v8490
      %8575 = vst.msk [vmem:[#allocation7 + $0x60] sm:$0xf] %vm5660, %v8492
      %8576 = vst.msk [vmem:[#allocation7 + $0x68] sm:$0xf] %vm5660, %v8494
      %8577 = vst.msk [vmem:[#allocation7 + $0x70] sm:$0xf] %vm5660, %v8496
      %8578 = vst.msk [vmem:[#allocation7 + $0x78] sm:$0xf] %vm5660, %v8498
      %8579 = vst.msk [vmem:[#allocation7 + $0x80] sm:$0xf] %vm5660, %v8500
      %8580 = vst.msk [vmem:[#allocation7 + $0x88] sm:$0xf] %vm5660, %v8502
      %8581 = vst.msk [vmem:[#allocation7 + $0x90] sm:$0xf] %vm5660, %v8504
      %8582 = vst.msk [vmem:[#allocation7 + $0x98] sm:$0xf] %vm5660, %v8506
      %8583 = vst.msk [vmem:[#allocation7 + $0xa0] sm:$0xf] %vm5660, %v8508
      %8584 = vst.msk [vmem:[#allocation7 + $0xa8] sm:$0xf] %vm5660, %v8510
      %8585 = vst.msk [vmem:[#allocation7 + $0xb0] sm:$0xf] %vm5660, %v8512
      %8586 = vst.msk [vmem:[#allocation7 + $0xb8] sm:$0xf] %vm5660, %v8514
      %8587 = vst.msk [vmem:[#allocation7 + $0xc0] sm:$0xf] %vm5660, %v8516
      %8588 = vst.msk [vmem:[#allocation7 + $0xc8] sm:$0xf] %vm5660, %v8518
      %8589 = vst.msk [vmem:[#allocation7 + $0xd0] sm:$0xf] %vm5660, %v8520
      %8590 = vst.msk [vmem:[#allocation7 + $0xd8] sm:$0xf] %vm5660, %v8522
      %8591 = vst.msk [vmem:[#allocation7 + $0xe0] sm:$0xf] %vm5660, %v8524
      %8592 = vst.msk [vmem:[#allocation7 + $0xe8] sm:$0xf] %vm5660, %v8526
      %8593 = vst.msk [vmem:[#allocation7 + $0xf0] sm:$0xf] %vm5660, %v8528
      %8594 = vst.msk [vmem:[#allocation7 + $0xf8] sm:$0xf] %vm5660, %v8530
      %v8595 = vld [vmem:[#allocation4 + $0x28] sm:$0xff]
      %v8596 = vld [vmem:[#allocation4 + $0x30] sm:$0xff]
      %v8597 = vld [vmem:[#allocation4 + $0x38] sm:$0xff]
      %v8598 = vld [vmem:[#allocation4 + $0x40] sm:$0xff]
      %v8599 = vld [vmem:[#allocation4 + $0x48] sm:$0xff]
      %v8600 = vld [vmem:[#allocation4 + $0x50] sm:$0xff]
      %v8601 = vld [vmem:[#allocation4 + $0x58] sm:$0xff]
      %v8602 = vld [vmem:[#allocation4 + $0x60] sm:$0xff]
      %v8603 = vld [vmem:[#allocation4 + $0x68] sm:$0xff]
      %v8604 = vld [vmem:[#allocation4 + $0x70] sm:$0xff]
      %v8605 = vld [vmem:[#allocation4 + $0x78] sm:$0xff]
      %v8606 = vld [vmem:[#allocation4 + $0x80] sm:$0xff]
      %v8607 = vld [vmem:[#allocation4 + $0x88] sm:$0xff]
      %v8608 = vld [vmem:[#allocation4 + $0x90] sm:$0xff]
      %v8609 = vld [vmem:[#allocation4 + $0x98] sm:$0xff]
      %v8610 = vld [vmem:[#allocation4 + $0xa0] sm:$0xff]
      %v8611 = vld [vmem:[#allocation4 + $0xa8] sm:$0xff]
      %v8612 = vld [vmem:[#allocation4 + $0xb0] sm:$0xff]
      %v8613 = vld [vmem:[#allocation4 + $0xb8] sm:$0xff]
      %v8614 = vld [vmem:[#allocation4 + $0xc0] sm:$0xff]
      %v8615 = vld [vmem:[#allocation4 + $0xc8] sm:$0xff]
      %v8616 = vld [vmem:[#allocation4 + $0xd0] sm:$0xff]
      %v8617 = vld [vmem:[#allocation4 + $0xd8] sm:$0xff]
      %v8618 = vld [vmem:[#allocation4 + $0xe0] sm:$0xff]
      %v8619 = vld [vmem:[#allocation4 + $0xe8] sm:$0xff]
      %v8620 = vld [vmem:[#allocation4 + $0xf0] sm:$0xff]
      %v8621 = vld [vmem:[#allocation4 + $0xf8] sm:$0xff]
      %v8622 = vld [vmem:[#allocation4 + $0x100] sm:$0xff]
      %v8623 = vld [vmem:[#allocation4 + $0x108] sm:$0xff]
      %v8624 = vld [vmem:[#allocation4 + $0x110] sm:$0xff]
      %v8625 = vld [vmem:[#allocation4 + $0x118] sm:$0xff]
      %v8626 = vld [vmem:[#allocation4 + $0x120] sm:$0xff]
      %v8627 = vpack.c.bf16 %v8596, %v8595
      %v8628 = vpack.c.bf16 %v8598, %v8597
      %v8629 = vpack.c.bf16 %v8600, %v8599
      %v8630 = vpack.c.bf16 %v8602, %v8601
      %v8631 = vpack.c.bf16 %v8604, %v8603
      %v8632 = vpack.c.bf16 %v8606, %v8605
      %v8633 = vpack.c.bf16 %v8608, %v8607
      %v8634 = vpack.c.bf16 %v8610, %v8609
      %v8635 = vpack.c.bf16 %v8612, %v8611
      %v8636 = vpack.c.bf16 %v8614, %v8613
      %v8637 = vpack.c.bf16 %v8616, %v8615
      %v8638 = vpack.c.bf16 %v8618, %v8617
      %v8639 = vpack.c.bf16 %v8620, %v8619
      %v8640 = vpack.c.bf16 %v8622, %v8621
      %v8641 = vpack.c.bf16 %v8624, %v8623
      %v8642 = vpack.c.bf16 %v8626, %v8625
      %v8659 = vunpack.c.l.b16 %v8627
      %v8660 = vunpack.c.h.b16 %v8627
      %v8661 = vunpack.c.l.b16 %v8628
      %v8662 = vunpack.c.h.b16 %v8628
      %v8663 = vunpack.c.l.b16 %v8629
      %v8664 = vunpack.c.h.b16 %v8629
      %v8665 = vunpack.c.l.b16 %v8630
      %v8666 = vunpack.c.h.b16 %v8630
      %v8667 = vunpack.c.l.b16 %v8631
      %v8668 = vunpack.c.h.b16 %v8631
      %v8669 = vunpack.c.l.b16 %v8632
      %v8670 = vunpack.c.h.b16 %v8632
      %v8671 = vunpack.c.l.b16 %v8633
      %v8672 = vunpack.c.h.b16 %v8633
      %v8673 = vunpack.c.l.b16 %v8634
      %v8674 = vunpack.c.h.b16 %v8634
      %v8675 = vunpack.c.l.b16 %v8635
      %v8676 = vunpack.c.h.b16 %v8635
      %v8677 = vunpack.c.l.b16 %v8636
      %v8678 = vunpack.c.h.b16 %v8636
      %v8679 = vunpack.c.l.b16 %v8637
      %v8680 = vunpack.c.h.b16 %v8637
      %v8681 = vunpack.c.l.b16 %v8638
      %v8682 = vunpack.c.h.b16 %v8638
      %v8683 = vunpack.c.l.b16 %v8639
      %v8684 = vunpack.c.h.b16 %v8639
      %v8685 = vunpack.c.l.b16 %v8640
      %v8686 = vunpack.c.h.b16 %v8640
      %v8687 = vunpack.c.l.b16 %v8641
      %v8688 = vunpack.c.h.b16 %v8641
      %v8689 = vunpack.c.l.b16 %v8642
      %v8690 = vunpack.c.h.b16 %v8642
      %v8691 = vpack.c.b16 %v8659, %v8659
      %v8692 = vpack.c.b16 %v8660, %v8660
      %v8693 = vpack.c.b16 %v8661, %v8661
      %v8694 = vpack.c.b16 %v8662, %v8662
      %v8695 = vpack.c.b16 %v8663, %v8663
      %v8696 = vpack.c.b16 %v8664, %v8664
      %v8697 = vpack.c.b16 %v8665, %v8665
      %v8698 = vpack.c.b16 %v8666, %v8666
      %v8699 = vpack.c.b16 %v8667, %v8667
      %v8700 = vpack.c.b16 %v8668, %v8668
      %v8701 = vpack.c.b16 %v8669, %v8669
      %v8702 = vpack.c.b16 %v8670, %v8670
      %v8703 = vpack.c.b16 %v8671, %v8671
      %v8704 = vpack.c.b16 %v8672, %v8672
      %v8705 = vpack.c.b16 %v8673, %v8673
      %v8706 = vpack.c.b16 %v8674, %v8674
      %v8707 = vpack.c.b16 %v8675, %v8675
      %v8708 = vpack.c.b16 %v8676, %v8676
      %v8709 = vpack.c.b16 %v8677, %v8677
      %v8710 = vpack.c.b16 %v8678, %v8678
      %v8711 = vpack.c.b16 %v8679, %v8679
      %v8712 = vpack.c.b16 %v8680, %v8680
      %v8713 = vpack.c.b16 %v8681, %v8681
      %v8714 = vpack.c.b16 %v8682, %v8682
      %v8715 = vpack.c.b16 %v8683, %v8683
      %v8716 = vpack.c.b16 %v8684, %v8684
      %v8717 = vpack.c.b16 %v8685, %v8685
      %v8718 = vpack.c.b16 %v8686, %v8686
      %v8719 = vpack.c.b16 %v8687, %v8687
      %v8720 = vpack.c.b16 %v8688, %v8688
      %v8721 = vpack.c.b16 %v8689, %v8689
      %v8722 = vpack.c.b16 %v8690, %v8690
      %8723 = vrot.lane.b32.xlu0 %v8691, 112
      %v8724 = vpop.permute.xlu0 %8723
      %8725 = vrot.lane.b32.xlu0 %v8692, 112
      %v8726 = vpop.permute.xlu0 %8725
      %8727 = vrot.lane.b32.xlu0 %v8693, 112
      %v8728 = vpop.permute.xlu0 %8727
      %8729 = vrot.lane.b32.xlu0 %v8694, 112
      %v8730 = vpop.permute.xlu0 %8729
      %8731 = vrot.lane.b32.xlu0 %v8695, 112
      %v8732 = vpop.permute.xlu0 %8731
      %8733 = vrot.lane.b32.xlu0 %v8696, 112
      %v8734 = vpop.permute.xlu0 %8733
      %8735 = vrot.lane.b32.xlu0 %v8697, 112
      %v8736 = vpop.permute.xlu0 %8735
      %8737 = vrot.lane.b32.xlu0 %v8698, 112
      %v8738 = vpop.permute.xlu0 %8737
      %8739 = vrot.lane.b32.xlu0 %v8699, 112
      %v8740 = vpop.permute.xlu0 %8739
      %8741 = vrot.lane.b32.xlu0 %v8700, 112
      %v8742 = vpop.permute.xlu0 %8741
      %8743 = vrot.lane.b32.xlu0 %v8701, 112
      %v8744 = vpop.permute.xlu0 %8743
      %8745 = vrot.lane.b32.xlu0 %v8702, 112
      %v8746 = vpop.permute.xlu0 %8745
      %8747 = vrot.lane.b32.xlu0 %v8703, 112
      %v8748 = vpop.permute.xlu0 %8747
      %8749 = vrot.lane.b32.xlu0 %v8704, 112
      %v8750 = vpop.permute.xlu0 %8749
      %8751 = vrot.lane.b32.xlu0 %v8705, 112
      %v8752 = vpop.permute.xlu0 %8751
      %8753 = vrot.lane.b32.xlu0 %v8706, 112
      %v8754 = vpop.permute.xlu0 %8753
      %8755 = vrot.lane.b32.xlu0 %v8707, 112
      %v8756 = vpop.permute.xlu0 %8755
      %8757 = vrot.lane.b32.xlu0 %v8708, 112
      %v8758 = vpop.permute.xlu0 %8757
      %8759 = vrot.lane.b32.xlu0 %v8709, 112
      %v8760 = vpop.permute.xlu0 %8759
      %8761 = vrot.lane.b32.xlu0 %v8710, 112
      %v8762 = vpop.permute.xlu0 %8761
      %8763 = vrot.lane.b32.xlu0 %v8711, 112
      %v8764 = vpop.permute.xlu0 %8763
      %8765 = vrot.lane.b32.xlu0 %v8712, 112
      %v8766 = vpop.permute.xlu0 %8765
      %8767 = vrot.lane.b32.xlu0 %v8713, 112
      %v8768 = vpop.permute.xlu0 %8767
      %8769 = vrot.lane.b32.xlu0 %v8714, 112
      %v8770 = vpop.permute.xlu0 %8769
      %8771 = vrot.lane.b32.xlu0 %v8715, 112
      %v8772 = vpop.permute.xlu0 %8771
      %8773 = vrot.lane.b32.xlu0 %v8716, 112
      %v8774 = vpop.permute.xlu0 %8773
      %8775 = vrot.lane.b32.xlu0 %v8717, 112
      %v8776 = vpop.permute.xlu0 %8775
      %8777 = vrot.lane.b32.xlu0 %v8718, 112
      %v8778 = vpop.permute.xlu0 %8777
      %8779 = vrot.lane.b32.xlu0 %v8719, 112
      %v8780 = vpop.permute.xlu0 %8779
      %8781 = vrot.lane.b32.xlu0 %v8720, 112
      %v8782 = vpop.permute.xlu0 %8781
      %8783 = vrot.lane.b32.xlu0 %v8721, 112
      %v8784 = vpop.permute.xlu0 %8783
      %8785 = vrot.lane.b32.xlu0 %v8722, 112
      %v8786 = vpop.permute.xlu0 %8785
      %8819 = vst.msk [vmem:[#allocation7] sm:$0xf] %vm5917, %v8724
      %8820 = vst.msk [vmem:[#allocation7 + $0x8] sm:$0xf] %vm5917, %v8726
      %8821 = vst.msk [vmem:[#allocation7 + $0x10] sm:$0xf] %vm5917, %v8728
      %8822 = vst.msk [vmem:[#allocation7 + $0x18] sm:$0xf] %vm5917, %v8730
      %8823 = vst.msk [vmem:[#allocation7 + $0x20] sm:$0xf] %vm5917, %v8732
      %8824 = vst.msk [vmem:[#allocation7 + $0x28] sm:$0xf] %vm5917, %v8734
      %8825 = vst.msk [vmem:[#allocation7 + $0x30] sm:$0xf] %vm5917, %v8736
      %8826 = vst.msk [vmem:[#allocation7 + $0x38] sm:$0xf] %vm5917, %v8738
      %8827 = vst.msk [vmem:[#allocation7 + $0x40] sm:$0xf] %vm5917, %v8740
      %8828 = vst.msk [vmem:[#allocation7 + $0x48] sm:$0xf] %vm5917, %v8742
      %8829 = vst.msk [vmem:[#allocation7 + $0x50] sm:$0xf] %vm5917, %v8744
      %8830 = vst.msk [vmem:[#allocation7 + $0x58] sm:$0xf] %vm5917, %v8746
      %8831 = vst.msk [vmem:[#allocation7 + $0x60] sm:$0xf] %vm5917, %v8748
      %8832 = vst.msk [vmem:[#allocation7 + $0x68] sm:$0xf] %vm5917, %v8750
      %8833 = vst.msk [vmem:[#allocation7 + $0x70] sm:$0xf] %vm5917, %v8752
      %8834 = vst.msk [vmem:[#allocation7 + $0x78] sm:$0xf] %vm5917, %v8754
      %8835 = vst.msk [vmem:[#allocation7 + $0x80] sm:$0xf] %vm5917, %v8756
      %8836 = vst.msk [vmem:[#allocation7 + $0x88] sm:$0xf] %vm5917, %v8758
      %8837 = vst.msk [vmem:[#allocation7 + $0x90] sm:$0xf] %vm5917, %v8760
      %8838 = vst.msk [vmem:[#allocation7 + $0x98] sm:$0xf] %vm5917, %v8762
      %8839 = vst.msk [vmem:[#allocation7 + $0xa0] sm:$0xf] %vm5917, %v8764
      %8840 = vst.msk [vmem:[#allocation7 + $0xa8] sm:$0xf] %vm5917, %v8766
      %8841 = vst.msk [vmem:[#allocation7 + $0xb0] sm:$0xf] %vm5917, %v8768
      %8842 = vst.msk [vmem:[#allocation7 + $0xb8] sm:$0xf] %vm5917, %v8770
      %8843 = vst.msk [vmem:[#allocation7 + $0xc0] sm:$0xf] %vm5917, %v8772
      %8844 = vst.msk [vmem:[#allocation7 + $0xc8] sm:$0xf] %vm5917, %v8774
      %8845 = vst.msk [vmem:[#allocation7 + $0xd0] sm:$0xf] %vm5917, %v8776
      %8846 = vst.msk [vmem:[#allocation7 + $0xd8] sm:$0xf] %vm5917, %v8778
      %8847 = vst.msk [vmem:[#allocation7 + $0xe0] sm:$0xf] %vm5917, %v8780
      %8848 = vst.msk [vmem:[#allocation7 + $0xe8] sm:$0xf] %vm5917, %v8782
      %8849 = vst.msk [vmem:[#allocation7 + $0xf0] sm:$0xf] %vm5917, %v8784
      %8850 = vst.msk [vmem:[#allocation7 + $0xf8] sm:$0xf] %vm5917, %v8786
      %v8851 = vld [vmem:[#allocation4 + $0x29] sm:$0xff]
      %v8852 = vld [vmem:[#allocation4 + $0x31] sm:$0xff]
      %v8853 = vld [vmem:[#allocation4 + $0x39] sm:$0xff]
      %v8854 = vld [vmem:[#allocation4 + $0x41] sm:$0xff]
      %v8855 = vld [vmem:[#allocation4 + $0x49] sm:$0xff]
      %v8856 = vld [vmem:[#allocation4 + $0x51] sm:$0xff]
      %v8857 = vld [vmem:[#allocation4 + $0x59] sm:$0xff]
      %v8858 = vld [vmem:[#allocation4 + $0x61] sm:$0xff]
      %v8859 = vld [vmem:[#allocation4 + $0x69] sm:$0xff]
      %v8860 = vld [vmem:[#allocation4 + $0x71] sm:$0xff]
      %v8861 = vld [vmem:[#allocation4 + $0x79] sm:$0xff]
      %v8862 = vld [vmem:[#allocation4 + $0x81] sm:$0xff]
      %v8863 = vld [vmem:[#allocation4 + $0x89] sm:$0xff]
      %v8864 = vld [vmem:[#allocation4 + $0x91] sm:$0xff]
      %v8865 = vld [vmem:[#allocation4 + $0x99] sm:$0xff]
      %v8866 = vld [vmem:[#allocation4 + $0xa1] sm:$0xff]
      %v8867 = vld [vmem:[#allocation4 + $0xa9] sm:$0xff]
      %v8868 = vld [vmem:[#allocation4 + $0xb1] sm:$0xff]
      %v8869 = vld [vmem:[#allocation4 + $0xb9] sm:$0xff]
      %v8870 = vld [vmem:[#allocation4 + $0xc1] sm:$0xff]
      %v8871 = vld [vmem:[#allocation4 + $0xc9] sm:$0xff]
      %v8872 = vld [vmem:[#allocation4 + $0xd1] sm:$0xff]
      %v8873 = vld [vmem:[#allocation4 + $0xd9] sm:$0xff]
      %v8874 = vld [vmem:[#allocation4 + $0xe1] sm:$0xff]
      %v8875 = vld [vmem:[#allocation4 + $0xe9] sm:$0xff]
      %v8876 = vld [vmem:[#allocation4 + $0xf1] sm:$0xff]
      %v8877 = vld [vmem:[#allocation4 + $0xf9] sm:$0xff]
      %v8878 = vld [vmem:[#allocation4 + $0x101] sm:$0xff]
      %v8879 = vld [vmem:[#allocation4 + $0x109] sm:$0xff]
      %v8880 = vld [vmem:[#allocation4 + $0x111] sm:$0xff]
      %v8881 = vld [vmem:[#allocation4 + $0x119] sm:$0xff]
      %v8882 = vld [vmem:[#allocation4 + $0x121] sm:$0xff]
      %v8883 = vsel %vm1401, %v8851, 0.0
      %v8884 = vsel %vm1402, %v8852, 0.0
      %v8885 = vsel %vm1403, %v8853, 0.0
      %v8886 = vsel %vm1404, %v8854, 0.0
      %v8887 = vsel %vm1405, %v8855, 0.0
      %v8888 = vsel %vm1406, %v8856, 0.0
      %v8889 = vsel %vm1407, %v8857, 0.0
      %v8890 = vsel %vm1408, %v8858, 0.0
      %v8891 = vsel %vm1409, %v8859, 0.0
      %v8892 = vsel %vm1410, %v8860, 0.0
      %v8893 = vsel %vm1411, %v8861, 0.0
      %v8894 = vsel %vm1412, %v8862, 0.0
      %v8895 = vsel %vm1413, %v8863, 0.0
      %v8896 = vsel %vm1414, %v8864, 0.0
      %v8897 = vsel %vm1415, %v8865, 0.0
      %v8898 = vsel %vm1416, %v8866, 0.0
      %v8899 = vsel %vm1417, %v8867, 0.0
      %v8900 = vsel %vm1418, %v8868, 0.0
      %v8901 = vsel %vm1419, %v8869, 0.0
      %v8902 = vsel %vm1420, %v8870, 0.0
      %v8903 = vsel %vm1421, %v8871, 0.0
      %v8904 = vsel %vm1422, %v8872, 0.0
      %v8905 = vsel %vm1423, %v8873, 0.0
      %v8906 = vsel %vm1424, %v8874, 0.0
      %v8907 = vsel %vm1425, %v8875, 0.0
      %v8908 = vsel %vm1426, %v8876, 0.0
      %v8909 = vsel %vm1427, %v8877, 0.0
      %v8910 = vsel %vm1428, %v8878, 0.0
      %v8911 = vsel %vm1429, %v8879, 0.0
      %v8912 = vsel %vm1430, %v8880, 0.0
      %v8913 = vsel %vm1431, %v8881, 0.0
      %v8914 = vsel %vm1432, %v8882, 0.0
      %v8915 = vpack.c.bf16 %v8884, %v8883
      %v8916 = vpack.c.bf16 %v8886, %v8885
      %v8917 = vpack.c.bf16 %v8888, %v8887
      %v8918 = vpack.c.bf16 %v8890, %v8889
      %v8919 = vpack.c.bf16 %v8892, %v8891
      %v8920 = vpack.c.bf16 %v8894, %v8893
      %v8921 = vpack.c.bf16 %v8896, %v8895
      %v8922 = vpack.c.bf16 %v8898, %v8897
      %v8923 = vpack.c.bf16 %v8900, %v8899
      %v8924 = vpack.c.bf16 %v8902, %v8901
      %v8925 = vpack.c.bf16 %v8904, %v8903
      %v8926 = vpack.c.bf16 %v8906, %v8905
      %v8927 = vpack.c.bf16 %v8908, %v8907
      %v8928 = vpack.c.bf16 %v8910, %v8909
      %v8929 = vpack.c.bf16 %v8912, %v8911
      %v8930 = vpack.c.bf16 %v8914, %v8913
      %v8947 = vunpack.c.l.b16 %v8915
      %v8948 = vunpack.c.h.b16 %v8915
      %v8949 = vunpack.c.l.b16 %v8916
      %v8950 = vunpack.c.h.b16 %v8916
      %v8951 = vunpack.c.l.b16 %v8917
      %v8952 = vunpack.c.h.b16 %v8917
      %v8953 = vunpack.c.l.b16 %v8918
      %v8954 = vunpack.c.h.b16 %v8918
      %v8955 = vunpack.c.l.b16 %v8919
      %v8956 = vunpack.c.h.b16 %v8919
      %v8957 = vunpack.c.l.b16 %v8920
      %v8958 = vunpack.c.h.b16 %v8920
      %v8959 = vunpack.c.l.b16 %v8921
      %v8960 = vunpack.c.h.b16 %v8921
      %v8961 = vunpack.c.l.b16 %v8922
      %v8962 = vunpack.c.h.b16 %v8922
      %v8963 = vunpack.c.l.b16 %v8923
      %v8964 = vunpack.c.h.b16 %v8923
      %v8965 = vunpack.c.l.b16 %v8924
      %v8966 = vunpack.c.h.b16 %v8924
      %v8967 = vunpack.c.l.b16 %v8925
      %v8968 = vunpack.c.h.b16 %v8925
      %v8969 = vunpack.c.l.b16 %v8926
      %v8970 = vunpack.c.h.b16 %v8926
      %v8971 = vunpack.c.l.b16 %v8927
      %v8972 = vunpack.c.h.b16 %v8927
      %v8973 = vunpack.c.l.b16 %v8928
      %v8974 = vunpack.c.h.b16 %v8928
      %v8975 = vunpack.c.l.b16 %v8929
      %v8976 = vunpack.c.h.b16 %v8929
      %v8977 = vunpack.c.l.b16 %v8930
      %v8978 = vunpack.c.h.b16 %v8930
      %v8979 = vpack.c.b16 %v8947, %v8947
      %v8980 = vpack.c.b16 %v8948, %v8948
      %v8981 = vpack.c.b16 %v8949, %v8949
      %v8982 = vpack.c.b16 %v8950, %v8950
      %v8983 = vpack.c.b16 %v8951, %v8951
      %v8984 = vpack.c.b16 %v8952, %v8952
      %v8985 = vpack.c.b16 %v8953, %v8953
      %v8986 = vpack.c.b16 %v8954, %v8954
      %v8987 = vpack.c.b16 %v8955, %v8955
      %v8988 = vpack.c.b16 %v8956, %v8956
      %v8989 = vpack.c.b16 %v8957, %v8957
      %v8990 = vpack.c.b16 %v8958, %v8958
      %v8991 = vpack.c.b16 %v8959, %v8959
      %v8992 = vpack.c.b16 %v8960, %v8960
      %v8993 = vpack.c.b16 %v8961, %v8961
      %v8994 = vpack.c.b16 %v8962, %v8962
      %v8995 = vpack.c.b16 %v8963, %v8963
      %v8996 = vpack.c.b16 %v8964, %v8964
      %v8997 = vpack.c.b16 %v8965, %v8965
      %v8998 = vpack.c.b16 %v8966, %v8966
      %v8999 = vpack.c.b16 %v8967, %v8967
      %v9000 = vpack.c.b16 %v8968, %v8968
      %v9001 = vpack.c.b16 %v8969, %v8969
      %v9002 = vpack.c.b16 %v8970, %v8970
      %v9003 = vpack.c.b16 %v8971, %v8971
      %v9004 = vpack.c.b16 %v8972, %v8972
      %v9005 = vpack.c.b16 %v8973, %v8973
      %v9006 = vpack.c.b16 %v8974, %v8974
      %v9007 = vpack.c.b16 %v8975, %v8975
      %v9008 = vpack.c.b16 %v8976, %v8976
      %v9009 = vpack.c.b16 %v8977, %v8977
      %v9010 = vpack.c.b16 %v8978, %v8978
      %9043 = vst.msk [vmem:[#allocation7 + $0x4] sm:$0xf] %vm3990, %v8979
      %9044 = vst.msk [vmem:[#allocation7 + $0xc] sm:$0xf] %vm3990, %v8980
      %9045 = vst.msk [vmem:[#allocation7 + $0x14] sm:$0xf] %vm3990, %v8981
      %9046 = vst.msk [vmem:[#allocation7 + $0x1c] sm:$0xf] %vm3990, %v8982
      %9047 = vst.msk [vmem:[#allocation7 + $0x24] sm:$0xf] %vm3990, %v8983
      %9048 = vst.msk [vmem:[#allocation7 + $0x2c] sm:$0xf] %vm3990, %v8984
      %9049 = vst.msk [vmem:[#allocation7 + $0x34] sm:$0xf] %vm3990, %v8985
      %9050 = vst.msk [vmem:[#allocation7 + $0x3c] sm:$0xf] %vm3990, %v8986
      %9051 = vst.msk [vmem:[#allocation7 + $0x44] sm:$0xf] %vm3990, %v8987
      %9052 = vst.msk [vmem:[#allocation7 + $0x4c] sm:$0xf] %vm3990, %v8988
      %9053 = vst.msk [vmem:[#allocation7 + $0x54] sm:$0xf] %vm3990, %v8989
      %9054 = vst.msk [vmem:[#allocation7 + $0x5c] sm:$0xf] %vm3990, %v8990
      %9055 = vst.msk [vmem:[#allocation7 + $0x64] sm:$0xf] %vm3990, %v8991
      %9056 = vst.msk [vmem:[#allocation7 + $0x6c] sm:$0xf] %vm3990, %v8992
      %9057 = vst.msk [vmem:[#allocation7 + $0x74] sm:$0xf] %vm3990, %v8993
      %9058 = vst.msk [vmem:[#allocation7 + $0x7c] sm:$0xf] %vm3990, %v8994
      %9059 = vst.msk [vmem:[#allocation7 + $0x84] sm:$0xf] %vm3990, %v8995
      %9060 = vst.msk [vmem:[#allocation7 + $0x8c] sm:$0xf] %vm3990, %v8996
      %9061 = vst.msk [vmem:[#allocation7 + $0x94] sm:$0xf] %vm3990, %v8997
      %9062 = vst.msk [vmem:[#allocation7 + $0x9c] sm:$0xf] %vm3990, %v8998
      %9063 = vst.msk [vmem:[#allocation7 + $0xa4] sm:$0xf] %vm3990, %v8999
      %9064 = vst.msk [vmem:[#allocation7 + $0xac] sm:$0xf] %vm3990, %v9000
      %9065 = vst.msk [vmem:[#allocation7 + $0xb4] sm:$0xf] %vm3990, %v9001
      %9066 = vst.msk [vmem:[#allocation7 + $0xbc] sm:$0xf] %vm3990, %v9002
      %9067 = vst.msk [vmem:[#allocation7 + $0xc4] sm:$0xf] %vm3990, %v9003
      %9068 = vst.msk [vmem:[#allocation7 + $0xcc] sm:$0xf] %vm3990, %v9004
      %9069 = vst.msk [vmem:[#allocation7 + $0xd4] sm:$0xf] %vm3990, %v9005
      %9070 = vst.msk [vmem:[#allocation7 + $0xdc] sm:$0xf] %vm3990, %v9006
      %9071 = vst.msk [vmem:[#allocation7 + $0xe4] sm:$0xf] %vm3990, %v9007
      %9072 = vst.msk [vmem:[#allocation7 + $0xec] sm:$0xf] %vm3990, %v9008
      %9073 = vst.msk [vmem:[#allocation7 + $0xf4] sm:$0xf] %vm3990, %v9009
      %9074 = vst.msk [vmem:[#allocation7 + $0xfc] sm:$0xf] %vm3990, %v9010
      %9107 = vrot.lane.b32.xlu0 %v175, 16
      %v9108 = vpop.permute.xlu0 %9107
      %9109 = vrot.lane.b32.xlu0 %v176, 16
      %v9110 = vpop.permute.xlu0 %9109
      %9111 = vrot.lane.b32.xlu0 %v177, 16
      %v9112 = vpop.permute.xlu0 %9111
      %9113 = vrot.lane.b32.xlu0 %v178, 16
      %v9114 = vpop.permute.xlu0 %9113
      %9115 = vrot.lane.b32.xlu0 %v179, 16
      %v9116 = vpop.permute.xlu0 %9115
      %9117 = vrot.lane.b32.xlu0 %v180, 16
      %v9118 = vpop.permute.xlu0 %9117
      %9119 = vrot.lane.b32.xlu0 %v181, 16
      %v9120 = vpop.permute.xlu0 %9119
      %9121 = vrot.lane.b32.xlu0 %v182, 16
      %v9122 = vpop.permute.xlu0 %9121
      %9123 = vrot.lane.b32.xlu0 %v183, 16
      %v9124 = vpop.permute.xlu0 %9123
      %9125 = vrot.lane.b32.xlu0 %v184, 16
      %v9126 = vpop.permute.xlu0 %9125
      %9127 = vrot.lane.b32.xlu0 %v185, 16
      %v9128 = vpop.permute.xlu0 %9127
      %9129 = vrot.lane.b32.xlu0 %v186, 16
      %v9130 = vpop.permute.xlu0 %9129
      %9131 = vrot.lane.b32.xlu0 %v187, 16
      %v9132 = vpop.permute.xlu0 %9131
      %9133 = vrot.lane.b32.xlu0 %v188, 16
      %v9134 = vpop.permute.xlu0 %9133
      %9135 = vrot.lane.b32.xlu0 %v189, 16
      %v9136 = vpop.permute.xlu0 %9135
      %9137 = vrot.lane.b32.xlu0 %v190, 16
      %v9138 = vpop.permute.xlu0 %9137
      %9139 = vrot.lane.b32.xlu0 %v191, 16
      %v9140 = vpop.permute.xlu0 %9139
      %9141 = vrot.lane.b32.xlu0 %v192, 16
      %v9142 = vpop.permute.xlu0 %9141
      %9143 = vrot.lane.b32.xlu0 %v193, 16
      %v9144 = vpop.permute.xlu0 %9143
      %9145 = vrot.lane.b32.xlu0 %v194, 16
      %v9146 = vpop.permute.xlu0 %9145
      %9147 = vrot.lane.b32.xlu0 %v195, 16
      %v9148 = vpop.permute.xlu0 %9147
      %9149 = vrot.lane.b32.xlu0 %v196, 16
      %v9150 = vpop.permute.xlu0 %9149
      %9151 = vrot.lane.b32.xlu0 %v197, 16
      %v9152 = vpop.permute.xlu0 %9151
      %9153 = vrot.lane.b32.xlu0 %v198, 16
      %v9154 = vpop.permute.xlu0 %9153
      %9155 = vrot.lane.b32.xlu0 %v199, 16
      %v9156 = vpop.permute.xlu0 %9155
      %9157 = vrot.lane.b32.xlu0 %v200, 16
      %v9158 = vpop.permute.xlu0 %9157
      %9159 = vrot.lane.b32.xlu0 %v201, 16
      %v9160 = vpop.permute.xlu0 %9159
      %9161 = vrot.lane.b32.xlu0 %v202, 16
      %v9162 = vpop.permute.xlu0 %9161
      %9163 = vrot.lane.b32.xlu0 %v203, 16
      %v9164 = vpop.permute.xlu0 %9163
      %9165 = vrot.lane.b32.xlu0 %v204, 16
      %v9166 = vpop.permute.xlu0 %9165
      %9167 = vrot.lane.b32.xlu0 %v205, 16
      %v9168 = vpop.permute.xlu0 %9167
      %9169 = vrot.lane.b32.xlu0 %v206, 16
      %v9170 = vpop.permute.xlu0 %9169
      %9203 = vst.msk [vmem:[#allocation7 + $0x4] sm:$0xf] %vm1657, %v9108
      %9204 = vst.msk [vmem:[#allocation7 + $0xc] sm:$0xf] %vm1657, %v9110
      %9205 = vst.msk [vmem:[#allocation7 + $0x14] sm:$0xf] %vm1657, %v9112
      %9206 = vst.msk [vmem:[#allocation7 + $0x1c] sm:$0xf] %vm1657, %v9114
      %9207 = vst.msk [vmem:[#allocation7 + $0x24] sm:$0xf] %vm1657, %v9116
      %9208 = vst.msk [vmem:[#allocation7 + $0x2c] sm:$0xf] %vm1657, %v9118
      %9209 = vst.msk [vmem:[#allocation7 + $0x34] sm:$0xf] %vm1657, %v9120
      %9210 = vst.msk [vmem:[#allocation7 + $0x3c] sm:$0xf] %vm1657, %v9122
      %9211 = vst.msk [vmem:[#allocation7 + $0x44] sm:$0xf] %vm1657, %v9124
      %9212 = vst.msk [vmem:[#allocation7 + $0x4c] sm:$0xf] %vm1657, %v9126
      %9213 = vst.msk [vmem:[#allocation7 + $0x54] sm:$0xf] %vm1657, %v9128
      %9214 = vst.msk [vmem:[#allocation7 + $0x5c] sm:$0xf] %vm1657, %v9130
      %9215 = vst.msk [vmem:[#allocation7 + $0x64] sm:$0xf] %vm1657, %v9132
      %9216 = vst.msk [vmem:[#allocation7 + $0x6c] sm:$0xf] %vm1657, %v9134
      %9217 = vst.msk [vmem:[#allocation7 + $0x74] sm:$0xf] %vm1657, %v9136
      %9218 = vst.msk [vmem:[#allocation7 + $0x7c] sm:$0xf] %vm1657, %v9138
      %9219 = vst.msk [vmem:[#allocation7 + $0x84] sm:$0xf] %vm1657, %v9140
      %9220 = vst.msk [vmem:[#allocation7 + $0x8c] sm:$0xf] %vm1657, %v9142
      %9221 = vst.msk [vmem:[#allocation7 + $0x94] sm:$0xf] %vm1657, %v9144
      %9222 = vst.msk [vmem:[#allocation7 + $0x9c] sm:$0xf] %vm1657, %v9146
      %9223 = vst.msk [vmem:[#allocation7 + $0xa4] sm:$0xf] %vm1657, %v9148
      %9224 = vst.msk [vmem:[#allocation7 + $0xac] sm:$0xf] %vm1657, %v9150
      %9225 = vst.msk [vmem:[#allocation7 + $0xb4] sm:$0xf] %vm1657, %v9152
      %9226 = vst.msk [vmem:[#allocation7 + $0xbc] sm:$0xf] %vm1657, %v9154
      %9227 = vst.msk [vmem:[#allocation7 + $0xc4] sm:$0xf] %vm1657, %v9156
      %9228 = vst.msk [vmem:[#allocation7 + $0xcc] sm:$0xf] %vm1657, %v9158
      %9229 = vst.msk [vmem:[#allocation7 + $0xd4] sm:$0xf] %vm1657, %v9160
      %9230 = vst.msk [vmem:[#allocation7 + $0xdc] sm:$0xf] %vm1657, %v9162
      %9231 = vst.msk [vmem:[#allocation7 + $0xe4] sm:$0xf] %vm1657, %v9164
      %9232 = vst.msk [vmem:[#allocation7 + $0xec] sm:$0xf] %vm1657, %v9166
      %9233 = vst.msk [vmem:[#allocation7 + $0xf4] sm:$0xf] %vm1657, %v9168
      %9234 = vst.msk [vmem:[#allocation7 + $0xfc] sm:$0xf] %vm1657, %v9170
      %s9235 = scalar_lea.vmem %s1, 152
      %v9236 = vld [vmem:[%s9235] sm:$0xf]
      %v9237 = vld [vmem:[%s9235 + $0x4] sm:$0xf]
      %v9238 = vld [vmem:[%s9235 + $0x8] sm:$0xf]
      %v9239 = vld [vmem:[%s9235 + $0xc] sm:$0xf]
      %v9240 = vld [vmem:[%s9235 + $0x10] sm:$0xf]
      %v9241 = vld [vmem:[%s9235 + $0x14] sm:$0xf]
      %v9242 = vld [vmem:[%s9235 + $0x18] sm:$0xf]
      %v9243 = vld [vmem:[%s9235 + $0x1c] sm:$0xf]
      %v9244 = vld [vmem:[%s9235 + $0x20] sm:$0xf]
      %v9245 = vld [vmem:[%s9235 + $0x24] sm:$0xf]
      %v9246 = vld [vmem:[%s9235 + $0x28] sm:$0xf]
      %v9247 = vld [vmem:[%s9235 + $0x2c] sm:$0xf]
      %v9248 = vld [vmem:[%s9235 + $0x30] sm:$0xf]
      %v9249 = vld [vmem:[%s9235 + $0x34] sm:$0xf]
      %v9250 = vld [vmem:[%s9235 + $0x38] sm:$0xf]
      %v9251 = vld [vmem:[%s9235 + $0x3c] sm:$0xf]
      %v9252 = vld [vmem:[%s9235 + $0x40] sm:$0xf]
      %v9253 = vld [vmem:[%s9235 + $0x44] sm:$0xf]
      %v9254 = vld [vmem:[%s9235 + $0x48] sm:$0xf]
      %v9255 = vld [vmem:[%s2 + $0x2] sm:$0x1]
      %v9256 = vld [vmem:[#allocation7] sm:$0xff]
      %v9257 = vld [vmem:[#allocation7 + $0x8] sm:$0xff]
      %v9258 = vld [vmem:[#allocation7 + $0x10] sm:$0xff]
      %v9259 = vld [vmem:[#allocation7 + $0x18] sm:$0xff]
      %v9260 = vld [vmem:[#allocation7 + $0x20] sm:$0xff]
      %v9261 = vld [vmem:[#allocation7 + $0x28] sm:$0xff]
      %v9262 = vld [vmem:[#allocation7 + $0x30] sm:$0xff]
      %v9263 = vld [vmem:[#allocation7 + $0x38] sm:$0xff]
      %v9264 = vld [vmem:[#allocation7 + $0x40] sm:$0xff]
      %v9265 = vld [vmem:[#allocation7 + $0x48] sm:$0xff]
      %v9266 = vld [vmem:[#allocation7 + $0x50] sm:$0xff]
      %v9267 = vld [vmem:[#allocation7 + $0x58] sm:$0xff]
      %v9268 = vld [vmem:[#allocation7 + $0x60] sm:$0xff]
      %v9269 = vld [vmem:[#allocation7 + $0x68] sm:$0xff]
      %v9270 = vld [vmem:[#allocation7 + $0x70] sm:$0xff]
      %v9271 = vld [vmem:[#allocation7 + $0x78] sm:$0xff]
      %v9272 = vld [vmem:[#allocation7 + $0x80] sm:$0xff]
      %v9273 = vld [vmem:[#allocation7 + $0x88] sm:$0xff]
      %v9274 = vld [vmem:[#allocation7 + $0x90] sm:$0xff]
      %v9275 = vld [vmem:[#allocation7 + $0x98] sm:$0xff]
      %v9276 = vld [vmem:[#allocation7 + $0xa0] sm:$0xff]
      %v9277 = vld [vmem:[#allocation7 + $0xa8] sm:$0xff]
      %v9278 = vld [vmem:[#allocation7 + $0xb0] sm:$0xff]
      %v9279 = vld [vmem:[#allocation7 + $0xb8] sm:$0xff]
      %v9280 = vld [vmem:[#allocation7 + $0xc0] sm:$0xff]
      %v9281 = vld [vmem:[#allocation7 + $0xc8] sm:$0xff]
      %v9282 = vld [vmem:[#allocation7 + $0xd0] sm:$0xff]
      %v9283 = vld [vmem:[#allocation7 + $0xd8] sm:$0xff]
      %v9284 = vld [vmem:[#allocation7 + $0xe0] sm:$0xff]
      %v9285 = vld [vmem:[#allocation7 + $0xe8] sm:$0xff]
      %v9286 = vld [vmem:[#allocation7 + $0xf0] sm:$0xff]
      %v9287 = vld [vmem:[#allocation7 + $0xf8] sm:$0xff]
      %v9288 = vlaneseq
      %v9289 = vshrl.u32 %v9288, 7
      %v9290 = vsub.s32 0, %v9289
      %v9291 = vrot.slane %v9255, %v9290
      %v9324 = vunpack.c.l.b16 %v9256
      %v9325 = vunpack.c.h.b16 %v9256
      %v9326 = vunpack.c.l.b16 %v9257
      %v9327 = vunpack.c.h.b16 %v9257
      %v9328 = vunpack.c.l.b16 %v9258
      %v9329 = vunpack.c.h.b16 %v9258
      %v9330 = vunpack.c.l.b16 %v9259
      %v9331 = vunpack.c.h.b16 %v9259
      %v9332 = vunpack.c.l.b16 %v9260
      %v9333 = vunpack.c.h.b16 %v9260
      %v9334 = vunpack.c.l.b16 %v9261
      %v9335 = vunpack.c.h.b16 %v9261
      %v9336 = vunpack.c.l.b16 %v9262
      %v9337 = vunpack.c.h.b16 %v9262
      %v9338 = vunpack.c.l.b16 %v9263
      %v9339 = vunpack.c.h.b16 %v9263
      %v9340 = vunpack.c.l.b16 %v9264
      %v9341 = vunpack.c.h.b16 %v9264
      %v9342 = vunpack.c.l.b16 %v9265
      %v9343 = vunpack.c.h.b16 %v9265
      %v9344 = vunpack.c.l.b16 %v9266
      %v9345 = vunpack.c.h.b16 %v9266
      %v9346 = vunpack.c.l.b16 %v9267
      %v9347 = vunpack.c.h.b16 %v9267
      %v9348 = vunpack.c.l.b16 %v9268
      %v9349 = vunpack.c.h.b16 %v9268
      %v9350 = vunpack.c.l.b16 %v9269
      %v9351 = vunpack.c.h.b16 %v9269
      %v9352 = vunpack.c.l.b16 %v9270
      %v9353 = vunpack.c.h.b16 %v9270
      %v9354 = vunpack.c.l.b16 %v9271
      %v9355 = vunpack.c.h.b16 %v9271
      %v9356 = vunpack.c.l.b16 %v9272
      %v9357 = vunpack.c.h.b16 %v9272
      %v9358 = vunpack.c.l.b16 %v9273
      %v9359 = vunpack.c.h.b16 %v9273
      %v9360 = vunpack.c.l.b16 %v9274
      %v9361 = vunpack.c.h.b16 %v9274
      %v9362 = vunpack.c.l.b16 %v9275
      %v9363 = vunpack.c.h.b16 %v9275
      %v9364 = vunpack.c.l.b16 %v9276
      %v9365 = vunpack.c.h.b16 %v9276
      %v9366 = vunpack.c.l.b16 %v9277
      %v9367 = vunpack.c.h.b16 %v9277
      %v9368 = vunpack.c.l.b16 %v9278
      %v9369 = vunpack.c.h.b16 %v9278
      %v9370 = vunpack.c.l.b16 %v9279
      %v9371 = vunpack.c.h.b16 %v9279
      %v9372 = vunpack.c.l.b16 %v9280
      %v9373 = vunpack.c.h.b16 %v9280
      %v9374 = vunpack.c.l.b16 %v9281
      %v9375 = vunpack.c.h.b16 %v9281
      %v9376 = vunpack.c.l.b16 %v9282
      %v9377 = vunpack.c.h.b16 %v9282
      %v9378 = vunpack.c.l.b16 %v9283
      %v9379 = vunpack.c.h.b16 %v9283
      %v9380 = vunpack.c.l.b16 %v9284
      %v9381 = vunpack.c.h.b16 %v9284
      %v9382 = vunpack.c.l.b16 %v9285
      %v9383 = vunpack.c.h.b16 %v9285
      %v9384 = vunpack.c.l.b16 %v9286
      %v9385 = vunpack.c.h.b16 %v9286
      %v9386 = vunpack.c.l.b16 %v9287
      %v9387 = vunpack.c.h.b16 %v9287
      %v9388 = vpack.c.b16 %v9326, %v9324
      %v9389 = vpack.c.b16 %v9327, %v9325
      %v9390 = vpack.c.b16 %v9330, %v9328
      %v9391 = vpack.c.b16 %v9331, %v9329
      %v9392 = vpack.c.b16 %v9334, %v9332
      %v9393 = vpack.c.b16 %v9335, %v9333
      %v9394 = vpack.c.b16 %v9338, %v9336
      %v9395 = vpack.c.b16 %v9339, %v9337
      %v9396 = vpack.c.b16 %v9342, %v9340
      %v9397 = vpack.c.b16 %v9343, %v9341
      %v9398 = vpack.c.b16 %v9346, %v9344
      %v9399 = vpack.c.b16 %v9347, %v9345
      %v9400 = vpack.c.b16 %v9350, %v9348
      %v9401 = vpack.c.b16 %v9351, %v9349
      %v9402 = vpack.c.b16 %v9354, %v9352
      %v9403 = vpack.c.b16 %v9355, %v9353
      %v9404 = vpack.c.b16 %v9358, %v9356
      %v9405 = vpack.c.b16 %v9359, %v9357
      %v9406 = vpack.c.b16 %v9362, %v9360
      %v9407 = vpack.c.b16 %v9363, %v9361
      %v9408 = vpack.c.b16 %v9366, %v9364
      %v9409 = vpack.c.b16 %v9367, %v9365
      %v9410 = vpack.c.b16 %v9370, %v9368
      %v9411 = vpack.c.b16 %v9371, %v9369
      %v9412 = vpack.c.b16 %v9374, %v9372
      %v9413 = vpack.c.b16 %v9375, %v9373
      %v9414 = vpack.c.b16 %v9378, %v9376
      %v9415 = vpack.c.b16 %v9379, %v9377
      %v9416 = vpack.c.b16 %v9382, %v9380
      %v9417 = vpack.c.b16 %v9383, %v9381
      %v9418 = vpack.c.b16 %v9386, %v9384
      %v9419 = vpack.c.b16 %v9387, %v9385
      %v9455 = vunpack.c.l.b16 %v9236
      %v9456 = vunpack.c.l.b16 %v9237
      %v9457 = vunpack.c.l.b16 %v9238
      %v9458 = vunpack.c.l.b16 %v9239
      %v9459 = vunpack.c.l.b16 %v9240
      %v9460 = vunpack.c.l.b16 %v9241
      %v9461 = vunpack.c.l.b16 %v9242
      %v9462 = vunpack.c.l.b16 %v9243
      %v9463 = vunpack.c.l.b16 %v9244
      %v9464 = vunpack.c.l.b16 %v9245
      %v9465 = vunpack.c.l.b16 %v9246
      %v9466 = vunpack.c.l.b16 %v9247
      %v9467 = vunpack.c.l.b16 %v9248
      %v9468 = vunpack.c.l.b16 %v9249
      %v9469 = vunpack.c.l.b16 %v9250
      %v9470 = vunpack.c.l.b16 %v9251
      %v9471 = vunpack.c.l.b16 %v9252
      %v9472 = vunpack.c.l.b16 %v9253
      %v9473 = vunpack.c.l.b16 %v9254
      %v9474 = vpack.c.b16 %v9456, %v9455
      %v9475 = vpack.c.b16 %v9458, %v9457
      %v9476 = vpack.c.b16 %v9460, %v9459
      %v9477 = vpack.c.b16 %v9462, %v9461
      %v9478 = vpack.c.b16 %v9464, %v9463
      %v9479 = vpack.c.b16 %v9466, %v9465
      %v9480 = vpack.c.b16 %v9468, %v9467
      %v9481 = vpack.c.b16 %v9470, %v9469
      %v9482 = vpack.c.b16 %v9472, %v9471
      %v9483 = vpack.c.b16 %v9473, %v9473
      %vm9493 = vcmask 195584
      %v9495 = vsel %vm9493, %v9389, 0
      %v9498 = vsel %vm9493, %v9391, 0
      %v9501 = vsel %vm9493, %v9393, 0
      %v9504 = vsel %vm9493, %v9395, 0
      %v9507 = vsel %vm9493, %v9397, 0
      %v9510 = vsel %vm9493, %v9399, 0
      %v9513 = vsel %vm9493, %v9401, 0
      %v9516 = vsel %vm9493, %v9403, 0
      %v9519 = vsel %vm9493, %v9405, 0
      %v9522 = vsel %vm9493, %v9407, 0
      %v9525 = vsel %vm9493, %v9409, 0
      %v9528 = vsel %vm9493, %v9411, 0
      %v9531 = vsel %vm9493, %v9413, 0
      %v9534 = vsel %vm9493, %v9415, 0
      %v9537 = vsel %vm9493, %v9417, 0
      %v9540 = vsel %vm9493, %v9419, 0
      %v9543 = vsel %vm3562, %v9483, 0
      %9545 = vmatprep.subr.bf16.mxu0 0
      %9546 = vmatpush1.bf16.msra.mxu0 %v9481
      %9547 = vmatprep.subr.bf16.mxu0 0
      %9548 = vmatpush1.bf16.msra.mxu0 %v9480
      %9549 = vmatprep.subr.bf16.mxu0 0
      %9550 = vmatpush1.bf16.msra.mxu0 %v9479
      %9551 = vmatprep.subr.bf16.mxu0 0
      %9552 = vmatpush1.bf16.msra.mxu0 %v9478
      %9553 = vmatprep.subr.bf16.mxu0 0
      %9554 = vmatpush1.bf16.msra.mxu0 %v9477
      %9555 = vmatprep.subr.bf16.mxu0 0
      %9556 = vmatpush1.bf16.msra.mxu0 %v9476
      %9557 = vmatprep.subr.bf16.mxu0 0
      %9558 = vmatpush1.bf16.msra.mxu0 %v9475
      %9559 = vmatprep.subr.bf16.mxu0 0
      %9560 = vmatpush1.bf16.msra.mxu0 %v9474
      %9561 = vmatprep.subr.bf16.mxu0 0
      %9562 = vmatpush2.bf16.msra.mxu0 0
      %9563 = vmatprep.subr.bf16.mxu0 0
      %9564 = vmatpush2.bf16.msra.mxu0 0
      %9565 = vmatprep.subr.bf16.mxu0 0
      %9566 = vmatpush2.bf16.msra.mxu0 0
      %9567 = vmatprep.subr.bf16.mxu0 0
      %9568 = vmatpush2.bf16.msra.mxu0 0
      %9569 = vmatprep.subr.bf16.mxu0 0
      %9570 = vmatpush2.bf16.msra.mxu0 0
      %9571 = vmatprep.subr.bf16.mxu0 0
      %9572 = vmatpush2.bf16.msra.mxu0 0
      %9573 = vmatprep.subr.bf16.mxu0 0
      %9574 = vmatpush2.bf16.msra.mxu0 %v9543
      %9575 = vmatprep.subr.bf16.mxu0 0
      %9576 = vmatpush2.bf16.msra.mxu0 %v9482
      %9577 = vmatprep.mubr.bf16.mxu0 %v9495
      %9578 = vmatmul.mubr.bf16.gmra.mxu0 %v9388
      %v9579 = vpop.f32.mrf.mxu0
      %v9580 = vadd.f32 %v9291, %v9579
      %v9581 = vpop.f32.mrf.mxu0
      %v9582 = vpop.f32.mrf.mxu0
      %v9583 = vadd.f32 %v9291, %v9582
      %v9584 = vpop.f32.mrf.mxu0
      %9585 = vmatprep.mubr.bf16.mxu0 %v9498
      %9586 = vmatmul.mubr.bf16.gmra.mxu0 %v9390
      %v9587 = vpop.f32.mrf.mxu0
      %v9588 = vadd.f32 %v9291, %v9587
      %v9589 = vpop.f32.mrf.mxu0
      %v9590 = vpop.f32.mrf.mxu0
      %v9591 = vadd.f32 %v9291, %v9590
      %v9592 = vpop.f32.mrf.mxu0
      %9593 = vmatprep.mubr.bf16.mxu0 %v9501
      %9594 = vmatmul.mubr.bf16.gmra.mxu0 %v9392
      %v9595 = vpop.f32.mrf.mxu0
      %v9596 = vadd.f32 %v9291, %v9595
      %v9597 = vpop.f32.mrf.mxu0
      %v9598 = vpop.f32.mrf.mxu0
      %v9599 = vadd.f32 %v9291, %v9598
      %v9600 = vpop.f32.mrf.mxu0
      %9601 = vmatprep.mubr.bf16.mxu0 %v9504
      %9602 = vmatmul.mubr.bf16.gmra.mxu0 %v9394
      %v9603 = vpop.f32.mrf.mxu0
      %v9604 = vadd.f32 %v9291, %v9603
      %v9605 = vpop.f32.mrf.mxu0
      %v9606 = vpop.f32.mrf.mxu0
      %v9607 = vadd.f32 %v9291, %v9606
      %v9608 = vpop.f32.mrf.mxu0
      %9609 = vmatprep.mubr.bf16.mxu0 %v9507
      %9610 = vmatmul.mubr.bf16.gmra.mxu0 %v9396
      %v9611 = vpop.f32.mrf.mxu0
      %v9612 = vadd.f32 %v9291, %v9611
      %v9613 = vpop.f32.mrf.mxu0
      %v9614 = vpop.f32.mrf.mxu0
      %v9615 = vadd.f32 %v9291, %v9614
      %v9616 = vpop.f32.mrf.mxu0
      %9617 = vmatprep.mubr.bf16.mxu0 %v9510
      %9618 = vmatmul.mubr.bf16.gmra.mxu0 %v9398
      %v9619 = vpop.f32.mrf.mxu0
      %v9620 = vadd.f32 %v9291, %v9619
      %v9621 = vpop.f32.mrf.mxu0
      %v9622 = vpop.f32.mrf.mxu0
      %v9623 = vadd.f32 %v9291, %v9622
      %v9624 = vpop.f32.mrf.mxu0
      %9625 = vmatprep.mubr.bf16.mxu0 %v9513
      %9626 = vmatmul.mubr.bf16.gmra.mxu0 %v9400
      %v9627 = vpop.f32.mrf.mxu0
      %v9628 = vadd.f32 %v9291, %v9627
      %v9629 = vpop.f32.mrf.mxu0
      %v9630 = vpop.f32.mrf.mxu0
      %v9631 = vadd.f32 %v9291, %v9630
      %v9632 = vpop.f32.mrf.mxu0
      %9633 = vmatprep.mubr.bf16.mxu0 %v9516
      %9634 = vmatmul.mubr.bf16.gmra.mxu0 %v9402
      %v9635 = vpop.f32.mrf.mxu0
      %v9636 = vadd.f32 %v9291, %v9635
      %v9637 = vpop.f32.mrf.mxu0
      %v9638 = vpop.f32.mrf.mxu0
      %v9639 = vadd.f32 %v9291, %v9638
      %v9640 = vpop.f32.mrf.mxu0
      %9641 = vmatprep.mubr.bf16.mxu0 %v9519
      %9642 = vmatmul.mubr.bf16.gmra.mxu0 %v9404
      %v9643 = vpop.f32.mrf.mxu0
      %v9644 = vadd.f32 %v9291, %v9643
      %v9645 = vpop.f32.mrf.mxu0
      %v9646 = vpop.f32.mrf.mxu0
      %v9647 = vadd.f32 %v9291, %v9646
      %v9648 = vpop.f32.mrf.mxu0
      %9649 = vmatprep.mubr.bf16.mxu0 %v9522
      %9650 = vmatmul.mubr.bf16.gmra.mxu0 %v9406
      %v9651 = vpop.f32.mrf.mxu0
      %v9652 = vadd.f32 %v9291, %v9651
      %v9653 = vpop.f32.mrf.mxu0
      %v9654 = vpop.f32.mrf.mxu0
      %v9655 = vadd.f32 %v9291, %v9654
      %v9656 = vpop.f32.mrf.mxu0
      %9657 = vmatprep.mubr.bf16.mxu0 %v9525
      %9658 = vmatmul.mubr.bf16.gmra.mxu0 %v9408
      %v9659 = vpop.f32.mrf.mxu0
      %v9660 = vadd.f32 %v9291, %v9659
      %v9661 = vpop.f32.mrf.mxu0
      %v9662 = vpop.f32.mrf.mxu0
      %v9663 = vadd.f32 %v9291, %v9662
      %v9664 = vpop.f32.mrf.mxu0
      %9665 = vmatprep.mubr.bf16.mxu0 %v9528
      %9666 = vmatmul.mubr.bf16.gmra.mxu0 %v9410
      %v9667 = vpop.f32.mrf.mxu0
      %v9668 = vadd.f32 %v9291, %v9667
      %v9669 = vpop.f32.mrf.mxu0
      %v9670 = vpop.f32.mrf.mxu0
      %v9671 = vadd.f32 %v9291, %v9670
      %v9672 = vpop.f32.mrf.mxu0
      %9673 = vmatprep.mubr.bf16.mxu0 %v9531
      %9674 = vmatmul.mubr.bf16.gmra.mxu0 %v9412
      %v9675 = vpop.f32.mrf.mxu0
      %v9676 = vadd.f32 %v9291, %v9675
      %v9677 = vpop.f32.mrf.mxu0
      %v9678 = vpop.f32.mrf.mxu0
      %v9679 = vadd.f32 %v9291, %v9678
      %v9680 = vpop.f32.mrf.mxu0
      %9681 = vmatprep.mubr.bf16.mxu0 %v9534
      %9682 = vmatmul.mubr.bf16.gmra.mxu0 %v9414
      %v9683 = vpop.f32.mrf.mxu0
      %v9684 = vadd.f32 %v9291, %v9683
      %v9685 = vpop.f32.mrf.mxu0
      %v9686 = vpop.f32.mrf.mxu0
      %v9687 = vadd.f32 %v9291, %v9686
      %v9688 = vpop.f32.mrf.mxu0
      %9689 = vmatprep.mubr.bf16.mxu0 %v9537
      %9690 = vmatmul.mubr.bf16.gmra.mxu0 %v9416
      %v9691 = vpop.f32.mrf.mxu0
      %v9692 = vadd.f32 %v9291, %v9691
      %v9693 = vpop.f32.mrf.mxu0
      %v9694 = vpop.f32.mrf.mxu0
      %v9695 = vadd.f32 %v9291, %v9694
      %v9696 = vpop.f32.mrf.mxu0
      %9697 = vmatprep.mubr.bf16.mxu0 %v9540
      %9698 = vmatmul.mubr.bf16.gmra.mxu0 %v9418
      %v9699 = vpop.f32.mrf.mxu0
      %v9700 = vadd.f32 %v9291, %v9699
      %v9701 = vpop.f32.mrf.mxu0
      %v9702 = vpop.f32.mrf.mxu0
      %v9703 = vadd.f32 %v9291, %v9702
      %v9704 = vpop.f32.mrf.mxu0
      %9705 = vdwg.mxu0
      %vm9706 = vcmask 261120
      %9707 = vst.msk [vmem:[%s172] sm:$0xff] %vm9706, %v9580
      %9708 = vst.msk [vmem:[%s172 + $0x8] sm:$0xff] %vm9706, %v9583
      %9709 = vst.msk [vmem:[%s172 + $0x10] sm:$0xff] %vm9706, %v9588
      %9710 = vst.msk [vmem:[%s172 + $0x18] sm:$0xff] %vm9706, %v9591
      %9711 = vst.msk [vmem:[%s172 + $0x20] sm:$0xff] %vm9706, %v9596
      %9712 = vst.msk [vmem:[%s172 + $0x28] sm:$0xff] %vm9706, %v9599
      %9713 = vst.msk [vmem:[%s172 + $0x30] sm:$0xff] %vm9706, %v9604
      %9714 = vst.msk [vmem:[%s172 + $0x38] sm:$0xff] %vm9706, %v9607
      %9715 = vst.msk [vmem:[%s172 + $0x40] sm:$0xff] %vm9706, %v9612
      %9716 = vst.msk [vmem:[%s172 + $0x48] sm:$0xff] %vm9706, %v9615
      %9717 = vst.msk [vmem:[%s172 + $0x50] sm:$0xff] %vm9706, %v9620
      %9718 = vst.msk [vmem:[%s172 + $0x58] sm:$0xff] %vm9706, %v9623
      %9719 = vst.msk [vmem:[%s172 + $0x60] sm:$0xff] %vm9706, %v9628
      %9720 = vst.msk [vmem:[%s172 + $0x68] sm:$0xff] %vm9706, %v9631
      %9721 = vst.msk [vmem:[%s172 + $0x70] sm:$0xff] %vm9706, %v9636
      %9722 = vst.msk [vmem:[%s172 + $0x78] sm:$0xff] %vm9706, %v9639
      %9723 = vst.msk [vmem:[%s172 + $0x80] sm:$0xff] %vm9706, %v9644
      %9724 = vst.msk [vmem:[%s172 + $0x88] sm:$0xff] %vm9706, %v9647
      %9725 = vst.msk [vmem:[%s172 + $0x90] sm:$0xff] %vm9706, %v9652
      %9726 = vst.msk [vmem:[%s172 + $0x98] sm:$0xff] %vm9706, %v9655
      %9727 = vst.msk [vmem:[%s172 + $0xa0] sm:$0xff] %vm9706, %v9660
      %9728 = vst.msk [vmem:[%s172 + $0xa8] sm:$0xff] %vm9706, %v9663
      %9729 = vst.msk [vmem:[%s172 + $0xb0] sm:$0xff] %vm9706, %v9668
      %9730 = vst.msk [vmem:[%s172 + $0xb8] sm:$0xff] %vm9706, %v9671
      %9731 = vst.msk [vmem:[%s172 + $0xc0] sm:$0xff] %vm9706, %v9676
      %9732 = vst.msk [vmem:[%s172 + $0xc8] sm:$0xff] %vm9706, %v9679
      %9733 = vst.msk [vmem:[%s172 + $0xd0] sm:$0xff] %vm9706, %v9684
      %9734 = vst.msk [vmem:[%s172 + $0xd8] sm:$0xff] %vm9706, %v9687
      %9735 = vst.msk [vmem:[%s172 + $0xe0] sm:$0xff] %vm9706, %v9692
      %9736 = vst.msk [vmem:[%s172 + $0xe8] sm:$0xff] %vm9706, %v9695
      %9737 = vst.msk [vmem:[%s172 + $0xf0] sm:$0xff] %vm9706, %v9700
      %9738 = vst.msk [vmem:[%s172 + $0xf8] sm:$0xff] %vm9706, %v9703
      %s9739 = smul.u32 32, %s14
      %p9740 = scmp.lt.s32.totalorder %s9739, 63
      %s9741 = scalar_select %p9740, %s9739, 63
      %s9742 = smul.addr %s9741, 8
      %s9743 = scalar_lea.vmem %s3, %s9742
      // Predicated region
      $region33: #{tpu_custom_call.1} parent=31 // pred_check
        %p9744 = pneg %p100
      $region34: #{tpu_custom_call.1} parent=31 // pred_check_branch
        %9746 = sbr.rel (%p9744) target = $region36
      $region35: #{tpu_custom_call.1} parent=31 // pred_region
        %s9747 = smul.u32 32, %s14
      $region36: #{tpu_custom_call.1} parent=31 // pred_fallthru
        _
    $region32: #{tpu_custom_call.1} parent=5 // pred_fallthru
      _
    %p9748 = scmp.le.s32.totalorder 2, %s9
    // Predicated region
    $region37: #{tpu_custom_call.1} parent=5 // pred_check
      %p9749 = pneg %p9748
    $region38: #{tpu_custom_call.1} parent=5 // pred_check_branch
      %9751 = sbr.rel (%p9749) target = $region40
    $region39: #{tpu_custom_call.1} parent=5 // pred_region
      %s9752 = ssub.s32 %s9, 2
      // Predicated region
      $region41: #{tpu_custom_call.1} parent=39 // pred_check
        %p9753 = pneg %p106
      $region42: #{tpu_custom_call.1} parent=39 // pred_check_branch
        %9755 = sbr.rel (%p9753) target = $region44
      $region43: #{tpu_custom_call.1} parent=39 // pred_region
        %s9756 = smul.u32 32, %s15
        %p9757 = scmp.lt.s32.totalorder %s9756, 63
        %s9758 = scalar_select %p9757, %s9756, 63
        %s9759 = smul.addr %s9758, 8
        %s9760 = scalar_lea.vmem %s3, %s9759
      $region44: #{tpu_custom_call.1} parent=39 // pred_fallthru
        _
    $region40: #{tpu_custom_call.1} parent=5 // pred_fallthru
      _
  $region6: #{tpu_custom_call.1} parent=0 // loop_footer
    %s13 = sadd.s32 1, %s9
  $region7: #{tpu_custom_call.1} parent=0 // loop_footer_branch
    %8 = sbr.rel target = $region3
  $region8: #{tpu_custom_call.1} parent=0 // loop_exit
    _

</llo_original>
